<compile_context>
chip_gen: v6e
topology: v6e:2x2x1
jax: 0.10.0
libtpu: 0.0.40
codegen_flags: <defaults>
</compile_context>

<pallas_src>
import functools

import jax
import jax.numpy as jnp
from jax import lax
from jax.experimental import pallas as pl
from jax.experimental.pallas import tpu as pltpu

EPS = 1e-5
LANE = 128


def _round_up(x, m):
    return (x + m - 1) // m * m


# -----------------------------------------------------------------------------
# Fused kernel: [conv3x3 + BN + ReLU] x 2 on one row band (one batch element)
# -----------------------------------------------------------------------------
def _fused_up_conv_kernel(x_main_ref, x_halo_ref, w1_ref, w2_ref,
                          s1_ref, b1_ref, s2_ref, b2_ref,
                          o_ref, band_ref, y1_ref, *, th, wb, h, w):
    # x_main_ref: (1, TH, WB, Cin_p)  rows [i*TH, i*TH+TH) of the 2-padded input
    # x_halo_ref: (1, 4,  WB, Cin_p)  rows [ (i+1)*TH, (i+1)*TH+4 )  (bottom halo)
    # w*_ref:     (3, 3, C, Cout_p)   HWIO bf16 weights
    # s*/b*_ref:  (1, Cout_p)         folded BN scale / bias (f32)
    # o_ref:      (1, TH, W, Cout_p)
    # band_ref:   ((TH+4)*WB + 8, Cin_p)   bf16 scratch (flattened input band)
    # y1_ref:     ((TH+2)*WB + 8, Cout_p)  bf16 scratch (masked conv1 output)
    cin_p = x_main_ref.shape[-1]
    cout_p = o_ref.shape[-1]
    i = pl.program_id(1)
    r0 = i * th                                   # first output row of this tile

    # ---- assemble flattened input band (free reshapes: WB % 16 == 0) ----------
    n_band = (th + 4) * wb
    band_ref[0:th * wb, :] = x_main_ref[0].reshape(th * wb, cin_p)
    band_ref[th * wb:n_band, :] = x_halo_ref[0].reshape(4 * wb, cin_p)
    band_ref[n_band:, :] = jnp.zeros((band_ref.shape[0] - n_band, cin_p),
                                     band_ref.dtype)

    # ---- conv1 + BN1 + ReLU: 9 lane-dense 2-D MXU matmuls ---------------------
    l1 = (th + 2) * wb
    acc1 = jnp.zeros((l1, cout_p), jnp.float32)
    for dy in range(3):
        for dx in range(3):
            s = dy * wb + dx
            acc1 = acc1 + jnp.dot(band_ref[s:s + l1, :], w1_ref[dy, dx],
                                  preferred_element_type=jnp.float32)
    y1 = jnp.maximum(acc1 * s1_ref[0] + b1_ref[0], 0.0)

    # Zero the positions that correspond to conv-padding of the intermediate
    # activation (image rows -1 / >=H, cols -1 / >=W), so the fused second conv
    # sees exactly the zero padding the unfused version would.
    y1 = y1.reshape(th + 2, wb, cout_p)
    rowg = lax.broadcasted_iota(jnp.int32, (th + 2, wb, cout_p), 0) + (r0 - 1)
    colg = lax.broadcasted_iota(jnp.int32, (th + 2, wb, cout_p), 1) - 1
    valid = (rowg >= 0) & (rowg < h) & (colg >= 0) & (colg < w)
    y1 = jnp.where(valid, y1, 0.0).astype(y1_ref.dtype)
    y1_ref[0:l1, :] = y1.reshape(l1, cout_p)
    y1_ref[l1:, :] = jnp.zeros((y1_ref.shape[0] - l1, cout_p), y1_ref.dtype)

    # ---- conv2 + BN2 + ReLU ---------------------------------------------------
    l2 = th * wb
    acc2 = jnp.zeros((l2, cout_p), jnp.float32)
    for dy in range(3):
        for dx in range(3):
            s = dy * wb + dx
            acc2 = acc2 + jnp.dot(y1_ref[s:s + l2, :], w2_ref[dy, dx],
                                  preferred_element_type=jnp.float32)
    y2 = jnp.maximum(acc2 * s2_ref[0] + b2_ref[0], 0.0)
    y2 = y2.reshape(th, wb, cout_p)
    o_ref[0] = y2[:, :w, :].astype(o_ref.dtype)


# -----------------------------------------------------------------------------
# Glue: bilinear upsample (align_corners=True), BN folding, tile-size choice
# -----------------------------------------------------------------------------
def _interp_matrix(n_in, n_out, dtype=jnp.float32):
    """(n_out, n_in) bilinear interpolation matrix, align_corners=True."""
    if n_out == 1:
        return jnp.zeros((1, n_in), dtype).at[0, 0].set(1.0)
    idx = jnp.arange(n_out, dtype=dtype)
    src = idx * (n_in - 1) / (n_out - 1)
    lo = jnp.clip(jnp.floor(src).astype(jnp.int32), 0, n_in - 1)
    hi = jnp.clip(lo + 1, 0, n_in - 1)
    frac = src - lo.astype(dtype)
    m = jnp.zeros((n_out, n_in), dtype)
    rows = jnp.arange(n_out)
    m = m.at[rows, lo].add(1.0 - frac)
    m = m.at[rows, hi].add(frac)
    return m


def fold_bn(gamma, beta, mean, var, eps=EPS):
    scale = gamma / jnp.sqrt(var + eps)
    return scale, beta - mean * scale


def _pick_tile_rows(h, w, wb, cin_p, cout_p, budget_bytes=20 * 1024 * 1024):
    """Largest row tile (multiple of 8) whose per-step VMEM footprint fits the
    budget (sized conservatively for v7x's 64 MiB VMEM) while keeping >= 2 row
    tiles so the pipeline has steps to overlap and both v7x TCs get work."""
    def est(th):
        band = ((th + 4) * wb + 8) * cin_p * 2           # bf16 band scratch
        y1 = ((th + 2) * wb + 8) * cout_p * 2            # bf16 intermediate
        acc = (th + 2) * wb * cout_p * 4 * 2             # f32 accumulator temps
        ins = 2 * (th + 4) * wb * cin_p * 2              # double-buffered inputs
        outs = 2 * th * w * cout_p * 4                   # double-buffered output
        wts = 9 * (cin_p + cout_p) * cout_p * 2
        return band + y1 + acc + ins + outs + wts
    half = max(8, _round_up(h, 8) // 2)
    th = 8
    while th + 8 <= half and est(th + 8) <= budget_bytes:
        th += 8
    return th


# -----------------------------------------------------------------------------
# The Up module forward (NCHW in / NCHW out, matching PyTorch)
# -----------------------------------------------------------------------------
@functools.partial(jax.jit, static_argnames=("scale_factor",))
def up_forward(x1_nchw, x2_nchw, params, scale_factor=2):
    # NHWC early: heavy tensors stay channels-last (lane axis)
    x1 = jnp.transpose(x1_nchw, (0, 2, 3, 1))
    x2 = jnp.transpose(x2_nchw, (0, 2, 3, 1))

    # bilinear upsample (align_corners=True) as two small interpolation matmuls
    _, h1, w1s, _ = x1.shape
    mh = _interp_matrix(h1, h1 * scale_factor, x1.dtype)
    mw = _interp_matrix(w1s, w1s * scale_factor, x1.dtype)
    x1_up = jnp.einsum("ip,npqc,jq->nijc", mh, x1, mw)

    # channel concat [x2, up(x1)] on the minor (lane) axis
    x = jnp.concatenate([x2, x1_up], axis=-1)
    n, h, w, cin = x.shape
    cout = params["w1"].shape[0]

    # lane-dense padding & tiling parameters (all static)
    cin_p = _round_up(cin, LANE)
    cout_p = _round_up(cout, LANE)
    wb = _round_up(w + 4, 16)                     # band width (free-reshape friendly)
    th = _pick_tile_rows(h, w, wb, cin_p, cout_p)
    h_t = _round_up(h, th)
    n_tiles = h_t // th

    # zero pad: 2-row/col halo for the two fused 3x3 convs, bottom rows to a
    # multiple of TH, right cols to WB, channels to a multiple of 128; cast bf16.
    xp = jnp.pad(x, ((0, 0), (2, h_t - h + 2), (2, wb - w - 2), (0, cin_p - cin)))
    xp = xp.astype(jnp.bfloat16)

    # weights OIHW -> HWIO, channel-padded, bf16; BN folded to f32 scale/bias
    w1 = jnp.transpose(params["w1"], (2, 3, 1, 0))
    w2 = jnp.transpose(params["w2"], (2, 3, 1, 0))
    w1 = jnp.pad(w1, ((0, 0), (0, 0), (0, cin_p - cin), (0, cout_p - cout)))
    w2 = jnp.pad(w2, ((0, 0), (0, 0), (0, cout_p - cout), (0, cout_p - cout)))
    w1 = w1.astype(jnp.bfloat16)
    w2 = w2.astype(jnp.bfloat16)
    s1, b1 = fold_bn(params["g1"], params["b1"], params["m1"], params["v1"])
    s2, b2 = fold_bn(params["g2"], params["b2"], params["m2"], params["v2"])
    pad_c = (0, cout_p - cout)
    s1 = jnp.pad(s1, pad_c).reshape(1, cout_p)
    b1 = jnp.pad(b1, pad_c).reshape(1, cout_p)
    s2 = jnp.pad(s2, pad_c).reshape(1, cout_p)
    b2 = jnp.pad(b2, pad_c).reshape(1, cout_p)

    kern = functools.partial(_fused_up_conv_kernel, th=th, wb=wb, h=h, w=w)
    out = pl.pallas_call(
        kern,
        out_shape=jax.ShapeDtypeStruct((n, h_t, w, cout_p), jnp.float32),
        grid=(n, n_tiles),
        in_specs=[
            # main TH-row band of the padded input
            pl.BlockSpec((1, th, wb, cin_p), lambda b, i: (b, i, 0, 0)),
            # 4-row halo directly below the main band (second view of same array)
            pl.BlockSpec((1, 4, wb, cin_p),
                         lambda b, i: (b, (i + 1) * (th // 4), 0, 0)),
            pl.BlockSpec((3, 3, cin_p, cout_p), lambda b, i: (0, 0, 0, 0)),
            pl.BlockSpec((3, 3, cout_p, cout_p), lambda b, i: (0, 0, 0, 0)),
            pl.BlockSpec((1, cout_p), lambda b, i: (0, 0)),
            pl.BlockSpec((1, cout_p), lambda b, i: (0, 0)),
            pl.BlockSpec((1, cout_p), lambda b, i: (0, 0)),
            pl.BlockSpec((1, cout_p), lambda b, i: (0, 0)),
        ],
        out_specs=pl.BlockSpec((1, th, w, cout_p), lambda b, i: (b, i, 0, 0)),
        scratch_shapes=[
            pltpu.VMEM(((th + 4) * wb + 8, cin_p), jnp.bfloat16),
            pltpu.VMEM(((th + 2) * wb + 8, cout_p), jnp.bfloat16),
        ],
        compiler_params=pltpu.CompilerParams(
            dimension_semantics=("parallel", "parallel"),
            vmem_limit_bytes=48 * 1024 * 1024,
        ),
    )(xp, xp, w1, w2, s1, b1, s2, b2)

    out = out[:, :h, :, :cout]               # strip row / channel padding
    return jnp.transpose(out, (0, 3, 1, 2))  # back to NCHW


# -----------------------------------------------------------------------------
# Pure-JAX f32 reference (lax conv) for the correctness check
# -----------------------------------------------------------------------------
def _upsample_nchw_ref(x, scale):
    _, _, h, w = x.shape
    mh = _interp_matrix(h, h * scale, x.dtype)
    mw = _interp_matrix(w, w * scale, x.dtype)
    return jnp.einsum("ip,ncpq,jq->ncij", mh, x, mw)


def up_forward_ref(x1_nchw, x2_nchw, params, scale_factor=2):
    x = jnp.concatenate([x2_nchw, _upsample_nchw_ref(x1_nchw, scale_factor)], axis=1)

    def block(xx, wt, g, b, m, v):
        y = lax.conv_general_dilated(
            xx, wt, window_strides=(1, 1), padding=((1, 1), (1, 1)),
            dimension_numbers=("NCHW", "OIHW", "NCHW"))
        y = (y - m[None, :, None, None]) / jnp.sqrt(v + EPS)[None, :, None, None]
        y = y * g[None, :, None, None] + b[None, :, None, None]
        return jnp.maximum(y, 0.0)

    y = block(x, params["w1"], params["g1"], params["b1"], params["m1"], params["v1"])
    y = block(y, params["w2"], params["g2"], params["b2"], params["m2"], params["v2"])
    return y


def init_up_params(key, in_channels, out_channels):
    ks = jax.random.split(key, 8)
    p = {}
    p["w1"] = 0.1 * jax.random.normal(ks[0], (out_channels, in_channels, 3, 3), jnp.float32)
    p["w2"] = 0.1 * jax.random.normal(ks[1], (out_channels, out_channels, 3, 3), jnp.float32)
    p["g1"] = 1.0 + 0.1 * jax.random.normal(ks[2], (out_channels,), jnp.float32)
    p["b1"] = 0.1 * jax.random.normal(ks[3], (out_channels,), jnp.float32)
    p["m1"] = 0.1 * jax.random.normal(ks[4], (out_channels,), jnp.float32)
    p["v1"] = jnp.abs(1.0 + 0.1 * jax.random.normal(ks[5], (out_channels,), jnp.float32))
    p["g2"] = 1.0 + 0.1 * jax.random.normal(ks[6], (out_channels,), jnp.float32)
    p["b2"] = 0.1 * jax.random.normal(ks[7], (out_channels,), jnp.float32)
    p["m2"] = jnp.zeros((out_channels,), jnp.float32)
    p["v2"] = jnp.ones((out_channels,), jnp.float32)
    return p


if __name__ == "__main__":
    key = jax.random.PRNGKey(0)
    k1, k2, kp = jax.random.split(key, 3)

    # small shapes consistent with the module: x1 is low-res, x2 is the 2x skip
    C1, C2, OUT = 8, 8, 8
    x1 = jax.random.normal(k1, (2, C1, 8, 8), jnp.float32)     # NCHW
    x2 = jax.random.normal(k2, (2, C2, 16, 16), jnp.float32)   # NCHW
    params = init_up_params(kp, in_channels=C1 + C2, out_channels=OUT)

    out = jax.block_until_ready(up_forward(x1, x2, params))
    ref = jax.block_until_ready(up_forward_ref(x1, x2, params))

    # bf16 MXU inputs with f32 accumulation vs f32 reference: ~1e-2 relative.
    if not jnp.allclose(out, ref, atol=5e-2, rtol=5e-2):
        raise AssertionError("Pallas output mismatches JAX reference")

    print("KERNEL_OK")
</pallas_src>

<mosaic_0001>
module attributes {stable_mosaic.version = 11 : i64} {
  func.func private @main(%arg0: i32) attributes {dimension_semantics = [#tpu.dimension_semantics<core_parallel>], iteration_bounds = array<i64: 2>, tpu.core_type = #tpu.core_type<sc_scalar_subcore>, window_params = []} {
    return
  }
}

module attributes {stable_mosaic.version = 11 : i64} {
  func.func private @main(%arg0: i32) attributes {dimension_semantics = [#tpu.dimension_semantics<core_parallel>], iteration_bounds = array<i64: 2>, tpu.core_type = #tpu.core_type<sc_scalar_subcore>, window_params = []} {
    return
  }
}

module attributes {stable_mosaic.version = 11 : i64} {
  func.func @_fused_up_conv_kernel(%arg0: i32, %arg1: i32, %arg2: memref<1x8x32x128xbf16, #tpu.memory_space<vmem>>, %arg3: memref<1x4x32x128xbf16, #tpu.memory_space<vmem>>, %arg4: memref<3x3x128x128xbf16, #tpu.memory_space<vmem>>, %arg5: memref<3x3x128x128xbf16, #tpu.memory_space<vmem>>, %arg6: memref<1x128xf32, #tpu.memory_space<vmem>>, %arg7: memref<1x128xf32, #tpu.memory_space<vmem>>, %arg8: memref<1x128xf32, #tpu.memory_space<vmem>>, %arg9: memref<1x128xf32, #tpu.memory_space<vmem>>, %arg10: memref<1x8x16x128xf32, #tpu.memory_space<vmem>>, %arg11: memref<392x128xbf16, #tpu.memory_space<vmem>>, %arg12: memref<328x128xbf16, #tpu.memory_space<vmem>>) attributes {dimension_semantics = [#tpu.dimension_semantics<parallel>, #tpu.dimension_semantics<parallel>], iteration_bounds = array<i64: 2, 2>, scalar_prefetch = 0 : i64, scratch_operands = 2 : i64, tpu.core_type = #tpu.core_type<tc>, window_params = [{transform_indices = @transform_0, window_bounds = array<i64: 1, 8, 32, 128>}, {transform_indices = @transform_1, window_bounds = array<i64: 1, 4, 32, 128>}, {pipeline_mode = #tpu.pipeline_mode<synchronous>, transform_indices = @transform_2, window_bounds = array<i64: 3, 3, 128, 128>}, {pipeline_mode = #tpu.pipeline_mode<synchronous>, transform_indices = @transform_3, window_bounds = array<i64: 3, 3, 128, 128>}, {pipeline_mode = #tpu.pipeline_mode<synchronous>, transform_indices = @transform_4, window_bounds = array<i64: 1, 128>}, {pipeline_mode = #tpu.pipeline_mode<synchronous>, transform_indices = @transform_5, window_bounds = array<i64: 1, 128>}, {pipeline_mode = #tpu.pipeline_mode<synchronous>, transform_indices = @transform_6, window_bounds = array<i64: 1, 128>}, {pipeline_mode = #tpu.pipeline_mode<synchronous>, transform_indices = @transform_7, window_bounds = array<i64: 1, 128>}, {transform_indices = @transform_8, window_bounds = array<i64: 1, 8, 16, 128>}]} {
    %c8_i32 = arith.constant 8 : i32
    %0 = arith.muli %arg1, %c8_i32 : i32
    %c0 = arith.constant 0 : index
    %c0_0 = arith.constant 0 : index
    %c0_1 = arith.constant 0 : index
    %c0_2 = arith.constant 0 : index
    %1 = vector.load %arg2[%c0, %c0_0, %c0_1, %c0_2] : memref<1x8x32x128xbf16, #tpu.memory_space<vmem>>, vector<1x8x32x128xbf16>
    %2 = vector.shape_cast %1 : vector<1x8x32x128xbf16> to vector<8x32x128xbf16>
    %3 = vector.shape_cast %2 : vector<8x32x128xbf16> to vector<256x128xbf16>
    %c0_3 = arith.constant 0 : index
    %c0_4 = arith.constant 0 : index
    %4 = vector.load %arg11[%c0_3, %c0_4] : memref<392x128xbf16, #tpu.memory_space<vmem>>, vector<256x128xbf16>
    tpu.vector_store %arg11[%c0_3, %c0_4], %3 {strides = array<i32>} : memref<392x128xbf16, #tpu.memory_space<vmem>>, vector<256x128xbf16>,
    %c0_5 = arith.constant 0 : index
    %c0_6 = arith.constant 0 : index
    %c0_7 = arith.constant 0 : index
    %c0_8 = arith.constant 0 : index
    %5 = vector.load %arg3[%c0_5, %c0_6, %c0_7, %c0_8] : memref<1x4x32x128xbf16, #tpu.memory_space<vmem>>, vector<1x4x32x128xbf16>
    %6 = vector.shape_cast %5 : vector<1x4x32x128xbf16> to vector<4x32x128xbf16>
    %7 = vector.shape_cast %6 : vector<4x32x128xbf16> to vector<128x128xbf16>
    %c256 = arith.constant 256 : index
    %c0_9 = arith.constant 0 : index
    %8 = vector.load %arg11[%c256, %c0_9] : memref<392x128xbf16, #tpu.memory_space<vmem>>, vector<128x128xbf16>
    tpu.vector_store %arg11[%c256, %c0_9], %7 {strides = array<i32>} : memref<392x128xbf16, #tpu.memory_space<vmem>>, vector<128x128xbf16>,
    %cst = arith.constant 0.000000e+00 : bf16
    %9 = vector.broadcast %cst : bf16 to vector<8x128xbf16>
    %c384 = arith.constant 384 : index
    %c0_10 = arith.constant 0 : index
    %10 = vector.load %arg11[%c384, %c0_10] : memref<392x128xbf16, #tpu.memory_space<vmem>>, vector<8x128xbf16>
    tpu.vector_store %arg11[%c384, %c0_10], %9 {strides = array<i32>} : memref<392x128xbf16, #tpu.memory_space<vmem>>, vector<8x128xbf16>,
    %cst_11 = arith.constant 0.000000e+00 : f32
    %11 = vector.broadcast %cst_11 : f32 to vector<320x128xf32>
    %c0_12 = arith.constant 0 : index
    %c0_13 = arith.constant 0 : index
    %12 = vector.load %arg11[%c0_12, %c0_13] : memref<392x128xbf16, #tpu.memory_space<vmem>>, vector<320x128xbf16>
    %c0_14 = arith.constant 0 : index
    %c0_15 = arith.constant 0 : index
    %c0_16 = arith.constant 0 : index
    %c0_17 = arith.constant 0 : index
    %13 = vector.load %arg4[%c0_14, %c0_15, %c0_16, %c0_17] : memref<3x3x128x128xbf16, #tpu.memory_space<vmem>>, vector<1x1x128x128xbf16>
    %14 = vector.shape_cast %13 : vector<1x1x128x128xbf16> to vector<128x128xbf16>
    %cst_18 = arith.constant dense<0.000000e+00> : vector<320x128xf32>
    %15 = tpu.matmul %12, %14, %cst_18 {dimension_numbers = #tpu.dot_dimension_numbers<[1], [0], [0], [1], [0, 0, 1, 1], [], []>} : vector<320x128xbf16>, vector<128x128xbf16>, vector<320x128xf32> -> vector<320x128xf32>
    %16 = arith.addf %11, %15 : vector<320x128xf32>
    %c1 = arith.constant 1 : index
    %c0_19 = arith.constant 0 : index
    %17 = vector.load %arg11[%c1, %c0_19] : memref<392x128xbf16, #tpu.memory_space<vmem>>, vector<320x128xbf16>
    %c0_20 = arith.constant 0 : index
    %c1_21 = arith.constant 1 : index
    %c0_22 = arith.constant 0 : index
    %c0_23 = arith.constant 0 : index
    %18 = vector.load %arg4[%c0_20, %c1_21, %c0_22, %c0_23] : memref<3x3x128x128xbf16, #tpu.memory_space<vmem>>, vector<1x1x128x128xbf16>
    %19 = vector.shape_cast %18 : vector<1x1x128x128xbf16> to vector<128x128xbf16>
    %cst_24 = arith.constant dense<0.000000e+00> : vector<320x128xf32>
    %20 = tpu.matmul %17, %19, %cst_24 {dimension_numbers = #tpu.dot_dimension_numbers<[1], [0], [0], [1], [0, 0, 1, 1], [], []>} : vector<320x128xbf16>, vector<128x128xbf16>, vector<320x128xf32> -> vector<320x128xf32>
    %21 = arith.addf %16, %20 : vector<320x128xf32>
    %c2 = arith.constant 2 : index
    %c0_25 = arith.constant 0 : index
    %22 = vector.load %arg11[%c2, %c0_25] : memref<392x128xbf16, #tpu.memory_space<vmem>>, vector<320x128xbf16>
    %c0_26 = arith.constant 0 : index
    %c2_27 = arith.constant 2 : index
    %c0_28 = arith.constant 0 : index
    %c0_29 = arith.constant 0 : index
    %23 = vector.load %arg4[%c0_26, %c2_27, %c0_28, %c0_29] : memref<3x3x128x128xbf16, #tpu.memory_space<vmem>>, vector<1x1x128x128xbf16>
    %24 = vector.shape_cast %23 : vector<1x1x128x128xbf16> to vector<128x128xbf16>
    %cst_30 = arith.constant dense<0.000000e+00> : vector<320x128xf32>
    %25 = tpu.matmul %22, %24, %cst_30 {dimension_numbers = #tpu.dot_dimension_numbers<[1], [0], [0], [1], [0, 0, 1, 1], [], []>} : vector<320x128xbf16>, vector<128x128xbf16>, vector<320x128xf32> -> vector<320x128xf32>
    %26 = arith.addf %21, %25 : vector<320x128xf32>
    %c32 = arith.constant 32 : index
    %c0_31 = arith.constant 0 : index
    %27 = vector.load %arg11[%c32, %c0_31] : memref<392x128xbf16, #tpu.memory_space<vmem>>, vector<320x128xbf16>
    %c1_32 = arith.constant 1 : index
    %c0_33 = arith.constant 0 : index
    %c0_34 = arith.constant 0 : index
    %c0_35 = arith.constant 0 : index
    %28 = vector.load %arg4[%c1_32, %c0_33, %c0_34, %c0_35] : memref<3x3x128x128xbf16, #tpu.memory_space<vmem>>, vector<1x1x128x128xbf16>
    %29 = vector.shape_cast %28 : vector<1x1x128x128xbf16> to vector<128x128xbf16>
    %cst_36 = arith.constant dense<0.000000e+00> : vector<320x128xf32>
    %30 = tpu.matmul %27, %29, %cst_36 {dimension_numbers = #tpu.dot_dimension_numbers<[1], [0], [0], [1], [0, 0, 1, 1], [], []>} : vector<320x128xbf16>, vector<128x128xbf16>, vector<320x128xf32> -> vector<320x128xf32>
    %31 = arith.addf %26, %30 : vector<320x128xf32>
    %c33 = arith.constant 33 : index
    %c0_37 = arith.constant 0 : index
    %32 = vector.load %arg11[%c33, %c0_37] : memref<392x128xbf16, #tpu.memory_space<vmem>>, vector<320x128xbf16>
    %c1_38 = arith.constant 1 : index
    %c1_39 = arith.constant 1 : index
    %c0_40 = arith.constant 0 : index
    %c0_41 = arith.constant 0 : index
    %33 = vector.load %arg4[%c1_38, %c1_39, %c0_40, %c0_41] : memref<3x3x128x128xbf16, #tpu.memory_space<vmem>>, vector<1x1x128x128xbf16>
    %34 = vector.shape_cast %33 : vector<1x1x128x128xbf16> to vector<128x128xbf16>
    %cst_42 = arith.constant dense<0.000000e+00> : vector<320x128xf32>
    %35 = tpu.matmul %32, %34, %cst_42 {dimension_numbers = #tpu.dot_dimension_numbers<[1], [0], [0], [1], [0, 0, 1, 1], [], []>} : vector<320x128xbf16>, vector<128x128xbf16>, vector<320x128xf32> -> vector<320x128xf32>
    %36 = arith.addf %31, %35 : vector<320x128xf32>
    %c34 = arith.constant 34 : index
    %c0_43 = arith.constant 0 : index
    %37 = vector.load %arg11[%c34, %c0_43] : memref<392x128xbf16, #tpu.memory_space<vmem>>, vector<320x128xbf16>
    %c1_44 = arith.constant 1 : index
    %c2_45 = arith.constant 2 : index
    %c0_46 = arith.constant 0 : index
    %c0_47 = arith.constant 0 : index
    %38 = vector.load %arg4[%c1_44, %c2_45, %c0_46, %c0_47] : memref<3x3x128x128xbf16, #tpu.memory_space<vmem>>, vector<1x1x128x128xbf16>
    %39 = vector.shape_cast %38 : vector<1x1x128x128xbf16> to vector<128x128xbf16>
    %cst_48 = arith.constant dense<0.000000e+00> : vector<320x128xf32>
    %40 = tpu.matmul %37, %39, %cst_48 {dimension_numbers = #tpu.dot_dimension_numbers<[1], [0], [0], [1], [0, 0, 1, 1], [], []>} : vector<320x128xbf16>, vector<128x128xbf16>, vector<320x128xf32> -> vector<320x128xf32>
    %41 = arith.addf %36, %40 : vector<320x128xf32>
    %c64 = arith.constant 64 : index
    %c0_49 = arith.constant 0 : index
    %42 = vector.load %arg11[%c64, %c0_49] : memref<392x128xbf16, #tpu.memory_space<vmem>>, vector<320x128xbf16>
    %c2_50 = arith.constant 2 : index
    %c0_51 = arith.constant 0 : index
    %c0_52 = arith.constant 0 : index
    %c0_53 = arith.constant 0 : index
    %43 = vector.load %arg4[%c2_50, %c0_51, %c0_52, %c0_53] : memref<3x3x128x128xbf16, #tpu.memory_space<vmem>>, vector<1x1x128x128xbf16>
    %44 = vector.shape_cast %43 : vector<1x1x128x128xbf16> to vector<128x128xbf16>
    %cst_54 = arith.constant dense<0.000000e+00> : vector<320x128xf32>
    %45 = tpu.matmul %42, %44, %cst_54 {dimension_numbers = #tpu.dot_dimension_numbers<[1], [0], [0], [1], [0, 0, 1, 1], [], []>} : vector<320x128xbf16>, vector<128x128xbf16>, vector<320x128xf32> -> vector<320x128xf32>
    %46 = arith.addf %41, %45 : vector<320x128xf32>
    %c65 = arith.constant 65 : index
    %c0_55 = arith.constant 0 : index
    %47 = vector.load %arg11[%c65, %c0_55] : memref<392x128xbf16, #tpu.memory_space<vmem>>, vector<320x128xbf16>
    %c2_56 = arith.constant 2 : index
    %c1_57 = arith.constant 1 : index
    %c0_58 = arith.constant 0 : index
    %c0_59 = arith.constant 0 : index
    %48 = vector.load %arg4[%c2_56, %c1_57, %c0_58, %c0_59] : memref<3x3x128x128xbf16, #tpu.memory_space<vmem>>, vector<1x1x128x128xbf16>
    %49 = vector.shape_cast %48 : vector<1x1x128x128xbf16> to vector<128x128xbf16>
    %cst_60 = arith.constant dense<0.000000e+00> : vector<320x128xf32>
    %50 = tpu.matmul %47, %49, %cst_60 {dimension_numbers = #tpu.dot_dimension_numbers<[1], [0], [0], [1], [0, 0, 1, 1], [], []>} : vector<320x128xbf16>, vector<128x128xbf16>, vector<320x128xf32> -> vector<320x128xf32>
    %51 = arith.addf %46, %50 : vector<320x128xf32>
    %c66 = arith.constant 66 : index
    %c0_61 = arith.constant 0 : index
    %52 = vector.load %arg11[%c66, %c0_61] : memref<392x128xbf16, #tpu.memory_space<vmem>>, vector<320x128xbf16>
    %c2_62 = arith.constant 2 : index
    %c2_63 = arith.constant 2 : index
    %c0_64 = arith.constant 0 : index
    %c0_65 = arith.constant 0 : index
    %53 = vector.load %arg4[%c2_62, %c2_63, %c0_64, %c0_65] : memref<3x3x128x128xbf16, #tpu.memory_space<vmem>>, vector<1x1x128x128xbf16>
    %54 = vector.shape_cast %53 : vector<1x1x128x128xbf16> to vector<128x128xbf16>
    %cst_66 = arith.constant dense<0.000000e+00> : vector<320x128xf32>
    %55 = tpu.matmul %52, %54, %cst_66 {dimension_numbers = #tpu.dot_dimension_numbers<[1], [0], [0], [1], [0, 0, 1, 1], [], []>} : vector<320x128xbf16>, vector<128x128xbf16>, vector<320x128xf32> -> vector<320x128xf32>
    %56 = arith.addf %51, %55 : vector<320x128xf32>
    %c0_67 = arith.constant 0 : index
    %c0_68 = arith.constant 0 : index
    %57 = vector.load %arg6[%c0_67, %c0_68] : memref<1x128xf32, #tpu.memory_space<vmem>>, vector<1x128xf32>
    %58 = vector.shape_cast %57 : vector<1x128xf32> to vector<128xf32>
    %59 = vector.shape_cast %58 : vector<128xf32> to vector<1x128xf32>
    %60 = vector.broadcast %59 : vector<1x128xf32> to vector<320x128xf32>
    %61 = arith.mulf %56, %60 : vector<320x128xf32>
    %c0_69 = arith.constant 0 : index
    %c0_70 = arith.constant 0 : index
    %62 = vector.load %arg7[%c0_69, %c0_70] : memref<1x128xf32, #tpu.memory_space<vmem>>, vector<1x128xf32>
    %63 = vector.shape_cast %62 : vector<1x128xf32> to vector<128xf32>
    %64 = vector.shape_cast %63 : vector<128xf32> to vector<1x128xf32>
    %65 = vector.broadcast %64 : vector<1x128xf32> to vector<320x128xf32>
    %66 = arith.addf %61, %65 : vector<320x128xf32>
    %cst_71 = arith.constant 0.000000e+00 : f32
    %67 = vector.broadcast %cst_71 : f32 to vector<320x128xf32>
    %68 = arith.maximumf %66, %67 : vector<320x128xf32>
    %69 = vector.shape_cast %68 : vector<320x128xf32> to vector<10x32x128xf32>
    %70 = tpu.iota {dimensions = array<i32: 0>} : vector<10x32x128xi32>
    %c1_i32 = arith.constant 1 : i32
    %71 = arith.subi %0, %c1_i32 : i32
    %72 = vector.broadcast %71 : i32 to vector<10x32x128xi32>
    %73 = arith.addi %70, %72 : vector<10x32x128xi32>
    %74 = tpu.iota {dimensions = array<i32: 1>} : vector<10x32x128xi32>
    %c1_i32_72 = arith.constant 1 : i32
    %75 = vector.broadcast %c1_i32_72 : i32 to vector<10x32x128xi32>
    %76 = arith.subi %74, %75 : vector<10x32x128xi32>
    %c0_i32 = arith.constant 0 : i32
    %77 = vector.broadcast %c0_i32 : i32 to vector<10x32x128xi32>
    %78 = arith.cmpi sge, %73, %77 : vector<10x32x128xi32>
    %c16_i32 = arith.constant 16 : i32
    %79 = vector.broadcast %c16_i32 : i32 to vector<10x32x128xi32>
    %80 = arith.cmpi slt, %73, %79 : vector<10x32x128xi32>
    %81 = arith.andi %78, %80 : vector<10x32x128xi1>
    %c0_i32_73 = arith.constant 0 : i32
    %82 = vector.broadcast %c0_i32_73 : i32 to vector<10x32x128xi32>
    %83 = arith.cmpi sge, %76, %82 : vector<10x32x128xi32>
    %84 = arith.andi %81, %83 : vector<10x32x128xi1>
    %c16_i32_74 = arith.constant 16 : i32
    %85 = vector.broadcast %c16_i32_74 : i32 to vector<10x32x128xi32>
    %86 = arith.cmpi slt, %76, %85 : vector<10x32x128xi32>
    %87 = arith.andi %84, %86 : vector<10x32x128xi1>
    %cst_75 = arith.constant 0.000000e+00 : f32
    %88 = vector.broadcast %cst_75 : f32 to vector<10x32x128xf32>
    %89 = arith.select %87, %69, %88 : vector<10x32x128xi1>, vector<10x32x128xf32>
    %90 = arith.truncf %89 : vector<10x32x128xf32> to vector<10x32x128xbf16>
    %91 = vector.shape_cast %90 : vector<10x32x128xbf16> to vector<320x128xbf16>
    %c0_76 = arith.constant 0 : index
    %c0_77 = arith.constant 0 : index
    %92 = vector.load %arg12[%c0_76, %c0_77] : memref<328x128xbf16, #tpu.memory_space<vmem>>, vector<320x128xbf16>
    tpu.vector_store %arg12[%c0_76, %c0_77], %91 {strides = array<i32>} : memref<328x128xbf16, #tpu.memory_space<vmem>>, vector<320x128xbf16>,
    %cst_78 = arith.constant 0.000000e+00 : bf16
    %93 = vector.broadcast %cst_78 : bf16 to vector<8x128xbf16>
    %c320 = arith.constant 320 : index
    %c0_79 = arith.constant 0 : index
    %94 = vector.load %arg12[%c320, %c0_79] : memref<328x128xbf16, #tpu.memory_space<vmem>>, vector<8x128xbf16>
    tpu.vector_store %arg12[%c320, %c0_79], %93 {strides = array<i32>} : memref<328x128xbf16, #tpu.memory_space<vmem>>, vector<8x128xbf16>,
    %cst_80 = arith.constant 0.000000e+00 : f32
    %95 = vector.broadcast %cst_80 : f32 to vector<256x128xf32>
    %c0_81 = arith.constant 0 : index
    %c0_82 = arith.constant 0 : index
    %96 = vector.load %arg12[%c0_81, %c0_82] : memref<328x128xbf16, #tpu.memory_space<vmem>>, vector<256x128xbf16>
    %c0_83 = arith.constant 0 : index
    %c0_84 = arith.constant 0 : index
    %c0_85 = arith.constant 0 : index
    %c0_86 = arith.constant 0 : index
    %97 = vector.load %arg5[%c0_83, %c0_84, %c0_85, %c0_86] : memref<3x3x128x128xbf16, #tpu.memory_space<vmem>>, vector<1x1x128x128xbf16>
    %98 = vector.shape_cast %97 : vector<1x1x128x128xbf16> to vector<128x128xbf16>
    %cst_87 = arith.constant dense<0.000000e+00> : vector<256x128xf32>
    %99 = tpu.matmul %96, %98, %cst_87 {dimension_numbers = #tpu.dot_dimension_numbers<[1], [0], [0], [1], [0, 0, 1, 1], [], []>} : vector<256x128xbf16>, vector<128x128xbf16>, vector<256x128xf32> -> vector<256x128xf32>
    %100 = arith.addf %95, %99 : vector<256x128xf32>
    %c1_88 = arith.constant 1 : index
    %c0_89 = arith.constant 0 : index
    %101 = vector.load %arg12[%c1_88, %c0_89] : memref<328x128xbf16, #tpu.memory_space<vmem>>, vector<256x128xbf16>
    %c0_90 = arith.constant 0 : index
    %c1_91 = arith.constant 1 : index
    %c0_92 = arith.constant 0 : index
    %c0_93 = arith.constant 0 : index
    %102 = vector.load %arg5[%c0_90, %c1_91, %c0_92, %c0_93] : memref<3x3x128x128xbf16, #tpu.memory_space<vmem>>, vector<1x1x128x128xbf16>
    %103 = vector.shape_cast %102 : vector<1x1x128x128xbf16> to vector<128x128xbf16>
    %cst_94 = arith.constant dense<0.000000e+00> : vector<256x128xf32>
    %104 = tpu.matmul %101, %103, %cst_94 {dimension_numbers = #tpu.dot_dimension_numbers<[1], [0], [0], [1], [0, 0, 1, 1], [], []>} : vector<256x128xbf16>, vector<128x128xbf16>, vector<256x128xf32> -> vector<256x128xf32>
    %105 = arith.addf %100, %104 : vector<256x128xf32>
    %c2_95 = arith.constant 2 : index
    %c0_96 = arith.constant 0 : index
    %106 = vector.load %arg12[%c2_95, %c0_96] : memref<328x128xbf16, #tpu.memory_space<vmem>>, vector<256x128xbf16>
    %c0_97 = arith.constant 0 : index
    %c2_98 = arith.constant 2 : index
    %c0_99 = arith.constant 0 : index
    %c0_100 = arith.constant 0 : index
    %107 = vector.load %arg5[%c0_97, %c2_98, %c0_99, %c0_100] : memref<3x3x128x128xbf16, #tpu.memory_space<vmem>>, vector<1x1x128x128xbf16>
    %108 = vector.shape_cast %107 : vector<1x1x128x128xbf16> to vector<128x128xbf16>
    %cst_101 = arith.constant dense<0.000000e+00> : vector<256x128xf32>
    %109 = tpu.matmul %106, %108, %cst_101 {dimension_numbers = #tpu.dot_dimension_numbers<[1], [0], [0], [1], [0, 0, 1, 1], [], []>} : vector<256x128xbf16>, vector<128x128xbf16>, vector<256x128xf32> -> vector<256x128xf32>
    %110 = arith.addf %105, %109 : vector<256x128xf32>
    %c32_102 = arith.constant 32 : index
    %c0_103 = arith.constant 0 : index
    %111 = vector.load %arg12[%c32_102, %c0_103] : memref<328x128xbf16, #tpu.memory_space<vmem>>, vector<256x128xbf16>
    %c1_104 = arith.constant 1 : index
    %c0_105 = arith.constant 0 : index
    %c0_106 = arith.constant 0 : index
    %c0_107 = arith.constant 0 : index
    %112 = vector.load %arg5[%c1_104, %c0_105, %c0_106, %c0_107] : memref<3x3x128x128xbf16, #tpu.memory_space<vmem>>, vector<1x1x128x128xbf16>
    %113 = vector.shape_cast %112 : vector<1x1x128x128xbf16> to vector<128x128xbf16>
    %cst_108 = arith.constant dense<0.000000e+00> : vector<256x128xf32>
    %114 = tpu.matmul %111, %113, %cst_108 {dimension_numbers = #tpu.dot_dimension_numbers<[1], [0], [0], [1], [0, 0, 1, 1], [], []>} : vector<256x128xbf16>, vector<128x128xbf16>, vector<256x128xf32> -> vector<256x128xf32>
    %115 = arith.addf %110, %114 : vector<256x128xf32>
    %c33_109 = arith.constant 33 : index
    %c0_110 = arith.constant 0 : index
    %116 = vector.load %arg12[%c33_109, %c0_110] : memref<328x128xbf16, #tpu.memory_space<vmem>>, vector<256x128xbf16>
    %c1_111 = arith.constant 1 : index
    %c1_112 = arith.constant 1 : index
    %c0_113 = arith.constant 0 : index
    %c0_114 = arith.constant 0 : index
    %117 = vector.load %arg5[%c1_111, %c1_112, %c0_113, %c0_114] : memref<3x3x128x128xbf16, #tpu.memory_space<vmem>>, vector<1x1x128x128xbf16>
    %118 = vector.shape_cast %117 : vector<1x1x128x128xbf16> to vector<128x128xbf16>
    %cst_115 = arith.constant dense<0.000000e+00> : vector<256x128xf32>
    %119 = tpu.matmul %116, %118, %cst_115 {dimension_numbers = #tpu.dot_dimension_numbers<[1], [0], [0], [1], [0, 0, 1, 1], [], []>} : vector<256x128xbf16>, vector<128x128xbf16>, vector<256x128xf32> -> vector<256x128xf32>
    %120 = arith.addf %115, %119 : vector<256x128xf32>
    %c34_116 = arith.constant 34 : index
    %c0_117 = arith.constant 0 : index
    %121 = vector.load %arg12[%c34_116, %c0_117] : memref<328x128xbf16, #tpu.memory_space<vmem>>, vector<256x128xbf16>
    %c1_118 = arith.constant 1 : index
    %c2_119 = arith.constant 2 : index
    %c0_120 = arith.constant 0 : index
    %c0_121 = arith.constant 0 : index
    %122 = vector.load %arg5[%c1_118, %c2_119, %c0_120, %c0_121] : memref<3x3x128x128xbf16, #tpu.memory_space<vmem>>, vector<1x1x128x128xbf16>
    %123 = vector.shape_cast %122 : vector<1x1x128x128xbf16> to vector<128x128xbf16>
    %cst_122 = arith.constant dense<0.000000e+00> : vector<256x128xf32>
    %124 = tpu.matmul %121, %123, %cst_122 {dimension_numbers = #tpu.dot_dimension_numbers<[1], [0], [0], [1], [0, 0, 1, 1], [], []>} : vector<256x128xbf16>, vector<128x128xbf16>, vector<256x128xf32> -> vector<256x128xf32>
    %125 = arith.addf %120, %124 : vector<256x128xf32>
    %c64_123 = arith.constant 64 : index
    %c0_124 = arith.constant 0 : index
    %126 = vector.load %arg12[%c64_123, %c0_124] : memref<328x128xbf16, #tpu.memory_space<vmem>>, vector<256x128xbf16>
    %c2_125 = arith.constant 2 : index
    %c0_126 = arith.constant 0 : index
    %c0_127 = arith.constant 0 : index
    %c0_128 = arith.constant 0 : index
    %127 = vector.load %arg5[%c2_125, %c0_126, %c0_127, %c0_128] : memref<3x3x128x128xbf16, #tpu.memory_space<vmem>>, vector<1x1x128x128xbf16>
    %128 = vector.shape_cast %127 : vector<1x1x128x128xbf16> to vector<128x128xbf16>
    %cst_129 = arith.constant dense<0.000000e+00> : vector<256x128xf32>
    %129 = tpu.matmul %126, %128, %cst_129 {dimension_numbers = #tpu.dot_dimension_numbers<[1], [0], [0], [1], [0, 0, 1, 1], [], []>} : vector<256x128xbf16>, vector<128x128xbf16>, vector<256x128xf32> -> vector<256x128xf32>
    %130 = arith.addf %125, %129 : vector<256x128xf32>
    %c65_130 = arith.constant 65 : index
    %c0_131 = arith.constant 0 : index
    %131 = vector.load %arg12[%c65_130, %c0_131] : memref<328x128xbf16, #tpu.memory_space<vmem>>, vector<256x128xbf16>
    %c2_132 = arith.constant 2 : index
    %c1_133 = arith.constant 1 : index
    %c0_134 = arith.constant 0 : index
    %c0_135 = arith.constant 0 : index
    %132 = vector.load %arg5[%c2_132, %c1_133, %c0_134, %c0_135] : memref<3x3x128x128xbf16, #tpu.memory_space<vmem>>, vector<1x1x128x128xbf16>
    %133 = vector.shape_cast %132 : vector<1x1x128x128xbf16> to vector<128x128xbf16>
    %cst_136 = arith.constant dense<0.000000e+00> : vector<256x128xf32>
    %134 = tpu.matmul %131, %133, %cst_136 {dimension_numbers = #tpu.dot_dimension_numbers<[1], [0], [0], [1], [0, 0, 1, 1], [], []>} : vector<256x128xbf16>, vector<128x128xbf16>, vector<256x128xf32> -> vector<256x128xf32>
    %135 = arith.addf %130, %134 : vector<256x128xf32>
    %c66_137 = arith.constant 66 : index
    %c0_138 = arith.constant 0 : index
    %136 = vector.load %arg12[%c66_137, %c0_138] : memref<328x128xbf16, #tpu.memory_space<vmem>>, vector<256x128xbf16>
    %c2_139 = arith.constant 2 : index
    %c2_140 = arith.constant 2 : index
    %c0_141 = arith.constant 0 : index
    %c0_142 = arith.constant 0 : index
    %137 = vector.load %arg5[%c2_139, %c2_140, %c0_141, %c0_142] : memref<3x3x128x128xbf16, #tpu.memory_space<vmem>>, vector<1x1x128x128xbf16>
    %138 = vector.shape_cast %137 : vector<1x1x128x128xbf16> to vector<128x128xbf16>
    %cst_143 = arith.constant dense<0.000000e+00> : vector<256x128xf32>
    %139 = tpu.matmul %136, %138, %cst_143 {dimension_numbers = #tpu.dot_dimension_numbers<[1], [0], [0], [1], [0, 0, 1, 1], [], []>} : vector<256x128xbf16>, vector<128x128xbf16>, vector<256x128xf32> -> vector<256x128xf32>
    %140 = arith.addf %135, %139 : vector<256x128xf32>
    %c0_144 = arith.constant 0 : index
    %c0_145 = arith.constant 0 : index
    %141 = vector.load %arg8[%c0_144, %c0_145] : memref<1x128xf32, #tpu.memory_space<vmem>>, vector<1x128xf32>
    %142 = vector.shape_cast %141 : vector<1x128xf32> to vector<128xf32>
    %143 = vector.shape_cast %142 : vector<128xf32> to vector<1x128xf32>
    %144 = vector.broadcast %143 : vector<1x128xf32> to vector<256x128xf32>
    %145 = arith.mulf %140, %144 : vector<256x128xf32>
    %c0_146 = arith.constant 0 : index
    %c0_147 = arith.constant 0 : index
    %146 = vector.load %arg9[%c0_146, %c0_147] : memref<1x128xf32, #tpu.memory_space<vmem>>, vector<1x128xf32>
    %147 = vector.shape_cast %146 : vector<1x128xf32> to vector<128xf32>
    %148 = vector.shape_cast %147 : vector<128xf32> to vector<1x128xf32>
    %149 = vector.broadcast %148 : vector<1x128xf32> to vector<256x128xf32>
    %150 = arith.addf %145, %149 : vector<256x128xf32>
    %cst_148 = arith.constant 0.000000e+00 : f32
    %151 = vector.broadcast %cst_148 : f32 to vector<256x128xf32>
    %152 = arith.maximumf %150, %151 : vector<256x128xf32>
    %153 = vector.shape_cast %152 : vector<256x128xf32> to vector<8x32x128xf32>
    %154 = vector.extract_strided_slice %153 {offsets = [0, 0, 0], sizes = [8, 16, 128], strides = [1, 1, 1]} : vector<8x32x128xf32> to vector<8x16x128xf32>
    %c0_149 = arith.constant 0 : index
    %c0_150 = arith.constant 0 : index
    %c0_151 = arith.constant 0 : index
    %c0_152 = arith.constant 0 : index
    %155 = vector.load %arg10[%c0_149, %c0_150, %c0_151, %c0_152] : memref<1x8x16x128xf32, #tpu.memory_space<vmem>>, vector<1x8x16x128xf32>
    %156 = vector.shape_cast %155 : vector<1x8x16x128xf32> to vector<8x16x128xf32>
    %157 = vector.shape_cast %154 : vector<8x16x128xf32> to vector<1x8x16x128xf32>
    tpu.vector_store %arg10[%c0_149, %c0_150, %c0_151, %c0_152], %157 {strides = array<i32>} : memref<1x8x16x128xf32, #tpu.memory_space<vmem>>, vector<1x8x16x128xf32>,
    return
  }
  func.func @transform_0(%arg0: i32, %arg1: i32) -> (i32, i32, i32, i32) {
    %c0_i32 = arith.constant 0 : i32
    %c0_i32_0 = arith.constant 0 : i32
    %c0_i32_1 = arith.constant 0 : i32
    return %arg0, %arg1, %c0_i32, %c0_i32_0 : i32, i32, i32, i32
  }
  func.func @transform_1(%arg0: i32, %arg1: i32) -> (i32, i32, i32, i32) {
    %c1_i32 = arith.constant 1 : i32
    %0 = arith.addi %arg1, %c1_i32 : i32
    %c2_i32 = arith.constant 2 : i32
    %1 = arith.muli %0, %c2_i32 : i32
    %c0_i32 = arith.constant 0 : i32
    %c0_i32_0 = arith.constant 0 : i32
    %c0_i32_1 = arith.constant 0 : i32
    return %arg0, %1, %c0_i32, %c0_i32_0 : i32, i32, i32, i32
  }
  func.func @transform_2(%arg0: i32, %arg1: i32) -> (i32, i32, i32, i32) {
    %c0_i32 = arith.constant 0 : i32
    %c0_i32_0 = arith.constant 0 : i32
    %c0_i32_1 = arith.constant 0 : i32
    %c0_i32_2 = arith.constant 0 : i32
    %c0_i32_3 = arith.constant 0 : i32
    return %c0_i32, %c0_i32_0, %c0_i32_1, %c0_i32_2 : i32, i32, i32, i32
  }
  func.func @transform_3(%arg0: i32, %arg1: i32) -> (i32, i32, i32, i32) {
    %c0_i32 = arith.constant 0 : i32
    %c0_i32_0 = arith.constant 0 : i32
    %c0_i32_1 = arith.constant 0 : i32
    %c0_i32_2 = arith.constant 0 : i32
    %c0_i32_3 = arith.constant 0 : i32
    return %c0_i32, %c0_i32_0, %c0_i32_1, %c0_i32_2 : i32, i32, i32, i32
  }
  func.func @transform_4(%arg0: i32, %arg1: i32) -> (i32, i32) {
    %c0_i32 = arith.constant 0 : i32
    %c0_i32_0 = arith.constant 0 : i32
    %c0_i32_1 = arith.constant 0 : i32
    return %c0_i32, %c0_i32_0 : i32, i32
  }
  func.func @transform_5(%arg0: i32, %arg1: i32) -> (i32, i32) {
    %c0_i32 = arith.constant 0 : i32
    %c0_i32_0 = arith.constant 0 : i32
    %c0_i32_1 = arith.constant 0 : i32
    return %c0_i32, %c0_i32_0 : i32, i32
  }
  func.func @transform_6(%arg0: i32, %arg1: i32) -> (i32, i32) {
    %c0_i32 = arith.constant 0 : i32
    %c0_i32_0 = arith.constant 0 : i32
    %c0_i32_1 = arith.constant 0 : i32
    return %c0_i32, %c0_i32_0 : i32, i32
  }
  func.func @transform_7(%arg0: i32, %arg1: i32) -> (i32, i32) {
    %c0_i32 = arith.constant 0 : i32
    %c0_i32_0 = arith.constant 0 : i32
    %c0_i32_1 = arith.constant 0 : i32
    return %c0_i32, %c0_i32_0 : i32, i32
  }
  func.func @transform_8(%arg0: i32, %arg1: i32) -> (i32, i32, i32, i32) {
    %c0_i32 = arith.constant 0 : i32
    %c0_i32_0 = arith.constant 0 : i32
    %c0_i32_1 = arith.constant 0 : i32
    return %arg0, %arg1, %c0_i32, %c0_i32_0 : i32, i32, i32, i32
  }
}

</mosaic_0001>

<llo_original>
// kernel: up_forward.1
$region0: #{up_forward.1}
  #allocation0 [shape = 'u32[]', space=smem, size = 0x4, offset = 0x4, fixed_abs, tag = 'smem constant byte address 0x4 - core index']
  #allocation1 [shape = 'u32[144,128]{1,0:T(1,128)}', space=vmem, size = 0x12000, scoped, tag = 'internal scratch']
  #allocation2 [shape = 'bf16[392,128]{1,0:T(8,128)(2,1)}', space=vmem, size = 0x18800, scoped, tag = 'scratch operand']
  #allocation3 [shape = 'bf16[328,128]{1,0:T(8,128)(2,1)}', space=vmem, size = 0x14800, scoped, tag = 'scratch operand']
  %s0 = inlined_call_operand.vmem [shape: bf16[2,20,32,128], index: 0, kind: input, shape index: {}, may-alias: {0,1}]
  %s1 = inlined_call_operand.vmem [shape: bf16[2,20,32,128], index: 1, kind: input, shape index: {}, may-alias: {0,1}]
  %s2 = inlined_call_operand.vmem [shape: bf16[3,3,128,128], index: 2, kind: input, shape index: {}]
  %s3 = inlined_call_operand.vmem [shape: bf16[3,3,128,128], index: 3, kind: input, shape index: {}]
  %s4 = inlined_call_operand.vmem [shape: f32[1,128], index: 4, kind: input, shape index: {}]
  %s5 = inlined_call_operand.vmem [shape: f32[1,128], index: 5, kind: input, shape index: {}]
  %s6 = inlined_call_operand.vmem [shape: f32[1,128], index: 6, kind: input, shape index: {}]
  %s7 = inlined_call_operand.vmem [shape: f32[1,128], index: 7, kind: input, shape index: {}]
  %s8 = inlined_call_operand.vmem [shape: f32[2,16,16,128], index: 8, kind: output, shape index: {}]
  %s9 = sld [smem:[#allocation0]]
  $region65: #{up_forward.1} parent=0
    _
  %s11 = ssub.s32 1, %s9
  %s12 = scalar_select 0, %s11, %s9
  loop: start=0, step=1, limit=6
  $region2: #{up_forward.1} parent=0 // loop_pre_header
    _
  $region3: #{up_forward.1} parent=0 // loop_header
    %s14 = sphi 0, %s18
    %p15 = scmp.ge.s32.totalorder %s14, 6
    %s21 = sphi 0, %s33
    %s22 = sphi 0, %s29
    %s23 = sphi 0, %s21
    %s24 = sphi 0, %s22
    %s25 = sphi 0, %s23
    %s26 = sphi 0, %s24
    %s38 = sphi 0, %s40
    %s41 = sphi 0, %s38
    %s42 = sphi 0, %s41
    %s58 = sphi 0, %s42
    %s70 = sphi 0, %s72
    %s73 = sphi 0, %s70
    %s74 = sphi 0, %s73
    %s90 = sphi 0, %s74
    %s94 = sphi 0, %s94
    %s96 = sphi 0, %s94
    %s97 = sphi 0, %s96
    %s111 = sphi 0, %s97
    %s115 = sphi 0, %s115
    %s117 = sphi 0, %s115
    %s118 = sphi 0, %s117
    %s132 = sphi 0, %s118
    %s136 = sphi 0, %s136
    %s138 = sphi 0, %s136
    %s139 = sphi 0, %s138
    %s153 = sphi 0, %s139
    %s157 = sphi 0, %s157
    %s159 = sphi 0, %s157
    %s160 = sphi 0, %s159
    %s174 = sphi 0, %s160
    %s178 = sphi 0, %s178
    %s180 = sphi 0, %s178
    %s181 = sphi 0, %s180
    %s195 = sphi 0, %s181
    %s199 = sphi 0, %s199
    %s201 = sphi 0, %s199
    %s202 = sphi 0, %s201
    %s216 = sphi 0, %s202
    %s224 = sphi 0, %s226
    %s227 = sphi 0, %s224
    %s228 = sphi 0, %s227
    %s244 = sphi 0, %s228
  $region4: #{up_forward.1} parent=0 // loop_header_branch
    %17 = sbr.rel (%p15) target = $region8
  $region5: #{up_forward.1} parent=0 // loop_body
    %s19 = ssub.s32 %s14, 1
    %s20 = ssub.s32 %s14, 2
    %s27 = sadd.s32 1, %s22
    %p28 = scmp.ge.s32.totalorder %s27, 2
    %s29 = scalar_select %p28, 0, %s27
    %s30 = sadd.s32 1, %s21
    %s31 = scalar_select %p28, %s30, %s21
    %p32 = scmp.ge.s32.totalorder %s31, 2
    %s33 = scalar_select %p32, 0, %s31
    %s34 = ssub.s32 %s21, %s33
    %s35 = ssub.s32 %s22, %s29
    %s36 = sor.u32 %s34, %s35
    %p37 = scmp.eq.s32.totalorder %s36, 0
    %s39 = sadd.s32 %s38, 1
    %s40 = scalar_select %p37, %s38, %s39
    %p43 = pneg %p37
    %p44 = scmp.eq.s32.totalorder %s14, 3
    %p45 = por %p43, %p44
    %p46 = scmp.ne.s32.totalorder %s38, %s41
    %p47 = scmp.eq.s32.totalorder %s14, 0
    %p48 = por %p46, %p47
    %p49 = scmp.ne.s32.totalorder %s38, %s41
    %p50 = scmp.eq.s32.totalorder %s19, 3
    %p51 = por %p49, %p50
    %p52 = scmp.ne.s32.totalorder %s41, %s42
    %p53 = scmp.eq.s32.totalorder %s19, 0
    %p54 = por %p52, %p53
    %p55 = scmp.ne.s32.totalorder %s41, %s42
    %p56 = scmp.eq.s32.totalorder %s20, 3
    %p57 = por %p55, %p56
    %p59 = scmp.ne.s32.totalorder %s42, %s58
    %p60 = scmp.eq.s32.totalorder %s20, 0
    %p61 = por %p59, %p60
    %s62 = sadd.s32 %s22, 1
    %s63 = smul.u32 %s62, 2
    %s64 = sadd.s32 %s29, 1
    %s65 = smul.u32 %s64, 2
    %s66 = ssub.s32 %s21, %s33
    %s67 = ssub.s32 %s63, %s65
    %s68 = sor.u32 %s66, %s67
    %p69 = scmp.eq.s32.totalorder %s68, 0
    %s71 = sadd.s32 %s70, 1
    %s72 = scalar_select %p69, %s70, %s71
    %p75 = pneg %p69
    %p76 = scmp.eq.s32.totalorder %s14, 3
    %p77 = por %p75, %p76
    %p78 = scmp.ne.s32.totalorder %s70, %s73
    %p79 = scmp.eq.s32.totalorder %s14, 0
    %p80 = por %p78, %p79
    %p81 = scmp.ne.s32.totalorder %s70, %s73
    %p82 = scmp.eq.s32.totalorder %s19, 3
    %p83 = por %p81, %p82
    %p84 = scmp.ne.s32.totalorder %s73, %s74
    %p85 = scmp.eq.s32.totalorder %s19, 0
    %p86 = por %p84, %p85
    %p87 = scmp.ne.s32.totalorder %s73, %s74
    %p88 = scmp.eq.s32.totalorder %s20, 3
    %p89 = por %p87, %p88
    %p91 = scmp.ne.s32.totalorder %s74, %s90
    %p92 = scmp.eq.s32.totalorder %s20, 0
    %p93 = por %p91, %p92
    %s95 = sadd.s32 %s94, 1
    %p98 = scmp.eq.s32.totalorder %s14, 3
    %p99 = scmp.ne.s32.totalorder %s94, %s96
    %p100 = scmp.eq.s32.totalorder %s14, 0
    %p101 = por %p99, %p100
    %p102 = scmp.ne.s32.totalorder %s94, %s96
    %p103 = scmp.eq.s32.totalorder %s19, 3
    %p104 = por %p102, %p103
    %p105 = scmp.ne.s32.totalorder %s96, %s97
    %p106 = scmp.eq.s32.totalorder %s19, 0
    %p107 = por %p105, %p106
    %p108 = scmp.ne.s32.totalorder %s96, %s97
    %p109 = scmp.eq.s32.totalorder %s20, 3
    %p110 = por %p108, %p109
    %p112 = scmp.ne.s32.totalorder %s97, %s111
    %p113 = scmp.eq.s32.totalorder %s20, 0
    %p114 = por %p112, %p113
    %s116 = sadd.s32 %s115, 1
    %p119 = scmp.eq.s32.totalorder %s14, 3
    %p120 = scmp.ne.s32.totalorder %s115, %s117
    %p121 = scmp.eq.s32.totalorder %s14, 0
    %p122 = por %p120, %p121
    %p123 = scmp.ne.s32.totalorder %s115, %s117
    %p124 = scmp.eq.s32.totalorder %s19, 3
    %p125 = por %p123, %p124
    %p126 = scmp.ne.s32.totalorder %s117, %s118
    %p127 = scmp.eq.s32.totalorder %s19, 0
    %p128 = por %p126, %p127
    %p129 = scmp.ne.s32.totalorder %s117, %s118
    %p130 = scmp.eq.s32.totalorder %s20, 3
    %p131 = por %p129, %p130
    %p133 = scmp.ne.s32.totalorder %s118, %s132
    %p134 = scmp.eq.s32.totalorder %s20, 0
    %p135 = por %p133, %p134
    %s137 = sadd.s32 %s136, 1
    %p140 = scmp.eq.s32.totalorder %s14, 3
    %p141 = scmp.ne.s32.totalorder %s136, %s138
    %p142 = scmp.eq.s32.totalorder %s14, 0
    %p143 = por %p141, %p142
    %p144 = scmp.ne.s32.totalorder %s136, %s138
    %p145 = scmp.eq.s32.totalorder %s19, 3
    %p146 = por %p144, %p145
    %p147 = scmp.ne.s32.totalorder %s138, %s139
    %p148 = scmp.eq.s32.totalorder %s19, 0
    %p149 = por %p147, %p148
    %p150 = scmp.ne.s32.totalorder %s138, %s139
    %p151 = scmp.eq.s32.totalorder %s20, 3
    %p152 = por %p150, %p151
    %p154 = scmp.ne.s32.totalorder %s139, %s153
    %p155 = scmp.eq.s32.totalorder %s20, 0
    %p156 = por %p154, %p155
    %s158 = sadd.s32 %s157, 1
    %p161 = scmp.eq.s32.totalorder %s14, 3
    %p162 = scmp.ne.s32.totalorder %s157, %s159
    %p163 = scmp.eq.s32.totalorder %s14, 0
    %p164 = por %p162, %p163
    %p165 = scmp.ne.s32.totalorder %s157, %s159
    %p166 = scmp.eq.s32.totalorder %s19, 3
    %p167 = por %p165, %p166
    %p168 = scmp.ne.s32.totalorder %s159, %s160
    %p169 = scmp.eq.s32.totalorder %s19, 0
    %p170 = por %p168, %p169
    %p171 = scmp.ne.s32.totalorder %s159, %s160
    %p172 = scmp.eq.s32.totalorder %s20, 3
    %p173 = por %p171, %p172
    %p175 = scmp.ne.s32.totalorder %s160, %s174
    %p176 = scmp.eq.s32.totalorder %s20, 0
    %p177 = por %p175, %p176
    %s179 = sadd.s32 %s178, 1
    %p182 = scmp.eq.s32.totalorder %s14, 3
    %p183 = scmp.ne.s32.totalorder %s178, %s180
    %p184 = scmp.eq.s32.totalorder %s14, 0
    %p185 = por %p183, %p184
    %p186 = scmp.ne.s32.totalorder %s178, %s180
    %p187 = scmp.eq.s32.totalorder %s19, 3
    %p188 = por %p186, %p187
    %p189 = scmp.ne.s32.totalorder %s180, %s181
    %p190 = scmp.eq.s32.totalorder %s19, 0
    %p191 = por %p189, %p190
    %p192 = scmp.ne.s32.totalorder %s180, %s181
    %p193 = scmp.eq.s32.totalorder %s20, 3
    %p194 = por %p192, %p193
    %p196 = scmp.ne.s32.totalorder %s181, %s195
    %p197 = scmp.eq.s32.totalorder %s20, 0
    %p198 = por %p196, %p197
    %s200 = sadd.s32 %s199, 1
    %p203 = scmp.eq.s32.totalorder %s14, 3
    %p204 = scmp.ne.s32.totalorder %s199, %s201
    %p205 = scmp.eq.s32.totalorder %s14, 0
    %p206 = por %p204, %p205
    %p207 = scmp.ne.s32.totalorder %s199, %s201
    %p208 = scmp.eq.s32.totalorder %s19, 3
    %p209 = por %p207, %p208
    %p210 = scmp.ne.s32.totalorder %s201, %s202
    %p211 = scmp.eq.s32.totalorder %s19, 0
    %p212 = por %p210, %p211
    %p213 = scmp.ne.s32.totalorder %s201, %s202
    %p214 = scmp.eq.s32.totalorder %s20, 3
    %p215 = por %p213, %p214
    %p217 = scmp.ne.s32.totalorder %s202, %s216
    %p218 = scmp.eq.s32.totalorder %s20, 0
    %p219 = por %p217, %p218
    %s220 = ssub.s32 %s21, %s33
    %s221 = ssub.s32 %s22, %s29
    %s222 = sor.u32 %s220, %s221
    %p223 = scmp.eq.s32.totalorder %s222, 0
    %s225 = sadd.s32 %s224, 1
    %s226 = scalar_select %p223, %s224, %s225
    %p229 = pneg %p223
    %p230 = scmp.eq.s32.totalorder %s14, 3
    %p231 = por %p229, %p230
    %p232 = scmp.ne.s32.totalorder %s224, %s227
    %p233 = scmp.eq.s32.totalorder %s14, 0
    %p234 = por %p232, %p233
    %p235 = scmp.ne.s32.totalorder %s224, %s227
    %p236 = scmp.eq.s32.totalorder %s19, 3
    %p237 = por %p235, %p236
    %p238 = scmp.ne.s32.totalorder %s227, %s228
    %p239 = scmp.eq.s32.totalorder %s19, 0
    %p240 = por %p238, %p239
    %p241 = scmp.ne.s32.totalorder %s227, %s228
    %p242 = scmp.eq.s32.totalorder %s20, 3
    %p243 = por %p241, %p242
    %p245 = scmp.ne.s32.totalorder %s228, %s244
    %p246 = scmp.eq.s32.totalorder %s20, 0
    %p247 = por %p245, %p246
    %p248 = scmp.le.s32.totalorder 1, %s14
    %p249 = scmp.lt.s32.totalorder %s14, 5
    %p250 = pnand %p248, %p249
    %p251 = pneg %p250
    // Predicated region
    $region9: #{up_forward.1} parent=5 // pred_check
      _
    $region10: #{up_forward.1} parent=5 // pred_check_branch
      %253 = sbr.rel (%p250) target = $region12
    $region11: #{up_forward.1} parent=5 // pred_region
      %s254 = ssub.s32 %s14, 1
      // Predicated region
      $region13: #{up_forward.1} parent=11 // pred_check
        %p255 = pneg %p107
      $region14: #{up_forward.1} parent=11 // pred_check_branch
        %257 = sbr.rel (%p255) target = $region16
      $region15: #{up_forward.1} parent=11 // pred_region
        _
      $region16: #{up_forward.1} parent=11 // pred_fallthru
        _
      // Predicated region
      $region17: #{up_forward.1} parent=11 // pred_check
        %p258 = pneg %p128
      $region18: #{up_forward.1} parent=11 // pred_check_branch
        %260 = sbr.rel (%p258) target = $region20
      $region19: #{up_forward.1} parent=11 // pred_region
        _
      $region20: #{up_forward.1} parent=11 // pred_fallthru
        _
      // Predicated region
      $region21: #{up_forward.1} parent=11 // pred_check
        %p261 = pneg %p149
      $region22: #{up_forward.1} parent=11 // pred_check_branch
        %263 = sbr.rel (%p261) target = $region24
      $region23: #{up_forward.1} parent=11 // pred_region
        _
      $region24: #{up_forward.1} parent=11 // pred_fallthru
        _
      // Predicated region
      $region25: #{up_forward.1} parent=11 // pred_check
        %p264 = pneg %p170
      $region26: #{up_forward.1} parent=11 // pred_check_branch
        %266 = sbr.rel (%p264) target = $region28
      $region27: #{up_forward.1} parent=11 // pred_region
        _
      $region28: #{up_forward.1} parent=11 // pred_fallthru
        _
      // Predicated region
      $region29: #{up_forward.1} parent=11 // pred_check
        %p267 = pneg %p191
      $region30: #{up_forward.1} parent=11 // pred_check_branch
        %269 = sbr.rel (%p267) target = $region32
      $region31: #{up_forward.1} parent=11 // pred_region
        _
      $region32: #{up_forward.1} parent=11 // pred_fallthru
        _
      // Predicated region
      $region33: #{up_forward.1} parent=11 // pred_check
        %p270 = pneg %p212
      $region34: #{up_forward.1} parent=11 // pred_check_branch
        %272 = sbr.rel (%p270) target = $region36
      $region35: #{up_forward.1} parent=11 // pred_region
        _
      $region36: #{up_forward.1} parent=11 // pred_fallthru
        _
    $region12: #{up_forward.1} parent=5 // pred_fallthru
      _
    %p273 = scmp.lt.s32.totalorder %s14, 4
    // Predicated region
    $region37: #{up_forward.1} parent=5 // pred_check
      %p274 = pneg %p273
    $region38: #{up_forward.1} parent=5 // pred_check_branch
      %276 = sbr.rel (%p274) target = $region40
    $region39: #{up_forward.1} parent=5 // pred_region
      // Predicated region
      $region41: #{up_forward.1} parent=39 // pred_check
        %p277 = pneg %p48
      $region42: #{up_forward.1} parent=39 // pred_check_branch
        %279 = sbr.rel (%p277) target = $region44
      $region43: #{up_forward.1} parent=39 // pred_region
        %s280 = smul.u32 8, %s22
        %s281 = ssub.s32 20, %s280
        %p282 = scmp.lt.s32.totalorder %s281, 8
        %s283 = scalar_select %p282, %s281, 8
        %s284 = smul.u32 64, %s283
        %s285 = smul.u32 %s284, 4
        %p286 = scmp.lt.s32.totalorder %s21, 1
        %s287 = scalar_select %p286, %s21, 1
        %p288 = scmp.lt.s32.totalorder %s280, 19
        %s289 = scalar_select %p288, %s280, 19
        %s290 = smul.addr %s289, 4
        %s291 = smul.addr %s287, 80
        %s292 = sadd.s32 %s290, %s291
        %s293 = smul.addr %s292, 4
        %s294 = scalar_lea.vmem %s0, %s293
        %s295 = smul.u32 8, %s22
        %s296 = ssub.s32 20, %s295
        %p297 = scmp.lt.s32.totalorder %s296, 8
        %s298 = scalar_select %p297, %s296, 8
        %s299 = smul.u32 64, %s298
        %s300 = smul.u32 %s299, 4
      $region44: #{up_forward.1} parent=39 // pred_fallthru
        _
      // Predicated region
      $region45: #{up_forward.1} parent=39 // pred_check
        %p301 = pneg %p80
      $region46: #{up_forward.1} parent=39 // pred_check_branch
        %303 = sbr.rel (%p301) target = $region48
      $region47: #{up_forward.1} parent=39 // pred_region
        %s304 = sadd.s32 %s22, 1
        %s305 = smul.u32 %s304, 2
        %s306 = smul.u32 4, %s305
        %p307 = scmp.lt.s32.totalorder %s21, 1
        %s308 = scalar_select %p307, %s21, 1
        %p309 = scmp.lt.s32.totalorder %s306, 19
        %s310 = scalar_select %p309, %s306, 19
        %s311 = smul.addr %s310, 4
        %s312 = smul.addr %s308, 80
        %s313 = sadd.s32 %s311, %s312
        %s314 = smul.addr %s313, 4
        %s315 = scalar_lea.vmem %s1, %s314
        %s316 = sadd.s32 %s22, 1
        %s317 = smul.u32 %s316, 2
        %s318 = smul.u32 4, %s317
      $region48: #{up_forward.1} parent=39 // pred_fallthru
        _
    $region40: #{up_forward.1} parent=5 // pred_fallthru
      _
    %p319 = scmp.le.s32.totalorder 1, %s14
    %p320 = scmp.lt.s32.totalorder %s14, 5
    %p321 = pnand %p319, %p320
    %p322 = pneg %p321
    // Predicated region
    $region49: #{up_forward.1} parent=5 // pred_check
      _
    $region50: #{up_forward.1} parent=5 // pred_check_branch
      %324 = sbr.rel (%p321) target = $region52
    $region51: #{up_forward.1} parent=5 // pred_region
      %s325 = ssub.s32 %s14, 1
      %s326 = smul.u32 8, %s24
      %s327 = ssub.s32 20, %s326
      %p328 = scmp.lt.s32.totalorder %s327, 8
      %s329 = scalar_select %p328, %s327, 8
      %s330 = smul.u32 64, %s329
      %s331 = smul.u32 %s330, 4
      %p332 = scmp.lt.s32.totalorder %s23, 1
      %s333 = scalar_select %p332, %s23, 1
      %p334 = scmp.lt.s32.totalorder %s326, 19
      %s335 = scalar_select %p334, %s326, 19
      %s336 = smul.addr %s335, 4
      %s337 = smul.addr %s333, 80
      %s338 = sadd.s32 %s336, %s337
      %s339 = smul.addr %s338, 4
      %s340 = scalar_lea.vmem %s0, %s339
      %p341 = pneg %p54
      %p342 = pneg %p51
      %s343 = sadd.s32 %s24, 1
      %s344 = smul.u32 %s343, 2
      %s345 = smul.u32 4, %s344
      %p346 = scmp.lt.s32.totalorder %s23, 1
      %s347 = scalar_select %p346, %s23, 1
      %p348 = scmp.lt.s32.totalorder %s345, 19
      %s349 = scalar_select %p348, %s345, 19
      %s350 = smul.addr %s349, 4
      %s351 = smul.addr %s347, 80
      %s352 = sadd.s32 %s350, %s351
      %s353 = smul.addr %s352, 4
      %s354 = scalar_lea.vmem %s1, %s353
      %p355 = pneg %p86
      %p356 = pneg %p83
      %p357 = pneg %p107
      %p358 = pneg %p104
      %p359 = pneg %p128
      %p360 = pneg %p125
      %p361 = pneg %p149
      %p362 = pneg %p146
      %p363 = pneg %p170
      %p364 = pneg %p167
      %p365 = pneg %p191
      %p366 = pneg %p188
      %p367 = pneg %p212
      %p368 = pneg %p209
      %p369 = pneg %p240
      %p370 = pneg %p237
      %s371 = smul.u32 8, %s24
      %p372 = scmp.lt.s32.totalorder %s23, 1
      %s373 = scalar_select %p372, %s23, 1
      %p374 = scmp.lt.s32.totalorder %s371, 15
      %s375 = scalar_select %p374, %s371, 15
      %s376 = smul.addr %s375, 2
      %s377 = smul.addr %s373, 32
      %s378 = sadd.s32 %s376, %s377
      %s379 = smul.addr %s378, 8
      %s380 = scalar_lea.vmem %s8, %s379
      %s381 = smul.u32 8, %s24
      %s382 = ssub.s32 20, %s381
      %p383 = scmp.lt.s32.totalorder %s382, 8
      %s384 = scalar_select %p383, %s382, 8
      %s385 = smul.u32 64, %s384
      %s386 = smul.u32 %s385, 4
      %p387 = scmp.lt.s32.totalorder %s23, 1
      %s388 = scalar_select %p387, %s23, 1
      %p389 = scmp.lt.s32.totalorder %s381, 19
      %s390 = scalar_select %p389, %s381, 19
      %s391 = smul.addr %s390, 4
      %s392 = smul.addr %s388, 80
      %s393 = sadd.s32 %s391, %s392
      %s394 = smul.addr %s393, 4
      %s395 = scalar_lea.vmem %s0, %s394
      %s396 = smul.u32 8, %s24
      %s397 = ssub.s32 20, %s396
      %p398 = scmp.lt.s32.totalorder %s397, 8
      %s399 = scalar_select %p398, %s397, 8
      %s400 = smul.u32 64, %s399
      %s401 = smul.u32 %s400, 4
      %s402 = sadd.s32 %s24, 1
      %s403 = smul.u32 %s402, 2
      %s404 = smul.u32 4, %s403
      %p405 = scmp.lt.s32.totalorder %s23, 1
      %s406 = scalar_select %p405, %s23, 1
      %p407 = scmp.lt.s32.totalorder %s404, 19
      %s408 = scalar_select %p407, %s404, 19
      %s409 = smul.addr %s408, 4
      %s410 = smul.addr %s406, 80
      %s411 = sadd.s32 %s409, %s410
      %s412 = smul.addr %s411, 4
      %s413 = scalar_lea.vmem %s1, %s412
      %s414 = sadd.s32 %s24, 1
      %s415 = smul.u32 %s414, 2
      %s416 = smul.u32 4, %s415
      %s417 = smul.u32 8, %s24
      %p418 = scmp.lt.s32.totalorder %s23, 1
      %s419 = scalar_select %p418, %s23, 1
      %p420 = scmp.lt.s32.totalorder %s417, 15
      %s421 = scalar_select %p420, %s417, 15
      %s422 = smul.addr %s421, 2
      %s423 = smul.addr %s419, 32
      %s424 = sadd.s32 %s422, %s423
      %s425 = smul.addr %s424, 8
      %s426 = scalar_lea.vmem %s8, %s425
      %s427 = smul.u32 8, %s24
      %s429 = smul.u32 %s24, 8
      %v430 = vld [vmem:[%s395] sm:$0xf]
      %v431 = vld [vmem:[%s395 + $0x4] sm:$0xf]
      %v432 = vld [vmem:[%s395 + $0x8] sm:$0xf]
      %v433 = vld [vmem:[%s395 + $0xc] sm:$0xf]
      %v434 = vld [vmem:[%s395 + $0x10] sm:$0xf]
      %v435 = vld [vmem:[%s395 + $0x14] sm:$0xf]
      %v436 = vld [vmem:[%s395 + $0x18] sm:$0xf]
      %v437 = vld [vmem:[%s395 + $0x1c] sm:$0xf]
      %v438 = vld [vmem:[%s395 + $0x20] sm:$0xf]
      %v439 = vld [vmem:[%s395 + $0x24] sm:$0xf]
      %v440 = vld [vmem:[%s395 + $0x28] sm:$0xf]
      %v441 = vld [vmem:[%s395 + $0x2c] sm:$0xf]
      %v442 = vld [vmem:[%s395 + $0x30] sm:$0xf]
      %v443 = vld [vmem:[%s395 + $0x34] sm:$0xf]
      %v444 = vld [vmem:[%s395 + $0x38] sm:$0xf]
      %v445 = vld [vmem:[%s395 + $0x3c] sm:$0xf]
      %v446 = vld [vmem:[%s395 + $0x40] sm:$0xf]
      %v447 = vld [vmem:[%s395 + $0x44] sm:$0xf]
      %v448 = vld [vmem:[%s395 + $0x48] sm:$0xf]
      %v449 = vld [vmem:[%s395 + $0x4c] sm:$0xf]
      %v450 = vld [vmem:[%s395 + $0x50] sm:$0xf]
      %v451 = vld [vmem:[%s395 + $0x54] sm:$0xf]
      %v452 = vld [vmem:[%s395 + $0x58] sm:$0xf]
      %v453 = vld [vmem:[%s395 + $0x5c] sm:$0xf]
      %v454 = vld [vmem:[%s395 + $0x60] sm:$0xf]
      %v455 = vld [vmem:[%s395 + $0x64] sm:$0xf]
      %v456 = vld [vmem:[%s395 + $0x68] sm:$0xf]
      %v457 = vld [vmem:[%s395 + $0x6c] sm:$0xf]
      %v458 = vld [vmem:[%s395 + $0x70] sm:$0xf]
      %v459 = vld [vmem:[%s395 + $0x74] sm:$0xf]
      %v460 = vld [vmem:[%s395 + $0x78] sm:$0xf]
      %v461 = vld [vmem:[%s395 + $0x7c] sm:$0xf]
      %462 = vst [vmem:[#allocation2] sm:$0xf] %v430
      %463 = vst [vmem:[#allocation2 + $0x4] sm:$0xf] %v431
      %464 = vst [vmem:[#allocation2 + $0x8] sm:$0xf] %v432
      %465 = vst [vmem:[#allocation2 + $0xc] sm:$0xf] %v433
      %466 = vst [vmem:[#allocation2 + $0x10] sm:$0xf] %v434
      %467 = vst [vmem:[#allocation2 + $0x14] sm:$0xf] %v435
      %468 = vst [vmem:[#allocation2 + $0x18] sm:$0xf] %v436
      %469 = vst [vmem:[#allocation2 + $0x1c] sm:$0xf] %v437
      %470 = vst [vmem:[#allocation2 + $0x20] sm:$0xf] %v438
      %471 = vst [vmem:[#allocation2 + $0x24] sm:$0xf] %v439
      %472 = vst [vmem:[#allocation2 + $0x28] sm:$0xf] %v440
      %473 = vst [vmem:[#allocation2 + $0x2c] sm:$0xf] %v441
      %474 = vst [vmem:[#allocation2 + $0x30] sm:$0xf] %v442
      %475 = vst [vmem:[#allocation2 + $0x34] sm:$0xf] %v443
      %476 = vst [vmem:[#allocation2 + $0x38] sm:$0xf] %v444
      %477 = vst [vmem:[#allocation2 + $0x3c] sm:$0xf] %v445
      %478 = vst [vmem:[#allocation2 + $0x40] sm:$0xf] %v446
      %479 = vst [vmem:[#allocation2 + $0x44] sm:$0xf] %v447
      %480 = vst [vmem:[#allocation2 + $0x48] sm:$0xf] %v448
      %481 = vst [vmem:[#allocation2 + $0x4c] sm:$0xf] %v449
      %482 = vst [vmem:[#allocation2 + $0x50] sm:$0xf] %v450
      %483 = vst [vmem:[#allocation2 + $0x54] sm:$0xf] %v451
      %484 = vst [vmem:[#allocation2 + $0x58] sm:$0xf] %v452
      %485 = vst [vmem:[#allocation2 + $0x5c] sm:$0xf] %v453
      %486 = vst [vmem:[#allocation2 + $0x60] sm:$0xf] %v454
      %487 = vst [vmem:[#allocation2 + $0x64] sm:$0xf] %v455
      %488 = vst [vmem:[#allocation2 + $0x68] sm:$0xf] %v456
      %489 = vst [vmem:[#allocation2 + $0x6c] sm:$0xf] %v457
      %490 = vst [vmem:[#allocation2 + $0x70] sm:$0xf] %v458
      %491 = vst [vmem:[#allocation2 + $0x74] sm:$0xf] %v459
      %492 = vst [vmem:[#allocation2 + $0x78] sm:$0xf] %v460
      %493 = vst [vmem:[#allocation2 + $0x7c] sm:$0xf] %v461
      %v494 = vld [vmem:[%s413] sm:$0xf]
      %v495 = vld [vmem:[%s413 + $0x4] sm:$0xf]
      %v496 = vld [vmem:[%s413 + $0x8] sm:$0xf]
      %v497 = vld [vmem:[%s413 + $0xc] sm:$0xf]
      %v498 = vld [vmem:[%s413 + $0x10] sm:$0xf]
      %v499 = vld [vmem:[%s413 + $0x14] sm:$0xf]
      %v500 = vld [vmem:[%s413 + $0x18] sm:$0xf]
      %v501 = vld [vmem:[%s413 + $0x1c] sm:$0xf]
      %v502 = vld [vmem:[%s413 + $0x20] sm:$0xf]
      %v503 = vld [vmem:[%s413 + $0x24] sm:$0xf]
      %v504 = vld [vmem:[%s413 + $0x28] sm:$0xf]
      %v505 = vld [vmem:[%s413 + $0x2c] sm:$0xf]
      %v506 = vld [vmem:[%s413 + $0x30] sm:$0xf]
      %v507 = vld [vmem:[%s413 + $0x34] sm:$0xf]
      %v508 = vld [vmem:[%s413 + $0x38] sm:$0xf]
      %v509 = vld [vmem:[%s413 + $0x3c] sm:$0xf]
      %510 = vst [vmem:[#allocation2 + $0x80] sm:$0xf] %v494
      %511 = vst [vmem:[#allocation2 + $0x84] sm:$0xf] %v495
      %512 = vst [vmem:[#allocation2 + $0x88] sm:$0xf] %v496
      %513 = vst [vmem:[#allocation2 + $0x8c] sm:$0xf] %v497
      %514 = vst [vmem:[#allocation2 + $0x90] sm:$0xf] %v498
      %515 = vst [vmem:[#allocation2 + $0x94] sm:$0xf] %v499
      %516 = vst [vmem:[#allocation2 + $0x98] sm:$0xf] %v500
      %517 = vst [vmem:[#allocation2 + $0x9c] sm:$0xf] %v501
      %518 = vst [vmem:[#allocation2 + $0xa0] sm:$0xf] %v502
      %519 = vst [vmem:[#allocation2 + $0xa4] sm:$0xf] %v503
      %520 = vst [vmem:[#allocation2 + $0xa8] sm:$0xf] %v504
      %521 = vst [vmem:[#allocation2 + $0xac] sm:$0xf] %v505
      %522 = vst [vmem:[#allocation2 + $0xb0] sm:$0xf] %v506
      %523 = vst [vmem:[#allocation2 + $0xb4] sm:$0xf] %v507
      %524 = vst [vmem:[#allocation2 + $0xb8] sm:$0xf] %v508
      %525 = vst [vmem:[#allocation2 + $0xbc] sm:$0xf] %v509
      %526 = vst [vmem:[#allocation2 + $0xc0] sm:$0xf] 0
      %v527 = vld [vmem:[#allocation2] sm:$0xf]
      %v528 = vld [vmem:[#allocation2 + $0x4] sm:$0xf]
      %v529 = vld [vmem:[#allocation2 + $0x8] sm:$0xf]
      %v530 = vld [vmem:[#allocation2 + $0xc] sm:$0xf]
      %v531 = vld [vmem:[#allocation2 + $0x10] sm:$0xf]
      %v532 = vld [vmem:[#allocation2 + $0x14] sm:$0xf]
      %v533 = vld [vmem:[#allocation2 + $0x18] sm:$0xf]
      %v534 = vld [vmem:[#allocation2 + $0x1c] sm:$0xf]
      %v535 = vld [vmem:[#allocation2 + $0x20] sm:$0xf]
      %v536 = vld [vmem:[#allocation2 + $0x24] sm:$0xf]
      %v537 = vld [vmem:[#allocation2 + $0x28] sm:$0xf]
      %v538 = vld [vmem:[#allocation2 + $0x2c] sm:$0xf]
      %v539 = vld [vmem:[#allocation2 + $0x30] sm:$0xf]
      %v540 = vld [vmem:[#allocation2 + $0x34] sm:$0xf]
      %v541 = vld [vmem:[#allocation2 + $0x38] sm:$0xf]
      %v542 = vld [vmem:[#allocation2 + $0x3c] sm:$0xf]
      %v543 = vld [vmem:[#allocation2 + $0x40] sm:$0xf]
      %v544 = vld [vmem:[#allocation2 + $0x44] sm:$0xf]
      %v545 = vld [vmem:[#allocation2 + $0x48] sm:$0xf]
      %v546 = vld [vmem:[#allocation2 + $0x4c] sm:$0xf]
      %v547 = vld [vmem:[#allocation2 + $0x50] sm:$0xf]
      %v548 = vld [vmem:[#allocation2 + $0x54] sm:$0xf]
      %v549 = vld [vmem:[#allocation2 + $0x58] sm:$0xf]
      %v550 = vld [vmem:[#allocation2 + $0x5c] sm:$0xf]
      %v551 = vld [vmem:[#allocation2 + $0x60] sm:$0xf]
      %v552 = vld [vmem:[#allocation2 + $0x64] sm:$0xf]
      %v553 = vld [vmem:[#allocation2 + $0x68] sm:$0xf]
      %v554 = vld [vmem:[#allocation2 + $0x6c] sm:$0xf]
      %v555 = vld [vmem:[#allocation2 + $0x70] sm:$0xf]
      %v556 = vld [vmem:[#allocation2 + $0x74] sm:$0xf]
      %v557 = vld [vmem:[#allocation2 + $0x78] sm:$0xf]
      %v558 = vld [vmem:[#allocation2 + $0x7c] sm:$0xf]
      %v559 = vld [vmem:[#allocation2 + $0x80] sm:$0xf]
      %v560 = vld [vmem:[#allocation2 + $0x84] sm:$0xf]
      %v561 = vld [vmem:[#allocation2 + $0x88] sm:$0xf]
      %v562 = vld [vmem:[#allocation2 + $0x8c] sm:$0xf]
      %v563 = vld [vmem:[#allocation2 + $0x90] sm:$0xf]
      %v564 = vld [vmem:[#allocation2 + $0x94] sm:$0xf]
      %v565 = vld [vmem:[#allocation2 + $0x98] sm:$0xf]
      %v566 = vld [vmem:[#allocation2 + $0x9c] sm:$0xf]
      %v567 = vld [vmem:[%s2] sm:$0xf]
      %v568 = vld [vmem:[%s2 + $0x4] sm:$0xf]
      %v569 = vld [vmem:[%s2 + $0x8] sm:$0xf]
      %v570 = vld [vmem:[%s2 + $0xc] sm:$0xf]
      %v571 = vld [vmem:[%s2 + $0x10] sm:$0xf]
      %v572 = vld [vmem:[%s2 + $0x14] sm:$0xf]
      %v573 = vld [vmem:[%s2 + $0x18] sm:$0xf]
      %v574 = vld [vmem:[%s2 + $0x1c] sm:$0xf]
      %v575 = vld [vmem:[%s2 + $0x20] sm:$0xf]
      %v576 = vld [vmem:[%s2 + $0x24] sm:$0xf]
      %v577 = vld [vmem:[%s2 + $0x28] sm:$0xf]
      %v578 = vld [vmem:[%s2 + $0x2c] sm:$0xf]
      %v579 = vld [vmem:[%s2 + $0x30] sm:$0xf]
      %v580 = vld [vmem:[%s2 + $0x34] sm:$0xf]
      %v581 = vld [vmem:[%s2 + $0x38] sm:$0xf]
      %v582 = vld [vmem:[%s2 + $0x3c] sm:$0xf]
      %v583 = vld [vmem:[#allocation2 + $0xa0] sm:$0x1]
      %s584 = scalar_lea.vmem %s2, 64
      %v585 = vld [vmem:[%s584] sm:$0xf]
      %v586 = vld [vmem:[%s584 + $0x4] sm:$0xf]
      %v587 = vld [vmem:[%s584 + $0x8] sm:$0xf]
      %v588 = vld [vmem:[%s584 + $0xc] sm:$0xf]
      %v589 = vld [vmem:[%s584 + $0x10] sm:$0xf]
      %v590 = vld [vmem:[%s584 + $0x14] sm:$0xf]
      %v591 = vld [vmem:[%s584 + $0x18] sm:$0xf]
      %v592 = vld [vmem:[%s584 + $0x1c] sm:$0xf]
      %v593 = vld [vmem:[%s584 + $0x20] sm:$0xf]
      %v594 = vld [vmem:[%s584 + $0x24] sm:$0xf]
      %v595 = vld [vmem:[%s584 + $0x28] sm:$0xf]
      %v596 = vld [vmem:[%s584 + $0x2c] sm:$0xf]
      %v597 = vld [vmem:[%s584 + $0x30] sm:$0xf]
      %v598 = vld [vmem:[%s584 + $0x34] sm:$0xf]
      %v599 = vld [vmem:[%s584 + $0x38] sm:$0xf]
      %v600 = vld [vmem:[%s584 + $0x3c] sm:$0xf]
      %v642 = vunpack.c.l.b16 %v527
      %v643 = vunpack.c.l.b16 %v528
      %v644 = vunpack.c.l.b16 %v529
      %v645 = vunpack.c.l.b16 %v530
      %v646 = vunpack.c.l.b16 %v531
      %v647 = vunpack.c.l.b16 %v532
      %v648 = vunpack.c.l.b16 %v533
      %v649 = vunpack.c.l.b16 %v534
      %v650 = vunpack.c.l.b16 %v535
      %v651 = vunpack.c.l.b16 %v536
      %v652 = vunpack.c.l.b16 %v537
      %v653 = vunpack.c.l.b16 %v538
      %v654 = vunpack.c.l.b16 %v539
      %v655 = vunpack.c.l.b16 %v540
      %v656 = vunpack.c.l.b16 %v541
      %v657 = vunpack.c.l.b16 %v542
      %v658 = vunpack.c.l.b16 %v543
      %v659 = vunpack.c.l.b16 %v544
      %v660 = vunpack.c.l.b16 %v545
      %v661 = vunpack.c.l.b16 %v546
      %v662 = vunpack.c.l.b16 %v547
      %v663 = vunpack.c.l.b16 %v548
      %v664 = vunpack.c.l.b16 %v549
      %v665 = vunpack.c.l.b16 %v550
      %v666 = vunpack.c.l.b16 %v551
      %v667 = vunpack.c.l.b16 %v552
      %v668 = vunpack.c.l.b16 %v553
      %v669 = vunpack.c.l.b16 %v554
      %v670 = vunpack.c.l.b16 %v555
      %v671 = vunpack.c.l.b16 %v556
      %v672 = vunpack.c.l.b16 %v557
      %v673 = vunpack.c.l.b16 %v558
      %v674 = vunpack.c.l.b16 %v559
      %v675 = vunpack.c.l.b16 %v560
      %v676 = vunpack.c.l.b16 %v561
      %v677 = vunpack.c.l.b16 %v562
      %v678 = vunpack.c.l.b16 %v563
      %v679 = vunpack.c.l.b16 %v564
      %v680 = vunpack.c.l.b16 %v565
      %v681 = vunpack.c.l.b16 %v566
      %v682 = vunpack.c.l.b16 %v583
      %v683 = vpack.c.b16 %v643, %v642
      %v684 = vpack.c.b16 %v645, %v644
      %v685 = vpack.c.b16 %v647, %v646
      %v686 = vpack.c.b16 %v649, %v648
      %v687 = vpack.c.b16 %v651, %v650
      %v688 = vpack.c.b16 %v653, %v652
      %v689 = vpack.c.b16 %v655, %v654
      %v690 = vpack.c.b16 %v657, %v656
      %v691 = vpack.c.b16 %v659, %v658
      %v692 = vpack.c.b16 %v661, %v660
      %v693 = vpack.c.b16 %v663, %v662
      %v694 = vpack.c.b16 %v665, %v664
      %v695 = vpack.c.b16 %v667, %v666
      %v696 = vpack.c.b16 %v669, %v668
      %v697 = vpack.c.b16 %v671, %v670
      %v698 = vpack.c.b16 %v673, %v672
      %v699 = vpack.c.b16 %v675, %v674
      %v700 = vpack.c.b16 %v677, %v676
      %v701 = vpack.c.b16 %v679, %v678
      %v702 = vpack.c.b16 %v681, %v680
      %v703 = vpack.c.b16 %v682, %v682
      %vm704 = vsmask.f32 7424
      %v706 = vshrl.u32 %v683, 16
      %v708 = vshll.u32 %v683, 16
      %v710 = vrot.slane %v708, 1
      %v711 = vor.u32 %v706, %v710
      %v713 = vshll.u32 %v684, 16
      %v715 = vrot.slane %v713, 1
      %v716 = vsel %vm704, %v711, %v715
      %v717 = vshrl.u32 %v684, 16
      %v719 = vor.u32 %v717, %v715
      %v721 = vshll.u32 %v685, 16
      %v723 = vrot.slane %v721, 1
      %v724 = vsel %vm704, %v719, %v723
      %v725 = vshrl.u32 %v685, 16
      %v727 = vor.u32 %v725, %v723
      %v729 = vshll.u32 %v686, 16
      %v731 = vrot.slane %v729, 1
      %v732 = vsel %vm704, %v727, %v731
      %v733 = vshrl.u32 %v686, 16
      %v735 = vor.u32 %v733, %v731
      %v737 = vshll.u32 %v687, 16
      %v739 = vrot.slane %v737, 1
      %v740 = vsel %vm704, %v735, %v739
      %v741 = vshrl.u32 %v687, 16
      %v743 = vor.u32 %v741, %v739
      %v745 = vshll.u32 %v688, 16
      %v747 = vrot.slane %v745, 1
      %v748 = vsel %vm704, %v743, %v747
      %v749 = vshrl.u32 %v688, 16
      %v751 = vor.u32 %v749, %v747
      %v753 = vshll.u32 %v689, 16
      %v755 = vrot.slane %v753, 1
      %v756 = vsel %vm704, %v751, %v755
      %v757 = vshrl.u32 %v689, 16
      %v759 = vor.u32 %v757, %v755
      %v761 = vshll.u32 %v690, 16
      %v763 = vrot.slane %v761, 1
      %v764 = vsel %vm704, %v759, %v763
      %v765 = vshrl.u32 %v690, 16
      %v767 = vor.u32 %v765, %v763
      %v769 = vshll.u32 %v691, 16
      %v771 = vrot.slane %v769, 1
      %v772 = vsel %vm704, %v767, %v771
      %v773 = vshrl.u32 %v691, 16
      %v775 = vor.u32 %v773, %v771
      %v777 = vshll.u32 %v692, 16
      %v779 = vrot.slane %v777, 1
      %v780 = vsel %vm704, %v775, %v779
      %v781 = vshrl.u32 %v692, 16
      %v783 = vor.u32 %v781, %v779
      %v785 = vshll.u32 %v693, 16
      %v787 = vrot.slane %v785, 1
      %v788 = vsel %vm704, %v783, %v787
      %v789 = vshrl.u32 %v693, 16
      %v791 = vor.u32 %v789, %v787
      %v793 = vshll.u32 %v694, 16
      %v795 = vrot.slane %v793, 1
      %v796 = vsel %vm704, %v791, %v795
      %v797 = vshrl.u32 %v694, 16
      %v799 = vor.u32 %v797, %v795
      %v801 = vshll.u32 %v695, 16
      %v803 = vrot.slane %v801, 1
      %v804 = vsel %vm704, %v799, %v803
      %v805 = vshrl.u32 %v695, 16
      %v807 = vor.u32 %v805, %v803
      %v809 = vshll.u32 %v696, 16
      %v811 = vrot.slane %v809, 1
      %v812 = vsel %vm704, %v807, %v811
      %v813 = vshrl.u32 %v696, 16
      %v815 = vor.u32 %v813, %v811
      %v817 = vshll.u32 %v697, 16
      %v819 = vrot.slane %v817, 1
      %v820 = vsel %vm704, %v815, %v819
      %v821 = vshrl.u32 %v697, 16
      %v823 = vor.u32 %v821, %v819
      %v825 = vshll.u32 %v698, 16
      %v827 = vrot.slane %v825, 1
      %v828 = vsel %vm704, %v823, %v827
      %v829 = vshrl.u32 %v698, 16
      %v831 = vor.u32 %v829, %v827
      %v833 = vshll.u32 %v699, 16
      %v835 = vrot.slane %v833, 1
      %v836 = vsel %vm704, %v831, %v835
      %v837 = vshrl.u32 %v699, 16
      %v839 = vor.u32 %v837, %v835
      %v841 = vshll.u32 %v700, 16
      %v843 = vrot.slane %v841, 1
      %v844 = vsel %vm704, %v839, %v843
      %v845 = vshrl.u32 %v700, 16
      %v847 = vor.u32 %v845, %v843
      %v849 = vshll.u32 %v701, 16
      %v851 = vrot.slane %v849, 1
      %v852 = vsel %vm704, %v847, %v851
      %v853 = vshrl.u32 %v701, 16
      %v855 = vor.u32 %v853, %v851
      %v857 = vshll.u32 %v702, 16
      %v859 = vrot.slane %v857, 1
      %v860 = vsel %vm704, %v855, %v859
      %v861 = vshrl.u32 %v702, 16
      %v863 = vor.u32 %v861, %v859
      %v865 = vshll.u32 %v703, 16
      %v867 = vrot.slane %v865, 1
      %v868 = vsel %vm704, %v863, %v867
      %v905 = vunpack.c.l.b16 %v585
      %v906 = vunpack.c.l.b16 %v586
      %v907 = vunpack.c.l.b16 %v587
      %v908 = vunpack.c.l.b16 %v588
      %v909 = vunpack.c.l.b16 %v589
      %v910 = vunpack.c.l.b16 %v590
      %v911 = vunpack.c.l.b16 %v591
      %v912 = vunpack.c.l.b16 %v592
      %v913 = vunpack.c.l.b16 %v593
      %v914 = vunpack.c.l.b16 %v594
      %v915 = vunpack.c.l.b16 %v595
      %v916 = vunpack.c.l.b16 %v596
      %v917 = vunpack.c.l.b16 %v597
      %v918 = vunpack.c.l.b16 %v598
      %v919 = vunpack.c.l.b16 %v599
      %v920 = vunpack.c.l.b16 %v600
      %v921 = vpack.c.b16 %v906, %v905
      %v922 = vpack.c.b16 %v908, %v907
      %v923 = vpack.c.b16 %v910, %v909
      %v924 = vpack.c.b16 %v912, %v911
      %v925 = vpack.c.b16 %v914, %v913
      %v926 = vpack.c.b16 %v916, %v915
      %v927 = vpack.c.b16 %v918, %v917
      %v928 = vpack.c.b16 %v920, %v919
      %937 = vmatprep.subr.bf16.mxu0 0
      %938 = vmatpush1.bf16.msra.mxu0 %v928
      %939 = vmatprep.subr.bf16.mxu0 0
      %940 = vmatpush1.bf16.msra.mxu0 %v927
      %941 = vmatprep.subr.bf16.mxu0 0
      %942 = vmatpush1.bf16.msra.mxu0 %v926
      %943 = vmatprep.subr.bf16.mxu0 0
      %944 = vmatpush1.bf16.msra.mxu0 %v925
      %945 = vmatprep.subr.bf16.mxu0 0
      %946 = vmatpush1.bf16.msra.mxu0 %v924
      %947 = vmatprep.subr.bf16.mxu0 0
      %948 = vmatpush1.bf16.msra.mxu0 %v923
      %949 = vmatprep.subr.bf16.mxu0 0
      %950 = vmatpush1.bf16.msra.mxu0 %v922
      %951 = vmatprep.subr.bf16.mxu0 0
      %952 = vmatpush1.bf16.msra.mxu0 %v921
      %953 = vmatprep.subr.bf16.mxu0 0
      %954 = vmatpush2.bf16.msra.mxu0 0
      %955 = vmatprep.subr.bf16.mxu0 0
      %956 = vmatpush2.bf16.msra.mxu0 0
      %957 = vmatprep.subr.bf16.mxu0 0
      %958 = vmatpush2.bf16.msra.mxu0 0
      %959 = vmatprep.subr.bf16.mxu0 0
      %960 = vmatpush2.bf16.msra.mxu0 0
      %961 = vmatprep.subr.bf16.mxu0 0
      %962 = vmatpush2.bf16.msra.mxu0 0
      %963 = vmatprep.subr.bf16.mxu0 0
      %964 = vmatpush2.bf16.msra.mxu0 0
      %965 = vmatprep.subr.bf16.mxu0 0
      %966 = vmatpush2.bf16.msra.mxu0 0
      %967 = vmatprep.subr.bf16.mxu0 0
      %968 = vmatpush2.bf16.msra.mxu0 0
      %969 = vmatprep.mubr.bf16.mxu0 0
      %970 = vmatmul.mubr.bf16.gmra.mxu0 %v716
      %v971 = vpop.f32.mrf.mxu0
      %v972 = vadd.f32 0.0, %v971
      %v973 = vpop.f32.mrf.mxu0
      %v974 = vpop.f32.mrf.mxu0
      %v975 = vadd.f32 0.0, %v974
      %v976 = vpop.f32.mrf.mxu0
      %977 = vmatprep.mubr.bf16.mxu0 0
      %978 = vmatmul.mubr.bf16.gmra.mxu0 %v724
      %v979 = vpop.f32.mrf.mxu0
      %v980 = vadd.f32 0.0, %v979
      %v981 = vpop.f32.mrf.mxu0
      %v982 = vpop.f32.mrf.mxu0
      %v983 = vadd.f32 0.0, %v982
      %v984 = vpop.f32.mrf.mxu0
      %985 = vmatprep.mubr.bf16.mxu0 0
      %986 = vmatmul.mubr.bf16.gmra.mxu0 %v732
      %v987 = vpop.f32.mrf.mxu0
      %v988 = vadd.f32 0.0, %v987
      %v989 = vpop.f32.mrf.mxu0
      %v990 = vpop.f32.mrf.mxu0
      %v991 = vadd.f32 0.0, %v990
      %v992 = vpop.f32.mrf.mxu0
      %993 = vmatprep.mubr.bf16.mxu0 0
      %994 = vmatmul.mubr.bf16.gmra.mxu0 %v740
      %v995 = vpop.f32.mrf.mxu0
      %v996 = vadd.f32 0.0, %v995
      %v997 = vpop.f32.mrf.mxu0
      %v998 = vpop.f32.mrf.mxu0
      %v999 = vadd.f32 0.0, %v998
      %v1000 = vpop.f32.mrf.mxu0
      %1001 = vmatprep.mubr.bf16.mxu0 0
      %1002 = vmatmul.mubr.bf16.gmra.mxu0 %v748
      %v1003 = vpop.f32.mrf.mxu0
      %v1004 = vadd.f32 0.0, %v1003
      %v1005 = vpop.f32.mrf.mxu0
      %v1006 = vpop.f32.mrf.mxu0
      %v1007 = vadd.f32 0.0, %v1006
      %v1008 = vpop.f32.mrf.mxu0
      %1009 = vmatprep.mubr.bf16.mxu0 0
      %1010 = vmatmul.mubr.bf16.gmra.mxu0 %v756
      %v1011 = vpop.f32.mrf.mxu0
      %v1012 = vadd.f32 0.0, %v1011
      %v1013 = vpop.f32.mrf.mxu0
      %v1014 = vpop.f32.mrf.mxu0
      %v1015 = vadd.f32 0.0, %v1014
      %v1016 = vpop.f32.mrf.mxu0
      %1017 = vmatprep.mubr.bf16.mxu0 0
      %1018 = vmatmul.mubr.bf16.gmra.mxu0 %v764
      %v1019 = vpop.f32.mrf.mxu0
      %v1020 = vadd.f32 0.0, %v1019
      %v1021 = vpop.f32.mrf.mxu0
      %v1022 = vpop.f32.mrf.mxu0
      %v1023 = vadd.f32 0.0, %v1022
      %v1024 = vpop.f32.mrf.mxu0
      %1025 = vmatprep.mubr.bf16.mxu0 0
      %1026 = vmatmul.mubr.bf16.gmra.mxu0 %v772
      %v1027 = vpop.f32.mrf.mxu0
      %v1028 = vadd.f32 0.0, %v1027
      %v1029 = vpop.f32.mrf.mxu0
      %v1030 = vpop.f32.mrf.mxu0
      %v1031 = vadd.f32 0.0, %v1030
      %v1032 = vpop.f32.mrf.mxu0
      %1033 = vmatprep.mubr.bf16.mxu0 0
      %1034 = vmatmul.mubr.bf16.gmra.mxu0 %v780
      %v1035 = vpop.f32.mrf.mxu0
      %v1036 = vadd.f32 0.0, %v1035
      %v1037 = vpop.f32.mrf.mxu0
      %v1038 = vpop.f32.mrf.mxu0
      %v1039 = vadd.f32 0.0, %v1038
      %v1040 = vpop.f32.mrf.mxu0
      %1041 = vmatprep.mubr.bf16.mxu0 0
      %1042 = vmatmul.mubr.bf16.gmra.mxu0 %v788
      %v1043 = vpop.f32.mrf.mxu0
      %v1044 = vadd.f32 0.0, %v1043
      %v1045 = vpop.f32.mrf.mxu0
      %v1046 = vpop.f32.mrf.mxu0
      %v1047 = vadd.f32 0.0, %v1046
      %v1048 = vpop.f32.mrf.mxu0
      %1049 = vmatprep.mubr.bf16.mxu0 0
      %1050 = vmatmul.mubr.bf16.gmra.mxu0 %v796
      %v1051 = vpop.f32.mrf.mxu0
      %v1052 = vadd.f32 0.0, %v1051
      %v1053 = vpop.f32.mrf.mxu0
      %v1054 = vpop.f32.mrf.mxu0
      %v1055 = vadd.f32 0.0, %v1054
      %v1056 = vpop.f32.mrf.mxu0
      %1057 = vmatprep.mubr.bf16.mxu0 0
      %1058 = vmatmul.mubr.bf16.gmra.mxu0 %v804
      %v1059 = vpop.f32.mrf.mxu0
      %v1060 = vadd.f32 0.0, %v1059
      %v1061 = vpop.f32.mrf.mxu0
      %v1062 = vpop.f32.mrf.mxu0
      %v1063 = vadd.f32 0.0, %v1062
      %v1064 = vpop.f32.mrf.mxu0
      %1065 = vmatprep.mubr.bf16.mxu0 0
      %1066 = vmatmul.mubr.bf16.gmra.mxu0 %v812
      %v1067 = vpop.f32.mrf.mxu0
      %v1068 = vadd.f32 0.0, %v1067
      %v1069 = vpop.f32.mrf.mxu0
      %v1070 = vpop.f32.mrf.mxu0
      %v1071 = vadd.f32 0.0, %v1070
      %v1072 = vpop.f32.mrf.mxu0
      %1073 = vmatprep.mubr.bf16.mxu0 0
      %1074 = vmatmul.mubr.bf16.gmra.mxu0 %v820
      %v1075 = vpop.f32.mrf.mxu0
      %v1076 = vadd.f32 0.0, %v1075
      %v1077 = vpop.f32.mrf.mxu0
      %v1078 = vpop.f32.mrf.mxu0
      %v1079 = vadd.f32 0.0, %v1078
      %v1080 = vpop.f32.mrf.mxu0
      %1081 = vmatprep.mubr.bf16.mxu0 0
      %1082 = vmatmul.mubr.bf16.gmra.mxu0 %v828
      %v1083 = vpop.f32.mrf.mxu0
      %v1084 = vadd.f32 0.0, %v1083
      %v1085 = vpop.f32.mrf.mxu0
      %v1086 = vpop.f32.mrf.mxu0
      %v1087 = vadd.f32 0.0, %v1086
      %v1088 = vpop.f32.mrf.mxu0
      %1089 = vmatprep.mubr.bf16.mxu0 0
      %1090 = vmatmul.mubr.bf16.gmra.mxu0 %v836
      %v1091 = vpop.f32.mrf.mxu0
      %v1092 = vadd.f32 0.0, %v1091
      %v1093 = vpop.f32.mrf.mxu0
      %v1094 = vpop.f32.mrf.mxu0
      %v1095 = vadd.f32 0.0, %v1094
      %v1096 = vpop.f32.mrf.mxu0
      %1097 = vmatprep.mubr.bf16.mxu0 0
      %1098 = vmatmul.mubr.bf16.gmra.mxu0 %v844
      %v1099 = vpop.f32.mrf.mxu0
      %v1100 = vadd.f32 0.0, %v1099
      %v1101 = vpop.f32.mrf.mxu0
      %v1102 = vpop.f32.mrf.mxu0
      %v1103 = vadd.f32 0.0, %v1102
      %v1104 = vpop.f32.mrf.mxu0
      %1105 = vmatprep.mubr.bf16.mxu0 0
      %1106 = vmatmul.mubr.bf16.gmra.mxu0 %v852
      %v1107 = vpop.f32.mrf.mxu0
      %v1108 = vadd.f32 0.0, %v1107
      %v1109 = vpop.f32.mrf.mxu0
      %v1110 = vpop.f32.mrf.mxu0
      %v1111 = vadd.f32 0.0, %v1110
      %v1112 = vpop.f32.mrf.mxu0
      %1113 = vmatprep.mubr.bf16.mxu0 0
      %1114 = vmatmul.mubr.bf16.gmra.mxu0 %v860
      %v1115 = vpop.f32.mrf.mxu0
      %v1116 = vadd.f32 0.0, %v1115
      %v1117 = vpop.f32.mrf.mxu0
      %v1118 = vpop.f32.mrf.mxu0
      %v1119 = vadd.f32 0.0, %v1118
      %v1120 = vpop.f32.mrf.mxu0
      %1121 = vmatprep.mubr.bf16.mxu0 0
      %1122 = vmatmul.mubr.bf16.gmra.mxu0 %v868
      %v1123 = vpop.f32.mrf.mxu0
      %v1124 = vadd.f32 0.0, %v1123
      %v1125 = vpop.f32.mrf.mxu0
      %v1126 = vpop.f32.mrf.mxu0
      %v1127 = vadd.f32 0.0, %v1126
      %v1128 = vpop.f32.mrf.mxu0
      %1129 = vdwg.mxu0
      %v1166 = vunpack.c.l.b16 %v567
      %v1167 = vunpack.c.l.b16 %v568
      %v1168 = vunpack.c.l.b16 %v569
      %v1169 = vunpack.c.l.b16 %v570
      %v1170 = vunpack.c.l.b16 %v571
      %v1171 = vunpack.c.l.b16 %v572
      %v1172 = vunpack.c.l.b16 %v573
      %v1173 = vunpack.c.l.b16 %v574
      %v1174 = vunpack.c.l.b16 %v575
      %v1175 = vunpack.c.l.b16 %v576
      %v1176 = vunpack.c.l.b16 %v577
      %v1177 = vunpack.c.l.b16 %v578
      %v1178 = vunpack.c.l.b16 %v579
      %v1179 = vunpack.c.l.b16 %v580
      %v1180 = vunpack.c.l.b16 %v581
      %v1181 = vunpack.c.l.b16 %v582
      %v1182 = vpack.c.b16 %v1167, %v1166
      %v1183 = vpack.c.b16 %v1169, %v1168
      %v1184 = vpack.c.b16 %v1171, %v1170
      %v1185 = vpack.c.b16 %v1173, %v1172
      %v1186 = vpack.c.b16 %v1175, %v1174
      %v1187 = vpack.c.b16 %v1177, %v1176
      %v1188 = vpack.c.b16 %v1179, %v1178
      %v1189 = vpack.c.b16 %v1181, %v1180
      %1198 = vmatprep.subr.bf16.mxu0 0
      %1199 = vmatpush1.bf16.msra.mxu0 %v1189
      %1200 = vmatprep.subr.bf16.mxu0 0
      %1201 = vmatpush1.bf16.msra.mxu0 %v1188
      %1202 = vmatprep.subr.bf16.mxu0 0
      %1203 = vmatpush1.bf16.msra.mxu0 %v1187
      %1204 = vmatprep.subr.bf16.mxu0 0
      %1205 = vmatpush1.bf16.msra.mxu0 %v1186
      %1206 = vmatprep.subr.bf16.mxu0 0
      %1207 = vmatpush1.bf16.msra.mxu0 %v1185
      %1208 = vmatprep.subr.bf16.mxu0 0
      %1209 = vmatpush1.bf16.msra.mxu0 %v1184
      %1210 = vmatprep.subr.bf16.mxu0 0
      %1211 = vmatpush1.bf16.msra.mxu0 %v1183
      %1212 = vmatprep.subr.bf16.mxu0 0
      %1213 = vmatpush1.bf16.msra.mxu0 %v1182
      %1214 = vmatprep.subr.bf16.mxu0 0
      %1215 = vmatpush2.bf16.msra.mxu0 0
      %1216 = vmatprep.subr.bf16.mxu0 0
      %1217 = vmatpush2.bf16.msra.mxu0 0
      %1218 = vmatprep.subr.bf16.mxu0 0
      %1219 = vmatpush2.bf16.msra.mxu0 0
      %1220 = vmatprep.subr.bf16.mxu0 0
      %1221 = vmatpush2.bf16.msra.mxu0 0
      %1222 = vmatprep.subr.bf16.mxu0 0
      %1223 = vmatpush2.bf16.msra.mxu0 0
      %1224 = vmatprep.subr.bf16.mxu0 0
      %1225 = vmatpush2.bf16.msra.mxu0 0
      %1226 = vmatprep.subr.bf16.mxu0 0
      %1227 = vmatpush2.bf16.msra.mxu0 0
      %1228 = vmatprep.subr.bf16.mxu0 0
      %1229 = vmatpush2.bf16.msra.mxu0 0
      %1230 = vmatprep.mubr.bf16.mxu0 0
      %1231 = vmatmul.mubr.bf16.gmra.mxu0 %v683
      %v1232 = vpop.f32.mrf.mxu0
      %v1233 = vadd.f32 %v972, %v1232
      %v1234 = vpop.f32.mrf.mxu0
      %v1235 = vpop.f32.mrf.mxu0
      %v1236 = vadd.f32 %v975, %v1235
      %v1237 = vpop.f32.mrf.mxu0
      %1238 = vmatprep.mubr.bf16.mxu0 0
      %1239 = vmatmul.mubr.bf16.gmra.mxu0 %v684
      %v1240 = vpop.f32.mrf.mxu0
      %v1241 = vadd.f32 %v980, %v1240
      %v1242 = vpop.f32.mrf.mxu0
      %v1243 = vpop.f32.mrf.mxu0
      %v1244 = vadd.f32 %v983, %v1243
      %v1245 = vpop.f32.mrf.mxu0
      %1246 = vmatprep.mubr.bf16.mxu0 0
      %1247 = vmatmul.mubr.bf16.gmra.mxu0 %v685
      %v1248 = vpop.f32.mrf.mxu0
      %v1249 = vadd.f32 %v988, %v1248
      %v1250 = vpop.f32.mrf.mxu0
      %v1251 = vpop.f32.mrf.mxu0
      %v1252 = vadd.f32 %v991, %v1251
      %v1253 = vpop.f32.mrf.mxu0
      %1254 = vmatprep.mubr.bf16.mxu0 0
      %1255 = vmatmul.mubr.bf16.gmra.mxu0 %v686
      %v1256 = vpop.f32.mrf.mxu0
      %v1257 = vadd.f32 %v996, %v1256
      %v1258 = vpop.f32.mrf.mxu0
      %v1259 = vpop.f32.mrf.mxu0
      %v1260 = vadd.f32 %v999, %v1259
      %v1261 = vpop.f32.mrf.mxu0
      %1262 = vmatprep.mubr.bf16.mxu0 0
      %1263 = vmatmul.mubr.bf16.gmra.mxu0 %v687
      %v1264 = vpop.f32.mrf.mxu0
      %v1265 = vadd.f32 %v1004, %v1264
      %v1266 = vpop.f32.mrf.mxu0
      %v1267 = vpop.f32.mrf.mxu0
      %v1268 = vadd.f32 %v1007, %v1267
      %v1269 = vpop.f32.mrf.mxu0
      %1270 = vmatprep.mubr.bf16.mxu0 0
      %1271 = vmatmul.mubr.bf16.gmra.mxu0 %v688
      %v1272 = vpop.f32.mrf.mxu0
      %v1273 = vadd.f32 %v1012, %v1272
      %v1274 = vpop.f32.mrf.mxu0
      %v1275 = vpop.f32.mrf.mxu0
      %v1276 = vadd.f32 %v1015, %v1275
      %v1277 = vpop.f32.mrf.mxu0
      %1278 = vmatprep.mubr.bf16.mxu0 0
      %1279 = vmatmul.mubr.bf16.gmra.mxu0 %v689
      %v1280 = vpop.f32.mrf.mxu0
      %v1281 = vadd.f32 %v1020, %v1280
      %v1282 = vpop.f32.mrf.mxu0
      %v1283 = vpop.f32.mrf.mxu0
      %v1284 = vadd.f32 %v1023, %v1283
      %v1285 = vpop.f32.mrf.mxu0
      %1286 = vmatprep.mubr.bf16.mxu0 0
      %1287 = vmatmul.mubr.bf16.gmra.mxu0 %v690
      %v1288 = vpop.f32.mrf.mxu0
      %v1289 = vadd.f32 %v1028, %v1288
      %v1290 = vpop.f32.mrf.mxu0
      %v1291 = vpop.f32.mrf.mxu0
      %v1292 = vadd.f32 %v1031, %v1291
      %v1293 = vpop.f32.mrf.mxu0
      %1294 = vmatprep.mubr.bf16.mxu0 0
      %1295 = vmatmul.mubr.bf16.gmra.mxu0 %v691
      %v1296 = vpop.f32.mrf.mxu0
      %v1297 = vadd.f32 %v1036, %v1296
      %v1298 = vpop.f32.mrf.mxu0
      %v1299 = vpop.f32.mrf.mxu0
      %v1300 = vadd.f32 %v1039, %v1299
      %v1301 = vpop.f32.mrf.mxu0
      %1302 = vmatprep.mubr.bf16.mxu0 0
      %1303 = vmatmul.mubr.bf16.gmra.mxu0 %v692
      %v1304 = vpop.f32.mrf.mxu0
      %v1305 = vadd.f32 %v1044, %v1304
      %v1306 = vpop.f32.mrf.mxu0
      %v1307 = vpop.f32.mrf.mxu0
      %v1308 = vadd.f32 %v1047, %v1307
      %v1309 = vpop.f32.mrf.mxu0
      %1310 = vmatprep.mubr.bf16.mxu0 0
      %1311 = vmatmul.mubr.bf16.gmra.mxu0 %v693
      %v1312 = vpop.f32.mrf.mxu0
      %v1313 = vadd.f32 %v1052, %v1312
      %v1314 = vpop.f32.mrf.mxu0
      %v1315 = vpop.f32.mrf.mxu0
      %v1316 = vadd.f32 %v1055, %v1315
      %v1317 = vpop.f32.mrf.mxu0
      %1318 = vmatprep.mubr.bf16.mxu0 0
      %1319 = vmatmul.mubr.bf16.gmra.mxu0 %v694
      %v1320 = vpop.f32.mrf.mxu0
      %v1321 = vadd.f32 %v1060, %v1320
      %v1322 = vpop.f32.mrf.mxu0
      %v1323 = vpop.f32.mrf.mxu0
      %v1324 = vadd.f32 %v1063, %v1323
      %v1325 = vpop.f32.mrf.mxu0
      %1326 = vmatprep.mubr.bf16.mxu0 0
      %1327 = vmatmul.mubr.bf16.gmra.mxu0 %v695
      %v1328 = vpop.f32.mrf.mxu0
      %v1329 = vadd.f32 %v1068, %v1328
      %v1330 = vpop.f32.mrf.mxu0
      %v1331 = vpop.f32.mrf.mxu0
      %v1332 = vadd.f32 %v1071, %v1331
      %v1333 = vpop.f32.mrf.mxu0
      %1334 = vmatprep.mubr.bf16.mxu0 0
      %1335 = vmatmul.mubr.bf16.gmra.mxu0 %v696
      %v1336 = vpop.f32.mrf.mxu0
      %v1337 = vadd.f32 %v1076, %v1336
      %v1338 = vpop.f32.mrf.mxu0
      %v1339 = vpop.f32.mrf.mxu0
      %v1340 = vadd.f32 %v1079, %v1339
      %v1341 = vpop.f32.mrf.mxu0
      %1342 = vmatprep.mubr.bf16.mxu0 0
      %1343 = vmatmul.mubr.bf16.gmra.mxu0 %v697
      %v1344 = vpop.f32.mrf.mxu0
      %v1345 = vadd.f32 %v1084, %v1344
      %v1346 = vpop.f32.mrf.mxu0
      %v1347 = vpop.f32.mrf.mxu0
      %v1348 = vadd.f32 %v1087, %v1347
      %v1349 = vpop.f32.mrf.mxu0
      %1350 = vmatprep.mubr.bf16.mxu0 0
      %1351 = vmatmul.mubr.bf16.gmra.mxu0 %v698
      %v1352 = vpop.f32.mrf.mxu0
      %v1353 = vadd.f32 %v1092, %v1352
      %v1354 = vpop.f32.mrf.mxu0
      %v1355 = vpop.f32.mrf.mxu0
      %v1356 = vadd.f32 %v1095, %v1355
      %v1357 = vpop.f32.mrf.mxu0
      %1358 = vmatprep.mubr.bf16.mxu0 0
      %1359 = vmatmul.mubr.bf16.gmra.mxu0 %v699
      %v1360 = vpop.f32.mrf.mxu0
      %v1361 = vadd.f32 %v1100, %v1360
      %v1362 = vpop.f32.mrf.mxu0
      %v1363 = vpop.f32.mrf.mxu0
      %v1364 = vadd.f32 %v1103, %v1363
      %v1365 = vpop.f32.mrf.mxu0
      %1366 = vmatprep.mubr.bf16.mxu0 0
      %1367 = vmatmul.mubr.bf16.gmra.mxu0 %v700
      %v1368 = vpop.f32.mrf.mxu0
      %v1369 = vadd.f32 %v1108, %v1368
      %v1370 = vpop.f32.mrf.mxu0
      %v1371 = vpop.f32.mrf.mxu0
      %v1372 = vadd.f32 %v1111, %v1371
      %v1373 = vpop.f32.mrf.mxu0
      %1374 = vmatprep.mubr.bf16.mxu0 0
      %1375 = vmatmul.mubr.bf16.gmra.mxu0 %v701
      %v1376 = vpop.f32.mrf.mxu0
      %v1377 = vadd.f32 %v1116, %v1376
      %v1378 = vpop.f32.mrf.mxu0
      %v1379 = vpop.f32.mrf.mxu0
      %v1380 = vadd.f32 %v1119, %v1379
      %v1381 = vpop.f32.mrf.mxu0
      %1382 = vmatprep.mubr.bf16.mxu0 0
      %1383 = vmatmul.mubr.bf16.gmra.mxu0 %v702
      %v1384 = vpop.f32.mrf.mxu0
      %v1385 = vadd.f32 %v1124, %v1384
      %v1386 = vpop.f32.mrf.mxu0
      %v1387 = vpop.f32.mrf.mxu0
      %v1388 = vadd.f32 %v1127, %v1387
      %v1389 = vpop.f32.mrf.mxu0
      %1390 = vdwg.mxu0
      %v1391 = vld [vmem:[#allocation2] sm:$0xe]
      %s1392 = scalar_lea.vmem %s2, 128
      %v1393 = vld [vmem:[%s1392] sm:$0xf]
      %v1394 = vld [vmem:[%s1392 + $0x4] sm:$0xf]
      %v1395 = vld [vmem:[%s1392 + $0x8] sm:$0xf]
      %v1396 = vld [vmem:[%s1392 + $0xc] sm:$0xf]
      %v1397 = vld [vmem:[%s1392 + $0x10] sm:$0xf]
      %v1398 = vld [vmem:[%s1392 + $0x14] sm:$0xf]
      %v1399 = vld [vmem:[%s1392 + $0x18] sm:$0xf]
      %v1400 = vld [vmem:[%s1392 + $0x1c] sm:$0xf]
      %v1401 = vld [vmem:[%s1392 + $0x20] sm:$0xf]
      %v1402 = vld [vmem:[%s1392 + $0x24] sm:$0xf]
      %v1403 = vld [vmem:[%s1392 + $0x28] sm:$0xf]
      %v1404 = vld [vmem:[%s1392 + $0x2c] sm:$0xf]
      %v1405 = vld [vmem:[%s1392 + $0x30] sm:$0xf]
      %v1406 = vld [vmem:[%s1392 + $0x34] sm:$0xf]
      %v1407 = vld [vmem:[%s1392 + $0x38] sm:$0xf]
      %v1408 = vld [vmem:[%s1392 + $0x3c] sm:$0xf]
      %v1410 = vunpack.c.l.b16 %v1391
      %v1411 = vpack.c.b16 %v643, %v1410
      %vm1412 = vcmask 1046528
      %v1413 = vrot.slane %v1411, 1
      %v1414 = vrot.slane %v684, 1
      %v1415 = vsel %vm1412, %v1413, %v1414
      %v1416 = vrot.slane %v685, 1
      %v1417 = vsel %vm1412, %v1414, %v1416
      %v1418 = vrot.slane %v686, 1
      %v1419 = vsel %vm1412, %v1416, %v1418
      %v1420 = vrot.slane %v687, 1
      %v1421 = vsel %vm1412, %v1418, %v1420
      %v1422 = vrot.slane %v688, 1
      %v1423 = vsel %vm1412, %v1420, %v1422
      %v1424 = vrot.slane %v689, 1
      %v1425 = vsel %vm1412, %v1422, %v1424
      %v1426 = vrot.slane %v690, 1
      %v1427 = vsel %vm1412, %v1424, %v1426
      %v1428 = vrot.slane %v691, 1
      %v1429 = vsel %vm1412, %v1426, %v1428
      %v1430 = vrot.slane %v692, 1
      %v1431 = vsel %vm1412, %v1428, %v1430
      %v1432 = vrot.slane %v693, 1
      %v1433 = vsel %vm1412, %v1430, %v1432
      %v1434 = vrot.slane %v694, 1
      %v1435 = vsel %vm1412, %v1432, %v1434
      %v1436 = vrot.slane %v695, 1
      %v1437 = vsel %vm1412, %v1434, %v1436
      %v1438 = vrot.slane %v696, 1
      %v1439 = vsel %vm1412, %v1436, %v1438
      %v1440 = vrot.slane %v697, 1
      %v1441 = vsel %vm1412, %v1438, %v1440
      %v1442 = vrot.slane %v698, 1
      %v1443 = vsel %vm1412, %v1440, %v1442
      %v1444 = vrot.slane %v699, 1
      %v1445 = vsel %vm1412, %v1442, %v1444
      %v1446 = vrot.slane %v700, 1
      %v1447 = vsel %vm1412, %v1444, %v1446
      %v1448 = vrot.slane %v701, 1
      %v1449 = vsel %vm1412, %v1446, %v1448
      %v1450 = vrot.slane %v702, 1
      %v1451 = vsel %vm1412, %v1448, %v1450
      %v1452 = vrot.slane %v703, 1
      %v1453 = vsel %vm1412, %v1450, %v1452
      %v1490 = vunpack.c.l.b16 %v1393
      %v1491 = vunpack.c.l.b16 %v1394
      %v1492 = vunpack.c.l.b16 %v1395
      %v1493 = vunpack.c.l.b16 %v1396
      %v1494 = vunpack.c.l.b16 %v1397
      %v1495 = vunpack.c.l.b16 %v1398
      %v1496 = vunpack.c.l.b16 %v1399
      %v1497 = vunpack.c.l.b16 %v1400
      %v1498 = vunpack.c.l.b16 %v1401
      %v1499 = vunpack.c.l.b16 %v1402
      %v1500 = vunpack.c.l.b16 %v1403
      %v1501 = vunpack.c.l.b16 %v1404
      %v1502 = vunpack.c.l.b16 %v1405
      %v1503 = vunpack.c.l.b16 %v1406
      %v1504 = vunpack.c.l.b16 %v1407
      %v1505 = vunpack.c.l.b16 %v1408
      %v1506 = vpack.c.b16 %v1491, %v1490
      %v1507 = vpack.c.b16 %v1493, %v1492
      %v1508 = vpack.c.b16 %v1495, %v1494
      %v1509 = vpack.c.b16 %v1497, %v1496
      %v1510 = vpack.c.b16 %v1499, %v1498
      %v1511 = vpack.c.b16 %v1501, %v1500
      %v1512 = vpack.c.b16 %v1503, %v1502
      %v1513 = vpack.c.b16 %v1505, %v1504
      %1522 = vmatprep.subr.bf16.mxu0 0
      %1523 = vmatpush1.bf16.msra.mxu0 %v1513
      %1524 = vmatprep.subr.bf16.mxu0 0
      %1525 = vmatpush1.bf16.msra.mxu0 %v1512
      %1526 = vmatprep.subr.bf16.mxu0 0
      %1527 = vmatpush1.bf16.msra.mxu0 %v1511
      %1528 = vmatprep.subr.bf16.mxu0 0
      %1529 = vmatpush1.bf16.msra.mxu0 %v1510
      %1530 = vmatprep.subr.bf16.mxu0 0
      %1531 = vmatpush1.bf16.msra.mxu0 %v1509
      %1532 = vmatprep.subr.bf16.mxu0 0
      %1533 = vmatpush1.bf16.msra.mxu0 %v1508
      %1534 = vmatprep.subr.bf16.mxu0 0
      %1535 = vmatpush1.bf16.msra.mxu0 %v1507
      %1536 = vmatprep.subr.bf16.mxu0 0
      %1537 = vmatpush1.bf16.msra.mxu0 %v1506
      %1538 = vmatprep.subr.bf16.mxu0 0
      %1539 = vmatpush2.bf16.msra.mxu0 0
      %1540 = vmatprep.subr.bf16.mxu0 0
      %1541 = vmatpush2.bf16.msra.mxu0 0
      %1542 = vmatprep.subr.bf16.mxu0 0
      %1543 = vmatpush2.bf16.msra.mxu0 0
      %1544 = vmatprep.subr.bf16.mxu0 0
      %1545 = vmatpush2.bf16.msra.mxu0 0
      %1546 = vmatprep.subr.bf16.mxu0 0
      %1547 = vmatpush2.bf16.msra.mxu0 0
      %1548 = vmatprep.subr.bf16.mxu0 0
      %1549 = vmatpush2.bf16.msra.mxu0 0
      %1550 = vmatprep.subr.bf16.mxu0 0
      %1551 = vmatpush2.bf16.msra.mxu0 0
      %1552 = vmatprep.subr.bf16.mxu0 0
      %1553 = vmatpush2.bf16.msra.mxu0 0
      %1554 = vmatprep.mubr.bf16.mxu0 0
      %1555 = vmatmul.mubr.bf16.gmra.mxu0 %v1415
      %v1556 = vpop.f32.mrf.mxu0
      %v1557 = vadd.f32 0.0, %v1556
      %v1558 = vpop.f32.mrf.mxu0
      %v1559 = vpop.f32.mrf.mxu0
      %v1560 = vadd.f32 0.0, %v1559
      %v1561 = vpop.f32.mrf.mxu0
      %1562 = vmatprep.mubr.bf16.mxu0 0
      %1563 = vmatmul.mubr.bf16.gmra.mxu0 %v1417
      %v1564 = vpop.f32.mrf.mxu0
      %v1565 = vadd.f32 0.0, %v1564
      %v1566 = vpop.f32.mrf.mxu0
      %v1567 = vpop.f32.mrf.mxu0
      %v1568 = vadd.f32 0.0, %v1567
      %v1569 = vpop.f32.mrf.mxu0
      %1570 = vmatprep.mubr.bf16.mxu0 0
      %1571 = vmatmul.mubr.bf16.gmra.mxu0 %v1419
      %v1572 = vpop.f32.mrf.mxu0
      %v1573 = vadd.f32 0.0, %v1572
      %v1574 = vpop.f32.mrf.mxu0
      %v1575 = vpop.f32.mrf.mxu0
      %v1576 = vadd.f32 0.0, %v1575
      %v1577 = vpop.f32.mrf.mxu0
      %1578 = vmatprep.mubr.bf16.mxu0 0
      %1579 = vmatmul.mubr.bf16.gmra.mxu0 %v1421
      %v1580 = vpop.f32.mrf.mxu0
      %v1581 = vadd.f32 0.0, %v1580
      %v1582 = vpop.f32.mrf.mxu0
      %v1583 = vpop.f32.mrf.mxu0
      %v1584 = vadd.f32 0.0, %v1583
      %v1585 = vpop.f32.mrf.mxu0
      %1586 = vmatprep.mubr.bf16.mxu0 0
      %1587 = vmatmul.mubr.bf16.gmra.mxu0 %v1423
      %v1588 = vpop.f32.mrf.mxu0
      %v1589 = vadd.f32 0.0, %v1588
      %v1590 = vpop.f32.mrf.mxu0
      %v1591 = vpop.f32.mrf.mxu0
      %v1592 = vadd.f32 0.0, %v1591
      %v1593 = vpop.f32.mrf.mxu0
      %1594 = vmatprep.mubr.bf16.mxu0 0
      %1595 = vmatmul.mubr.bf16.gmra.mxu0 %v1425
      %v1596 = vpop.f32.mrf.mxu0
      %v1597 = vadd.f32 0.0, %v1596
      %v1598 = vpop.f32.mrf.mxu0
      %v1599 = vpop.f32.mrf.mxu0
      %v1600 = vadd.f32 0.0, %v1599
      %v1601 = vpop.f32.mrf.mxu0
      %1602 = vmatprep.mubr.bf16.mxu0 0
      %1603 = vmatmul.mubr.bf16.gmra.mxu0 %v1427
      %v1604 = vpop.f32.mrf.mxu0
      %v1605 = vadd.f32 0.0, %v1604
      %v1606 = vpop.f32.mrf.mxu0
      %v1607 = vpop.f32.mrf.mxu0
      %v1608 = vadd.f32 0.0, %v1607
      %v1609 = vpop.f32.mrf.mxu0
      %1610 = vmatprep.mubr.bf16.mxu0 0
      %1611 = vmatmul.mubr.bf16.gmra.mxu0 %v1429
      %v1612 = vpop.f32.mrf.mxu0
      %v1613 = vadd.f32 0.0, %v1612
      %v1614 = vpop.f32.mrf.mxu0
      %v1615 = vpop.f32.mrf.mxu0
      %v1616 = vadd.f32 0.0, %v1615
      %v1617 = vpop.f32.mrf.mxu0
      %1618 = vmatprep.mubr.bf16.mxu0 0
      %1619 = vmatmul.mubr.bf16.gmra.mxu0 %v1431
      %v1620 = vpop.f32.mrf.mxu0
      %v1621 = vadd.f32 0.0, %v1620
      %v1622 = vpop.f32.mrf.mxu0
      %v1623 = vpop.f32.mrf.mxu0
      %v1624 = vadd.f32 0.0, %v1623
      %v1625 = vpop.f32.mrf.mxu0
      %1626 = vmatprep.mubr.bf16.mxu0 0
      %1627 = vmatmul.mubr.bf16.gmra.mxu0 %v1433
      %v1628 = vpop.f32.mrf.mxu0
      %v1629 = vadd.f32 0.0, %v1628
      %v1630 = vpop.f32.mrf.mxu0
      %v1631 = vpop.f32.mrf.mxu0
      %v1632 = vadd.f32 0.0, %v1631
      %v1633 = vpop.f32.mrf.mxu0
      %1634 = vmatprep.mubr.bf16.mxu0 0
      %1635 = vmatmul.mubr.bf16.gmra.mxu0 %v1435
      %v1636 = vpop.f32.mrf.mxu0
      %v1637 = vadd.f32 0.0, %v1636
      %v1638 = vpop.f32.mrf.mxu0
      %v1639 = vpop.f32.mrf.mxu0
      %v1640 = vadd.f32 0.0, %v1639
      %v1641 = vpop.f32.mrf.mxu0
      %1642 = vmatprep.mubr.bf16.mxu0 0
      %1643 = vmatmul.mubr.bf16.gmra.mxu0 %v1437
      %v1644 = vpop.f32.mrf.mxu0
      %v1645 = vadd.f32 0.0, %v1644
      %v1646 = vpop.f32.mrf.mxu0
      %v1647 = vpop.f32.mrf.mxu0
      %v1648 = vadd.f32 0.0, %v1647
      %v1649 = vpop.f32.mrf.mxu0
      %1650 = vmatprep.mubr.bf16.mxu0 0
      %1651 = vmatmul.mubr.bf16.gmra.mxu0 %v1439
      %v1652 = vpop.f32.mrf.mxu0
      %v1653 = vadd.f32 0.0, %v1652
      %v1654 = vpop.f32.mrf.mxu0
      %v1655 = vpop.f32.mrf.mxu0
      %v1656 = vadd.f32 0.0, %v1655
      %v1657 = vpop.f32.mrf.mxu0
      %1658 = vmatprep.mubr.bf16.mxu0 0
      %1659 = vmatmul.mubr.bf16.gmra.mxu0 %v1441
      %v1660 = vpop.f32.mrf.mxu0
      %v1661 = vadd.f32 0.0, %v1660
      %v1662 = vpop.f32.mrf.mxu0
      %v1663 = vpop.f32.mrf.mxu0
      %v1664 = vadd.f32 0.0, %v1663
      %v1665 = vpop.f32.mrf.mxu0
      %1666 = vmatprep.mubr.bf16.mxu0 0
      %1667 = vmatmul.mubr.bf16.gmra.mxu0 %v1443
      %v1668 = vpop.f32.mrf.mxu0
      %v1669 = vadd.f32 0.0, %v1668
      %v1670 = vpop.f32.mrf.mxu0
      %v1671 = vpop.f32.mrf.mxu0
      %v1672 = vadd.f32 0.0, %v1671
      %v1673 = vpop.f32.mrf.mxu0
      %1674 = vmatprep.mubr.bf16.mxu0 0
      %1675 = vmatmul.mubr.bf16.gmra.mxu0 %v1445
      %v1676 = vpop.f32.mrf.mxu0
      %v1677 = vadd.f32 0.0, %v1676
      %v1678 = vpop.f32.mrf.mxu0
      %v1679 = vpop.f32.mrf.mxu0
      %v1680 = vadd.f32 0.0, %v1679
      %v1681 = vpop.f32.mrf.mxu0
      %1682 = vmatprep.mubr.bf16.mxu0 0
      %1683 = vmatmul.mubr.bf16.gmra.mxu0 %v1447
      %v1684 = vpop.f32.mrf.mxu0
      %v1685 = vadd.f32 0.0, %v1684
      %v1686 = vpop.f32.mrf.mxu0
      %v1687 = vpop.f32.mrf.mxu0
      %v1688 = vadd.f32 0.0, %v1687
      %v1689 = vpop.f32.mrf.mxu0
      %1690 = vmatprep.mubr.bf16.mxu0 0
      %1691 = vmatmul.mubr.bf16.gmra.mxu0 %v1449
      %v1692 = vpop.f32.mrf.mxu0
      %v1693 = vadd.f32 0.0, %v1692
      %v1694 = vpop.f32.mrf.mxu0
      %v1695 = vpop.f32.mrf.mxu0
      %v1696 = vadd.f32 0.0, %v1695
      %v1697 = vpop.f32.mrf.mxu0
      %1698 = vmatprep.mubr.bf16.mxu0 0
      %1699 = vmatmul.mubr.bf16.gmra.mxu0 %v1451
      %v1700 = vpop.f32.mrf.mxu0
      %v1701 = vadd.f32 0.0, %v1700
      %v1702 = vpop.f32.mrf.mxu0
      %v1703 = vpop.f32.mrf.mxu0
      %v1704 = vadd.f32 0.0, %v1703
      %v1705 = vpop.f32.mrf.mxu0
      %1706 = vmatprep.mubr.bf16.mxu0 0
      %1707 = vmatmul.mubr.bf16.gmra.mxu0 %v1453
      %v1708 = vpop.f32.mrf.mxu0
      %v1709 = vadd.f32 0.0, %v1708
      %v1710 = vpop.f32.mrf.mxu0
      %v1711 = vpop.f32.mrf.mxu0
      %v1712 = vadd.f32 0.0, %v1711
      %v1713 = vpop.f32.mrf.mxu0
      %1714 = vdwg.mxu0
      %v1715 = vadd.f32 %v1233, %v1557
      %v1716 = vadd.f32 %v1236, %v1560
      %v1717 = vadd.f32 %v1241, %v1565
      %v1718 = vadd.f32 %v1244, %v1568
      %v1719 = vadd.f32 %v1249, %v1573
      %v1720 = vadd.f32 %v1252, %v1576
      %v1721 = vadd.f32 %v1257, %v1581
      %v1722 = vadd.f32 %v1260, %v1584
      %v1723 = vadd.f32 %v1265, %v1589
      %v1724 = vadd.f32 %v1268, %v1592
      %v1725 = vadd.f32 %v1273, %v1597
      %v1726 = vadd.f32 %v1276, %v1600
      %v1727 = vadd.f32 %v1281, %v1605
      %v1728 = vadd.f32 %v1284, %v1608
      %v1729 = vadd.f32 %v1289, %v1613
      %v1730 = vadd.f32 %v1292, %v1616
      %v1731 = vadd.f32 %v1297, %v1621
      %v1732 = vadd.f32 %v1300, %v1624
      %v1733 = vadd.f32 %v1305, %v1629
      %v1734 = vadd.f32 %v1308, %v1632
      %v1735 = vadd.f32 %v1313, %v1637
      %v1736 = vadd.f32 %v1316, %v1640
      %v1737 = vadd.f32 %v1321, %v1645
      %v1738 = vadd.f32 %v1324, %v1648
      %v1739 = vadd.f32 %v1329, %v1653
      %v1740 = vadd.f32 %v1332, %v1656
      %v1741 = vadd.f32 %v1337, %v1661
      %v1742 = vadd.f32 %v1340, %v1664
      %v1743 = vadd.f32 %v1345, %v1669
      %v1744 = vadd.f32 %v1348, %v1672
      %v1745 = vadd.f32 %v1353, %v1677
      %v1746 = vadd.f32 %v1356, %v1680
      %v1747 = vadd.f32 %v1361, %v1685
      %v1748 = vadd.f32 %v1364, %v1688
      %v1749 = vadd.f32 %v1369, %v1693
      %v1750 = vadd.f32 %v1372, %v1696
      %v1751 = vadd.f32 %v1377, %v1701
      %v1752 = vadd.f32 %v1380, %v1704
      %v1753 = vadd.f32 %v1385, %v1709
      %v1754 = vadd.f32 %v1388, %v1712
      %v1755 = vld [vmem:[#allocation2 + $0x10] sm:$0xf]
      %v1756 = vld [vmem:[#allocation2 + $0x14] sm:$0xf]
      %v1757 = vld [vmem:[#allocation2 + $0x18] sm:$0xf]
      %v1758 = vld [vmem:[#allocation2 + $0x1c] sm:$0xf]
      %v1759 = vld [vmem:[#allocation2 + $0x20] sm:$0xf]
      %v1760 = vld [vmem:[#allocation2 + $0x24] sm:$0xf]
      %v1761 = vld [vmem:[#allocation2 + $0x28] sm:$0xf]
      %v1762 = vld [vmem:[#allocation2 + $0x2c] sm:$0xf]
      %v1763 = vld [vmem:[#allocation2 + $0x30] sm:$0xf]
      %v1764 = vld [vmem:[#allocation2 + $0x34] sm:$0xf]
      %v1765 = vld [vmem:[#allocation2 + $0x38] sm:$0xf]
      %v1766 = vld [vmem:[#allocation2 + $0x3c] sm:$0xf]
      %v1767 = vld [vmem:[#allocation2 + $0x40] sm:$0xf]
      %v1768 = vld [vmem:[#allocation2 + $0x44] sm:$0xf]
      %v1769 = vld [vmem:[#allocation2 + $0x48] sm:$0xf]
      %v1770 = vld [vmem:[#allocation2 + $0x4c] sm:$0xf]
      %v1771 = vld [vmem:[#allocation2 + $0x50] sm:$0xf]
      %v1772 = vld [vmem:[#allocation2 + $0x54] sm:$0xf]
      %v1773 = vld [vmem:[#allocation2 + $0x58] sm:$0xf]
      %v1774 = vld [vmem:[#allocation2 + $0x5c] sm:$0xf]
      %v1775 = vld [vmem:[#allocation2 + $0x60] sm:$0xf]
      %v1776 = vld [vmem:[#allocation2 + $0x64] sm:$0xf]
      %v1777 = vld [vmem:[#allocation2 + $0x68] sm:$0xf]
      %v1778 = vld [vmem:[#allocation2 + $0x6c] sm:$0xf]
      %v1779 = vld [vmem:[#allocation2 + $0x70] sm:$0xf]
      %v1780 = vld [vmem:[#allocation2 + $0x74] sm:$0xf]
      %v1781 = vld [vmem:[#allocation2 + $0x78] sm:$0xf]
      %v1782 = vld [vmem:[#allocation2 + $0x7c] sm:$0xf]
      %v1783 = vld [vmem:[#allocation2 + $0x80] sm:$0xf]
      %v1784 = vld [vmem:[#allocation2 + $0x84] sm:$0xf]
      %v1785 = vld [vmem:[#allocation2 + $0x88] sm:$0xf]
      %v1786 = vld [vmem:[#allocation2 + $0x8c] sm:$0xf]
      %v1787 = vld [vmem:[#allocation2 + $0x90] sm:$0xf]
      %v1788 = vld [vmem:[#allocation2 + $0x94] sm:$0xf]
      %v1789 = vld [vmem:[#allocation2 + $0x98] sm:$0xf]
      %v1790 = vld [vmem:[#allocation2 + $0x9c] sm:$0xf]
      %v1791 = vld [vmem:[#allocation2 + $0xa0] sm:$0xf]
      %v1792 = vld [vmem:[#allocation2 + $0xa4] sm:$0xf]
      %v1793 = vld [vmem:[#allocation2 + $0xa8] sm:$0xf]
      %v1794 = vld [vmem:[#allocation2 + $0xac] sm:$0xf]
      %s1795 = scalar_lea.vmem %s2, 192
      %v1796 = vld [vmem:[%s1795] sm:$0xf]
      %v1797 = vld [vmem:[%s1795 + $0x4] sm:$0xf]
      %v1798 = vld [vmem:[%s1795 + $0x8] sm:$0xf]
      %v1799 = vld [vmem:[%s1795 + $0xc] sm:$0xf]
      %v1800 = vld [vmem:[%s1795 + $0x10] sm:$0xf]
      %v1801 = vld [vmem:[%s1795 + $0x14] sm:$0xf]
      %v1802 = vld [vmem:[%s1795 + $0x18] sm:$0xf]
      %v1803 = vld [vmem:[%s1795 + $0x1c] sm:$0xf]
      %v1804 = vld [vmem:[%s1795 + $0x20] sm:$0xf]
      %v1805 = vld [vmem:[%s1795 + $0x24] sm:$0xf]
      %v1806 = vld [vmem:[%s1795 + $0x28] sm:$0xf]
      %v1807 = vld [vmem:[%s1795 + $0x2c] sm:$0xf]
      %v1808 = vld [vmem:[%s1795 + $0x30] sm:$0xf]
      %v1809 = vld [vmem:[%s1795 + $0x34] sm:$0xf]
      %v1810 = vld [vmem:[%s1795 + $0x38] sm:$0xf]
      %v1811 = vld [vmem:[%s1795 + $0x3c] sm:$0xf]
      %v1852 = vunpack.c.l.b16 %v1755
      %v1853 = vunpack.c.l.b16 %v1756
      %v1854 = vunpack.c.l.b16 %v1757
      %v1855 = vunpack.c.l.b16 %v1758
      %v1856 = vunpack.c.l.b16 %v1759
      %v1857 = vunpack.c.l.b16 %v1760
      %v1858 = vunpack.c.l.b16 %v1761
      %v1859 = vunpack.c.l.b16 %v1762
      %v1860 = vunpack.c.l.b16 %v1763
      %v1861 = vunpack.c.l.b16 %v1764
      %v1862 = vunpack.c.l.b16 %v1765
      %v1863 = vunpack.c.l.b16 %v1766
      %v1864 = vunpack.c.l.b16 %v1767
      %v1865 = vunpack.c.l.b16 %v1768
      %v1866 = vunpack.c.l.b16 %v1769
      %v1867 = vunpack.c.l.b16 %v1770
      %v1868 = vunpack.c.l.b16 %v1771
      %v1869 = vunpack.c.l.b16 %v1772
      %v1870 = vunpack.c.l.b16 %v1773
      %v1871 = vunpack.c.l.b16 %v1774
      %v1872 = vunpack.c.l.b16 %v1775
      %v1873 = vunpack.c.l.b16 %v1776
      %v1874 = vunpack.c.l.b16 %v1777
      %v1875 = vunpack.c.l.b16 %v1778
      %v1876 = vunpack.c.l.b16 %v1779
      %v1877 = vunpack.c.l.b16 %v1780
      %v1878 = vunpack.c.l.b16 %v1781
      %v1879 = vunpack.c.l.b16 %v1782
      %v1880 = vunpack.c.l.b16 %v1783
      %v1881 = vunpack.c.l.b16 %v1784
      %v1882 = vunpack.c.l.b16 %v1785
      %v1883 = vunpack.c.l.b16 %v1786
      %v1884 = vunpack.c.l.b16 %v1787
      %v1885 = vunpack.c.l.b16 %v1788
      %v1886 = vunpack.c.l.b16 %v1789
      %v1887 = vunpack.c.l.b16 %v1790
      %v1888 = vunpack.c.l.b16 %v1791
      %v1889 = vunpack.c.l.b16 %v1792
      %v1890 = vunpack.c.l.b16 %v1793
      %v1891 = vunpack.c.l.b16 %v1794
      %v1892 = vpack.c.b16 %v1853, %v1852
      %v1893 = vpack.c.b16 %v1855, %v1854
      %v1894 = vpack.c.b16 %v1857, %v1856
      %v1895 = vpack.c.b16 %v1859, %v1858
      %v1896 = vpack.c.b16 %v1861, %v1860
      %v1897 = vpack.c.b16 %v1863, %v1862
      %v1898 = vpack.c.b16 %v1865, %v1864
      %v1899 = vpack.c.b16 %v1867, %v1866
      %v1900 = vpack.c.b16 %v1869, %v1868
      %v1901 = vpack.c.b16 %v1871, %v1870
      %v1902 = vpack.c.b16 %v1873, %v1872
      %v1903 = vpack.c.b16 %v1875, %v1874
      %v1904 = vpack.c.b16 %v1877, %v1876
      %v1905 = vpack.c.b16 %v1879, %v1878
      %v1906 = vpack.c.b16 %v1881, %v1880
      %v1907 = vpack.c.b16 %v1883, %v1882
      %v1908 = vpack.c.b16 %v1885, %v1884
      %v1909 = vpack.c.b16 %v1887, %v1886
      %v1910 = vpack.c.b16 %v1889, %v1888
      %v1911 = vpack.c.b16 %v1891, %v1890
      %v1948 = vunpack.c.l.b16 %v1796
      %v1949 = vunpack.c.l.b16 %v1797
      %v1950 = vunpack.c.l.b16 %v1798
      %v1951 = vunpack.c.l.b16 %v1799
      %v1952 = vunpack.c.l.b16 %v1800
      %v1953 = vunpack.c.l.b16 %v1801
      %v1954 = vunpack.c.l.b16 %v1802
      %v1955 = vunpack.c.l.b16 %v1803
      %v1956 = vunpack.c.l.b16 %v1804
      %v1957 = vunpack.c.l.b16 %v1805
      %v1958 = vunpack.c.l.b16 %v1806
      %v1959 = vunpack.c.l.b16 %v1807
      %v1960 = vunpack.c.l.b16 %v1808
      %v1961 = vunpack.c.l.b16 %v1809
      %v1962 = vunpack.c.l.b16 %v1810
      %v1963 = vunpack.c.l.b16 %v1811
      %v1964 = vpack.c.b16 %v1949, %v1948
      %v1965 = vpack.c.b16 %v1951, %v1950
      %v1966 = vpack.c.b16 %v1953, %v1952
      %v1967 = vpack.c.b16 %v1955, %v1954
      %v1968 = vpack.c.b16 %v1957, %v1956
      %v1969 = vpack.c.b16 %v1959, %v1958
      %v1970 = vpack.c.b16 %v1961, %v1960
      %v1971 = vpack.c.b16 %v1963, %v1962
      %1980 = vmatprep.subr.bf16.mxu0 0
      %1981 = vmatpush1.bf16.msra.mxu0 %v1971
      %1982 = vmatprep.subr.bf16.mxu0 0
      %1983 = vmatpush1.bf16.msra.mxu0 %v1970
      %1984 = vmatprep.subr.bf16.mxu0 0
      %1985 = vmatpush1.bf16.msra.mxu0 %v1969
      %1986 = vmatprep.subr.bf16.mxu0 0
      %1987 = vmatpush1.bf16.msra.mxu0 %v1968
      %1988 = vmatprep.subr.bf16.mxu0 0
      %1989 = vmatpush1.bf16.msra.mxu0 %v1967
      %1990 = vmatprep.subr.bf16.mxu0 0
      %1991 = vmatpush1.bf16.msra.mxu0 %v1966
      %1992 = vmatprep.subr.bf16.mxu0 0
      %1993 = vmatpush1.bf16.msra.mxu0 %v1965
      %1994 = vmatprep.subr.bf16.mxu0 0
      %1995 = vmatpush1.bf16.msra.mxu0 %v1964
      %1996 = vmatprep.subr.bf16.mxu0 0
      %1997 = vmatpush2.bf16.msra.mxu0 0
      %1998 = vmatprep.subr.bf16.mxu0 0
      %1999 = vmatpush2.bf16.msra.mxu0 0
      %2000 = vmatprep.subr.bf16.mxu0 0
      %2001 = vmatpush2.bf16.msra.mxu0 0
      %2002 = vmatprep.subr.bf16.mxu0 0
      %2003 = vmatpush2.bf16.msra.mxu0 0
      %2004 = vmatprep.subr.bf16.mxu0 0
      %2005 = vmatpush2.bf16.msra.mxu0 0
      %2006 = vmatprep.subr.bf16.mxu0 0
      %2007 = vmatpush2.bf16.msra.mxu0 0
      %2008 = vmatprep.subr.bf16.mxu0 0
      %2009 = vmatpush2.bf16.msra.mxu0 0
      %2010 = vmatprep.subr.bf16.mxu0 0
      %2011 = vmatpush2.bf16.msra.mxu0 0
      %2012 = vmatprep.mubr.bf16.mxu0 0
      %2013 = vmatmul.mubr.bf16.gmra.mxu0 %v1892
      %v2014 = vpop.f32.mrf.mxu0
      %v2015 = vadd.f32 0.0, %v2014
      %v2016 = vpop.f32.mrf.mxu0
      %v2017 = vpop.f32.mrf.mxu0
      %v2018 = vadd.f32 0.0, %v2017
      %v2019 = vpop.f32.mrf.mxu0
      %2020 = vmatprep.mubr.bf16.mxu0 0
      %2021 = vmatmul.mubr.bf16.gmra.mxu0 %v1893
      %v2022 = vpop.f32.mrf.mxu0
      %v2023 = vadd.f32 0.0, %v2022
      %v2024 = vpop.f32.mrf.mxu0
      %v2025 = vpop.f32.mrf.mxu0
      %v2026 = vadd.f32 0.0, %v2025
      %v2027 = vpop.f32.mrf.mxu0
      %2028 = vmatprep.mubr.bf16.mxu0 0
      %2029 = vmatmul.mubr.bf16.gmra.mxu0 %v1894
      %v2030 = vpop.f32.mrf.mxu0
      %v2031 = vadd.f32 0.0, %v2030
      %v2032 = vpop.f32.mrf.mxu0
      %v2033 = vpop.f32.mrf.mxu0
      %v2034 = vadd.f32 0.0, %v2033
      %v2035 = vpop.f32.mrf.mxu0
      %2036 = vmatprep.mubr.bf16.mxu0 0
      %2037 = vmatmul.mubr.bf16.gmra.mxu0 %v1895
      %v2038 = vpop.f32.mrf.mxu0
      %v2039 = vadd.f32 0.0, %v2038
      %v2040 = vpop.f32.mrf.mxu0
      %v2041 = vpop.f32.mrf.mxu0
      %v2042 = vadd.f32 0.0, %v2041
      %v2043 = vpop.f32.mrf.mxu0
      %2044 = vmatprep.mubr.bf16.mxu0 0
      %2045 = vmatmul.mubr.bf16.gmra.mxu0 %v1896
      %v2046 = vpop.f32.mrf.mxu0
      %v2047 = vadd.f32 0.0, %v2046
      %v2048 = vpop.f32.mrf.mxu0
      %v2049 = vpop.f32.mrf.mxu0
      %v2050 = vadd.f32 0.0, %v2049
      %v2051 = vpop.f32.mrf.mxu0
      %2052 = vmatprep.mubr.bf16.mxu0 0
      %2053 = vmatmul.mubr.bf16.gmra.mxu0 %v1897
      %v2054 = vpop.f32.mrf.mxu0
      %v2055 = vadd.f32 0.0, %v2054
      %v2056 = vpop.f32.mrf.mxu0
      %v2057 = vpop.f32.mrf.mxu0
      %v2058 = vadd.f32 0.0, %v2057
      %v2059 = vpop.f32.mrf.mxu0
      %2060 = vmatprep.mubr.bf16.mxu0 0
      %2061 = vmatmul.mubr.bf16.gmra.mxu0 %v1898
      %v2062 = vpop.f32.mrf.mxu0
      %v2063 = vadd.f32 0.0, %v2062
      %v2064 = vpop.f32.mrf.mxu0
      %v2065 = vpop.f32.mrf.mxu0
      %v2066 = vadd.f32 0.0, %v2065
      %v2067 = vpop.f32.mrf.mxu0
      %2068 = vmatprep.mubr.bf16.mxu0 0
      %2069 = vmatmul.mubr.bf16.gmra.mxu0 %v1899
      %v2070 = vpop.f32.mrf.mxu0
      %v2071 = vadd.f32 0.0, %v2070
      %v2072 = vpop.f32.mrf.mxu0
      %v2073 = vpop.f32.mrf.mxu0
      %v2074 = vadd.f32 0.0, %v2073
      %v2075 = vpop.f32.mrf.mxu0
      %2076 = vmatprep.mubr.bf16.mxu0 0
      %2077 = vmatmul.mubr.bf16.gmra.mxu0 %v1900
      %v2078 = vpop.f32.mrf.mxu0
      %v2079 = vadd.f32 0.0, %v2078
      %v2080 = vpop.f32.mrf.mxu0
      %v2081 = vpop.f32.mrf.mxu0
      %v2082 = vadd.f32 0.0, %v2081
      %v2083 = vpop.f32.mrf.mxu0
      %2084 = vmatprep.mubr.bf16.mxu0 0
      %2085 = vmatmul.mubr.bf16.gmra.mxu0 %v1901
      %v2086 = vpop.f32.mrf.mxu0
      %v2087 = vadd.f32 0.0, %v2086
      %v2088 = vpop.f32.mrf.mxu0
      %v2089 = vpop.f32.mrf.mxu0
      %v2090 = vadd.f32 0.0, %v2089
      %v2091 = vpop.f32.mrf.mxu0
      %2092 = vmatprep.mubr.bf16.mxu0 0
      %2093 = vmatmul.mubr.bf16.gmra.mxu0 %v1902
      %v2094 = vpop.f32.mrf.mxu0
      %v2095 = vadd.f32 0.0, %v2094
      %v2096 = vpop.f32.mrf.mxu0
      %v2097 = vpop.f32.mrf.mxu0
      %v2098 = vadd.f32 0.0, %v2097
      %v2099 = vpop.f32.mrf.mxu0
      %2100 = vmatprep.mubr.bf16.mxu0 0
      %2101 = vmatmul.mubr.bf16.gmra.mxu0 %v1903
      %v2102 = vpop.f32.mrf.mxu0
      %v2103 = vadd.f32 0.0, %v2102
      %v2104 = vpop.f32.mrf.mxu0
      %v2105 = vpop.f32.mrf.mxu0
      %v2106 = vadd.f32 0.0, %v2105
      %v2107 = vpop.f32.mrf.mxu0
      %2108 = vmatprep.mubr.bf16.mxu0 0
      %2109 = vmatmul.mubr.bf16.gmra.mxu0 %v1904
      %v2110 = vpop.f32.mrf.mxu0
      %v2111 = vadd.f32 0.0, %v2110
      %v2112 = vpop.f32.mrf.mxu0
      %v2113 = vpop.f32.mrf.mxu0
      %v2114 = vadd.f32 0.0, %v2113
      %v2115 = vpop.f32.mrf.mxu0
      %2116 = vmatprep.mubr.bf16.mxu0 0
      %2117 = vmatmul.mubr.bf16.gmra.mxu0 %v1905
      %v2118 = vpop.f32.mrf.mxu0
      %v2119 = vadd.f32 0.0, %v2118
      %v2120 = vpop.f32.mrf.mxu0
      %v2121 = vpop.f32.mrf.mxu0
      %v2122 = vadd.f32 0.0, %v2121
      %v2123 = vpop.f32.mrf.mxu0
      %2124 = vmatprep.mubr.bf16.mxu0 0
      %2125 = vmatmul.mubr.bf16.gmra.mxu0 %v1906
      %v2126 = vpop.f32.mrf.mxu0
      %v2127 = vadd.f32 0.0, %v2126
      %v2128 = vpop.f32.mrf.mxu0
      %v2129 = vpop.f32.mrf.mxu0
      %v2130 = vadd.f32 0.0, %v2129
      %v2131 = vpop.f32.mrf.mxu0
      %2132 = vmatprep.mubr.bf16.mxu0 0
      %2133 = vmatmul.mubr.bf16.gmra.mxu0 %v1907
      %v2134 = vpop.f32.mrf.mxu0
      %v2135 = vadd.f32 0.0, %v2134
      %v2136 = vpop.f32.mrf.mxu0
      %v2137 = vpop.f32.mrf.mxu0
      %v2138 = vadd.f32 0.0, %v2137
      %v2139 = vpop.f32.mrf.mxu0
      %2140 = vmatprep.mubr.bf16.mxu0 0
      %2141 = vmatmul.mubr.bf16.gmra.mxu0 %v1908
      %v2142 = vpop.f32.mrf.mxu0
      %v2143 = vadd.f32 0.0, %v2142
      %v2144 = vpop.f32.mrf.mxu0
      %v2145 = vpop.f32.mrf.mxu0
      %v2146 = vadd.f32 0.0, %v2145
      %v2147 = vpop.f32.mrf.mxu0
      %2148 = vmatprep.mubr.bf16.mxu0 0
      %2149 = vmatmul.mubr.bf16.gmra.mxu0 %v1909
      %v2150 = vpop.f32.mrf.mxu0
      %v2151 = vadd.f32 0.0, %v2150
      %v2152 = vpop.f32.mrf.mxu0
      %v2153 = vpop.f32.mrf.mxu0
      %v2154 = vadd.f32 0.0, %v2153
      %v2155 = vpop.f32.mrf.mxu0
      %2156 = vmatprep.mubr.bf16.mxu0 0
      %2157 = vmatmul.mubr.bf16.gmra.mxu0 %v1910
      %v2158 = vpop.f32.mrf.mxu0
      %v2159 = vadd.f32 0.0, %v2158
      %v2160 = vpop.f32.mrf.mxu0
      %v2161 = vpop.f32.mrf.mxu0
      %v2162 = vadd.f32 0.0, %v2161
      %v2163 = vpop.f32.mrf.mxu0
      %2164 = vmatprep.mubr.bf16.mxu0 0
      %2165 = vmatmul.mubr.bf16.gmra.mxu0 %v1911
      %v2166 = vpop.f32.mrf.mxu0
      %v2167 = vadd.f32 0.0, %v2166
      %v2168 = vpop.f32.mrf.mxu0
      %v2169 = vpop.f32.mrf.mxu0
      %v2170 = vadd.f32 0.0, %v2169
      %v2171 = vpop.f32.mrf.mxu0
      %2172 = vdwg.mxu0
      %v2173 = vadd.f32 %v1715, %v2015
      %v2174 = vadd.f32 %v1716, %v2018
      %v2175 = vadd.f32 %v1717, %v2023
      %v2176 = vadd.f32 %v1718, %v2026
      %v2177 = vadd.f32 %v1719, %v2031
      %v2178 = vadd.f32 %v1720, %v2034
      %v2179 = vadd.f32 %v1721, %v2039
      %v2180 = vadd.f32 %v1722, %v2042
      %v2181 = vadd.f32 %v1723, %v2047
      %v2182 = vadd.f32 %v1724, %v2050
      %v2183 = vadd.f32 %v1725, %v2055
      %v2184 = vadd.f32 %v1726, %v2058
      %v2185 = vadd.f32 %v1727, %v2063
      %v2186 = vadd.f32 %v1728, %v2066
      %v2187 = vadd.f32 %v1729, %v2071
      %v2188 = vadd.f32 %v1730, %v2074
      %v2189 = vadd.f32 %v1731, %v2079
      %v2190 = vadd.f32 %v1732, %v2082
      %v2191 = vadd.f32 %v1733, %v2087
      %v2192 = vadd.f32 %v1734, %v2090
      %v2193 = vadd.f32 %v1735, %v2095
      %v2194 = vadd.f32 %v1736, %v2098
      %v2195 = vadd.f32 %v1737, %v2103
      %v2196 = vadd.f32 %v1738, %v2106
      %v2197 = vadd.f32 %v1739, %v2111
      %v2198 = vadd.f32 %v1740, %v2114
      %v2199 = vadd.f32 %v1741, %v2119
      %v2200 = vadd.f32 %v1742, %v2122
      %v2201 = vadd.f32 %v1743, %v2127
      %v2202 = vadd.f32 %v1744, %v2130
      %v2203 = vadd.f32 %v1745, %v2135
      %v2204 = vadd.f32 %v1746, %v2138
      %v2205 = vadd.f32 %v1747, %v2143
      %v2206 = vadd.f32 %v1748, %v2146
      %v2207 = vadd.f32 %v1749, %v2151
      %v2208 = vadd.f32 %v1750, %v2154
      %v2209 = vadd.f32 %v1751, %v2159
      %v2210 = vadd.f32 %v1752, %v2162
      %v2211 = vadd.f32 %v1753, %v2167
      %v2212 = vadd.f32 %v1754, %v2170
      %v2213 = vld [vmem:[#allocation2 + $0x10] sm:$0xf]
      %v2214 = vld [vmem:[#allocation2 + $0x14] sm:$0xf]
      %v2215 = vld [vmem:[#allocation2 + $0x18] sm:$0xf]
      %v2216 = vld [vmem:[#allocation2 + $0x1c] sm:$0xf]
      %v2217 = vld [vmem:[#allocation2 + $0x20] sm:$0xf]
      %v2218 = vld [vmem:[#allocation2 + $0x24] sm:$0xf]
      %v2219 = vld [vmem:[#allocation2 + $0x28] sm:$0xf]
      %v2220 = vld [vmem:[#allocation2 + $0x2c] sm:$0xf]
      %v2221 = vld [vmem:[#allocation2 + $0x30] sm:$0xf]
      %v2222 = vld [vmem:[#allocation2 + $0x34] sm:$0xf]
      %v2223 = vld [vmem:[#allocation2 + $0x38] sm:$0xf]
      %v2224 = vld [vmem:[#allocation2 + $0x3c] sm:$0xf]
      %v2225 = vld [vmem:[#allocation2 + $0x40] sm:$0xf]
      %v2226 = vld [vmem:[#allocation2 + $0x44] sm:$0xf]
      %v2227 = vld [vmem:[#allocation2 + $0x48] sm:$0xf]
      %v2228 = vld [vmem:[#allocation2 + $0x4c] sm:$0xf]
      %v2229 = vld [vmem:[#allocation2 + $0x50] sm:$0xf]
      %v2230 = vld [vmem:[#allocation2 + $0x54] sm:$0xf]
      %v2231 = vld [vmem:[#allocation2 + $0x58] sm:$0xf]
      %v2232 = vld [vmem:[#allocation2 + $0x5c] sm:$0xf]
      %v2233 = vld [vmem:[#allocation2 + $0x60] sm:$0xf]
      %v2234 = vld [vmem:[#allocation2 + $0x64] sm:$0xf]
      %v2235 = vld [vmem:[#allocation2 + $0x68] sm:$0xf]
      %v2236 = vld [vmem:[#allocation2 + $0x6c] sm:$0xf]
      %v2237 = vld [vmem:[#allocation2 + $0x70] sm:$0xf]
      %v2238 = vld [vmem:[#allocation2 + $0x74] sm:$0xf]
      %v2239 = vld [vmem:[#allocation2 + $0x78] sm:$0xf]
      %v2240 = vld [vmem:[#allocation2 + $0x7c] sm:$0xf]
      %v2241 = vld [vmem:[#allocation2 + $0x80] sm:$0xf]
      %v2242 = vld [vmem:[#allocation2 + $0x84] sm:$0xf]
      %v2243 = vld [vmem:[#allocation2 + $0x88] sm:$0xf]
      %v2244 = vld [vmem:[#allocation2 + $0x8c] sm:$0xf]
      %v2245 = vld [vmem:[#allocation2 + $0x90] sm:$0xf]
      %v2246 = vld [vmem:[#allocation2 + $0x94] sm:$0xf]
      %v2247 = vld [vmem:[#allocation2 + $0x98] sm:$0xf]
      %v2248 = vld [vmem:[#allocation2 + $0x9c] sm:$0xf]
      %v2249 = vld [vmem:[#allocation2 + $0xa0] sm:$0xf]
      %v2250 = vld [vmem:[#allocation2 + $0xa4] sm:$0xf]
      %v2251 = vld [vmem:[#allocation2 + $0xa8] sm:$0xf]
      %v2252 = vld [vmem:[#allocation2 + $0xac] sm:$0xf]
      %v2253 = vld [vmem:[#allocation2 + $0xb0] sm:$0x1]
      %s2254 = scalar_lea.vmem %s2, 256
      %v2255 = vld [vmem:[%s2254] sm:$0xf]
      %v2256 = vld [vmem:[%s2254 + $0x4] sm:$0xf]
      %v2257 = vld [vmem:[%s2254 + $0x8] sm:$0xf]
      %v2258 = vld [vmem:[%s2254 + $0xc] sm:$0xf]
      %v2259 = vld [vmem:[%s2254 + $0x10] sm:$0xf]
      %v2260 = vld [vmem:[%s2254 + $0x14] sm:$0xf]
      %v2261 = vld [vmem:[%s2254 + $0x18] sm:$0xf]
      %v2262 = vld [vmem:[%s2254 + $0x1c] sm:$0xf]
      %v2263 = vld [vmem:[%s2254 + $0x20] sm:$0xf]
      %v2264 = vld [vmem:[%s2254 + $0x24] sm:$0xf]
      %v2265 = vld [vmem:[%s2254 + $0x28] sm:$0xf]
      %v2266 = vld [vmem:[%s2254 + $0x2c] sm:$0xf]
      %v2267 = vld [vmem:[%s2254 + $0x30] sm:$0xf]
      %v2268 = vld [vmem:[%s2254 + $0x34] sm:$0xf]
      %v2269 = vld [vmem:[%s2254 + $0x38] sm:$0xf]
      %v2270 = vld [vmem:[%s2254 + $0x3c] sm:$0xf]
      %v2312 = vunpack.c.l.b16 %v2213
      %v2313 = vunpack.c.l.b16 %v2214
      %v2314 = vunpack.c.l.b16 %v2215
      %v2315 = vunpack.c.l.b16 %v2216
      %v2316 = vunpack.c.l.b16 %v2217
      %v2317 = vunpack.c.l.b16 %v2218
      %v2318 = vunpack.c.l.b16 %v2219
      %v2319 = vunpack.c.l.b16 %v2220
      %v2320 = vunpack.c.l.b16 %v2221
      %v2321 = vunpack.c.l.b16 %v2222
      %v2322 = vunpack.c.l.b16 %v2223
      %v2323 = vunpack.c.l.b16 %v2224
      %v2324 = vunpack.c.l.b16 %v2225
      %v2325 = vunpack.c.l.b16 %v2226
      %v2326 = vunpack.c.l.b16 %v2227
      %v2327 = vunpack.c.l.b16 %v2228
      %v2328 = vunpack.c.l.b16 %v2229
      %v2329 = vunpack.c.l.b16 %v2230
      %v2330 = vunpack.c.l.b16 %v2231
      %v2331 = vunpack.c.l.b16 %v2232
      %v2332 = vunpack.c.l.b16 %v2233
      %v2333 = vunpack.c.l.b16 %v2234
      %v2334 = vunpack.c.l.b16 %v2235
      %v2335 = vunpack.c.l.b16 %v2236
      %v2336 = vunpack.c.l.b16 %v2237
      %v2337 = vunpack.c.l.b16 %v2238
      %v2338 = vunpack.c.l.b16 %v2239
      %v2339 = vunpack.c.l.b16 %v2240
      %v2340 = vunpack.c.l.b16 %v2241
      %v2341 = vunpack.c.l.b16 %v2242
      %v2342 = vunpack.c.l.b16 %v2243
      %v2343 = vunpack.c.l.b16 %v2244
      %v2344 = vunpack.c.l.b16 %v2245
      %v2345 = vunpack.c.l.b16 %v2246
      %v2346 = vunpack.c.l.b16 %v2247
      %v2347 = vunpack.c.l.b16 %v2248
      %v2348 = vunpack.c.l.b16 %v2249
      %v2349 = vunpack.c.l.b16 %v2250
      %v2350 = vunpack.c.l.b16 %v2251
      %v2351 = vunpack.c.l.b16 %v2252
      %v2352 = vunpack.c.l.b16 %v2253
      %v2353 = vpack.c.b16 %v2313, %v2312
      %v2354 = vpack.c.b16 %v2315, %v2314
      %v2355 = vpack.c.b16 %v2317, %v2316
      %v2356 = vpack.c.b16 %v2319, %v2318
      %v2357 = vpack.c.b16 %v2321, %v2320
      %v2358 = vpack.c.b16 %v2323, %v2322
      %v2359 = vpack.c.b16 %v2325, %v2324
      %v2360 = vpack.c.b16 %v2327, %v2326
      %v2361 = vpack.c.b16 %v2329, %v2328
      %v2362 = vpack.c.b16 %v2331, %v2330
      %v2363 = vpack.c.b16 %v2333, %v2332
      %v2364 = vpack.c.b16 %v2335, %v2334
      %v2365 = vpack.c.b16 %v2337, %v2336
      %v2366 = vpack.c.b16 %v2339, %v2338
      %v2367 = vpack.c.b16 %v2341, %v2340
      %v2368 = vpack.c.b16 %v2343, %v2342
      %v2369 = vpack.c.b16 %v2345, %v2344
      %v2370 = vpack.c.b16 %v2347, %v2346
      %v2371 = vpack.c.b16 %v2349, %v2348
      %v2372 = vpack.c.b16 %v2351, %v2350
      %v2373 = vpack.c.b16 %v2352, %v2352
      %v2375 = vshrl.u32 %v2353, 16
      %v2377 = vshll.u32 %v2353, 16
      %v2379 = vrot.slane %v2377, 1
      %v2380 = vor.u32 %v2375, %v2379
      %v2382 = vshll.u32 %v2354, 16
      %v2384 = vrot.slane %v2382, 1
      %v2385 = vsel %vm704, %v2380, %v2384
      %v2386 = vshrl.u32 %v2354, 16
      %v2388 = vor.u32 %v2386, %v2384
      %v2390 = vshll.u32 %v2355, 16
      %v2392 = vrot.slane %v2390, 1
      %v2393 = vsel %vm704, %v2388, %v2392
      %v2394 = vshrl.u32 %v2355, 16
      %v2396 = vor.u32 %v2394, %v2392
      %v2398 = vshll.u32 %v2356, 16
      %v2400 = vrot.slane %v2398, 1
      %v2401 = vsel %vm704, %v2396, %v2400
      %v2402 = vshrl.u32 %v2356, 16
      %v2404 = vor.u32 %v2402, %v2400
      %v2406 = vshll.u32 %v2357, 16
      %v2408 = vrot.slane %v2406, 1
      %v2409 = vsel %vm704, %v2404, %v2408
      %v2410 = vshrl.u32 %v2357, 16
      %v2412 = vor.u32 %v2410, %v2408
      %v2414 = vshll.u32 %v2358, 16
      %v2416 = vrot.slane %v2414, 1
      %v2417 = vsel %vm704, %v2412, %v2416
      %v2418 = vshrl.u32 %v2358, 16
      %v2420 = vor.u32 %v2418, %v2416
      %v2422 = vshll.u32 %v2359, 16
      %v2424 = vrot.slane %v2422, 1
      %v2425 = vsel %vm704, %v2420, %v2424
      %v2426 = vshrl.u32 %v2359, 16
      %v2428 = vor.u32 %v2426, %v2424
      %v2430 = vshll.u32 %v2360, 16
      %v2432 = vrot.slane %v2430, 1
      %v2433 = vsel %vm704, %v2428, %v2432
      %v2434 = vshrl.u32 %v2360, 16
      %v2436 = vor.u32 %v2434, %v2432
      %v2438 = vshll.u32 %v2361, 16
      %v2440 = vrot.slane %v2438, 1
      %v2441 = vsel %vm704, %v2436, %v2440
      %v2442 = vshrl.u32 %v2361, 16
      %v2444 = vor.u32 %v2442, %v2440
      %v2446 = vshll.u32 %v2362, 16
      %v2448 = vrot.slane %v2446, 1
      %v2449 = vsel %vm704, %v2444, %v2448
      %v2450 = vshrl.u32 %v2362, 16
      %v2452 = vor.u32 %v2450, %v2448
      %v2454 = vshll.u32 %v2363, 16
      %v2456 = vrot.slane %v2454, 1
      %v2457 = vsel %vm704, %v2452, %v2456
      %v2458 = vshrl.u32 %v2363, 16
      %v2460 = vor.u32 %v2458, %v2456
      %v2462 = vshll.u32 %v2364, 16
      %v2464 = vrot.slane %v2462, 1
      %v2465 = vsel %vm704, %v2460, %v2464
      %v2466 = vshrl.u32 %v2364, 16
      %v2468 = vor.u32 %v2466, %v2464
      %v2470 = vshll.u32 %v2365, 16
      %v2472 = vrot.slane %v2470, 1
      %v2473 = vsel %vm704, %v2468, %v2472
      %v2474 = vshrl.u32 %v2365, 16
      %v2476 = vor.u32 %v2474, %v2472
      %v2478 = vshll.u32 %v2366, 16
      %v2480 = vrot.slane %v2478, 1
      %v2481 = vsel %vm704, %v2476, %v2480
      %v2482 = vshrl.u32 %v2366, 16
      %v2484 = vor.u32 %v2482, %v2480
      %v2486 = vshll.u32 %v2367, 16
      %v2488 = vrot.slane %v2486, 1
      %v2489 = vsel %vm704, %v2484, %v2488
      %v2490 = vshrl.u32 %v2367, 16
      %v2492 = vor.u32 %v2490, %v2488
      %v2494 = vshll.u32 %v2368, 16
      %v2496 = vrot.slane %v2494, 1
      %v2497 = vsel %vm704, %v2492, %v2496
      %v2498 = vshrl.u32 %v2368, 16
      %v2500 = vor.u32 %v2498, %v2496
      %v2502 = vshll.u32 %v2369, 16
      %v2504 = vrot.slane %v2502, 1
      %v2505 = vsel %vm704, %v2500, %v2504
      %v2506 = vshrl.u32 %v2369, 16
      %v2508 = vor.u32 %v2506, %v2504
      %v2510 = vshll.u32 %v2370, 16
      %v2512 = vrot.slane %v2510, 1
      %v2513 = vsel %vm704, %v2508, %v2512
      %v2514 = vshrl.u32 %v2370, 16
      %v2516 = vor.u32 %v2514, %v2512
      %v2518 = vshll.u32 %v2371, 16
      %v2520 = vrot.slane %v2518, 1
      %v2521 = vsel %vm704, %v2516, %v2520
      %v2522 = vshrl.u32 %v2371, 16
      %v2524 = vor.u32 %v2522, %v2520
      %v2526 = vshll.u32 %v2372, 16
      %v2528 = vrot.slane %v2526, 1
      %v2529 = vsel %vm704, %v2524, %v2528
      %v2530 = vshrl.u32 %v2372, 16
      %v2532 = vor.u32 %v2530, %v2528
      %v2534 = vshll.u32 %v2373, 16
      %v2536 = vrot.slane %v2534, 1
      %v2537 = vsel %vm704, %v2532, %v2536
      %v2574 = vunpack.c.l.b16 %v2255
      %v2575 = vunpack.c.l.b16 %v2256
      %v2576 = vunpack.c.l.b16 %v2257
      %v2577 = vunpack.c.l.b16 %v2258
      %v2578 = vunpack.c.l.b16 %v2259
      %v2579 = vunpack.c.l.b16 %v2260
      %v2580 = vunpack.c.l.b16 %v2261
      %v2581 = vunpack.c.l.b16 %v2262
      %v2582 = vunpack.c.l.b16 %v2263
      %v2583 = vunpack.c.l.b16 %v2264
      %v2584 = vunpack.c.l.b16 %v2265
      %v2585 = vunpack.c.l.b16 %v2266
      %v2586 = vunpack.c.l.b16 %v2267
      %v2587 = vunpack.c.l.b16 %v2268
      %v2588 = vunpack.c.l.b16 %v2269
      %v2589 = vunpack.c.l.b16 %v2270
      %v2590 = vpack.c.b16 %v2575, %v2574
      %v2591 = vpack.c.b16 %v2577, %v2576
      %v2592 = vpack.c.b16 %v2579, %v2578
      %v2593 = vpack.c.b16 %v2581, %v2580
      %v2594 = vpack.c.b16 %v2583, %v2582
      %v2595 = vpack.c.b16 %v2585, %v2584
      %v2596 = vpack.c.b16 %v2587, %v2586
      %v2597 = vpack.c.b16 %v2589, %v2588
      %2606 = vmatprep.subr.bf16.mxu0 0
      %2607 = vmatpush1.bf16.msra.mxu0 %v2597
      %2608 = vmatprep.subr.bf16.mxu0 0
      %2609 = vmatpush1.bf16.msra.mxu0 %v2596
      %2610 = vmatprep.subr.bf16.mxu0 0
      %2611 = vmatpush1.bf16.msra.mxu0 %v2595
      %2612 = vmatprep.subr.bf16.mxu0 0
      %2613 = vmatpush1.bf16.msra.mxu0 %v2594
      %2614 = vmatprep.subr.bf16.mxu0 0
      %2615 = vmatpush1.bf16.msra.mxu0 %v2593
      %2616 = vmatprep.subr.bf16.mxu0 0
      %2617 = vmatpush1.bf16.msra.mxu0 %v2592
      %2618 = vmatprep.subr.bf16.mxu0 0
      %2619 = vmatpush1.bf16.msra.mxu0 %v2591
      %2620 = vmatprep.subr.bf16.mxu0 0
      %2621 = vmatpush1.bf16.msra.mxu0 %v2590
      %2622 = vmatprep.subr.bf16.mxu0 0
      %2623 = vmatpush2.bf16.msra.mxu0 0
      %2624 = vmatprep.subr.bf16.mxu0 0
      %2625 = vmatpush2.bf16.msra.mxu0 0
      %2626 = vmatprep.subr.bf16.mxu0 0
      %2627 = vmatpush2.bf16.msra.mxu0 0
      %2628 = vmatprep.subr.bf16.mxu0 0
      %2629 = vmatpush2.bf16.msra.mxu0 0
      %2630 = vmatprep.subr.bf16.mxu0 0
      %2631 = vmatpush2.bf16.msra.mxu0 0
      %2632 = vmatprep.subr.bf16.mxu0 0
      %2633 = vmatpush2.bf16.msra.mxu0 0
      %2634 = vmatprep.subr.bf16.mxu0 0
      %2635 = vmatpush2.bf16.msra.mxu0 0
      %2636 = vmatprep.subr.bf16.mxu0 0
      %2637 = vmatpush2.bf16.msra.mxu0 0
      %2638 = vmatprep.mubr.bf16.mxu0 0
      %2639 = vmatmul.mubr.bf16.gmra.mxu0 %v2385
      %v2640 = vpop.f32.mrf.mxu0
      %v2641 = vadd.f32 0.0, %v2640
      %v2642 = vpop.f32.mrf.mxu0
      %v2643 = vpop.f32.mrf.mxu0
      %v2644 = vadd.f32 0.0, %v2643
      %v2645 = vpop.f32.mrf.mxu0
      %2646 = vmatprep.mubr.bf16.mxu0 0
      %2647 = vmatmul.mubr.bf16.gmra.mxu0 %v2393
      %v2648 = vpop.f32.mrf.mxu0
      %v2649 = vadd.f32 0.0, %v2648
      %v2650 = vpop.f32.mrf.mxu0
      %v2651 = vpop.f32.mrf.mxu0
      %v2652 = vadd.f32 0.0, %v2651
      %v2653 = vpop.f32.mrf.mxu0
      %2654 = vmatprep.mubr.bf16.mxu0 0
      %2655 = vmatmul.mubr.bf16.gmra.mxu0 %v2401
      %v2656 = vpop.f32.mrf.mxu0
      %v2657 = vadd.f32 0.0, %v2656
      %v2658 = vpop.f32.mrf.mxu0
      %v2659 = vpop.f32.mrf.mxu0
      %v2660 = vadd.f32 0.0, %v2659
      %v2661 = vpop.f32.mrf.mxu0
      %2662 = vmatprep.mubr.bf16.mxu0 0
      %2663 = vmatmul.mubr.bf16.gmra.mxu0 %v2409
      %v2664 = vpop.f32.mrf.mxu0
      %v2665 = vadd.f32 0.0, %v2664
      %v2666 = vpop.f32.mrf.mxu0
      %v2667 = vpop.f32.mrf.mxu0
      %v2668 = vadd.f32 0.0, %v2667
      %v2669 = vpop.f32.mrf.mxu0
      %2670 = vmatprep.mubr.bf16.mxu0 0
      %2671 = vmatmul.mubr.bf16.gmra.mxu0 %v2417
      %v2672 = vpop.f32.mrf.mxu0
      %v2673 = vadd.f32 0.0, %v2672
      %v2674 = vpop.f32.mrf.mxu0
      %v2675 = vpop.f32.mrf.mxu0
      %v2676 = vadd.f32 0.0, %v2675
      %v2677 = vpop.f32.mrf.mxu0
      %2678 = vmatprep.mubr.bf16.mxu0 0
      %2679 = vmatmul.mubr.bf16.gmra.mxu0 %v2425
      %v2680 = vpop.f32.mrf.mxu0
      %v2681 = vadd.f32 0.0, %v2680
      %v2682 = vpop.f32.mrf.mxu0
      %v2683 = vpop.f32.mrf.mxu0
      %v2684 = vadd.f32 0.0, %v2683
      %v2685 = vpop.f32.mrf.mxu0
      %2686 = vmatprep.mubr.bf16.mxu0 0
      %2687 = vmatmul.mubr.bf16.gmra.mxu0 %v2433
      %v2688 = vpop.f32.mrf.mxu0
      %v2689 = vadd.f32 0.0, %v2688
      %v2690 = vpop.f32.mrf.mxu0
      %v2691 = vpop.f32.mrf.mxu0
      %v2692 = vadd.f32 0.0, %v2691
      %v2693 = vpop.f32.mrf.mxu0
      %2694 = vmatprep.mubr.bf16.mxu0 0
      %2695 = vmatmul.mubr.bf16.gmra.mxu0 %v2441
      %v2696 = vpop.f32.mrf.mxu0
      %v2697 = vadd.f32 0.0, %v2696
      %v2698 = vpop.f32.mrf.mxu0
      %v2699 = vpop.f32.mrf.mxu0
      %v2700 = vadd.f32 0.0, %v2699
      %v2701 = vpop.f32.mrf.mxu0
      %2702 = vmatprep.mubr.bf16.mxu0 0
      %2703 = vmatmul.mubr.bf16.gmra.mxu0 %v2449
      %v2704 = vpop.f32.mrf.mxu0
      %v2705 = vadd.f32 0.0, %v2704
      %v2706 = vpop.f32.mrf.mxu0
      %v2707 = vpop.f32.mrf.mxu0
      %v2708 = vadd.f32 0.0, %v2707
      %v2709 = vpop.f32.mrf.mxu0
      %2710 = vmatprep.mubr.bf16.mxu0 0
      %2711 = vmatmul.mubr.bf16.gmra.mxu0 %v2457
      %v2712 = vpop.f32.mrf.mxu0
      %v2713 = vadd.f32 0.0, %v2712
      %v2714 = vpop.f32.mrf.mxu0
      %v2715 = vpop.f32.mrf.mxu0
      %v2716 = vadd.f32 0.0, %v2715
      %v2717 = vpop.f32.mrf.mxu0
      %2718 = vmatprep.mubr.bf16.mxu0 0
      %2719 = vmatmul.mubr.bf16.gmra.mxu0 %v2465
      %v2720 = vpop.f32.mrf.mxu0
      %v2721 = vadd.f32 0.0, %v2720
      %v2722 = vpop.f32.mrf.mxu0
      %v2723 = vpop.f32.mrf.mxu0
      %v2724 = vadd.f32 0.0, %v2723
      %v2725 = vpop.f32.mrf.mxu0
      %2726 = vmatprep.mubr.bf16.mxu0 0
      %2727 = vmatmul.mubr.bf16.gmra.mxu0 %v2473
      %v2728 = vpop.f32.mrf.mxu0
      %v2729 = vadd.f32 0.0, %v2728
      %v2730 = vpop.f32.mrf.mxu0
      %v2731 = vpop.f32.mrf.mxu0
      %v2732 = vadd.f32 0.0, %v2731
      %v2733 = vpop.f32.mrf.mxu0
      %2734 = vmatprep.mubr.bf16.mxu0 0
      %2735 = vmatmul.mubr.bf16.gmra.mxu0 %v2481
      %v2736 = vpop.f32.mrf.mxu0
      %v2737 = vadd.f32 0.0, %v2736
      %v2738 = vpop.f32.mrf.mxu0
      %v2739 = vpop.f32.mrf.mxu0
      %v2740 = vadd.f32 0.0, %v2739
      %v2741 = vpop.f32.mrf.mxu0
      %2742 = vmatprep.mubr.bf16.mxu0 0
      %2743 = vmatmul.mubr.bf16.gmra.mxu0 %v2489
      %v2744 = vpop.f32.mrf.mxu0
      %v2745 = vadd.f32 0.0, %v2744
      %v2746 = vpop.f32.mrf.mxu0
      %v2747 = vpop.f32.mrf.mxu0
      %v2748 = vadd.f32 0.0, %v2747
      %v2749 = vpop.f32.mrf.mxu0
      %2750 = vmatprep.mubr.bf16.mxu0 0
      %2751 = vmatmul.mubr.bf16.gmra.mxu0 %v2497
      %v2752 = vpop.f32.mrf.mxu0
      %v2753 = vadd.f32 0.0, %v2752
      %v2754 = vpop.f32.mrf.mxu0
      %v2755 = vpop.f32.mrf.mxu0
      %v2756 = vadd.f32 0.0, %v2755
      %v2757 = vpop.f32.mrf.mxu0
      %2758 = vmatprep.mubr.bf16.mxu0 0
      %2759 = vmatmul.mubr.bf16.gmra.mxu0 %v2505
      %v2760 = vpop.f32.mrf.mxu0
      %v2761 = vadd.f32 0.0, %v2760
      %v2762 = vpop.f32.mrf.mxu0
      %v2763 = vpop.f32.mrf.mxu0
      %v2764 = vadd.f32 0.0, %v2763
      %v2765 = vpop.f32.mrf.mxu0
      %2766 = vmatprep.mubr.bf16.mxu0 0
      %2767 = vmatmul.mubr.bf16.gmra.mxu0 %v2513
      %v2768 = vpop.f32.mrf.mxu0
      %v2769 = vadd.f32 0.0, %v2768
      %v2770 = vpop.f32.mrf.mxu0
      %v2771 = vpop.f32.mrf.mxu0
      %v2772 = vadd.f32 0.0, %v2771
      %v2773 = vpop.f32.mrf.mxu0
      %2774 = vmatprep.mubr.bf16.mxu0 0
      %2775 = vmatmul.mubr.bf16.gmra.mxu0 %v2521
      %v2776 = vpop.f32.mrf.mxu0
      %v2777 = vadd.f32 0.0, %v2776
      %v2778 = vpop.f32.mrf.mxu0
      %v2779 = vpop.f32.mrf.mxu0
      %v2780 = vadd.f32 0.0, %v2779
      %v2781 = vpop.f32.mrf.mxu0
      %2782 = vmatprep.mubr.bf16.mxu0 0
      %2783 = vmatmul.mubr.bf16.gmra.mxu0 %v2529
      %v2784 = vpop.f32.mrf.mxu0
      %v2785 = vadd.f32 0.0, %v2784
      %v2786 = vpop.f32.mrf.mxu0
      %v2787 = vpop.f32.mrf.mxu0
      %v2788 = vadd.f32 0.0, %v2787
      %v2789 = vpop.f32.mrf.mxu0
      %2790 = vmatprep.mubr.bf16.mxu0 0
      %2791 = vmatmul.mubr.bf16.gmra.mxu0 %v2537
      %v2792 = vpop.f32.mrf.mxu0
      %v2793 = vadd.f32 0.0, %v2792
      %v2794 = vpop.f32.mrf.mxu0
      %v2795 = vpop.f32.mrf.mxu0
      %v2796 = vadd.f32 0.0, %v2795
      %v2797 = vpop.f32.mrf.mxu0
      %2798 = vdwg.mxu0
      %v2799 = vadd.f32 %v2173, %v2641
      %v2800 = vadd.f32 %v2174, %v2644
      %v2801 = vadd.f32 %v2175, %v2649
      %v2802 = vadd.f32 %v2176, %v2652
      %v2803 = vadd.f32 %v2177, %v2657
      %v2804 = vadd.f32 %v2178, %v2660
      %v2805 = vadd.f32 %v2179, %v2665
      %v2806 = vadd.f32 %v2180, %v2668
      %v2807 = vadd.f32 %v2181, %v2673
      %v2808 = vadd.f32 %v2182, %v2676
      %v2809 = vadd.f32 %v2183, %v2681
      %v2810 = vadd.f32 %v2184, %v2684
      %v2811 = vadd.f32 %v2185, %v2689
      %v2812 = vadd.f32 %v2186, %v2692
      %v2813 = vadd.f32 %v2187, %v2697
      %v2814 = vadd.f32 %v2188, %v2700
      %v2815 = vadd.f32 %v2189, %v2705
      %v2816 = vadd.f32 %v2190, %v2708
      %v2817 = vadd.f32 %v2191, %v2713
      %v2818 = vadd.f32 %v2192, %v2716
      %v2819 = vadd.f32 %v2193, %v2721
      %v2820 = vadd.f32 %v2194, %v2724
      %v2821 = vadd.f32 %v2195, %v2729
      %v2822 = vadd.f32 %v2196, %v2732
      %v2823 = vadd.f32 %v2197, %v2737
      %v2824 = vadd.f32 %v2198, %v2740
      %v2825 = vadd.f32 %v2199, %v2745
      %v2826 = vadd.f32 %v2200, %v2748
      %v2827 = vadd.f32 %v2201, %v2753
      %v2828 = vadd.f32 %v2202, %v2756
      %v2829 = vadd.f32 %v2203, %v2761
      %v2830 = vadd.f32 %v2204, %v2764
      %v2831 = vadd.f32 %v2205, %v2769
      %v2832 = vadd.f32 %v2206, %v2772
      %v2833 = vadd.f32 %v2207, %v2777
      %v2834 = vadd.f32 %v2208, %v2780
      %v2835 = vadd.f32 %v2209, %v2785
      %v2836 = vadd.f32 %v2210, %v2788
      %v2837 = vadd.f32 %v2211, %v2793
      %v2838 = vadd.f32 %v2212, %v2796
      %v2839 = vld [vmem:[#allocation2 + $0x10] sm:$0xe]
      %s2840 = scalar_lea.vmem %s2, 320
      %v2841 = vld [vmem:[%s2840] sm:$0xf]
      %v2842 = vld [vmem:[%s2840 + $0x4] sm:$0xf]
      %v2843 = vld [vmem:[%s2840 + $0x8] sm:$0xf]
      %v2844 = vld [vmem:[%s2840 + $0xc] sm:$0xf]
      %v2845 = vld [vmem:[%s2840 + $0x10] sm:$0xf]
      %v2846 = vld [vmem:[%s2840 + $0x14] sm:$0xf]
      %v2847 = vld [vmem:[%s2840 + $0x18] sm:$0xf]
      %v2848 = vld [vmem:[%s2840 + $0x1c] sm:$0xf]
      %v2849 = vld [vmem:[%s2840 + $0x20] sm:$0xf]
      %v2850 = vld [vmem:[%s2840 + $0x24] sm:$0xf]
      %v2851 = vld [vmem:[%s2840 + $0x28] sm:$0xf]
      %v2852 = vld [vmem:[%s2840 + $0x2c] sm:$0xf]
      %v2853 = vld [vmem:[%s2840 + $0x30] sm:$0xf]
      %v2854 = vld [vmem:[%s2840 + $0x34] sm:$0xf]
      %v2855 = vld [vmem:[%s2840 + $0x38] sm:$0xf]
      %v2856 = vld [vmem:[%s2840 + $0x3c] sm:$0xf]
      %v2858 = vunpack.c.l.b16 %v2839
      %v2859 = vpack.c.b16 %v2313, %v2858
      %v2860 = vrot.slane %v2859, 1
      %v2861 = vrot.slane %v2354, 1
      %v2862 = vsel %vm1412, %v2860, %v2861
      %v2863 = vrot.slane %v2355, 1
      %v2864 = vsel %vm1412, %v2861, %v2863
      %v2865 = vrot.slane %v2356, 1
      %v2866 = vsel %vm1412, %v2863, %v2865
      %v2867 = vrot.slane %v2357, 1
      %v2868 = vsel %vm1412, %v2865, %v2867
      %v2869 = vrot.slane %v2358, 1
      %v2870 = vsel %vm1412, %v2867, %v2869
      %v2871 = vrot.slane %v2359, 1
      %v2872 = vsel %vm1412, %v2869, %v2871
      %v2873 = vrot.slane %v2360, 1
      %v2874 = vsel %vm1412, %v2871, %v2873
      %v2875 = vrot.slane %v2361, 1
      %v2876 = vsel %vm1412, %v2873, %v2875
      %v2877 = vrot.slane %v2362, 1
      %v2878 = vsel %vm1412, %v2875, %v2877
      %v2879 = vrot.slane %v2363, 1
      %v2880 = vsel %vm1412, %v2877, %v2879
      %v2881 = vrot.slane %v2364, 1
      %v2882 = vsel %vm1412, %v2879, %v2881
      %v2883 = vrot.slane %v2365, 1
      %v2884 = vsel %vm1412, %v2881, %v2883
      %v2885 = vrot.slane %v2366, 1
      %v2886 = vsel %vm1412, %v2883, %v2885
      %v2887 = vrot.slane %v2367, 1
      %v2888 = vsel %vm1412, %v2885, %v2887
      %v2889 = vrot.slane %v2368, 1
      %v2890 = vsel %vm1412, %v2887, %v2889
      %v2891 = vrot.slane %v2369, 1
      %v2892 = vsel %vm1412, %v2889, %v2891
      %v2893 = vrot.slane %v2370, 1
      %v2894 = vsel %vm1412, %v2891, %v2893
      %v2895 = vrot.slane %v2371, 1
      %v2896 = vsel %vm1412, %v2893, %v2895
      %v2897 = vrot.slane %v2372, 1
      %v2898 = vsel %vm1412, %v2895, %v2897
      %v2899 = vrot.slane %v2373, 1
      %v2900 = vsel %vm1412, %v2897, %v2899
      %v2937 = vunpack.c.l.b16 %v2841
      %v2938 = vunpack.c.l.b16 %v2842
      %v2939 = vunpack.c.l.b16 %v2843
      %v2940 = vunpack.c.l.b16 %v2844
      %v2941 = vunpack.c.l.b16 %v2845
      %v2942 = vunpack.c.l.b16 %v2846
      %v2943 = vunpack.c.l.b16 %v2847
      %v2944 = vunpack.c.l.b16 %v2848
      %v2945 = vunpack.c.l.b16 %v2849
      %v2946 = vunpack.c.l.b16 %v2850
      %v2947 = vunpack.c.l.b16 %v2851
      %v2948 = vunpack.c.l.b16 %v2852
      %v2949 = vunpack.c.l.b16 %v2853
      %v2950 = vunpack.c.l.b16 %v2854
      %v2951 = vunpack.c.l.b16 %v2855
      %v2952 = vunpack.c.l.b16 %v2856
      %v2953 = vpack.c.b16 %v2938, %v2937
      %v2954 = vpack.c.b16 %v2940, %v2939
      %v2955 = vpack.c.b16 %v2942, %v2941
      %v2956 = vpack.c.b16 %v2944, %v2943
      %v2957 = vpack.c.b16 %v2946, %v2945
      %v2958 = vpack.c.b16 %v2948, %v2947
      %v2959 = vpack.c.b16 %v2950, %v2949
      %v2960 = vpack.c.b16 %v2952, %v2951
      %2969 = vmatprep.subr.bf16.mxu0 0
      %2970 = vmatpush1.bf16.msra.mxu0 %v2960
      %2971 = vmatprep.subr.bf16.mxu0 0
      %2972 = vmatpush1.bf16.msra.mxu0 %v2959
      %2973 = vmatprep.subr.bf16.mxu0 0
      %2974 = vmatpush1.bf16.msra.mxu0 %v2958
      %2975 = vmatprep.subr.bf16.mxu0 0
      %2976 = vmatpush1.bf16.msra.mxu0 %v2957
      %2977 = vmatprep.subr.bf16.mxu0 0
      %2978 = vmatpush1.bf16.msra.mxu0 %v2956
      %2979 = vmatprep.subr.bf16.mxu0 0
      %2980 = vmatpush1.bf16.msra.mxu0 %v2955
      %2981 = vmatprep.subr.bf16.mxu0 0
      %2982 = vmatpush1.bf16.msra.mxu0 %v2954
      %2983 = vmatprep.subr.bf16.mxu0 0
      %2984 = vmatpush1.bf16.msra.mxu0 %v2953
      %2985 = vmatprep.subr.bf16.mxu0 0
      %2986 = vmatpush2.bf16.msra.mxu0 0
      %2987 = vmatprep.subr.bf16.mxu0 0
      %2988 = vmatpush2.bf16.msra.mxu0 0
      %2989 = vmatprep.subr.bf16.mxu0 0
      %2990 = vmatpush2.bf16.msra.mxu0 0
      %2991 = vmatprep.subr.bf16.mxu0 0
      %2992 = vmatpush2.bf16.msra.mxu0 0
      %2993 = vmatprep.subr.bf16.mxu0 0
      %2994 = vmatpush2.bf16.msra.mxu0 0
      %2995 = vmatprep.subr.bf16.mxu0 0
      %2996 = vmatpush2.bf16.msra.mxu0 0
      %2997 = vmatprep.subr.bf16.mxu0 0
      %2998 = vmatpush2.bf16.msra.mxu0 0
      %2999 = vmatprep.subr.bf16.mxu0 0
      %3000 = vmatpush2.bf16.msra.mxu0 0
      %3001 = vmatprep.mubr.bf16.mxu0 0
      %3002 = vmatmul.mubr.bf16.gmra.mxu0 %v2862
      %v3003 = vpop.f32.mrf.mxu0
      %v3004 = vadd.f32 0.0, %v3003
      %v3005 = vpop.f32.mrf.mxu0
      %v3006 = vpop.f32.mrf.mxu0
      %v3007 = vadd.f32 0.0, %v3006
      %v3008 = vpop.f32.mrf.mxu0
      %3009 = vmatprep.mubr.bf16.mxu0 0
      %3010 = vmatmul.mubr.bf16.gmra.mxu0 %v2864
      %v3011 = vpop.f32.mrf.mxu0
      %v3012 = vadd.f32 0.0, %v3011
      %v3013 = vpop.f32.mrf.mxu0
      %v3014 = vpop.f32.mrf.mxu0
      %v3015 = vadd.f32 0.0, %v3014
      %v3016 = vpop.f32.mrf.mxu0
      %3017 = vmatprep.mubr.bf16.mxu0 0
      %3018 = vmatmul.mubr.bf16.gmra.mxu0 %v2866
      %v3019 = vpop.f32.mrf.mxu0
      %v3020 = vadd.f32 0.0, %v3019
      %v3021 = vpop.f32.mrf.mxu0
      %v3022 = vpop.f32.mrf.mxu0
      %v3023 = vadd.f32 0.0, %v3022
      %v3024 = vpop.f32.mrf.mxu0
      %3025 = vmatprep.mubr.bf16.mxu0 0
      %3026 = vmatmul.mubr.bf16.gmra.mxu0 %v2868
      %v3027 = vpop.f32.mrf.mxu0
      %v3028 = vadd.f32 0.0, %v3027
      %v3029 = vpop.f32.mrf.mxu0
      %v3030 = vpop.f32.mrf.mxu0
      %v3031 = vadd.f32 0.0, %v3030
      %v3032 = vpop.f32.mrf.mxu0
      %3033 = vmatprep.mubr.bf16.mxu0 0
      %3034 = vmatmul.mubr.bf16.gmra.mxu0 %v2870
      %v3035 = vpop.f32.mrf.mxu0
      %v3036 = vadd.f32 0.0, %v3035
      %v3037 = vpop.f32.mrf.mxu0
      %v3038 = vpop.f32.mrf.mxu0
      %v3039 = vadd.f32 0.0, %v3038
      %v3040 = vpop.f32.mrf.mxu0
      %3041 = vmatprep.mubr.bf16.mxu0 0
      %3042 = vmatmul.mubr.bf16.gmra.mxu0 %v2872
      %v3043 = vpop.f32.mrf.mxu0
      %v3044 = vadd.f32 0.0, %v3043
      %v3045 = vpop.f32.mrf.mxu0
      %v3046 = vpop.f32.mrf.mxu0
      %v3047 = vadd.f32 0.0, %v3046
      %v3048 = vpop.f32.mrf.mxu0
      %3049 = vmatprep.mubr.bf16.mxu0 0
      %3050 = vmatmul.mubr.bf16.gmra.mxu0 %v2874
      %v3051 = vpop.f32.mrf.mxu0
      %v3052 = vadd.f32 0.0, %v3051
      %v3053 = vpop.f32.mrf.mxu0
      %v3054 = vpop.f32.mrf.mxu0
      %v3055 = vadd.f32 0.0, %v3054
      %v3056 = vpop.f32.mrf.mxu0
      %3057 = vmatprep.mubr.bf16.mxu0 0
      %3058 = vmatmul.mubr.bf16.gmra.mxu0 %v2876
      %v3059 = vpop.f32.mrf.mxu0
      %v3060 = vadd.f32 0.0, %v3059
      %v3061 = vpop.f32.mrf.mxu0
      %v3062 = vpop.f32.mrf.mxu0
      %v3063 = vadd.f32 0.0, %v3062
      %v3064 = vpop.f32.mrf.mxu0
      %3065 = vmatprep.mubr.bf16.mxu0 0
      %3066 = vmatmul.mubr.bf16.gmra.mxu0 %v2878
      %v3067 = vpop.f32.mrf.mxu0
      %v3068 = vadd.f32 0.0, %v3067
      %v3069 = vpop.f32.mrf.mxu0
      %v3070 = vpop.f32.mrf.mxu0
      %v3071 = vadd.f32 0.0, %v3070
      %v3072 = vpop.f32.mrf.mxu0
      %3073 = vmatprep.mubr.bf16.mxu0 0
      %3074 = vmatmul.mubr.bf16.gmra.mxu0 %v2880
      %v3075 = vpop.f32.mrf.mxu0
      %v3076 = vadd.f32 0.0, %v3075
      %v3077 = vpop.f32.mrf.mxu0
      %v3078 = vpop.f32.mrf.mxu0
      %v3079 = vadd.f32 0.0, %v3078
      %v3080 = vpop.f32.mrf.mxu0
      %3081 = vmatprep.mubr.bf16.mxu0 0
      %3082 = vmatmul.mubr.bf16.gmra.mxu0 %v2882
      %v3083 = vpop.f32.mrf.mxu0
      %v3084 = vadd.f32 0.0, %v3083
      %v3085 = vpop.f32.mrf.mxu0
      %v3086 = vpop.f32.mrf.mxu0
      %v3087 = vadd.f32 0.0, %v3086
      %v3088 = vpop.f32.mrf.mxu0
      %3089 = vmatprep.mubr.bf16.mxu0 0
      %3090 = vmatmul.mubr.bf16.gmra.mxu0 %v2884
      %v3091 = vpop.f32.mrf.mxu0
      %v3092 = vadd.f32 0.0, %v3091
      %v3093 = vpop.f32.mrf.mxu0
      %v3094 = vpop.f32.mrf.mxu0
      %v3095 = vadd.f32 0.0, %v3094
      %v3096 = vpop.f32.mrf.mxu0
      %3097 = vmatprep.mubr.bf16.mxu0 0
      %3098 = vmatmul.mubr.bf16.gmra.mxu0 %v2886
      %v3099 = vpop.f32.mrf.mxu0
      %v3100 = vadd.f32 0.0, %v3099
      %v3101 = vpop.f32.mrf.mxu0
      %v3102 = vpop.f32.mrf.mxu0
      %v3103 = vadd.f32 0.0, %v3102
      %v3104 = vpop.f32.mrf.mxu0
      %3105 = vmatprep.mubr.bf16.mxu0 0
      %3106 = vmatmul.mubr.bf16.gmra.mxu0 %v2888
      %v3107 = vpop.f32.mrf.mxu0
      %v3108 = vadd.f32 0.0, %v3107
      %v3109 = vpop.f32.mrf.mxu0
      %v3110 = vpop.f32.mrf.mxu0
      %v3111 = vadd.f32 0.0, %v3110
      %v3112 = vpop.f32.mrf.mxu0
      %3113 = vmatprep.mubr.bf16.mxu0 0
      %3114 = vmatmul.mubr.bf16.gmra.mxu0 %v2890
      %v3115 = vpop.f32.mrf.mxu0
      %v3116 = vadd.f32 0.0, %v3115
      %v3117 = vpop.f32.mrf.mxu0
      %v3118 = vpop.f32.mrf.mxu0
      %v3119 = vadd.f32 0.0, %v3118
      %v3120 = vpop.f32.mrf.mxu0
      %3121 = vmatprep.mubr.bf16.mxu0 0
      %3122 = vmatmul.mubr.bf16.gmra.mxu0 %v2892
      %v3123 = vpop.f32.mrf.mxu0
      %v3124 = vadd.f32 0.0, %v3123
      %v3125 = vpop.f32.mrf.mxu0
      %v3126 = vpop.f32.mrf.mxu0
      %v3127 = vadd.f32 0.0, %v3126
      %v3128 = vpop.f32.mrf.mxu0
      %3129 = vmatprep.mubr.bf16.mxu0 0
      %3130 = vmatmul.mubr.bf16.gmra.mxu0 %v2894
      %v3131 = vpop.f32.mrf.mxu0
      %v3132 = vadd.f32 0.0, %v3131
      %v3133 = vpop.f32.mrf.mxu0
      %v3134 = vpop.f32.mrf.mxu0
      %v3135 = vadd.f32 0.0, %v3134
      %v3136 = vpop.f32.mrf.mxu0
      %3137 = vmatprep.mubr.bf16.mxu0 0
      %3138 = vmatmul.mubr.bf16.gmra.mxu0 %v2896
      %v3139 = vpop.f32.mrf.mxu0
      %v3140 = vadd.f32 0.0, %v3139
      %v3141 = vpop.f32.mrf.mxu0
      %v3142 = vpop.f32.mrf.mxu0
      %v3143 = vadd.f32 0.0, %v3142
      %v3144 = vpop.f32.mrf.mxu0
      %3145 = vmatprep.mubr.bf16.mxu0 0
      %3146 = vmatmul.mubr.bf16.gmra.mxu0 %v2898
      %v3147 = vpop.f32.mrf.mxu0
      %v3148 = vadd.f32 0.0, %v3147
      %v3149 = vpop.f32.mrf.mxu0
      %v3150 = vpop.f32.mrf.mxu0
      %v3151 = vadd.f32 0.0, %v3150
      %v3152 = vpop.f32.mrf.mxu0
      %3153 = vmatprep.mubr.bf16.mxu0 0
      %3154 = vmatmul.mubr.bf16.gmra.mxu0 %v2900
      %v3155 = vpop.f32.mrf.mxu0
      %v3156 = vadd.f32 0.0, %v3155
      %v3157 = vpop.f32.mrf.mxu0
      %v3158 = vpop.f32.mrf.mxu0
      %v3159 = vadd.f32 0.0, %v3158
      %v3160 = vpop.f32.mrf.mxu0
      %3161 = vdwg.mxu0
      %v3162 = vadd.f32 %v2799, %v3004
      %v3163 = vadd.f32 %v2800, %v3007
      %v3164 = vadd.f32 %v2801, %v3012
      %v3165 = vadd.f32 %v2802, %v3015
      %v3166 = vadd.f32 %v2803, %v3020
      %v3167 = vadd.f32 %v2804, %v3023
      %v3168 = vadd.f32 %v2805, %v3028
      %v3169 = vadd.f32 %v2806, %v3031
      %v3170 = vadd.f32 %v2807, %v3036
      %v3171 = vadd.f32 %v2808, %v3039
      %v3172 = vadd.f32 %v2809, %v3044
      %v3173 = vadd.f32 %v2810, %v3047
      %v3174 = vadd.f32 %v2811, %v3052
      %v3175 = vadd.f32 %v2812, %v3055
      %v3176 = vadd.f32 %v2813, %v3060
      %v3177 = vadd.f32 %v2814, %v3063
      %v3178 = vadd.f32 %v2815, %v3068
      %v3179 = vadd.f32 %v2816, %v3071
      %v3180 = vadd.f32 %v2817, %v3076
      %v3181 = vadd.f32 %v2818, %v3079
      %v3182 = vadd.f32 %v2819, %v3084
      %v3183 = vadd.f32 %v2820, %v3087
      %v3184 = vadd.f32 %v2821, %v3092
      %v3185 = vadd.f32 %v2822, %v3095
      %v3186 = vadd.f32 %v2823, %v3100
      %v3187 = vadd.f32 %v2824, %v3103
      %v3188 = vadd.f32 %v2825, %v3108
      %v3189 = vadd.f32 %v2826, %v3111
      %v3190 = vadd.f32 %v2827, %v3116
      %v3191 = vadd.f32 %v2828, %v3119
      %v3192 = vadd.f32 %v2829, %v3124
      %v3193 = vadd.f32 %v2830, %v3127
      %v3194 = vadd.f32 %v2831, %v3132
      %v3195 = vadd.f32 %v2832, %v3135
      %v3196 = vadd.f32 %v2833, %v3140
      %v3197 = vadd.f32 %v2834, %v3143
      %v3198 = vadd.f32 %v2835, %v3148
      %v3199 = vadd.f32 %v2836, %v3151
      %v3200 = vadd.f32 %v2837, %v3156
      %v3201 = vadd.f32 %v2838, %v3159
      %v3202 = vld [vmem:[#allocation2 + $0x20] sm:$0xf]
      %v3203 = vld [vmem:[#allocation2 + $0x24] sm:$0xf]
      %v3204 = vld [vmem:[#allocation2 + $0x28] sm:$0xf]
      %v3205 = vld [vmem:[#allocation2 + $0x2c] sm:$0xf]
      %v3206 = vld [vmem:[#allocation2 + $0x30] sm:$0xf]
      %v3207 = vld [vmem:[#allocation2 + $0x34] sm:$0xf]
      %v3208 = vld [vmem:[#allocation2 + $0x38] sm:$0xf]
      %v3209 = vld [vmem:[#allocation2 + $0x3c] sm:$0xf]
      %v3210 = vld [vmem:[#allocation2 + $0x40] sm:$0xf]
      %v3211 = vld [vmem:[#allocation2 + $0x44] sm:$0xf]
      %v3212 = vld [vmem:[#allocation2 + $0x48] sm:$0xf]
      %v3213 = vld [vmem:[#allocation2 + $0x4c] sm:$0xf]
      %v3214 = vld [vmem:[#allocation2 + $0x50] sm:$0xf]
      %v3215 = vld [vmem:[#allocation2 + $0x54] sm:$0xf]
      %v3216 = vld [vmem:[#allocation2 + $0x58] sm:$0xf]
      %v3217 = vld [vmem:[#allocation2 + $0x5c] sm:$0xf]
      %v3218 = vld [vmem:[#allocation2 + $0x60] sm:$0xf]
      %v3219 = vld [vmem:[#allocation2 + $0x64] sm:$0xf]
      %v3220 = vld [vmem:[#allocation2 + $0x68] sm:$0xf]
      %v3221 = vld [vmem:[#allocation2 + $0x6c] sm:$0xf]
      %v3222 = vld [vmem:[#allocation2 + $0x70] sm:$0xf]
      %v3223 = vld [vmem:[#allocation2 + $0x74] sm:$0xf]
      %v3224 = vld [vmem:[#allocation2 + $0x78] sm:$0xf]
      %v3225 = vld [vmem:[#allocation2 + $0x7c] sm:$0xf]
      %v3226 = vld [vmem:[#allocation2 + $0x80] sm:$0xf]
      %v3227 = vld [vmem:[#allocation2 + $0x84] sm:$0xf]
      %v3228 = vld [vmem:[#allocation2 + $0x88] sm:$0xf]
      %v3229 = vld [vmem:[#allocation2 + $0x8c] sm:$0xf]
      %v3230 = vld [vmem:[#allocation2 + $0x90] sm:$0xf]
      %v3231 = vld [vmem:[#allocation2 + $0x94] sm:$0xf]
      %v3232 = vld [vmem:[#allocation2 + $0x98] sm:$0xf]
      %v3233 = vld [vmem:[#allocation2 + $0x9c] sm:$0xf]
      %v3234 = vld [vmem:[#allocation2 + $0xa0] sm:$0xf]
      %v3235 = vld [vmem:[#allocation2 + $0xa4] sm:$0xf]
      %v3236 = vld [vmem:[#allocation2 + $0xa8] sm:$0xf]
      %v3237 = vld [vmem:[#allocation2 + $0xac] sm:$0xf]
      %v3238 = vld [vmem:[#allocation2 + $0xb0] sm:$0xf]
      %v3239 = vld [vmem:[#allocation2 + $0xb4] sm:$0xf]
      %v3240 = vld [vmem:[#allocation2 + $0xb8] sm:$0xf]
      %v3241 = vld [vmem:[#allocation2 + $0xbc] sm:$0xf]
      %s3242 = scalar_lea.vmem %s2, 384
      %v3243 = vld [vmem:[%s3242] sm:$0xf]
      %v3244 = vld [vmem:[%s3242 + $0x4] sm:$0xf]
      %v3245 = vld [vmem:[%s3242 + $0x8] sm:$0xf]
      %v3246 = vld [vmem:[%s3242 + $0xc] sm:$0xf]
      %v3247 = vld [vmem:[%s3242 + $0x10] sm:$0xf]
      %v3248 = vld [vmem:[%s3242 + $0x14] sm:$0xf]
      %v3249 = vld [vmem:[%s3242 + $0x18] sm:$0xf]
      %v3250 = vld [vmem:[%s3242 + $0x1c] sm:$0xf]
      %v3251 = vld [vmem:[%s3242 + $0x20] sm:$0xf]
      %v3252 = vld [vmem:[%s3242 + $0x24] sm:$0xf]
      %v3253 = vld [vmem:[%s3242 + $0x28] sm:$0xf]
      %v3254 = vld [vmem:[%s3242 + $0x2c] sm:$0xf]
      %v3255 = vld [vmem:[%s3242 + $0x30] sm:$0xf]
      %v3256 = vld [vmem:[%s3242 + $0x34] sm:$0xf]
      %v3257 = vld [vmem:[%s3242 + $0x38] sm:$0xf]
      %v3258 = vld [vmem:[%s3242 + $0x3c] sm:$0xf]
      %v3299 = vunpack.c.l.b16 %v3202
      %v3300 = vunpack.c.l.b16 %v3203
      %v3301 = vunpack.c.l.b16 %v3204
      %v3302 = vunpack.c.l.b16 %v3205
      %v3303 = vunpack.c.l.b16 %v3206
      %v3304 = vunpack.c.l.b16 %v3207
      %v3305 = vunpack.c.l.b16 %v3208
      %v3306 = vunpack.c.l.b16 %v3209
      %v3307 = vunpack.c.l.b16 %v3210
      %v3308 = vunpack.c.l.b16 %v3211
      %v3309 = vunpack.c.l.b16 %v3212
      %v3310 = vunpack.c.l.b16 %v3213
      %v3311 = vunpack.c.l.b16 %v3214
      %v3312 = vunpack.c.l.b16 %v3215
      %v3313 = vunpack.c.l.b16 %v3216
      %v3314 = vunpack.c.l.b16 %v3217
      %v3315 = vunpack.c.l.b16 %v3218
      %v3316 = vunpack.c.l.b16 %v3219
      %v3317 = vunpack.c.l.b16 %v3220
      %v3318 = vunpack.c.l.b16 %v3221
      %v3319 = vunpack.c.l.b16 %v3222
      %v3320 = vunpack.c.l.b16 %v3223
      %v3321 = vunpack.c.l.b16 %v3224
      %v3322 = vunpack.c.l.b16 %v3225
      %v3323 = vunpack.c.l.b16 %v3226
      %v3324 = vunpack.c.l.b16 %v3227
      %v3325 = vunpack.c.l.b16 %v3228
      %v3326 = vunpack.c.l.b16 %v3229
      %v3327 = vunpack.c.l.b16 %v3230
      %v3328 = vunpack.c.l.b16 %v3231
      %v3329 = vunpack.c.l.b16 %v3232
      %v3330 = vunpack.c.l.b16 %v3233
      %v3331 = vunpack.c.l.b16 %v3234
      %v3332 = vunpack.c.l.b16 %v3235
      %v3333 = vunpack.c.l.b16 %v3236
      %v3334 = vunpack.c.l.b16 %v3237
      %v3335 = vunpack.c.l.b16 %v3238
      %v3336 = vunpack.c.l.b16 %v3239
      %v3337 = vunpack.c.l.b16 %v3240
      %v3338 = vunpack.c.l.b16 %v3241
      %v3339 = vpack.c.b16 %v3300, %v3299
      %v3340 = vpack.c.b16 %v3302, %v3301
      %v3341 = vpack.c.b16 %v3304, %v3303
      %v3342 = vpack.c.b16 %v3306, %v3305
      %v3343 = vpack.c.b16 %v3308, %v3307
      %v3344 = vpack.c.b16 %v3310, %v3309
      %v3345 = vpack.c.b16 %v3312, %v3311
      %v3346 = vpack.c.b16 %v3314, %v3313
      %v3347 = vpack.c.b16 %v3316, %v3315
      %v3348 = vpack.c.b16 %v3318, %v3317
      %v3349 = vpack.c.b16 %v3320, %v3319
      %v3350 = vpack.c.b16 %v3322, %v3321
      %v3351 = vpack.c.b16 %v3324, %v3323
      %v3352 = vpack.c.b16 %v3326, %v3325
      %v3353 = vpack.c.b16 %v3328, %v3327
      %v3354 = vpack.c.b16 %v3330, %v3329
      %v3355 = vpack.c.b16 %v3332, %v3331
      %v3356 = vpack.c.b16 %v3334, %v3333
      %v3357 = vpack.c.b16 %v3336, %v3335
      %v3358 = vpack.c.b16 %v3338, %v3337
      %v3395 = vunpack.c.l.b16 %v3243
      %v3396 = vunpack.c.l.b16 %v3244
      %v3397 = vunpack.c.l.b16 %v3245
      %v3398 = vunpack.c.l.b16 %v3246
      %v3399 = vunpack.c.l.b16 %v3247
      %v3400 = vunpack.c.l.b16 %v3248
      %v3401 = vunpack.c.l.b16 %v3249
      %v3402 = vunpack.c.l.b16 %v3250
      %v3403 = vunpack.c.l.b16 %v3251
      %v3404 = vunpack.c.l.b16 %v3252
      %v3405 = vunpack.c.l.b16 %v3253
      %v3406 = vunpack.c.l.b16 %v3254
      %v3407 = vunpack.c.l.b16 %v3255
      %v3408 = vunpack.c.l.b16 %v3256
      %v3409 = vunpack.c.l.b16 %v3257
      %v3410 = vunpack.c.l.b16 %v3258
      %v3411 = vpack.c.b16 %v3396, %v3395
      %v3412 = vpack.c.b16 %v3398, %v3397
      %v3413 = vpack.c.b16 %v3400, %v3399
      %v3414 = vpack.c.b16 %v3402, %v3401
      %v3415 = vpack.c.b16 %v3404, %v3403
      %v3416 = vpack.c.b16 %v3406, %v3405
      %v3417 = vpack.c.b16 %v3408, %v3407
      %v3418 = vpack.c.b16 %v3410, %v3409
      %3427 = vmatprep.subr.bf16.mxu0 0
      %3428 = vmatpush1.bf16.msra.mxu0 %v3418
      %3429 = vmatprep.subr.bf16.mxu0 0
      %3430 = vmatpush1.bf16.msra.mxu0 %v3417
      %3431 = vmatprep.subr.bf16.mxu0 0
      %3432 = vmatpush1.bf16.msra.mxu0 %v3416
      %3433 = vmatprep.subr.bf16.mxu0 0
      %3434 = vmatpush1.bf16.msra.mxu0 %v3415
      %3435 = vmatprep.subr.bf16.mxu0 0
      %3436 = vmatpush1.bf16.msra.mxu0 %v3414
      %3437 = vmatprep.subr.bf16.mxu0 0
      %3438 = vmatpush1.bf16.msra.mxu0 %v3413
      %3439 = vmatprep.subr.bf16.mxu0 0
      %3440 = vmatpush1.bf16.msra.mxu0 %v3412
      %3441 = vmatprep.subr.bf16.mxu0 0
      %3442 = vmatpush1.bf16.msra.mxu0 %v3411
      %3443 = vmatprep.subr.bf16.mxu0 0
      %3444 = vmatpush2.bf16.msra.mxu0 0
      %3445 = vmatprep.subr.bf16.mxu0 0
      %3446 = vmatpush2.bf16.msra.mxu0 0
      %3447 = vmatprep.subr.bf16.mxu0 0
      %3448 = vmatpush2.bf16.msra.mxu0 0
      %3449 = vmatprep.subr.bf16.mxu0 0
      %3450 = vmatpush2.bf16.msra.mxu0 0
      %3451 = vmatprep.subr.bf16.mxu0 0
      %3452 = vmatpush2.bf16.msra.mxu0 0
      %3453 = vmatprep.subr.bf16.mxu0 0
      %3454 = vmatpush2.bf16.msra.mxu0 0
      %3455 = vmatprep.subr.bf16.mxu0 0
      %3456 = vmatpush2.bf16.msra.mxu0 0
      %3457 = vmatprep.subr.bf16.mxu0 0
      %3458 = vmatpush2.bf16.msra.mxu0 0
      %3459 = vmatprep.mubr.bf16.mxu0 0
      %3460 = vmatmul.mubr.bf16.gmra.mxu0 %v3339
      %v3461 = vpop.f32.mrf.mxu0
      %v3462 = vadd.f32 0.0, %v3461
      %v3463 = vpop.f32.mrf.mxu0
      %v3464 = vpop.f32.mrf.mxu0
      %v3465 = vadd.f32 0.0, %v3464
      %v3466 = vpop.f32.mrf.mxu0
      %3467 = vmatprep.mubr.bf16.mxu0 0
      %3468 = vmatmul.mubr.bf16.gmra.mxu0 %v3340
      %v3469 = vpop.f32.mrf.mxu0
      %v3470 = vadd.f32 0.0, %v3469
      %v3471 = vpop.f32.mrf.mxu0
      %v3472 = vpop.f32.mrf.mxu0
      %v3473 = vadd.f32 0.0, %v3472
      %v3474 = vpop.f32.mrf.mxu0
      %3475 = vmatprep.mubr.bf16.mxu0 0
      %3476 = vmatmul.mubr.bf16.gmra.mxu0 %v3341
      %v3477 = vpop.f32.mrf.mxu0
      %v3478 = vadd.f32 0.0, %v3477
      %v3479 = vpop.f32.mrf.mxu0
      %v3480 = vpop.f32.mrf.mxu0
      %v3481 = vadd.f32 0.0, %v3480
      %v3482 = vpop.f32.mrf.mxu0
      %3483 = vmatprep.mubr.bf16.mxu0 0
      %3484 = vmatmul.mubr.bf16.gmra.mxu0 %v3342
      %v3485 = vpop.f32.mrf.mxu0
      %v3486 = vadd.f32 0.0, %v3485
      %v3487 = vpop.f32.mrf.mxu0
      %v3488 = vpop.f32.mrf.mxu0
      %v3489 = vadd.f32 0.0, %v3488
      %v3490 = vpop.f32.mrf.mxu0
      %3491 = vmatprep.mubr.bf16.mxu0 0
      %3492 = vmatmul.mubr.bf16.gmra.mxu0 %v3343
      %v3493 = vpop.f32.mrf.mxu0
      %v3494 = vadd.f32 0.0, %v3493
      %v3495 = vpop.f32.mrf.mxu0
      %v3496 = vpop.f32.mrf.mxu0
      %v3497 = vadd.f32 0.0, %v3496
      %v3498 = vpop.f32.mrf.mxu0
      %3499 = vmatprep.mubr.bf16.mxu0 0
      %3500 = vmatmul.mubr.bf16.gmra.mxu0 %v3344
      %v3501 = vpop.f32.mrf.mxu0
      %v3502 = vadd.f32 0.0, %v3501
      %v3503 = vpop.f32.mrf.mxu0
      %v3504 = vpop.f32.mrf.mxu0
      %v3505 = vadd.f32 0.0, %v3504
      %v3506 = vpop.f32.mrf.mxu0
      %3507 = vmatprep.mubr.bf16.mxu0 0
      %3508 = vmatmul.mubr.bf16.gmra.mxu0 %v3345
      %v3509 = vpop.f32.mrf.mxu0
      %v3510 = vadd.f32 0.0, %v3509
      %v3511 = vpop.f32.mrf.mxu0
      %v3512 = vpop.f32.mrf.mxu0
      %v3513 = vadd.f32 0.0, %v3512
      %v3514 = vpop.f32.mrf.mxu0
      %3515 = vmatprep.mubr.bf16.mxu0 0
      %3516 = vmatmul.mubr.bf16.gmra.mxu0 %v3346
      %v3517 = vpop.f32.mrf.mxu0
      %v3518 = vadd.f32 0.0, %v3517
      %v3519 = vpop.f32.mrf.mxu0
      %v3520 = vpop.f32.mrf.mxu0
      %v3521 = vadd.f32 0.0, %v3520
      %v3522 = vpop.f32.mrf.mxu0
      %3523 = vmatprep.mubr.bf16.mxu0 0
      %3524 = vmatmul.mubr.bf16.gmra.mxu0 %v3347
      %v3525 = vpop.f32.mrf.mxu0
      %v3526 = vadd.f32 0.0, %v3525
      %v3527 = vpop.f32.mrf.mxu0
      %v3528 = vpop.f32.mrf.mxu0
      %v3529 = vadd.f32 0.0, %v3528
      %v3530 = vpop.f32.mrf.mxu0
      %3531 = vmatprep.mubr.bf16.mxu0 0
      %3532 = vmatmul.mubr.bf16.gmra.mxu0 %v3348
      %v3533 = vpop.f32.mrf.mxu0
      %v3534 = vadd.f32 0.0, %v3533
      %v3535 = vpop.f32.mrf.mxu0
      %v3536 = vpop.f32.mrf.mxu0
      %v3537 = vadd.f32 0.0, %v3536
      %v3538 = vpop.f32.mrf.mxu0
      %3539 = vmatprep.mubr.bf16.mxu0 0
      %3540 = vmatmul.mubr.bf16.gmra.mxu0 %v3349
      %v3541 = vpop.f32.mrf.mxu0
      %v3542 = vadd.f32 0.0, %v3541
      %v3543 = vpop.f32.mrf.mxu0
      %v3544 = vpop.f32.mrf.mxu0
      %v3545 = vadd.f32 0.0, %v3544
      %v3546 = vpop.f32.mrf.mxu0
      %3547 = vmatprep.mubr.bf16.mxu0 0
      %3548 = vmatmul.mubr.bf16.gmra.mxu0 %v3350
      %v3549 = vpop.f32.mrf.mxu0
      %v3550 = vadd.f32 0.0, %v3549
      %v3551 = vpop.f32.mrf.mxu0
      %v3552 = vpop.f32.mrf.mxu0
      %v3553 = vadd.f32 0.0, %v3552
      %v3554 = vpop.f32.mrf.mxu0
      %3555 = vmatprep.mubr.bf16.mxu0 0
      %3556 = vmatmul.mubr.bf16.gmra.mxu0 %v3351
      %v3557 = vpop.f32.mrf.mxu0
      %v3558 = vadd.f32 0.0, %v3557
      %v3559 = vpop.f32.mrf.mxu0
      %v3560 = vpop.f32.mrf.mxu0
      %v3561 = vadd.f32 0.0, %v3560
      %v3562 = vpop.f32.mrf.mxu0
      %3563 = vmatprep.mubr.bf16.mxu0 0
      %3564 = vmatmul.mubr.bf16.gmra.mxu0 %v3352
      %v3565 = vpop.f32.mrf.mxu0
      %v3566 = vadd.f32 0.0, %v3565
      %v3567 = vpop.f32.mrf.mxu0
      %v3568 = vpop.f32.mrf.mxu0
      %v3569 = vadd.f32 0.0, %v3568
      %v3570 = vpop.f32.mrf.mxu0
      %3571 = vmatprep.mubr.bf16.mxu0 0
      %3572 = vmatmul.mubr.bf16.gmra.mxu0 %v3353
      %v3573 = vpop.f32.mrf.mxu0
      %v3574 = vadd.f32 0.0, %v3573
      %v3575 = vpop.f32.mrf.mxu0
      %v3576 = vpop.f32.mrf.mxu0
      %v3577 = vadd.f32 0.0, %v3576
      %v3578 = vpop.f32.mrf.mxu0
      %3579 = vmatprep.mubr.bf16.mxu0 0
      %3580 = vmatmul.mubr.bf16.gmra.mxu0 %v3354
      %v3581 = vpop.f32.mrf.mxu0
      %v3582 = vadd.f32 0.0, %v3581
      %v3583 = vpop.f32.mrf.mxu0
      %v3584 = vpop.f32.mrf.mxu0
      %v3585 = vadd.f32 0.0, %v3584
      %v3586 = vpop.f32.mrf.mxu0
      %3587 = vmatprep.mubr.bf16.mxu0 0
      %3588 = vmatmul.mubr.bf16.gmra.mxu0 %v3355
      %v3589 = vpop.f32.mrf.mxu0
      %v3590 = vadd.f32 0.0, %v3589
      %v3591 = vpop.f32.mrf.mxu0
      %v3592 = vpop.f32.mrf.mxu0
      %v3593 = vadd.f32 0.0, %v3592
      %v3594 = vpop.f32.mrf.mxu0
      %3595 = vmatprep.mubr.bf16.mxu0 0
      %3596 = vmatmul.mubr.bf16.gmra.mxu0 %v3356
      %v3597 = vpop.f32.mrf.mxu0
      %v3598 = vadd.f32 0.0, %v3597
      %v3599 = vpop.f32.mrf.mxu0
      %v3600 = vpop.f32.mrf.mxu0
      %v3601 = vadd.f32 0.0, %v3600
      %v3602 = vpop.f32.mrf.mxu0
      %3603 = vmatprep.mubr.bf16.mxu0 0
      %3604 = vmatmul.mubr.bf16.gmra.mxu0 %v3357
      %v3605 = vpop.f32.mrf.mxu0
      %v3606 = vadd.f32 0.0, %v3605
      %v3607 = vpop.f32.mrf.mxu0
      %v3608 = vpop.f32.mrf.mxu0
      %v3609 = vadd.f32 0.0, %v3608
      %v3610 = vpop.f32.mrf.mxu0
      %3611 = vmatprep.mubr.bf16.mxu0 0
      %3612 = vmatmul.mubr.bf16.gmra.mxu0 %v3358
      %v3613 = vpop.f32.mrf.mxu0
      %v3614 = vadd.f32 0.0, %v3613
      %v3615 = vpop.f32.mrf.mxu0
      %v3616 = vpop.f32.mrf.mxu0
      %v3617 = vadd.f32 0.0, %v3616
      %v3618 = vpop.f32.mrf.mxu0
      %3619 = vdwg.mxu0
      %v3620 = vadd.f32 %v3162, %v3462
      %v3621 = vadd.f32 %v3163, %v3465
      %v3622 = vadd.f32 %v3164, %v3470
      %v3623 = vadd.f32 %v3165, %v3473
      %v3624 = vadd.f32 %v3166, %v3478
      %v3625 = vadd.f32 %v3167, %v3481
      %v3626 = vadd.f32 %v3168, %v3486
      %v3627 = vadd.f32 %v3169, %v3489
      %v3628 = vadd.f32 %v3170, %v3494
      %v3629 = vadd.f32 %v3171, %v3497
      %v3630 = vadd.f32 %v3172, %v3502
      %v3631 = vadd.f32 %v3173, %v3505
      %v3632 = vadd.f32 %v3174, %v3510
      %v3633 = vadd.f32 %v3175, %v3513
      %v3634 = vadd.f32 %v3176, %v3518
      %v3635 = vadd.f32 %v3177, %v3521
      %v3636 = vadd.f32 %v3178, %v3526
      %v3637 = vadd.f32 %v3179, %v3529
      %v3638 = vadd.f32 %v3180, %v3534
      %v3639 = vadd.f32 %v3181, %v3537
      %v3640 = vadd.f32 %v3182, %v3542
      %v3641 = vadd.f32 %v3183, %v3545
      %v3642 = vadd.f32 %v3184, %v3550
      %v3643 = vadd.f32 %v3185, %v3553
      %v3644 = vadd.f32 %v3186, %v3558
      %v3645 = vadd.f32 %v3187, %v3561
      %v3646 = vadd.f32 %v3188, %v3566
      %v3647 = vadd.f32 %v3189, %v3569
      %v3648 = vadd.f32 %v3190, %v3574
      %v3649 = vadd.f32 %v3191, %v3577
      %v3650 = vadd.f32 %v3192, %v3582
      %v3651 = vadd.f32 %v3193, %v3585
      %v3652 = vadd.f32 %v3194, %v3590
      %v3653 = vadd.f32 %v3195, %v3593
      %v3654 = vadd.f32 %v3196, %v3598
      %v3655 = vadd.f32 %v3197, %v3601
      %v3656 = vadd.f32 %v3198, %v3606
      %v3657 = vadd.f32 %v3199, %v3609
      %v3658 = vadd.f32 %v3200, %v3614
      %v3659 = vadd.f32 %v3201, %v3617
      %v3660 = vld [vmem:[#allocation2 + $0x20] sm:$0xf]
      %v3661 = vld [vmem:[#allocation2 + $0x24] sm:$0xf]
      %v3662 = vld [vmem:[#allocation2 + $0x28] sm:$0xf]
      %v3663 = vld [vmem:[#allocation2 + $0x2c] sm:$0xf]
      %v3664 = vld [vmem:[#allocation2 + $0x30] sm:$0xf]
      %v3665 = vld [vmem:[#allocation2 + $0x34] sm:$0xf]
      %v3666 = vld [vmem:[#allocation2 + $0x38] sm:$0xf]
      %v3667 = vld [vmem:[#allocation2 + $0x3c] sm:$0xf]
      %v3668 = vld [vmem:[#allocation2 + $0x40] sm:$0xf]
      %v3669 = vld [vmem:[#allocation2 + $0x44] sm:$0xf]
      %v3670 = vld [vmem:[#allocation2 + $0x48] sm:$0xf]
      %v3671 = vld [vmem:[#allocation2 + $0x4c] sm:$0xf]
      %v3672 = vld [vmem:[#allocation2 + $0x50] sm:$0xf]
      %v3673 = vld [vmem:[#allocation2 + $0x54] sm:$0xf]
      %v3674 = vld [vmem:[#allocation2 + $0x58] sm:$0xf]
      %v3675 = vld [vmem:[#allocation2 + $0x5c] sm:$0xf]
      %v3676 = vld [vmem:[#allocation2 + $0x60] sm:$0xf]
      %v3677 = vld [vmem:[#allocation2 + $0x64] sm:$0xf]
      %v3678 = vld [vmem:[#allocation2 + $0x68] sm:$0xf]
      %v3679 = vld [vmem:[#allocation2 + $0x6c] sm:$0xf]
      %v3680 = vld [vmem:[#allocation2 + $0x70] sm:$0xf]
      %v3681 = vld [vmem:[#allocation2 + $0x74] sm:$0xf]
      %v3682 = vld [vmem:[#allocation2 + $0x78] sm:$0xf]
      %v3683 = vld [vmem:[#allocation2 + $0x7c] sm:$0xf]
      %v3684 = vld [vmem:[#allocation2 + $0x80] sm:$0xf]
      %v3685 = vld [vmem:[#allocation2 + $0x84] sm:$0xf]
      %v3686 = vld [vmem:[#allocation2 + $0x88] sm:$0xf]
      %v3687 = vld [vmem:[#allocation2 + $0x8c] sm:$0xf]
      %v3688 = vld [vmem:[#allocation2 + $0x90] sm:$0xf]
      %v3689 = vld [vmem:[#allocation2 + $0x94] sm:$0xf]
      %v3690 = vld [vmem:[#allocation2 + $0x98] sm:$0xf]
      %v3691 = vld [vmem:[#allocation2 + $0x9c] sm:$0xf]
      %v3692 = vld [vmem:[#allocation2 + $0xa0] sm:$0xf]
      %v3693 = vld [vmem:[#allocation2 + $0xa4] sm:$0xf]
      %v3694 = vld [vmem:[#allocation2 + $0xa8] sm:$0xf]
      %v3695 = vld [vmem:[#allocation2 + $0xac] sm:$0xf]
      %v3696 = vld [vmem:[#allocation2 + $0xb0] sm:$0xf]
      %v3697 = vld [vmem:[#allocation2 + $0xb4] sm:$0xf]
      %v3698 = vld [vmem:[#allocation2 + $0xb8] sm:$0xf]
      %v3699 = vld [vmem:[#allocation2 + $0xbc] sm:$0xf]
      %v3700 = vld [vmem:[#allocation2 + $0xc0] sm:$0x1]
      %s3701 = scalar_lea.vmem %s2, 448
      %v3702 = vld [vmem:[%s3701] sm:$0xf]
      %v3703 = vld [vmem:[%s3701 + $0x4] sm:$0xf]
      %v3704 = vld [vmem:[%s3701 + $0x8] sm:$0xf]
      %v3705 = vld [vmem:[%s3701 + $0xc] sm:$0xf]
      %v3706 = vld [vmem:[%s3701 + $0x10] sm:$0xf]
      %v3707 = vld [vmem:[%s3701 + $0x14] sm:$0xf]
      %v3708 = vld [vmem:[%s3701 + $0x18] sm:$0xf]
      %v3709 = vld [vmem:[%s3701 + $0x1c] sm:$0xf]
      %v3710 = vld [vmem:[%s3701 + $0x20] sm:$0xf]
      %v3711 = vld [vmem:[%s3701 + $0x24] sm:$0xf]
      %v3712 = vld [vmem:[%s3701 + $0x28] sm:$0xf]
      %v3713 = vld [vmem:[%s3701 + $0x2c] sm:$0xf]
      %v3714 = vld [vmem:[%s3701 + $0x30] sm:$0xf]
      %v3715 = vld [vmem:[%s3701 + $0x34] sm:$0xf]
      %v3716 = vld [vmem:[%s3701 + $0x38] sm:$0xf]
      %v3717 = vld [vmem:[%s3701 + $0x3c] sm:$0xf]
      %v3759 = vunpack.c.l.b16 %v3660
      %v3760 = vunpack.c.l.b16 %v3661
      %v3761 = vunpack.c.l.b16 %v3662
      %v3762 = vunpack.c.l.b16 %v3663
      %v3763 = vunpack.c.l.b16 %v3664
      %v3764 = vunpack.c.l.b16 %v3665
      %v3765 = vunpack.c.l.b16 %v3666
      %v3766 = vunpack.c.l.b16 %v3667
      %v3767 = vunpack.c.l.b16 %v3668
      %v3768 = vunpack.c.l.b16 %v3669
      %v3769 = vunpack.c.l.b16 %v3670
      %v3770 = vunpack.c.l.b16 %v3671
      %v3771 = vunpack.c.l.b16 %v3672
      %v3772 = vunpack.c.l.b16 %v3673
      %v3773 = vunpack.c.l.b16 %v3674
      %v3774 = vunpack.c.l.b16 %v3675
      %v3775 = vunpack.c.l.b16 %v3676
      %v3776 = vunpack.c.l.b16 %v3677
      %v3777 = vunpack.c.l.b16 %v3678
      %v3778 = vunpack.c.l.b16 %v3679
      %v3779 = vunpack.c.l.b16 %v3680
      %v3780 = vunpack.c.l.b16 %v3681
      %v3781 = vunpack.c.l.b16 %v3682
      %v3782 = vunpack.c.l.b16 %v3683
      %v3783 = vunpack.c.l.b16 %v3684
      %v3784 = vunpack.c.l.b16 %v3685
      %v3785 = vunpack.c.l.b16 %v3686
      %v3786 = vunpack.c.l.b16 %v3687
      %v3787 = vunpack.c.l.b16 %v3688
      %v3788 = vunpack.c.l.b16 %v3689
      %v3789 = vunpack.c.l.b16 %v3690
      %v3790 = vunpack.c.l.b16 %v3691
      %v3791 = vunpack.c.l.b16 %v3692
      %v3792 = vunpack.c.l.b16 %v3693
      %v3793 = vunpack.c.l.b16 %v3694
      %v3794 = vunpack.c.l.b16 %v3695
      %v3795 = vunpack.c.l.b16 %v3696
      %v3796 = vunpack.c.l.b16 %v3697
      %v3797 = vunpack.c.l.b16 %v3698
      %v3798 = vunpack.c.l.b16 %v3699
      %v3799 = vunpack.c.l.b16 %v3700
      %v3800 = vpack.c.b16 %v3760, %v3759
      %v3801 = vpack.c.b16 %v3762, %v3761
      %v3802 = vpack.c.b16 %v3764, %v3763
      %v3803 = vpack.c.b16 %v3766, %v3765
      %v3804 = vpack.c.b16 %v3768, %v3767
      %v3805 = vpack.c.b16 %v3770, %v3769
      %v3806 = vpack.c.b16 %v3772, %v3771
      %v3807 = vpack.c.b16 %v3774, %v3773
      %v3808 = vpack.c.b16 %v3776, %v3775
      %v3809 = vpack.c.b16 %v3778, %v3777
      %v3810 = vpack.c.b16 %v3780, %v3779
      %v3811 = vpack.c.b16 %v3782, %v3781
      %v3812 = vpack.c.b16 %v3784, %v3783
      %v3813 = vpack.c.b16 %v3786, %v3785
      %v3814 = vpack.c.b16 %v3788, %v3787
      %v3815 = vpack.c.b16 %v3790, %v3789
      %v3816 = vpack.c.b16 %v3792, %v3791
      %v3817 = vpack.c.b16 %v3794, %v3793
      %v3818 = vpack.c.b16 %v3796, %v3795
      %v3819 = vpack.c.b16 %v3798, %v3797
      %v3820 = vpack.c.b16 %v3799, %v3799
      %v3822 = vshrl.u32 %v3800, 16
      %v3824 = vshll.u32 %v3800, 16
      %v3826 = vrot.slane %v3824, 1
      %v3827 = vor.u32 %v3822, %v3826
      %v3829 = vshll.u32 %v3801, 16
      %v3831 = vrot.slane %v3829, 1
      %v3832 = vsel %vm704, %v3827, %v3831
      %v3833 = vshrl.u32 %v3801, 16
      %v3835 = vor.u32 %v3833, %v3831
      %v3837 = vshll.u32 %v3802, 16
      %v3839 = vrot.slane %v3837, 1
      %v3840 = vsel %vm704, %v3835, %v3839
      %v3841 = vshrl.u32 %v3802, 16
      %v3843 = vor.u32 %v3841, %v3839
      %v3845 = vshll.u32 %v3803, 16
      %v3847 = vrot.slane %v3845, 1
      %v3848 = vsel %vm704, %v3843, %v3847
      %v3849 = vshrl.u32 %v3803, 16
      %v3851 = vor.u32 %v3849, %v3847
      %v3853 = vshll.u32 %v3804, 16
      %v3855 = vrot.slane %v3853, 1
      %v3856 = vsel %vm704, %v3851, %v3855
      %v3857 = vshrl.u32 %v3804, 16
      %v3859 = vor.u32 %v3857, %v3855
      %v3861 = vshll.u32 %v3805, 16
      %v3863 = vrot.slane %v3861, 1
      %v3864 = vsel %vm704, %v3859, %v3863
      %v3865 = vshrl.u32 %v3805, 16
      %v3867 = vor.u32 %v3865, %v3863
      %v3869 = vshll.u32 %v3806, 16
      %v3871 = vrot.slane %v3869, 1
      %v3872 = vsel %vm704, %v3867, %v3871
      %v3873 = vshrl.u32 %v3806, 16
      %v3875 = vor.u32 %v3873, %v3871
      %v3877 = vshll.u32 %v3807, 16
      %v3879 = vrot.slane %v3877, 1
      %v3880 = vsel %vm704, %v3875, %v3879
      %v3881 = vshrl.u32 %v3807, 16
      %v3883 = vor.u32 %v3881, %v3879
      %v3885 = vshll.u32 %v3808, 16
      %v3887 = vrot.slane %v3885, 1
      %v3888 = vsel %vm704, %v3883, %v3887
      %v3889 = vshrl.u32 %v3808, 16
      %v3891 = vor.u32 %v3889, %v3887
      %v3893 = vshll.u32 %v3809, 16
      %v3895 = vrot.slane %v3893, 1
      %v3896 = vsel %vm704, %v3891, %v3895
      %v3897 = vshrl.u32 %v3809, 16
      %v3899 = vor.u32 %v3897, %v3895
      %v3901 = vshll.u32 %v3810, 16
      %v3903 = vrot.slane %v3901, 1
      %v3904 = vsel %vm704, %v3899, %v3903
      %v3905 = vshrl.u32 %v3810, 16
      %v3907 = vor.u32 %v3905, %v3903
      %v3909 = vshll.u32 %v3811, 16
      %v3911 = vrot.slane %v3909, 1
      %v3912 = vsel %vm704, %v3907, %v3911
      %v3913 = vshrl.u32 %v3811, 16
      %v3915 = vor.u32 %v3913, %v3911
      %v3917 = vshll.u32 %v3812, 16
      %v3919 = vrot.slane %v3917, 1
      %v3920 = vsel %vm704, %v3915, %v3919
      %v3921 = vshrl.u32 %v3812, 16
      %v3923 = vor.u32 %v3921, %v3919
      %v3925 = vshll.u32 %v3813, 16
      %v3927 = vrot.slane %v3925, 1
      %v3928 = vsel %vm704, %v3923, %v3927
      %v3929 = vshrl.u32 %v3813, 16
      %v3931 = vor.u32 %v3929, %v3927
      %v3933 = vshll.u32 %v3814, 16
      %v3935 = vrot.slane %v3933, 1
      %v3936 = vsel %vm704, %v3931, %v3935
      %v3937 = vshrl.u32 %v3814, 16
      %v3939 = vor.u32 %v3937, %v3935
      %v3941 = vshll.u32 %v3815, 16
      %v3943 = vrot.slane %v3941, 1
      %v3944 = vsel %vm704, %v3939, %v3943
      %v3945 = vshrl.u32 %v3815, 16
      %v3947 = vor.u32 %v3945, %v3943
      %v3949 = vshll.u32 %v3816, 16
      %v3951 = vrot.slane %v3949, 1
      %v3952 = vsel %vm704, %v3947, %v3951
      %v3953 = vshrl.u32 %v3816, 16
      %v3955 = vor.u32 %v3953, %v3951
      %v3957 = vshll.u32 %v3817, 16
      %v3959 = vrot.slane %v3957, 1
      %v3960 = vsel %vm704, %v3955, %v3959
      %v3961 = vshrl.u32 %v3817, 16
      %v3963 = vor.u32 %v3961, %v3959
      %v3965 = vshll.u32 %v3818, 16
      %v3967 = vrot.slane %v3965, 1
      %v3968 = vsel %vm704, %v3963, %v3967
      %v3969 = vshrl.u32 %v3818, 16
      %v3971 = vor.u32 %v3969, %v3967
      %v3973 = vshll.u32 %v3819, 16
      %v3975 = vrot.slane %v3973, 1
      %v3976 = vsel %vm704, %v3971, %v3975
      %v3977 = vshrl.u32 %v3819, 16
      %v3979 = vor.u32 %v3977, %v3975
      %v3981 = vshll.u32 %v3820, 16
      %v3983 = vrot.slane %v3981, 1
      %v3984 = vsel %vm704, %v3979, %v3983
      %v4021 = vunpack.c.l.b16 %v3702
      %v4022 = vunpack.c.l.b16 %v3703
      %v4023 = vunpack.c.l.b16 %v3704
      %v4024 = vunpack.c.l.b16 %v3705
      %v4025 = vunpack.c.l.b16 %v3706
      %v4026 = vunpack.c.l.b16 %v3707
      %v4027 = vunpack.c.l.b16 %v3708
      %v4028 = vunpack.c.l.b16 %v3709
      %v4029 = vunpack.c.l.b16 %v3710
      %v4030 = vunpack.c.l.b16 %v3711
      %v4031 = vunpack.c.l.b16 %v3712
      %v4032 = vunpack.c.l.b16 %v3713
      %v4033 = vunpack.c.l.b16 %v3714
      %v4034 = vunpack.c.l.b16 %v3715
      %v4035 = vunpack.c.l.b16 %v3716
      %v4036 = vunpack.c.l.b16 %v3717
      %v4037 = vpack.c.b16 %v4022, %v4021
      %v4038 = vpack.c.b16 %v4024, %v4023
      %v4039 = vpack.c.b16 %v4026, %v4025
      %v4040 = vpack.c.b16 %v4028, %v4027
      %v4041 = vpack.c.b16 %v4030, %v4029
      %v4042 = vpack.c.b16 %v4032, %v4031
      %v4043 = vpack.c.b16 %v4034, %v4033
      %v4044 = vpack.c.b16 %v4036, %v4035
      %4053 = vmatprep.subr.bf16.mxu0 0
      %4054 = vmatpush1.bf16.msra.mxu0 %v4044
      %4055 = vmatprep.subr.bf16.mxu0 0
      %4056 = vmatpush1.bf16.msra.mxu0 %v4043
      %4057 = vmatprep.subr.bf16.mxu0 0
      %4058 = vmatpush1.bf16.msra.mxu0 %v4042
      %4059 = vmatprep.subr.bf16.mxu0 0
      %4060 = vmatpush1.bf16.msra.mxu0 %v4041
      %4061 = vmatprep.subr.bf16.mxu0 0
      %4062 = vmatpush1.bf16.msra.mxu0 %v4040
      %4063 = vmatprep.subr.bf16.mxu0 0
      %4064 = vmatpush1.bf16.msra.mxu0 %v4039
      %4065 = vmatprep.subr.bf16.mxu0 0
      %4066 = vmatpush1.bf16.msra.mxu0 %v4038
      %4067 = vmatprep.subr.bf16.mxu0 0
      %4068 = vmatpush1.bf16.msra.mxu0 %v4037
      %4069 = vmatprep.subr.bf16.mxu0 0
      %4070 = vmatpush2.bf16.msra.mxu0 0
      %4071 = vmatprep.subr.bf16.mxu0 0
      %4072 = vmatpush2.bf16.msra.mxu0 0
      %4073 = vmatprep.subr.bf16.mxu0 0
      %4074 = vmatpush2.bf16.msra.mxu0 0
      %4075 = vmatprep.subr.bf16.mxu0 0
      %4076 = vmatpush2.bf16.msra.mxu0 0
      %4077 = vmatprep.subr.bf16.mxu0 0
      %4078 = vmatpush2.bf16.msra.mxu0 0
      %4079 = vmatprep.subr.bf16.mxu0 0
      %4080 = vmatpush2.bf16.msra.mxu0 0
      %4081 = vmatprep.subr.bf16.mxu0 0
      %4082 = vmatpush2.bf16.msra.mxu0 0
      %4083 = vmatprep.subr.bf16.mxu0 0
      %4084 = vmatpush2.bf16.msra.mxu0 0
      %4085 = vmatprep.mubr.bf16.mxu0 0
      %4086 = vmatmul.mubr.bf16.gmra.mxu0 %v3832
      %v4087 = vpop.f32.mrf.mxu0
      %v4088 = vadd.f32 0.0, %v4087
      %v4089 = vpop.f32.mrf.mxu0
      %v4090 = vpop.f32.mrf.mxu0
      %v4091 = vadd.f32 0.0, %v4090
      %v4092 = vpop.f32.mrf.mxu0
      %4093 = vmatprep.mubr.bf16.mxu0 0
      %4094 = vmatmul.mubr.bf16.gmra.mxu0 %v3840
      %v4095 = vpop.f32.mrf.mxu0
      %v4096 = vadd.f32 0.0, %v4095
      %v4097 = vpop.f32.mrf.mxu0
      %v4098 = vpop.f32.mrf.mxu0
      %v4099 = vadd.f32 0.0, %v4098
      %v4100 = vpop.f32.mrf.mxu0
      %4101 = vmatprep.mubr.bf16.mxu0 0
      %4102 = vmatmul.mubr.bf16.gmra.mxu0 %v3848
      %v4103 = vpop.f32.mrf.mxu0
      %v4104 = vadd.f32 0.0, %v4103
      %v4105 = vpop.f32.mrf.mxu0
      %v4106 = vpop.f32.mrf.mxu0
      %v4107 = vadd.f32 0.0, %v4106
      %v4108 = vpop.f32.mrf.mxu0
      %4109 = vmatprep.mubr.bf16.mxu0 0
      %4110 = vmatmul.mubr.bf16.gmra.mxu0 %v3856
      %v4111 = vpop.f32.mrf.mxu0
      %v4112 = vadd.f32 0.0, %v4111
      %v4113 = vpop.f32.mrf.mxu0
      %v4114 = vpop.f32.mrf.mxu0
      %v4115 = vadd.f32 0.0, %v4114
      %v4116 = vpop.f32.mrf.mxu0
      %4117 = vmatprep.mubr.bf16.mxu0 0
      %4118 = vmatmul.mubr.bf16.gmra.mxu0 %v3864
      %v4119 = vpop.f32.mrf.mxu0
      %v4120 = vadd.f32 0.0, %v4119
      %v4121 = vpop.f32.mrf.mxu0
      %v4122 = vpop.f32.mrf.mxu0
      %v4123 = vadd.f32 0.0, %v4122
      %v4124 = vpop.f32.mrf.mxu0
      %4125 = vmatprep.mubr.bf16.mxu0 0
      %4126 = vmatmul.mubr.bf16.gmra.mxu0 %v3872
      %v4127 = vpop.f32.mrf.mxu0
      %v4128 = vadd.f32 0.0, %v4127
      %v4129 = vpop.f32.mrf.mxu0
      %v4130 = vpop.f32.mrf.mxu0
      %v4131 = vadd.f32 0.0, %v4130
      %v4132 = vpop.f32.mrf.mxu0
      %4133 = vmatprep.mubr.bf16.mxu0 0
      %4134 = vmatmul.mubr.bf16.gmra.mxu0 %v3880
      %v4135 = vpop.f32.mrf.mxu0
      %v4136 = vadd.f32 0.0, %v4135
      %v4137 = vpop.f32.mrf.mxu0
      %v4138 = vpop.f32.mrf.mxu0
      %v4139 = vadd.f32 0.0, %v4138
      %v4140 = vpop.f32.mrf.mxu0
      %4141 = vmatprep.mubr.bf16.mxu0 0
      %4142 = vmatmul.mubr.bf16.gmra.mxu0 %v3888
      %v4143 = vpop.f32.mrf.mxu0
      %v4144 = vadd.f32 0.0, %v4143
      %v4145 = vpop.f32.mrf.mxu0
      %v4146 = vpop.f32.mrf.mxu0
      %v4147 = vadd.f32 0.0, %v4146
      %v4148 = vpop.f32.mrf.mxu0
      %4149 = vmatprep.mubr.bf16.mxu0 0
      %4150 = vmatmul.mubr.bf16.gmra.mxu0 %v3896
      %v4151 = vpop.f32.mrf.mxu0
      %v4152 = vadd.f32 0.0, %v4151
      %v4153 = vpop.f32.mrf.mxu0
      %v4154 = vpop.f32.mrf.mxu0
      %v4155 = vadd.f32 0.0, %v4154
      %v4156 = vpop.f32.mrf.mxu0
      %4157 = vmatprep.mubr.bf16.mxu0 0
      %4158 = vmatmul.mubr.bf16.gmra.mxu0 %v3904
      %v4159 = vpop.f32.mrf.mxu0
      %v4160 = vadd.f32 0.0, %v4159
      %v4161 = vpop.f32.mrf.mxu0
      %v4162 = vpop.f32.mrf.mxu0
      %v4163 = vadd.f32 0.0, %v4162
      %v4164 = vpop.f32.mrf.mxu0
      %4165 = vmatprep.mubr.bf16.mxu0 0
      %4166 = vmatmul.mubr.bf16.gmra.mxu0 %v3912
      %v4167 = vpop.f32.mrf.mxu0
      %v4168 = vadd.f32 0.0, %v4167
      %v4169 = vpop.f32.mrf.mxu0
      %v4170 = vpop.f32.mrf.mxu0
      %v4171 = vadd.f32 0.0, %v4170
      %v4172 = vpop.f32.mrf.mxu0
      %4173 = vmatprep.mubr.bf16.mxu0 0
      %4174 = vmatmul.mubr.bf16.gmra.mxu0 %v3920
      %v4175 = vpop.f32.mrf.mxu0
      %v4176 = vadd.f32 0.0, %v4175
      %v4177 = vpop.f32.mrf.mxu0
      %v4178 = vpop.f32.mrf.mxu0
      %v4179 = vadd.f32 0.0, %v4178
      %v4180 = vpop.f32.mrf.mxu0
      %4181 = vmatprep.mubr.bf16.mxu0 0
      %4182 = vmatmul.mubr.bf16.gmra.mxu0 %v3928
      %v4183 = vpop.f32.mrf.mxu0
      %v4184 = vadd.f32 0.0, %v4183
      %v4185 = vpop.f32.mrf.mxu0
      %v4186 = vpop.f32.mrf.mxu0
      %v4187 = vadd.f32 0.0, %v4186
      %v4188 = vpop.f32.mrf.mxu0
      %4189 = vmatprep.mubr.bf16.mxu0 0
      %4190 = vmatmul.mubr.bf16.gmra.mxu0 %v3936
      %v4191 = vpop.f32.mrf.mxu0
      %v4192 = vadd.f32 0.0, %v4191
      %v4193 = vpop.f32.mrf.mxu0
      %v4194 = vpop.f32.mrf.mxu0
      %v4195 = vadd.f32 0.0, %v4194
      %v4196 = vpop.f32.mrf.mxu0
      %4197 = vmatprep.mubr.bf16.mxu0 0
      %4198 = vmatmul.mubr.bf16.gmra.mxu0 %v3944
      %v4199 = vpop.f32.mrf.mxu0
      %v4200 = vadd.f32 0.0, %v4199
      %v4201 = vpop.f32.mrf.mxu0
      %v4202 = vpop.f32.mrf.mxu0
      %v4203 = vadd.f32 0.0, %v4202
      %v4204 = vpop.f32.mrf.mxu0
      %4205 = vmatprep.mubr.bf16.mxu0 0
      %4206 = vmatmul.mubr.bf16.gmra.mxu0 %v3952
      %v4207 = vpop.f32.mrf.mxu0
      %v4208 = vadd.f32 0.0, %v4207
      %v4209 = vpop.f32.mrf.mxu0
      %v4210 = vpop.f32.mrf.mxu0
      %v4211 = vadd.f32 0.0, %v4210
      %v4212 = vpop.f32.mrf.mxu0
      %4213 = vmatprep.mubr.bf16.mxu0 0
      %4214 = vmatmul.mubr.bf16.gmra.mxu0 %v3960
      %v4215 = vpop.f32.mrf.mxu0
      %v4216 = vadd.f32 0.0, %v4215
      %v4217 = vpop.f32.mrf.mxu0
      %v4218 = vpop.f32.mrf.mxu0
      %v4219 = vadd.f32 0.0, %v4218
      %v4220 = vpop.f32.mrf.mxu0
      %4221 = vmatprep.mubr.bf16.mxu0 0
      %4222 = vmatmul.mubr.bf16.gmra.mxu0 %v3968
      %v4223 = vpop.f32.mrf.mxu0
      %v4224 = vadd.f32 0.0, %v4223
      %v4225 = vpop.f32.mrf.mxu0
      %v4226 = vpop.f32.mrf.mxu0
      %v4227 = vadd.f32 0.0, %v4226
      %v4228 = vpop.f32.mrf.mxu0
      %4229 = vmatprep.mubr.bf16.mxu0 0
      %4230 = vmatmul.mubr.bf16.gmra.mxu0 %v3976
      %v4231 = vpop.f32.mrf.mxu0
      %v4232 = vadd.f32 0.0, %v4231
      %v4233 = vpop.f32.mrf.mxu0
      %v4234 = vpop.f32.mrf.mxu0
      %v4235 = vadd.f32 0.0, %v4234
      %v4236 = vpop.f32.mrf.mxu0
      %4237 = vmatprep.mubr.bf16.mxu0 0
      %4238 = vmatmul.mubr.bf16.gmra.mxu0 %v3984
      %v4239 = vpop.f32.mrf.mxu0
      %v4240 = vadd.f32 0.0, %v4239
      %v4241 = vpop.f32.mrf.mxu0
      %v4242 = vpop.f32.mrf.mxu0
      %v4243 = vadd.f32 0.0, %v4242
      %v4244 = vpop.f32.mrf.mxu0
      %4245 = vdwg.mxu0
      %v4246 = vadd.f32 %v3620, %v4088
      %v4247 = vadd.f32 %v3621, %v4091
      %v4248 = vadd.f32 %v3622, %v4096
      %v4249 = vadd.f32 %v3623, %v4099
      %v4250 = vadd.f32 %v3624, %v4104
      %v4251 = vadd.f32 %v3625, %v4107
      %v4252 = vadd.f32 %v3626, %v4112
      %v4253 = vadd.f32 %v3627, %v4115
      %v4254 = vadd.f32 %v3628, %v4120
      %v4255 = vadd.f32 %v3629, %v4123
      %v4256 = vadd.f32 %v3630, %v4128
      %v4257 = vadd.f32 %v3631, %v4131
      %v4258 = vadd.f32 %v3632, %v4136
      %v4259 = vadd.f32 %v3633, %v4139
      %v4260 = vadd.f32 %v3634, %v4144
      %v4261 = vadd.f32 %v3635, %v4147
      %v4262 = vadd.f32 %v3636, %v4152
      %v4263 = vadd.f32 %v3637, %v4155
      %v4264 = vadd.f32 %v3638, %v4160
      %v4265 = vadd.f32 %v3639, %v4163
      %v4266 = vadd.f32 %v3640, %v4168
      %v4267 = vadd.f32 %v3641, %v4171
      %v4268 = vadd.f32 %v3642, %v4176
      %v4269 = vadd.f32 %v3643, %v4179
      %v4270 = vadd.f32 %v3644, %v4184
      %v4271 = vadd.f32 %v3645, %v4187
      %v4272 = vadd.f32 %v3646, %v4192
      %v4273 = vadd.f32 %v3647, %v4195
      %v4274 = vadd.f32 %v3648, %v4200
      %v4275 = vadd.f32 %v3649, %v4203
      %v4276 = vadd.f32 %v3650, %v4208
      %v4277 = vadd.f32 %v3651, %v4211
      %v4278 = vadd.f32 %v3652, %v4216
      %v4279 = vadd.f32 %v3653, %v4219
      %v4280 = vadd.f32 %v3654, %v4224
      %v4281 = vadd.f32 %v3655, %v4227
      %v4282 = vadd.f32 %v3656, %v4232
      %v4283 = vadd.f32 %v3657, %v4235
      %v4284 = vadd.f32 %v3658, %v4240
      %v4285 = vadd.f32 %v3659, %v4243
      %v4286 = vld [vmem:[#allocation2 + $0x20] sm:$0xe]
      %s4287 = scalar_lea.vmem %s2, 512
      %v4288 = vld [vmem:[%s4287] sm:$0xf]
      %v4289 = vld [vmem:[%s4287 + $0x4] sm:$0xf]
      %v4290 = vld [vmem:[%s4287 + $0x8] sm:$0xf]
      %v4291 = vld [vmem:[%s4287 + $0xc] sm:$0xf]
      %v4292 = vld [vmem:[%s4287 + $0x10] sm:$0xf]
      %v4293 = vld [vmem:[%s4287 + $0x14] sm:$0xf]
      %v4294 = vld [vmem:[%s4287 + $0x18] sm:$0xf]
      %v4295 = vld [vmem:[%s4287 + $0x1c] sm:$0xf]
      %v4296 = vld [vmem:[%s4287 + $0x20] sm:$0xf]
      %v4297 = vld [vmem:[%s4287 + $0x24] sm:$0xf]
      %v4298 = vld [vmem:[%s4287 + $0x28] sm:$0xf]
      %v4299 = vld [vmem:[%s4287 + $0x2c] sm:$0xf]
      %v4300 = vld [vmem:[%s4287 + $0x30] sm:$0xf]
      %v4301 = vld [vmem:[%s4287 + $0x34] sm:$0xf]
      %v4302 = vld [vmem:[%s4287 + $0x38] sm:$0xf]
      %v4303 = vld [vmem:[%s4287 + $0x3c] sm:$0xf]
      %v4305 = vunpack.c.l.b16 %v4286
      %v4306 = vpack.c.b16 %v3760, %v4305
      %v4307 = vrot.slane %v4306, 1
      %v4308 = vrot.slane %v3801, 1
      %v4309 = vsel %vm1412, %v4307, %v4308
      %v4310 = vrot.slane %v3802, 1
      %v4311 = vsel %vm1412, %v4308, %v4310
      %v4312 = vrot.slane %v3803, 1
      %v4313 = vsel %vm1412, %v4310, %v4312
      %v4314 = vrot.slane %v3804, 1
      %v4315 = vsel %vm1412, %v4312, %v4314
      %v4316 = vrot.slane %v3805, 1
      %v4317 = vsel %vm1412, %v4314, %v4316
      %v4318 = vrot.slane %v3806, 1
      %v4319 = vsel %vm1412, %v4316, %v4318
      %v4320 = vrot.slane %v3807, 1
      %v4321 = vsel %vm1412, %v4318, %v4320
      %v4322 = vrot.slane %v3808, 1
      %v4323 = vsel %vm1412, %v4320, %v4322
      %v4324 = vrot.slane %v3809, 1
      %v4325 = vsel %vm1412, %v4322, %v4324
      %v4326 = vrot.slane %v3810, 1
      %v4327 = vsel %vm1412, %v4324, %v4326
      %v4328 = vrot.slane %v3811, 1
      %v4329 = vsel %vm1412, %v4326, %v4328
      %v4330 = vrot.slane %v3812, 1
      %v4331 = vsel %vm1412, %v4328, %v4330
      %v4332 = vrot.slane %v3813, 1
      %v4333 = vsel %vm1412, %v4330, %v4332
      %v4334 = vrot.slane %v3814, 1
      %v4335 = vsel %vm1412, %v4332, %v4334
      %v4336 = vrot.slane %v3815, 1
      %v4337 = vsel %vm1412, %v4334, %v4336
      %v4338 = vrot.slane %v3816, 1
      %v4339 = vsel %vm1412, %v4336, %v4338
      %v4340 = vrot.slane %v3817, 1
      %v4341 = vsel %vm1412, %v4338, %v4340
      %v4342 = vrot.slane %v3818, 1
      %v4343 = vsel %vm1412, %v4340, %v4342
      %v4344 = vrot.slane %v3819, 1
      %v4345 = vsel %vm1412, %v4342, %v4344
      %v4346 = vrot.slane %v3820, 1
      %v4347 = vsel %vm1412, %v4344, %v4346
      %v4384 = vunpack.c.l.b16 %v4288
      %v4385 = vunpack.c.l.b16 %v4289
      %v4386 = vunpack.c.l.b16 %v4290
      %v4387 = vunpack.c.l.b16 %v4291
      %v4388 = vunpack.c.l.b16 %v4292
      %v4389 = vunpack.c.l.b16 %v4293
      %v4390 = vunpack.c.l.b16 %v4294
      %v4391 = vunpack.c.l.b16 %v4295
      %v4392 = vunpack.c.l.b16 %v4296
      %v4393 = vunpack.c.l.b16 %v4297
      %v4394 = vunpack.c.l.b16 %v4298
      %v4395 = vunpack.c.l.b16 %v4299
      %v4396 = vunpack.c.l.b16 %v4300
      %v4397 = vunpack.c.l.b16 %v4301
      %v4398 = vunpack.c.l.b16 %v4302
      %v4399 = vunpack.c.l.b16 %v4303
      %v4400 = vpack.c.b16 %v4385, %v4384
      %v4401 = vpack.c.b16 %v4387, %v4386
      %v4402 = vpack.c.b16 %v4389, %v4388
      %v4403 = vpack.c.b16 %v4391, %v4390
      %v4404 = vpack.c.b16 %v4393, %v4392
      %v4405 = vpack.c.b16 %v4395, %v4394
      %v4406 = vpack.c.b16 %v4397, %v4396
      %v4407 = vpack.c.b16 %v4399, %v4398
      %4416 = vmatprep.subr.bf16.mxu0 0
      %4417 = vmatpush1.bf16.msra.mxu0 %v4407
      %4418 = vmatprep.subr.bf16.mxu0 0
      %4419 = vmatpush1.bf16.msra.mxu0 %v4406
      %4420 = vmatprep.subr.bf16.mxu0 0
      %4421 = vmatpush1.bf16.msra.mxu0 %v4405
      %4422 = vmatprep.subr.bf16.mxu0 0
      %4423 = vmatpush1.bf16.msra.mxu0 %v4404
      %4424 = vmatprep.subr.bf16.mxu0 0
      %4425 = vmatpush1.bf16.msra.mxu0 %v4403
      %4426 = vmatprep.subr.bf16.mxu0 0
      %4427 = vmatpush1.bf16.msra.mxu0 %v4402
      %4428 = vmatprep.subr.bf16.mxu0 0
      %4429 = vmatpush1.bf16.msra.mxu0 %v4401
      %4430 = vmatprep.subr.bf16.mxu0 0
      %4431 = vmatpush1.bf16.msra.mxu0 %v4400
      %4432 = vmatprep.subr.bf16.mxu0 0
      %4433 = vmatpush2.bf16.msra.mxu0 0
      %4434 = vmatprep.subr.bf16.mxu0 0
      %4435 = vmatpush2.bf16.msra.mxu0 0
      %4436 = vmatprep.subr.bf16.mxu0 0
      %4437 = vmatpush2.bf16.msra.mxu0 0
      %4438 = vmatprep.subr.bf16.mxu0 0
      %4439 = vmatpush2.bf16.msra.mxu0 0
      %4440 = vmatprep.subr.bf16.mxu0 0
      %4441 = vmatpush2.bf16.msra.mxu0 0
      %4442 = vmatprep.subr.bf16.mxu0 0
      %4443 = vmatpush2.bf16.msra.mxu0 0
      %4444 = vmatprep.subr.bf16.mxu0 0
      %4445 = vmatpush2.bf16.msra.mxu0 0
      %4446 = vmatprep.subr.bf16.mxu0 0
      %4447 = vmatpush2.bf16.msra.mxu0 0
      %4448 = vmatprep.mubr.bf16.mxu0 0
      %4449 = vmatmul.mubr.bf16.gmra.mxu0 %v4309
      %v4450 = vpop.f32.mrf.mxu0
      %v4451 = vadd.f32 0.0, %v4450
      %v4452 = vpop.f32.mrf.mxu0
      %v4453 = vpop.f32.mrf.mxu0
      %v4454 = vadd.f32 0.0, %v4453
      %v4455 = vpop.f32.mrf.mxu0
      %4456 = vmatprep.mubr.bf16.mxu0 0
      %4457 = vmatmul.mubr.bf16.gmra.mxu0 %v4311
      %v4458 = vpop.f32.mrf.mxu0
      %v4459 = vadd.f32 0.0, %v4458
      %v4460 = vpop.f32.mrf.mxu0
      %v4461 = vpop.f32.mrf.mxu0
      %v4462 = vadd.f32 0.0, %v4461
      %v4463 = vpop.f32.mrf.mxu0
      %4464 = vmatprep.mubr.bf16.mxu0 0
      %4465 = vmatmul.mubr.bf16.gmra.mxu0 %v4313
      %v4466 = vpop.f32.mrf.mxu0
      %v4467 = vadd.f32 0.0, %v4466
      %v4468 = vpop.f32.mrf.mxu0
      %v4469 = vpop.f32.mrf.mxu0
      %v4470 = vadd.f32 0.0, %v4469
      %v4471 = vpop.f32.mrf.mxu0
      %4472 = vmatprep.mubr.bf16.mxu0 0
      %4473 = vmatmul.mubr.bf16.gmra.mxu0 %v4315
      %v4474 = vpop.f32.mrf.mxu0
      %v4475 = vadd.f32 0.0, %v4474
      %v4476 = vpop.f32.mrf.mxu0
      %v4477 = vpop.f32.mrf.mxu0
      %v4478 = vadd.f32 0.0, %v4477
      %v4479 = vpop.f32.mrf.mxu0
      %4480 = vmatprep.mubr.bf16.mxu0 0
      %4481 = vmatmul.mubr.bf16.gmra.mxu0 %v4317
      %v4482 = vpop.f32.mrf.mxu0
      %v4483 = vadd.f32 0.0, %v4482
      %v4484 = vpop.f32.mrf.mxu0
      %v4485 = vpop.f32.mrf.mxu0
      %v4486 = vadd.f32 0.0, %v4485
      %v4487 = vpop.f32.mrf.mxu0
      %4488 = vmatprep.mubr.bf16.mxu0 0
      %4489 = vmatmul.mubr.bf16.gmra.mxu0 %v4319
      %v4490 = vpop.f32.mrf.mxu0
      %v4491 = vadd.f32 0.0, %v4490
      %v4492 = vpop.f32.mrf.mxu0
      %v4493 = vpop.f32.mrf.mxu0
      %v4494 = vadd.f32 0.0, %v4493
      %v4495 = vpop.f32.mrf.mxu0
      %4496 = vmatprep.mubr.bf16.mxu0 0
      %4497 = vmatmul.mubr.bf16.gmra.mxu0 %v4321
      %v4498 = vpop.f32.mrf.mxu0
      %v4499 = vadd.f32 0.0, %v4498
      %v4500 = vpop.f32.mrf.mxu0
      %v4501 = vpop.f32.mrf.mxu0
      %v4502 = vadd.f32 0.0, %v4501
      %v4503 = vpop.f32.mrf.mxu0
      %4504 = vmatprep.mubr.bf16.mxu0 0
      %4505 = vmatmul.mubr.bf16.gmra.mxu0 %v4323
      %v4506 = vpop.f32.mrf.mxu0
      %v4507 = vadd.f32 0.0, %v4506
      %v4508 = vpop.f32.mrf.mxu0
      %v4509 = vpop.f32.mrf.mxu0
      %v4510 = vadd.f32 0.0, %v4509
      %v4511 = vpop.f32.mrf.mxu0
      %4512 = vmatprep.mubr.bf16.mxu0 0
      %4513 = vmatmul.mubr.bf16.gmra.mxu0 %v4325
      %v4514 = vpop.f32.mrf.mxu0
      %v4515 = vadd.f32 0.0, %v4514
      %v4516 = vpop.f32.mrf.mxu0
      %v4517 = vpop.f32.mrf.mxu0
      %v4518 = vadd.f32 0.0, %v4517
      %v4519 = vpop.f32.mrf.mxu0
      %4520 = vmatprep.mubr.bf16.mxu0 0
      %4521 = vmatmul.mubr.bf16.gmra.mxu0 %v4327
      %v4522 = vpop.f32.mrf.mxu0
      %v4523 = vadd.f32 0.0, %v4522
      %v4524 = vpop.f32.mrf.mxu0
      %v4525 = vpop.f32.mrf.mxu0
      %v4526 = vadd.f32 0.0, %v4525
      %v4527 = vpop.f32.mrf.mxu0
      %4528 = vmatprep.mubr.bf16.mxu0 0
      %4529 = vmatmul.mubr.bf16.gmra.mxu0 %v4329
      %v4530 = vpop.f32.mrf.mxu0
      %v4531 = vadd.f32 0.0, %v4530
      %v4532 = vpop.f32.mrf.mxu0
      %v4533 = vpop.f32.mrf.mxu0
      %v4534 = vadd.f32 0.0, %v4533
      %v4535 = vpop.f32.mrf.mxu0
      %4536 = vmatprep.mubr.bf16.mxu0 0
      %4537 = vmatmul.mubr.bf16.gmra.mxu0 %v4331
      %v4538 = vpop.f32.mrf.mxu0
      %v4539 = vadd.f32 0.0, %v4538
      %v4540 = vpop.f32.mrf.mxu0
      %v4541 = vpop.f32.mrf.mxu0
      %v4542 = vadd.f32 0.0, %v4541
      %v4543 = vpop.f32.mrf.mxu0
      %4544 = vmatprep.mubr.bf16.mxu0 0
      %4545 = vmatmul.mubr.bf16.gmra.mxu0 %v4333
      %v4546 = vpop.f32.mrf.mxu0
      %v4547 = vadd.f32 0.0, %v4546
      %v4548 = vpop.f32.mrf.mxu0
      %v4549 = vpop.f32.mrf.mxu0
      %v4550 = vadd.f32 0.0, %v4549
      %v4551 = vpop.f32.mrf.mxu0
      %4552 = vmatprep.mubr.bf16.mxu0 0
      %4553 = vmatmul.mubr.bf16.gmra.mxu0 %v4335
      %v4554 = vpop.f32.mrf.mxu0
      %v4555 = vadd.f32 0.0, %v4554
      %v4556 = vpop.f32.mrf.mxu0
      %v4557 = vpop.f32.mrf.mxu0
      %v4558 = vadd.f32 0.0, %v4557
      %v4559 = vpop.f32.mrf.mxu0
      %4560 = vmatprep.mubr.bf16.mxu0 0
      %4561 = vmatmul.mubr.bf16.gmra.mxu0 %v4337
      %v4562 = vpop.f32.mrf.mxu0
      %v4563 = vadd.f32 0.0, %v4562
      %v4564 = vpop.f32.mrf.mxu0
      %v4565 = vpop.f32.mrf.mxu0
      %v4566 = vadd.f32 0.0, %v4565
      %v4567 = vpop.f32.mrf.mxu0
      %4568 = vmatprep.mubr.bf16.mxu0 0
      %4569 = vmatmul.mubr.bf16.gmra.mxu0 %v4339
      %v4570 = vpop.f32.mrf.mxu0
      %v4571 = vadd.f32 0.0, %v4570
      %v4572 = vpop.f32.mrf.mxu0
      %v4573 = vpop.f32.mrf.mxu0
      %v4574 = vadd.f32 0.0, %v4573
      %v4575 = vpop.f32.mrf.mxu0
      %4576 = vmatprep.mubr.bf16.mxu0 0
      %4577 = vmatmul.mubr.bf16.gmra.mxu0 %v4341
      %v4578 = vpop.f32.mrf.mxu0
      %v4579 = vadd.f32 0.0, %v4578
      %v4580 = vpop.f32.mrf.mxu0
      %v4581 = vpop.f32.mrf.mxu0
      %v4582 = vadd.f32 0.0, %v4581
      %v4583 = vpop.f32.mrf.mxu0
      %4584 = vmatprep.mubr.bf16.mxu0 0
      %4585 = vmatmul.mubr.bf16.gmra.mxu0 %v4343
      %v4586 = vpop.f32.mrf.mxu0
      %v4587 = vadd.f32 0.0, %v4586
      %v4588 = vpop.f32.mrf.mxu0
      %v4589 = vpop.f32.mrf.mxu0
      %v4590 = vadd.f32 0.0, %v4589
      %v4591 = vpop.f32.mrf.mxu0
      %4592 = vmatprep.mubr.bf16.mxu0 0
      %4593 = vmatmul.mubr.bf16.gmra.mxu0 %v4345
      %v4594 = vpop.f32.mrf.mxu0
      %v4595 = vadd.f32 0.0, %v4594
      %v4596 = vpop.f32.mrf.mxu0
      %v4597 = vpop.f32.mrf.mxu0
      %v4598 = vadd.f32 0.0, %v4597
      %v4599 = vpop.f32.mrf.mxu0
      %4600 = vmatprep.mubr.bf16.mxu0 0
      %4601 = vmatmul.mubr.bf16.gmra.mxu0 %v4347
      %v4602 = vpop.f32.mrf.mxu0
      %v4603 = vadd.f32 0.0, %v4602
      %v4604 = vpop.f32.mrf.mxu0
      %v4605 = vpop.f32.mrf.mxu0
      %v4606 = vadd.f32 0.0, %v4605
      %v4607 = vpop.f32.mrf.mxu0
      %4608 = vdwg.mxu0
      %v4609 = vadd.f32 %v4246, %v4451
      %v4610 = vadd.f32 %v4247, %v4454
      %v4611 = vadd.f32 %v4248, %v4459
      %v4612 = vadd.f32 %v4249, %v4462
      %v4613 = vadd.f32 %v4250, %v4467
      %v4614 = vadd.f32 %v4251, %v4470
      %v4615 = vadd.f32 %v4252, %v4475
      %v4616 = vadd.f32 %v4253, %v4478
      %v4617 = vadd.f32 %v4254, %v4483
      %v4618 = vadd.f32 %v4255, %v4486
      %v4619 = vadd.f32 %v4256, %v4491
      %v4620 = vadd.f32 %v4257, %v4494
      %v4621 = vadd.f32 %v4258, %v4499
      %v4622 = vadd.f32 %v4259, %v4502
      %v4623 = vadd.f32 %v4260, %v4507
      %v4624 = vadd.f32 %v4261, %v4510
      %v4625 = vadd.f32 %v4262, %v4515
      %v4626 = vadd.f32 %v4263, %v4518
      %v4627 = vadd.f32 %v4264, %v4523
      %v4628 = vadd.f32 %v4265, %v4526
      %v4629 = vadd.f32 %v4266, %v4531
      %v4630 = vadd.f32 %v4267, %v4534
      %v4631 = vadd.f32 %v4268, %v4539
      %v4632 = vadd.f32 %v4269, %v4542
      %v4633 = vadd.f32 %v4270, %v4547
      %v4634 = vadd.f32 %v4271, %v4550
      %v4635 = vadd.f32 %v4272, %v4555
      %v4636 = vadd.f32 %v4273, %v4558
      %v4637 = vadd.f32 %v4274, %v4563
      %v4638 = vadd.f32 %v4275, %v4566
      %v4639 = vadd.f32 %v4276, %v4571
      %v4640 = vadd.f32 %v4277, %v4574
      %v4641 = vadd.f32 %v4278, %v4579
      %v4642 = vadd.f32 %v4279, %v4582
      %v4643 = vadd.f32 %v4280, %v4587
      %v4644 = vadd.f32 %v4281, %v4590
      %v4645 = vadd.f32 %v4282, %v4595
      %v4646 = vadd.f32 %v4283, %v4598
      %v4647 = vadd.f32 %v4284, %v4603
      %v4648 = vadd.f32 %v4285, %v4606
      %v4649 = vld [vmem:[%s4] sm:$0x1]
      %v4651 = vlaneseq
      %v4652 = vshrl.u32 %v4651, 7
      %v4653 = vsub.s32 0, %v4652
      %v4654 = vrot.slane %v4649, %v4653
      %v4656 = vmul.f32 %v4609, %v4654
      %v4657 = vmul.f32 %v4610, %v4654
      %v4658 = vmul.f32 %v4611, %v4654
      %v4659 = vmul.f32 %v4612, %v4654
      %v4660 = vmul.f32 %v4613, %v4654
      %v4661 = vmul.f32 %v4614, %v4654
      %v4662 = vmul.f32 %v4615, %v4654
      %v4663 = vmul.f32 %v4616, %v4654
      %v4664 = vmul.f32 %v4617, %v4654
      %v4665 = vmul.f32 %v4618, %v4654
      %v4666 = vmul.f32 %v4619, %v4654
      %v4667 = vmul.f32 %v4620, %v4654
      %v4668 = vmul.f32 %v4621, %v4654
      %v4669 = vmul.f32 %v4622, %v4654
      %v4670 = vmul.f32 %v4623, %v4654
      %v4671 = vmul.f32 %v4624, %v4654
      %v4672 = vmul.f32 %v4625, %v4654
      %v4673 = vmul.f32 %v4626, %v4654
      %v4674 = vmul.f32 %v4627, %v4654
      %v4675 = vmul.f32 %v4628, %v4654
      %v4676 = vmul.f32 %v4629, %v4654
      %v4677 = vmul.f32 %v4630, %v4654
      %v4678 = vmul.f32 %v4631, %v4654
      %v4679 = vmul.f32 %v4632, %v4654
      %v4680 = vmul.f32 %v4633, %v4654
      %v4681 = vmul.f32 %v4634, %v4654
      %v4682 = vmul.f32 %v4635, %v4654
      %v4683 = vmul.f32 %v4636, %v4654
      %v4684 = vmul.f32 %v4637, %v4654
      %v4685 = vmul.f32 %v4638, %v4654
      %v4686 = vmul.f32 %v4639, %v4654
      %v4687 = vmul.f32 %v4640, %v4654
      %v4688 = vmul.f32 %v4641, %v4654
      %v4689 = vmul.f32 %v4642, %v4654
      %v4690 = vmul.f32 %v4643, %v4654
      %v4691 = vmul.f32 %v4644, %v4654
      %v4692 = vmul.f32 %v4645, %v4654
      %v4693 = vmul.f32 %v4646, %v4654
      %v4694 = vmul.f32 %v4647, %v4654
      %v4695 = vmul.f32 %v4648, %v4654
      %v4696 = vld [vmem:[%s5] sm:$0x1]
      %v4698 = vlaneseq
      %v4699 = vshrl.u32 %v4698, 7
      %v4700 = vsub.s32 0, %v4699
      %v4701 = vrot.slane %v4696, %v4700
      %v4703 = vadd.f32 %v4656, %v4701
      %v4704 = vadd.f32 %v4657, %v4701
      %v4705 = vadd.f32 %v4658, %v4701
      %v4706 = vadd.f32 %v4659, %v4701
      %v4707 = vadd.f32 %v4660, %v4701
      %v4708 = vadd.f32 %v4661, %v4701
      %v4709 = vadd.f32 %v4662, %v4701
      %v4710 = vadd.f32 %v4663, %v4701
      %v4711 = vadd.f32 %v4664, %v4701
      %v4712 = vadd.f32 %v4665, %v4701
      %v4713 = vadd.f32 %v4666, %v4701
      %v4714 = vadd.f32 %v4667, %v4701
      %v4715 = vadd.f32 %v4668, %v4701
      %v4716 = vadd.f32 %v4669, %v4701
      %v4717 = vadd.f32 %v4670, %v4701
      %v4718 = vadd.f32 %v4671, %v4701
      %v4719 = vadd.f32 %v4672, %v4701
      %v4720 = vadd.f32 %v4673, %v4701
      %v4721 = vadd.f32 %v4674, %v4701
      %v4722 = vadd.f32 %v4675, %v4701
      %v4723 = vadd.f32 %v4676, %v4701
      %v4724 = vadd.f32 %v4677, %v4701
      %v4725 = vadd.f32 %v4678, %v4701
      %v4726 = vadd.f32 %v4679, %v4701
      %v4727 = vadd.f32 %v4680, %v4701
      %v4728 = vadd.f32 %v4681, %v4701
      %v4729 = vadd.f32 %v4682, %v4701
      %v4730 = vadd.f32 %v4683, %v4701
      %v4731 = vadd.f32 %v4684, %v4701
      %v4732 = vadd.f32 %v4685, %v4701
      %v4733 = vadd.f32 %v4686, %v4701
      %v4734 = vadd.f32 %v4687, %v4701
      %v4735 = vadd.f32 %v4688, %v4701
      %v4736 = vadd.f32 %v4689, %v4701
      %v4737 = vadd.f32 %v4690, %v4701
      %v4738 = vadd.f32 %v4691, %v4701
      %v4739 = vadd.f32 %v4692, %v4701
      %v4740 = vadd.f32 %v4693, %v4701
      %v4741 = vadd.f32 %v4694, %v4701
      %v4742 = vadd.f32 %v4695, %v4701
      %v4743 = vmax.f32 %v4703, 0.0
      %v4744 = vmax.f32 %v4704, 0.0
      %v4745 = vmax.f32 %v4705, 0.0
      %v4746 = vmax.f32 %v4706, 0.0
      %v4747 = vmax.f32 %v4707, 0.0
      %v4748 = vmax.f32 %v4708, 0.0
      %v4749 = vmax.f32 %v4709, 0.0
      %v4750 = vmax.f32 %v4710, 0.0
      %v4751 = vmax.f32 %v4711, 0.0
      %v4752 = vmax.f32 %v4712, 0.0
      %v4753 = vmax.f32 %v4713, 0.0
      %v4754 = vmax.f32 %v4714, 0.0
      %v4755 = vmax.f32 %v4715, 0.0
      %v4756 = vmax.f32 %v4716, 0.0
      %v4757 = vmax.f32 %v4717, 0.0
      %v4758 = vmax.f32 %v4718, 0.0
      %v4759 = vmax.f32 %v4719, 0.0
      %v4760 = vmax.f32 %v4720, 0.0
      %v4761 = vmax.f32 %v4721, 0.0
      %v4762 = vmax.f32 %v4722, 0.0
      %v4763 = vmax.f32 %v4723, 0.0
      %v4764 = vmax.f32 %v4724, 0.0
      %v4765 = vmax.f32 %v4725, 0.0
      %v4766 = vmax.f32 %v4726, 0.0
      %v4767 = vmax.f32 %v4727, 0.0
      %v4768 = vmax.f32 %v4728, 0.0
      %v4769 = vmax.f32 %v4729, 0.0
      %v4770 = vmax.f32 %v4730, 0.0
      %v4771 = vmax.f32 %v4731, 0.0
      %v4772 = vmax.f32 %v4732, 0.0
      %v4773 = vmax.f32 %v4733, 0.0
      %v4774 = vmax.f32 %v4734, 0.0
      %v4775 = vmax.f32 %v4735, 0.0
      %v4776 = vmax.f32 %v4736, 0.0
      %v4777 = vmax.f32 %v4737, 0.0
      %v4778 = vmax.f32 %v4738, 0.0
      %v4779 = vmax.f32 %v4739, 0.0
      %v4780 = vmax.f32 %v4740, 0.0
      %v4781 = vmax.f32 %v4741, 0.0
      %v4782 = vmax.f32 %v4742, 0.0
      %s4783 = ssub.s32 %s429, 1
      %v4784 = vstv %s4783
      %v4785 = vadd.s32 %v4784, 1
      %v4786 = vadd.s32 %v4784, 2
      %v4787 = vadd.s32 %v4784, 3
      %v4788 = vadd.s32 %v4784, 4
      %v4789 = vadd.s32 %v4784, 5
      %v4790 = vadd.s32 %v4784, 6
      %v4791 = vadd.s32 %v4784, 7
      %v4792 = vadd.s32 %v4784, 8
      %v4793 = vadd.s32 %v4784, 9
      %v4794 = vlaneseq
      %v4795 = vshrl.u32 %v4794, 7
      %v4796 = vadd.s32 %v4795, 8
      %v4797 = vadd.s32 %v4795, 16
      %v4798 = vadd.s32 %v4795, 24
      %v4799 = vsub.s32 %v4795, 1
      %v4800 = vsub.s32 %v4796, 1
      %v4801 = vsub.s32 %v4797, 1
      %v4802 = vsub.s32 %v4798, 1
      %vm4803 = vcmp.ge.s32.totalorder %v4784, 0
      %vm4804 = vcmp.ge.s32.totalorder %v4785, 0
      %vm4805 = vcmp.ge.s32.totalorder %v4786, 0
      %vm4806 = vcmp.ge.s32.totalorder %v4787, 0
      %vm4807 = vcmp.ge.s32.totalorder %v4788, 0
      %vm4808 = vcmp.ge.s32.totalorder %v4789, 0
      %vm4809 = vcmp.ge.s32.totalorder %v4790, 0
      %vm4810 = vcmp.ge.s32.totalorder %v4791, 0
      %vm4811 = vcmp.ge.s32.totalorder %v4792, 0
      %vm4812 = vcmp.ge.s32.totalorder %v4793, 0
      %vm4813 = vcmp.lt.s32.totalorder %v4784, 16
      %vm4814 = vcmp.lt.s32.totalorder %v4785, 16
      %vm4815 = vcmp.lt.s32.totalorder %v4786, 16
      %vm4816 = vcmp.lt.s32.totalorder %v4787, 16
      %vm4817 = vcmp.lt.s32.totalorder %v4788, 16
      %vm4818 = vcmp.lt.s32.totalorder %v4789, 16
      %vm4819 = vcmp.lt.s32.totalorder %v4790, 16
      %vm4820 = vcmp.lt.s32.totalorder %v4791, 16
      %vm4821 = vcmp.lt.s32.totalorder %v4792, 16
      %vm4822 = vcmp.lt.s32.totalorder %v4793, 16
      %vm4823 = vmand %vm4803, %vm4813
      %vm4824 = vmand %vm4804, %vm4814
      %vm4825 = vmand %vm4805, %vm4815
      %vm4826 = vmand %vm4806, %vm4816
      %vm4827 = vmand %vm4807, %vm4817
      %vm4828 = vmand %vm4808, %vm4818
      %vm4829 = vmand %vm4809, %vm4819
      %vm4830 = vmand %vm4810, %vm4820
      %vm4831 = vmand %vm4811, %vm4821
      %vm4832 = vmand %vm4812, %vm4822
      %vm4833 = vcmp.ge.s32.totalorder %v4799, 0
      %vm4834 = vcmp.ge.s32.totalorder %v4800, 0
      %vm4835 = vcmp.ge.s32.totalorder %v4801, 0
      %vm4836 = vcmp.ge.s32.totalorder %v4802, 0
      %vm4837 = vmand %vm4823, %vm4833
      %vm4838 = vmand %vm4823, %vm4834
      %vm4839 = vmand %vm4823, %vm4835
      %vm4840 = vmand %vm4823, %vm4836
      %vm4841 = vmand %vm4824, %vm4833
      %vm4842 = vmand %vm4824, %vm4834
      %vm4843 = vmand %vm4824, %vm4835
      %vm4844 = vmand %vm4824, %vm4836
      %vm4845 = vmand %vm4825, %vm4833
      %vm4846 = vmand %vm4825, %vm4834
      %vm4847 = vmand %vm4825, %vm4835
      %vm4848 = vmand %vm4825, %vm4836
      %vm4849 = vmand %vm4826, %vm4833
      %vm4850 = vmand %vm4826, %vm4834
      %vm4851 = vmand %vm4826, %vm4835
      %vm4852 = vmand %vm4826, %vm4836
      %vm4853 = vmand %vm4827, %vm4833
      %vm4854 = vmand %vm4827, %vm4834
      %vm4855 = vmand %vm4827, %vm4835
      %vm4856 = vmand %vm4827, %vm4836
      %vm4857 = vmand %vm4828, %vm4833
      %vm4858 = vmand %vm4828, %vm4834
      %vm4859 = vmand %vm4828, %vm4835
      %vm4860 = vmand %vm4828, %vm4836
      %vm4861 = vmand %vm4829, %vm4833
      %vm4862 = vmand %vm4829, %vm4834
      %vm4863 = vmand %vm4829, %vm4835
      %vm4864 = vmand %vm4829, %vm4836
      %vm4865 = vmand %vm4830, %vm4833
      %vm4866 = vmand %vm4830, %vm4834
      %vm4867 = vmand %vm4830, %vm4835
      %vm4868 = vmand %vm4830, %vm4836
      %vm4869 = vmand %vm4831, %vm4833
      %vm4870 = vmand %vm4831, %vm4834
      %vm4871 = vmand %vm4831, %vm4835
      %vm4872 = vmand %vm4831, %vm4836
      %vm4873 = vmand %vm4832, %vm4833
      %vm4874 = vmand %vm4832, %vm4834
      %vm4875 = vmand %vm4832, %vm4835
      %vm4876 = vmand %vm4832, %vm4836
      %vm4877 = vcmp.lt.s32.totalorder %v4799, 16
      %vm4878 = vcmp.lt.s32.totalorder %v4800, 16
      %vm4879 = vcmp.lt.s32.totalorder %v4801, 16
      %vm4880 = vcmp.lt.s32.totalorder %v4802, 16
      %vm4881 = vmand %vm4837, %vm4877
      %vm4882 = vmand %vm4838, %vm4878
      %vm4883 = vmand %vm4839, %vm4879
      %vm4884 = vmand %vm4840, %vm4880
      %vm4885 = vmand %vm4841, %vm4877
      %vm4886 = vmand %vm4842, %vm4878
      %vm4887 = vmand %vm4843, %vm4879
      %vm4888 = vmand %vm4844, %vm4880
      %vm4889 = vmand %vm4845, %vm4877
      %vm4890 = vmand %vm4846, %vm4878
      %vm4891 = vmand %vm4847, %vm4879
      %vm4892 = vmand %vm4848, %vm4880
      %vm4893 = vmand %vm4849, %vm4877
      %vm4894 = vmand %vm4850, %vm4878
      %vm4895 = vmand %vm4851, %vm4879
      %vm4896 = vmand %vm4852, %vm4880
      %vm4897 = vmand %vm4853, %vm4877
      %vm4898 = vmand %vm4854, %vm4878
      %vm4899 = vmand %vm4855, %vm4879
      %vm4900 = vmand %vm4856, %vm4880
      %vm4901 = vmand %vm4857, %vm4877
      %vm4902 = vmand %vm4858, %vm4878
      %vm4903 = vmand %vm4859, %vm4879
      %vm4904 = vmand %vm4860, %vm4880
      %vm4905 = vmand %vm4861, %vm4877
      %vm4906 = vmand %vm4862, %vm4878
      %vm4907 = vmand %vm4863, %vm4879
      %vm4908 = vmand %vm4864, %vm4880
      %vm4909 = vmand %vm4865, %vm4877
      %vm4910 = vmand %vm4866, %vm4878
      %vm4911 = vmand %vm4867, %vm4879
      %vm4912 = vmand %vm4868, %vm4880
      %vm4913 = vmand %vm4869, %vm4877
      %vm4914 = vmand %vm4870, %vm4878
      %vm4915 = vmand %vm4871, %vm4879
      %vm4916 = vmand %vm4872, %vm4880
      %vm4917 = vmand %vm4873, %vm4877
      %vm4918 = vmand %vm4874, %vm4878
      %vm4919 = vmand %vm4875, %vm4879
      %vm4920 = vmand %vm4876, %vm4880
      %v4921 = vsel %vm4881, %v4743, 0.0
      %v4922 = vsel %vm4882, %v4744, 0.0
      %v4923 = vsel %vm4883, %v4745, 0.0
      %v4924 = vsel %vm4884, %v4746, 0.0
      %v4925 = vsel %vm4885, %v4747, 0.0
      %v4926 = vsel %vm4886, %v4748, 0.0
      %v4927 = vsel %vm4887, %v4749, 0.0
      %v4928 = vsel %vm4888, %v4750, 0.0
      %v4929 = vsel %vm4889, %v4751, 0.0
      %v4930 = vsel %vm4890, %v4752, 0.0
      %v4931 = vsel %vm4891, %v4753, 0.0
      %v4932 = vsel %vm4892, %v4754, 0.0
      %v4933 = vsel %vm4893, %v4755, 0.0
      %v4934 = vsel %vm4894, %v4756, 0.0
      %v4935 = vsel %vm4895, %v4757, 0.0
      %v4936 = vsel %vm4896, %v4758, 0.0
      %v4937 = vsel %vm4897, %v4759, 0.0
      %v4938 = vsel %vm4898, %v4760, 0.0
      %v4939 = vsel %vm4899, %v4761, 0.0
      %v4940 = vsel %vm4900, %v4762, 0.0
      %v4941 = vsel %vm4901, %v4763, 0.0
      %v4942 = vsel %vm4902, %v4764, 0.0
      %v4943 = vsel %vm4903, %v4765, 0.0
      %v4944 = vsel %vm4904, %v4766, 0.0
      %v4945 = vsel %vm4905, %v4767, 0.0
      %v4946 = vsel %vm4906, %v4768, 0.0
      %v4947 = vsel %vm4907, %v4769, 0.0
      %v4948 = vsel %vm4908, %v4770, 0.0
      %v4949 = vsel %vm4909, %v4771, 0.0
      %v4950 = vsel %vm4910, %v4772, 0.0
      %v4951 = vsel %vm4911, %v4773, 0.0
      %v4952 = vsel %vm4912, %v4774, 0.0
      %v4953 = vsel %vm4913, %v4775, 0.0
      %v4954 = vsel %vm4914, %v4776, 0.0
      %v4955 = vsel %vm4915, %v4777, 0.0
      %v4956 = vsel %vm4916, %v4778, 0.0
      %v4957 = vsel %vm4917, %v4779, 0.0
      %v4958 = vsel %vm4918, %v4780, 0.0
      %v4959 = vsel %vm4919, %v4781, 0.0
      %v4960 = vsel %vm4920, %v4782, 0.0
      %v4961 = vpack.c.bf16 %v4922, %v4921
      %v4962 = vpack.c.bf16 %v4924, %v4923
      %v4963 = vpack.c.bf16 %v4926, %v4925
      %v4964 = vpack.c.bf16 %v4928, %v4927
      %v4965 = vpack.c.bf16 %v4930, %v4929
      %v4966 = vpack.c.bf16 %v4932, %v4931
      %v4967 = vpack.c.bf16 %v4934, %v4933
      %v4968 = vpack.c.bf16 %v4936, %v4935
      %v4969 = vpack.c.bf16 %v4938, %v4937
      %v4970 = vpack.c.bf16 %v4940, %v4939
      %v4971 = vpack.c.bf16 %v4942, %v4941
      %v4972 = vpack.c.bf16 %v4944, %v4943
      %v4973 = vpack.c.bf16 %v4946, %v4945
      %v4974 = vpack.c.bf16 %v4948, %v4947
      %v4975 = vpack.c.bf16 %v4950, %v4949
      %v4976 = vpack.c.bf16 %v4952, %v4951
      %v4977 = vpack.c.bf16 %v4954, %v4953
      %v4978 = vpack.c.bf16 %v4956, %v4955
      %v4979 = vpack.c.bf16 %v4958, %v4957
      %v4980 = vpack.c.bf16 %v4960, %v4959
      %v5001 = vunpack.c.l.b16 %v4961
      %v5002 = vunpack.c.h.b16 %v4961
      %v5003 = vunpack.c.l.b16 %v4962
      %v5004 = vunpack.c.h.b16 %v4962
      %v5005 = vunpack.c.l.b16 %v4963
      %v5006 = vunpack.c.h.b16 %v4963
      %v5007 = vunpack.c.l.b16 %v4964
      %v5008 = vunpack.c.h.b16 %v4964
      %v5009 = vunpack.c.l.b16 %v4965
      %v5010 = vunpack.c.h.b16 %v4965
      %v5011 = vunpack.c.l.b16 %v4966
      %v5012 = vunpack.c.h.b16 %v4966
      %v5013 = vunpack.c.l.b16 %v4967
      %v5014 = vunpack.c.h.b16 %v4967
      %v5015 = vunpack.c.l.b16 %v4968
      %v5016 = vunpack.c.h.b16 %v4968
      %v5017 = vunpack.c.l.b16 %v4969
      %v5018 = vunpack.c.h.b16 %v4969
      %v5019 = vunpack.c.l.b16 %v4970
      %v5020 = vunpack.c.h.b16 %v4970
      %v5021 = vunpack.c.l.b16 %v4971
      %v5022 = vunpack.c.h.b16 %v4971
      %v5023 = vunpack.c.l.b16 %v4972
      %v5024 = vunpack.c.h.b16 %v4972
      %v5025 = vunpack.c.l.b16 %v4973
      %v5026 = vunpack.c.h.b16 %v4973
      %v5027 = vunpack.c.l.b16 %v4974
      %v5028 = vunpack.c.h.b16 %v4974
      %v5029 = vunpack.c.l.b16 %v4975
      %v5030 = vunpack.c.h.b16 %v4975
      %v5031 = vunpack.c.l.b16 %v4976
      %v5032 = vunpack.c.h.b16 %v4976
      %v5033 = vunpack.c.l.b16 %v4977
      %v5034 = vunpack.c.h.b16 %v4977
      %v5035 = vunpack.c.l.b16 %v4978
      %v5036 = vunpack.c.h.b16 %v4978
      %v5037 = vunpack.c.l.b16 %v4979
      %v5038 = vunpack.c.h.b16 %v4979
      %v5039 = vunpack.c.l.b16 %v4980
      %v5040 = vunpack.c.h.b16 %v4980
      %v5041 = vpack.c.b16 %v5001, %v5001
      %v5042 = vpack.c.b16 %v5002, %v5002
      %v5043 = vpack.c.b16 %v5003, %v5003
      %v5044 = vpack.c.b16 %v5004, %v5004
      %v5045 = vpack.c.b16 %v5005, %v5005
      %v5046 = vpack.c.b16 %v5006, %v5006
      %v5047 = vpack.c.b16 %v5007, %v5007
      %v5048 = vpack.c.b16 %v5008, %v5008
      %v5049 = vpack.c.b16 %v5009, %v5009
      %v5050 = vpack.c.b16 %v5010, %v5010
      %v5051 = vpack.c.b16 %v5011, %v5011
      %v5052 = vpack.c.b16 %v5012, %v5012
      %v5053 = vpack.c.b16 %v5013, %v5013
      %v5054 = vpack.c.b16 %v5014, %v5014
      %v5055 = vpack.c.b16 %v5015, %v5015
      %v5056 = vpack.c.b16 %v5016, %v5016
      %v5057 = vpack.c.b16 %v5017, %v5017
      %v5058 = vpack.c.b16 %v5018, %v5018
      %v5059 = vpack.c.b16 %v5019, %v5019
      %v5060 = vpack.c.b16 %v5020, %v5020
      %v5061 = vpack.c.b16 %v5021, %v5021
      %v5062 = vpack.c.b16 %v5022, %v5022
      %v5063 = vpack.c.b16 %v5023, %v5023
      %v5064 = vpack.c.b16 %v5024, %v5024
      %v5065 = vpack.c.b16 %v5025, %v5025
      %v5066 = vpack.c.b16 %v5026, %v5026
      %v5067 = vpack.c.b16 %v5027, %v5027
      %v5068 = vpack.c.b16 %v5028, %v5028
      %v5069 = vpack.c.b16 %v5029, %v5029
      %v5070 = vpack.c.b16 %v5030, %v5030
      %v5071 = vpack.c.b16 %v5031, %v5031
      %v5072 = vpack.c.b16 %v5032, %v5032
      %v5073 = vpack.c.b16 %v5033, %v5033
      %v5074 = vpack.c.b16 %v5034, %v5034
      %v5075 = vpack.c.b16 %v5035, %v5035
      %v5076 = vpack.c.b16 %v5036, %v5036
      %v5077 = vpack.c.b16 %v5037, %v5037
      %v5078 = vpack.c.b16 %v5038, %v5038
      %v5079 = vpack.c.b16 %v5039, %v5039
      %v5080 = vpack.c.b16 %v5040, %v5040
      %5121 = vst [vmem:[#allocation3] sm:$0xf] %v5041
      %5122 = vst [vmem:[#allocation3 + $0x4] sm:$0xf] %v5042
      %5123 = vst [vmem:[#allocation3 + $0x8] sm:$0xf] %v5043
      %5124 = vst [vmem:[#allocation3 + $0xc] sm:$0xf] %v5044
      %5125 = vst [vmem:[#allocation3 + $0x10] sm:$0xf] %v5045
      %5126 = vst [vmem:[#allocation3 + $0x14] sm:$0xf] %v5046
      %5127 = vst [vmem:[#allocation3 + $0x18] sm:$0xf] %v5047
      %5128 = vst [vmem:[#allocation3 + $0x1c] sm:$0xf] %v5048
      %5129 = vst [vmem:[#allocation3 + $0x20] sm:$0xf] %v5049
      %5130 = vst [vmem:[#allocation3 + $0x24] sm:$0xf] %v5050
      %5131 = vst [vmem:[#allocation3 + $0x28] sm:$0xf] %v5051
      %5132 = vst [vmem:[#allocation3 + $0x2c] sm:$0xf] %v5052
      %5133 = vst [vmem:[#allocation3 + $0x30] sm:$0xf] %v5053
      %5134 = vst [vmem:[#allocation3 + $0x34] sm:$0xf] %v5054
      %5135 = vst [vmem:[#allocation3 + $0x38] sm:$0xf] %v5055
      %5136 = vst [vmem:[#allocation3 + $0x3c] sm:$0xf] %v5056
      %5137 = vst [vmem:[#allocation3 + $0x40] sm:$0xf] %v5057
      %5138 = vst [vmem:[#allocation3 + $0x44] sm:$0xf] %v5058
      %5139 = vst [vmem:[#allocation3 + $0x48] sm:$0xf] %v5059
      %5140 = vst [vmem:[#allocation3 + $0x4c] sm:$0xf] %v5060
      %5141 = vst [vmem:[#allocation3 + $0x50] sm:$0xf] %v5061
      %5142 = vst [vmem:[#allocation3 + $0x54] sm:$0xf] %v5062
      %5143 = vst [vmem:[#allocation3 + $0x58] sm:$0xf] %v5063
      %5144 = vst [vmem:[#allocation3 + $0x5c] sm:$0xf] %v5064
      %5145 = vst [vmem:[#allocation3 + $0x60] sm:$0xf] %v5065
      %5146 = vst [vmem:[#allocation3 + $0x64] sm:$0xf] %v5066
      %5147 = vst [vmem:[#allocation3 + $0x68] sm:$0xf] %v5067
      %5148 = vst [vmem:[#allocation3 + $0x6c] sm:$0xf] %v5068
      %5149 = vst [vmem:[#allocation3 + $0x70] sm:$0xf] %v5069
      %5150 = vst [vmem:[#allocation3 + $0x74] sm:$0xf] %v5070
      %5151 = vst [vmem:[#allocation3 + $0x78] sm:$0xf] %v5071
      %5152 = vst [vmem:[#allocation3 + $0x7c] sm:$0xf] %v5072
      %5153 = vst [vmem:[#allocation3 + $0x80] sm:$0xf] %v5073
      %5154 = vst [vmem:[#allocation3 + $0x84] sm:$0xf] %v5074
      %5155 = vst [vmem:[#allocation3 + $0x88] sm:$0xf] %v5075
      %5156 = vst [vmem:[#allocation3 + $0x8c] sm:$0xf] %v5076
      %5157 = vst [vmem:[#allocation3 + $0x90] sm:$0xf] %v5077
      %5158 = vst [vmem:[#allocation3 + $0x94] sm:$0xf] %v5078
      %5159 = vst [vmem:[#allocation3 + $0x98] sm:$0xf] %v5079
      %5160 = vst [vmem:[#allocation3 + $0x9c] sm:$0xf] %v5080
      %5161 = vst [vmem:[#allocation3 + $0xa0] sm:$0xf] 0
      %v5162 = vld [vmem:[#allocation3] sm:$0xf]
      %v5163 = vld [vmem:[#allocation3 + $0x4] sm:$0xf]
      %v5164 = vld [vmem:[#allocation3 + $0x8] sm:$0xf]
      %v5165 = vld [vmem:[#allocation3 + $0xc] sm:$0xf]
      %v5166 = vld [vmem:[#allocation3 + $0x10] sm:$0xf]
      %v5167 = vld [vmem:[#allocation3 + $0x14] sm:$0xf]
      %v5168 = vld [vmem:[#allocation3 + $0x18] sm:$0xf]
      %v5169 = vld [vmem:[#allocation3 + $0x1c] sm:$0xf]
      %v5170 = vld [vmem:[#allocation3 + $0x20] sm:$0xf]
      %v5171 = vld [vmem:[#allocation3 + $0x24] sm:$0xf]
      %v5172 = vld [vmem:[#allocation3 + $0x28] sm:$0xf]
      %v5173 = vld [vmem:[#allocation3 + $0x2c] sm:$0xf]
      %v5174 = vld [vmem:[#allocation3 + $0x30] sm:$0xf]
      %v5175 = vld [vmem:[#allocation3 + $0x34] sm:$0xf]
      %v5176 = vld [vmem:[#allocation3 + $0x38] sm:$0xf]
      %v5177 = vld [vmem:[#allocation3 + $0x3c] sm:$0xf]
      %v5178 = vld [vmem:[#allocation3 + $0x40] sm:$0xf]
      %v5179 = vld [vmem:[#allocation3 + $0x44] sm:$0xf]
      %v5180 = vld [vmem:[#allocation3 + $0x48] sm:$0xf]
      %v5181 = vld [vmem:[#allocation3 + $0x4c] sm:$0xf]
      %v5182 = vld [vmem:[#allocation3 + $0x50] sm:$0xf]
      %v5183 = vld [vmem:[#allocation3 + $0x54] sm:$0xf]
      %v5184 = vld [vmem:[#allocation3 + $0x58] sm:$0xf]
      %v5185 = vld [vmem:[#allocation3 + $0x5c] sm:$0xf]
      %v5186 = vld [vmem:[#allocation3 + $0x60] sm:$0xf]
      %v5187 = vld [vmem:[#allocation3 + $0x64] sm:$0xf]
      %v5188 = vld [vmem:[#allocation3 + $0x68] sm:$0xf]
      %v5189 = vld [vmem:[#allocation3 + $0x6c] sm:$0xf]
      %v5190 = vld [vmem:[#allocation3 + $0x70] sm:$0xf]
      %v5191 = vld [vmem:[#allocation3 + $0x74] sm:$0xf]
      %v5192 = vld [vmem:[#allocation3 + $0x78] sm:$0xf]
      %v5193 = vld [vmem:[#allocation3 + $0x7c] sm:$0xf]
      %v5194 = vld [vmem:[%s3] sm:$0xf]
      %v5195 = vld [vmem:[%s3 + $0x4] sm:$0xf]
      %v5196 = vld [vmem:[%s3 + $0x8] sm:$0xf]
      %v5197 = vld [vmem:[%s3 + $0xc] sm:$0xf]
      %v5198 = vld [vmem:[%s3 + $0x10] sm:$0xf]
      %v5199 = vld [vmem:[%s3 + $0x14] sm:$0xf]
      %v5200 = vld [vmem:[%s3 + $0x18] sm:$0xf]
      %v5201 = vld [vmem:[%s3 + $0x1c] sm:$0xf]
      %v5202 = vld [vmem:[%s3 + $0x20] sm:$0xf]
      %v5203 = vld [vmem:[%s3 + $0x24] sm:$0xf]
      %v5204 = vld [vmem:[%s3 + $0x28] sm:$0xf]
      %v5205 = vld [vmem:[%s3 + $0x2c] sm:$0xf]
      %v5206 = vld [vmem:[%s3 + $0x30] sm:$0xf]
      %v5207 = vld [vmem:[%s3 + $0x34] sm:$0xf]
      %v5208 = vld [vmem:[%s3 + $0x38] sm:$0xf]
      %v5209 = vld [vmem:[%s3 + $0x3c] sm:$0xf]
      %v5210 = vld [vmem:[#allocation3 + $0x80] sm:$0x1]
      %s5211 = scalar_lea.vmem %s3, 64
      %v5212 = vld [vmem:[%s5211] sm:$0xf]
      %v5213 = vld [vmem:[%s5211 + $0x4] sm:$0xf]
      %v5214 = vld [vmem:[%s5211 + $0x8] sm:$0xf]
      %v5215 = vld [vmem:[%s5211 + $0xc] sm:$0xf]
      %v5216 = vld [vmem:[%s5211 + $0x10] sm:$0xf]
      %v5217 = vld [vmem:[%s5211 + $0x14] sm:$0xf]
      %v5218 = vld [vmem:[%s5211 + $0x18] sm:$0xf]
      %v5219 = vld [vmem:[%s5211 + $0x1c] sm:$0xf]
      %v5220 = vld [vmem:[%s5211 + $0x20] sm:$0xf]
      %v5221 = vld [vmem:[%s5211 + $0x24] sm:$0xf]
      %v5222 = vld [vmem:[%s5211 + $0x28] sm:$0xf]
      %v5223 = vld [vmem:[%s5211 + $0x2c] sm:$0xf]
      %v5224 = vld [vmem:[%s5211 + $0x30] sm:$0xf]
      %v5225 = vld [vmem:[%s5211 + $0x34] sm:$0xf]
      %v5226 = vld [vmem:[%s5211 + $0x38] sm:$0xf]
      %v5227 = vld [vmem:[%s5211 + $0x3c] sm:$0xf]
      %v5261 = vunpack.c.l.b16 %v5162
      %v5262 = vunpack.c.l.b16 %v5163
      %v5263 = vunpack.c.l.b16 %v5164
      %v5264 = vunpack.c.l.b16 %v5165
      %v5265 = vunpack.c.l.b16 %v5166
      %v5266 = vunpack.c.l.b16 %v5167
      %v5267 = vunpack.c.l.b16 %v5168
      %v5268 = vunpack.c.l.b16 %v5169
      %v5269 = vunpack.c.l.b16 %v5170
      %v5270 = vunpack.c.l.b16 %v5171
      %v5271 = vunpack.c.l.b16 %v5172
      %v5272 = vunpack.c.l.b16 %v5173
      %v5273 = vunpack.c.l.b16 %v5174
      %v5274 = vunpack.c.l.b16 %v5175
      %v5275 = vunpack.c.l.b16 %v5176
      %v5276 = vunpack.c.l.b16 %v5177
      %v5277 = vunpack.c.l.b16 %v5178
      %v5278 = vunpack.c.l.b16 %v5179
      %v5279 = vunpack.c.l.b16 %v5180
      %v5280 = vunpack.c.l.b16 %v5181
      %v5281 = vunpack.c.l.b16 %v5182
      %v5282 = vunpack.c.l.b16 %v5183
      %v5283 = vunpack.c.l.b16 %v5184
      %v5284 = vunpack.c.l.b16 %v5185
      %v5285 = vunpack.c.l.b16 %v5186
      %v5286 = vunpack.c.l.b16 %v5187
      %v5287 = vunpack.c.l.b16 %v5188
      %v5288 = vunpack.c.l.b16 %v5189
      %v5289 = vunpack.c.l.b16 %v5190
      %v5290 = vunpack.c.l.b16 %v5191
      %v5291 = vunpack.c.l.b16 %v5192
      %v5292 = vunpack.c.l.b16 %v5193
      %v5293 = vunpack.c.l.b16 %v5210
      %v5294 = vpack.c.b16 %v5262, %v5261
      %v5295 = vpack.c.b16 %v5264, %v5263
      %v5296 = vpack.c.b16 %v5266, %v5265
      %v5297 = vpack.c.b16 %v5268, %v5267
      %v5298 = vpack.c.b16 %v5270, %v5269
      %v5299 = vpack.c.b16 %v5272, %v5271
      %v5300 = vpack.c.b16 %v5274, %v5273
      %v5301 = vpack.c.b16 %v5276, %v5275
      %v5302 = vpack.c.b16 %v5278, %v5277
      %v5303 = vpack.c.b16 %v5280, %v5279
      %v5304 = vpack.c.b16 %v5282, %v5281
      %v5305 = vpack.c.b16 %v5284, %v5283
      %v5306 = vpack.c.b16 %v5286, %v5285
      %v5307 = vpack.c.b16 %v5288, %v5287
      %v5308 = vpack.c.b16 %v5290, %v5289
      %v5309 = vpack.c.b16 %v5292, %v5291
      %v5310 = vpack.c.b16 %v5293, %v5293
      %v5312 = vshrl.u32 %v5294, 16
      %v5314 = vshll.u32 %v5294, 16
      %v5316 = vrot.slane %v5314, 1
      %v5317 = vor.u32 %v5312, %v5316
      %v5319 = vshll.u32 %v5295, 16
      %v5321 = vrot.slane %v5319, 1
      %v5322 = vsel %vm704, %v5317, %v5321
      %v5323 = vshrl.u32 %v5295, 16
      %v5325 = vor.u32 %v5323, %v5321
      %v5327 = vshll.u32 %v5296, 16
      %v5329 = vrot.slane %v5327, 1
      %v5330 = vsel %vm704, %v5325, %v5329
      %v5331 = vshrl.u32 %v5296, 16
      %v5333 = vor.u32 %v5331, %v5329
      %v5335 = vshll.u32 %v5297, 16
      %v5337 = vrot.slane %v5335, 1
      %v5338 = vsel %vm704, %v5333, %v5337
      %v5339 = vshrl.u32 %v5297, 16
      %v5341 = vor.u32 %v5339, %v5337
      %v5343 = vshll.u32 %v5298, 16
      %v5345 = vrot.slane %v5343, 1
      %v5346 = vsel %vm704, %v5341, %v5345
      %v5347 = vshrl.u32 %v5298, 16
      %v5349 = vor.u32 %v5347, %v5345
      %v5351 = vshll.u32 %v5299, 16
      %v5353 = vrot.slane %v5351, 1
      %v5354 = vsel %vm704, %v5349, %v5353
      %v5355 = vshrl.u32 %v5299, 16
      %v5357 = vor.u32 %v5355, %v5353
      %v5359 = vshll.u32 %v5300, 16
      %v5361 = vrot.slane %v5359, 1
      %v5362 = vsel %vm704, %v5357, %v5361
      %v5363 = vshrl.u32 %v5300, 16
      %v5365 = vor.u32 %v5363, %v5361
      %v5367 = vshll.u32 %v5301, 16
      %v5369 = vrot.slane %v5367, 1
      %v5370 = vsel %vm704, %v5365, %v5369
      %v5371 = vshrl.u32 %v5301, 16
      %v5373 = vor.u32 %v5371, %v5369
      %v5375 = vshll.u32 %v5302, 16
      %v5377 = vrot.slane %v5375, 1
      %v5378 = vsel %vm704, %v5373, %v5377
      %v5379 = vshrl.u32 %v5302, 16
      %v5381 = vor.u32 %v5379, %v5377
      %v5383 = vshll.u32 %v5303, 16
      %v5385 = vrot.slane %v5383, 1
      %v5386 = vsel %vm704, %v5381, %v5385
      %v5387 = vshrl.u32 %v5303, 16
      %v5389 = vor.u32 %v5387, %v5385
      %v5391 = vshll.u32 %v5304, 16
      %v5393 = vrot.slane %v5391, 1
      %v5394 = vsel %vm704, %v5389, %v5393
      %v5395 = vshrl.u32 %v5304, 16
      %v5397 = vor.u32 %v5395, %v5393
      %v5399 = vshll.u32 %v5305, 16
      %v5401 = vrot.slane %v5399, 1
      %v5402 = vsel %vm704, %v5397, %v5401
      %v5403 = vshrl.u32 %v5305, 16
      %v5405 = vor.u32 %v5403, %v5401
      %v5407 = vshll.u32 %v5306, 16
      %v5409 = vrot.slane %v5407, 1
      %v5410 = vsel %vm704, %v5405, %v5409
      %v5411 = vshrl.u32 %v5306, 16
      %v5413 = vor.u32 %v5411, %v5409
      %v5415 = vshll.u32 %v5307, 16
      %v5417 = vrot.slane %v5415, 1
      %v5418 = vsel %vm704, %v5413, %v5417
      %v5419 = vshrl.u32 %v5307, 16
      %v5421 = vor.u32 %v5419, %v5417
      %v5423 = vshll.u32 %v5308, 16
      %v5425 = vrot.slane %v5423, 1
      %v5426 = vsel %vm704, %v5421, %v5425
      %v5427 = vshrl.u32 %v5308, 16
      %v5429 = vor.u32 %v5427, %v5425
      %v5431 = vshll.u32 %v5309, 16
      %v5433 = vrot.slane %v5431, 1
      %v5434 = vsel %vm704, %v5429, %v5433
      %v5435 = vshrl.u32 %v5309, 16
      %v5437 = vor.u32 %v5435, %v5433
      %v5439 = vshll.u32 %v5310, 16
      %v5441 = vrot.slane %v5439, 1
      %v5442 = vsel %vm704, %v5437, %v5441
      %v5475 = vunpack.c.l.b16 %v5212
      %v5476 = vunpack.c.l.b16 %v5213
      %v5477 = vunpack.c.l.b16 %v5214
      %v5478 = vunpack.c.l.b16 %v5215
      %v5479 = vunpack.c.l.b16 %v5216
      %v5480 = vunpack.c.l.b16 %v5217
      %v5481 = vunpack.c.l.b16 %v5218
      %v5482 = vunpack.c.l.b16 %v5219
      %v5483 = vunpack.c.l.b16 %v5220
      %v5484 = vunpack.c.l.b16 %v5221
      %v5485 = vunpack.c.l.b16 %v5222
      %v5486 = vunpack.c.l.b16 %v5223
      %v5487 = vunpack.c.l.b16 %v5224
      %v5488 = vunpack.c.l.b16 %v5225
      %v5489 = vunpack.c.l.b16 %v5226
      %v5490 = vunpack.c.l.b16 %v5227
      %v5491 = vpack.c.b16 %v5476, %v5475
      %v5492 = vpack.c.b16 %v5478, %v5477
      %v5493 = vpack.c.b16 %v5480, %v5479
      %v5494 = vpack.c.b16 %v5482, %v5481
      %v5495 = vpack.c.b16 %v5484, %v5483
      %v5496 = vpack.c.b16 %v5486, %v5485
      %v5497 = vpack.c.b16 %v5488, %v5487
      %v5498 = vpack.c.b16 %v5490, %v5489
      %5507 = vmatprep.subr.bf16.mxu0 0
      %5508 = vmatpush1.bf16.msra.mxu0 %v5498
      %5509 = vmatprep.subr.bf16.mxu0 0
      %5510 = vmatpush1.bf16.msra.mxu0 %v5497
      %5511 = vmatprep.subr.bf16.mxu0 0
      %5512 = vmatpush1.bf16.msra.mxu0 %v5496
      %5513 = vmatprep.subr.bf16.mxu0 0
      %5514 = vmatpush1.bf16.msra.mxu0 %v5495
      %5515 = vmatprep.subr.bf16.mxu0 0
      %5516 = vmatpush1.bf16.msra.mxu0 %v5494
      %5517 = vmatprep.subr.bf16.mxu0 0
      %5518 = vmatpush1.bf16.msra.mxu0 %v5493
      %5519 = vmatprep.subr.bf16.mxu0 0
      %5520 = vmatpush1.bf16.msra.mxu0 %v5492
      %5521 = vmatprep.subr.bf16.mxu0 0
      %5522 = vmatpush1.bf16.msra.mxu0 %v5491
      %5523 = vmatprep.subr.bf16.mxu0 0
      %5524 = vmatpush2.bf16.msra.mxu0 0
      %5525 = vmatprep.subr.bf16.mxu0 0
      %5526 = vmatpush2.bf16.msra.mxu0 0
      %5527 = vmatprep.subr.bf16.mxu0 0
      %5528 = vmatpush2.bf16.msra.mxu0 0
      %5529 = vmatprep.subr.bf16.mxu0 0
      %5530 = vmatpush2.bf16.msra.mxu0 0
      %5531 = vmatprep.subr.bf16.mxu0 0
      %5532 = vmatpush2.bf16.msra.mxu0 0
      %5533 = vmatprep.subr.bf16.mxu0 0
      %5534 = vmatpush2.bf16.msra.mxu0 0
      %5535 = vmatprep.subr.bf16.mxu0 0
      %5536 = vmatpush2.bf16.msra.mxu0 0
      %5537 = vmatprep.subr.bf16.mxu0 0
      %5538 = vmatpush2.bf16.msra.mxu0 0
      %5539 = vmatprep.mubr.bf16.mxu0 0
      %5540 = vmatmul.mubr.bf16.gmra.mxu0 %v5322
      %v5541 = vpop.f32.mrf.mxu0
      %v5542 = vadd.f32 0.0, %v5541
      %v5543 = vpop.f32.mrf.mxu0
      %v5544 = vpop.f32.mrf.mxu0
      %v5545 = vadd.f32 0.0, %v5544
      %v5546 = vpop.f32.mrf.mxu0
      %5547 = vmatprep.mubr.bf16.mxu0 0
      %5548 = vmatmul.mubr.bf16.gmra.mxu0 %v5330
      %v5549 = vpop.f32.mrf.mxu0
      %v5550 = vpop.f32.mrf.mxu0
      %v5551 = vpop.f32.mrf.mxu0
      %v5552 = vpop.f32.mrf.mxu0
      %5553 = vmatprep.mubr.bf16.mxu0 0
      %5554 = vmatmul.mubr.bf16.gmra.mxu0 %v5338
      %v5555 = vpop.f32.mrf.mxu0
      %v5556 = vadd.f32 0.0, %v5555
      %v5557 = vpop.f32.mrf.mxu0
      %v5558 = vpop.f32.mrf.mxu0
      %v5559 = vadd.f32 0.0, %v5558
      %v5560 = vpop.f32.mrf.mxu0
      %5561 = vmatprep.mubr.bf16.mxu0 0
      %5562 = vmatmul.mubr.bf16.gmra.mxu0 %v5346
      %v5563 = vpop.f32.mrf.mxu0
      %v5564 = vpop.f32.mrf.mxu0
      %v5565 = vpop.f32.mrf.mxu0
      %v5566 = vpop.f32.mrf.mxu0
      %5567 = vmatprep.mubr.bf16.mxu0 0
      %5568 = vmatmul.mubr.bf16.gmra.mxu0 %v5354
      %v5569 = vpop.f32.mrf.mxu0
      %v5570 = vadd.f32 0.0, %v5569
      %v5571 = vpop.f32.mrf.mxu0
      %v5572 = vpop.f32.mrf.mxu0
      %v5573 = vadd.f32 0.0, %v5572
      %v5574 = vpop.f32.mrf.mxu0
      %5575 = vmatprep.mubr.bf16.mxu0 0
      %5576 = vmatmul.mubr.bf16.gmra.mxu0 %v5362
      %v5577 = vpop.f32.mrf.mxu0
      %v5578 = vpop.f32.mrf.mxu0
      %v5579 = vpop.f32.mrf.mxu0
      %v5580 = vpop.f32.mrf.mxu0
      %5581 = vmatprep.mubr.bf16.mxu0 0
      %5582 = vmatmul.mubr.bf16.gmra.mxu0 %v5370
      %v5583 = vpop.f32.mrf.mxu0
      %v5584 = vadd.f32 0.0, %v5583
      %v5585 = vpop.f32.mrf.mxu0
      %v5586 = vpop.f32.mrf.mxu0
      %v5587 = vadd.f32 0.0, %v5586
      %v5588 = vpop.f32.mrf.mxu0
      %5589 = vmatprep.mubr.bf16.mxu0 0
      %5590 = vmatmul.mubr.bf16.gmra.mxu0 %v5378
      %v5591 = vpop.f32.mrf.mxu0
      %v5592 = vpop.f32.mrf.mxu0
      %v5593 = vpop.f32.mrf.mxu0
      %v5594 = vpop.f32.mrf.mxu0
      %5595 = vmatprep.mubr.bf16.mxu0 0
      %5596 = vmatmul.mubr.bf16.gmra.mxu0 %v5386
      %v5597 = vpop.f32.mrf.mxu0
      %v5598 = vadd.f32 0.0, %v5597
      %v5599 = vpop.f32.mrf.mxu0
      %v5600 = vpop.f32.mrf.mxu0
      %v5601 = vadd.f32 0.0, %v5600
      %v5602 = vpop.f32.mrf.mxu0
      %5603 = vmatprep.mubr.bf16.mxu0 0
      %5604 = vmatmul.mubr.bf16.gmra.mxu0 %v5394
      %v5605 = vpop.f32.mrf.mxu0
      %v5606 = vpop.f32.mrf.mxu0
      %v5607 = vpop.f32.mrf.mxu0
      %v5608 = vpop.f32.mrf.mxu0
      %5609 = vmatprep.mubr.bf16.mxu0 0
      %5610 = vmatmul.mubr.bf16.gmra.mxu0 %v5402
      %v5611 = vpop.f32.mrf.mxu0
      %v5612 = vadd.f32 0.0, %v5611
      %v5613 = vpop.f32.mrf.mxu0
      %v5614 = vpop.f32.mrf.mxu0
      %v5615 = vadd.f32 0.0, %v5614
      %v5616 = vpop.f32.mrf.mxu0
      %5617 = vmatprep.mubr.bf16.mxu0 0
      %5618 = vmatmul.mubr.bf16.gmra.mxu0 %v5410
      %v5619 = vpop.f32.mrf.mxu0
      %v5620 = vpop.f32.mrf.mxu0
      %v5621 = vpop.f32.mrf.mxu0
      %v5622 = vpop.f32.mrf.mxu0
      %5623 = vmatprep.mubr.bf16.mxu0 0
      %5624 = vmatmul.mubr.bf16.gmra.mxu0 %v5418
      %v5625 = vpop.f32.mrf.mxu0
      %v5626 = vadd.f32 0.0, %v5625
      %v5627 = vpop.f32.mrf.mxu0
      %v5628 = vpop.f32.mrf.mxu0
      %v5629 = vadd.f32 0.0, %v5628
      %v5630 = vpop.f32.mrf.mxu0
      %5631 = vmatprep.mubr.bf16.mxu0 0
      %5632 = vmatmul.mubr.bf16.gmra.mxu0 %v5426
      %v5633 = vpop.f32.mrf.mxu0
      %v5634 = vpop.f32.mrf.mxu0
      %v5635 = vpop.f32.mrf.mxu0
      %v5636 = vpop.f32.mrf.mxu0
      %5637 = vmatprep.mubr.bf16.mxu0 0
      %5638 = vmatmul.mubr.bf16.gmra.mxu0 %v5434
      %v5639 = vpop.f32.mrf.mxu0
      %v5640 = vadd.f32 0.0, %v5639
      %v5641 = vpop.f32.mrf.mxu0
      %v5642 = vpop.f32.mrf.mxu0
      %v5643 = vadd.f32 0.0, %v5642
      %v5644 = vpop.f32.mrf.mxu0
      %5645 = vmatprep.mubr.bf16.mxu0 0
      %5646 = vmatmul.mubr.bf16.gmra.mxu0 %v5442
      %v5647 = vpop.f32.mrf.mxu0
      %v5648 = vpop.f32.mrf.mxu0
      %v5649 = vpop.f32.mrf.mxu0
      %v5650 = vpop.f32.mrf.mxu0
      %5651 = vdwg.mxu0
      %v5684 = vunpack.c.l.b16 %v5194
      %v5685 = vunpack.c.l.b16 %v5195
      %v5686 = vunpack.c.l.b16 %v5196
      %v5687 = vunpack.c.l.b16 %v5197
      %v5688 = vunpack.c.l.b16 %v5198
      %v5689 = vunpack.c.l.b16 %v5199
      %v5690 = vunpack.c.l.b16 %v5200
      %v5691 = vunpack.c.l.b16 %v5201
      %v5692 = vunpack.c.l.b16 %v5202
      %v5693 = vunpack.c.l.b16 %v5203
      %v5694 = vunpack.c.l.b16 %v5204
      %v5695 = vunpack.c.l.b16 %v5205
      %v5696 = vunpack.c.l.b16 %v5206
      %v5697 = vunpack.c.l.b16 %v5207
      %v5698 = vunpack.c.l.b16 %v5208
      %v5699 = vunpack.c.l.b16 %v5209
      %v5700 = vpack.c.b16 %v5685, %v5684
      %v5701 = vpack.c.b16 %v5687, %v5686
      %v5702 = vpack.c.b16 %v5689, %v5688
      %v5703 = vpack.c.b16 %v5691, %v5690
      %v5704 = vpack.c.b16 %v5693, %v5692
      %v5705 = vpack.c.b16 %v5695, %v5694
      %v5706 = vpack.c.b16 %v5697, %v5696
      %v5707 = vpack.c.b16 %v5699, %v5698
      %5716 = vmatprep.subr.bf16.mxu0 0
      %5717 = vmatpush1.bf16.msra.mxu0 %v5707
      %5718 = vmatprep.subr.bf16.mxu0 0
      %5719 = vmatpush1.bf16.msra.mxu0 %v5706
      %5720 = vmatprep.subr.bf16.mxu0 0
      %5721 = vmatpush1.bf16.msra.mxu0 %v5705
      %5722 = vmatprep.subr.bf16.mxu0 0
      %5723 = vmatpush1.bf16.msra.mxu0 %v5704
      %5724 = vmatprep.subr.bf16.mxu0 0
      %5725 = vmatpush1.bf16.msra.mxu0 %v5703
      %5726 = vmatprep.subr.bf16.mxu0 0
      %5727 = vmatpush1.bf16.msra.mxu0 %v5702
      %5728 = vmatprep.subr.bf16.mxu0 0
      %5729 = vmatpush1.bf16.msra.mxu0 %v5701
      %5730 = vmatprep.subr.bf16.mxu0 0
      %5731 = vmatpush1.bf16.msra.mxu0 %v5700
      %5732 = vmatprep.subr.bf16.mxu0 0
      %5733 = vmatpush2.bf16.msra.mxu0 0
      %5734 = vmatprep.subr.bf16.mxu0 0
      %5735 = vmatpush2.bf16.msra.mxu0 0
      %5736 = vmatprep.subr.bf16.mxu0 0
      %5737 = vmatpush2.bf16.msra.mxu0 0
      %5738 = vmatprep.subr.bf16.mxu0 0
      %5739 = vmatpush2.bf16.msra.mxu0 0
      %5740 = vmatprep.subr.bf16.mxu0 0
      %5741 = vmatpush2.bf16.msra.mxu0 0
      %5742 = vmatprep.subr.bf16.mxu0 0
      %5743 = vmatpush2.bf16.msra.mxu0 0
      %5744 = vmatprep.subr.bf16.mxu0 0
      %5745 = vmatpush2.bf16.msra.mxu0 0
      %5746 = vmatprep.subr.bf16.mxu0 0
      %5747 = vmatpush2.bf16.msra.mxu0 0
      %5748 = vmatprep.mubr.bf16.mxu0 0
      %5749 = vmatmul.mubr.bf16.gmra.mxu0 %v5294
      %v5750 = vpop.f32.mrf.mxu0
      %v5751 = vadd.f32 %v5542, %v5750
      %v5752 = vpop.f32.mrf.mxu0
      %v5753 = vpop.f32.mrf.mxu0
      %v5754 = vadd.f32 %v5545, %v5753
      %v5755 = vpop.f32.mrf.mxu0
      %5756 = vmatprep.mubr.bf16.mxu0 0
      %5757 = vmatmul.mubr.bf16.gmra.mxu0 %v5295
      %v5758 = vpop.f32.mrf.mxu0
      %v5759 = vpop.f32.mrf.mxu0
      %v5760 = vpop.f32.mrf.mxu0
      %v5761 = vpop.f32.mrf.mxu0
      %5762 = vmatprep.mubr.bf16.mxu0 0
      %5763 = vmatmul.mubr.bf16.gmra.mxu0 %v5296
      %v5764 = vpop.f32.mrf.mxu0
      %v5765 = vadd.f32 %v5556, %v5764
      %v5766 = vpop.f32.mrf.mxu0
      %v5767 = vpop.f32.mrf.mxu0
      %v5768 = vadd.f32 %v5559, %v5767
      %v5769 = vpop.f32.mrf.mxu0
      %5770 = vmatprep.mubr.bf16.mxu0 0
      %5771 = vmatmul.mubr.bf16.gmra.mxu0 %v5297
      %v5772 = vpop.f32.mrf.mxu0
      %v5773 = vpop.f32.mrf.mxu0
      %v5774 = vpop.f32.mrf.mxu0
      %v5775 = vpop.f32.mrf.mxu0
      %5776 = vmatprep.mubr.bf16.mxu0 0
      %5777 = vmatmul.mubr.bf16.gmra.mxu0 %v5298
      %v5778 = vpop.f32.mrf.mxu0
      %v5779 = vadd.f32 %v5570, %v5778
      %v5780 = vpop.f32.mrf.mxu0
      %v5781 = vpop.f32.mrf.mxu0
      %v5782 = vadd.f32 %v5573, %v5781
      %v5783 = vpop.f32.mrf.mxu0
      %5784 = vmatprep.mubr.bf16.mxu0 0
      %5785 = vmatmul.mubr.bf16.gmra.mxu0 %v5299
      %v5786 = vpop.f32.mrf.mxu0
      %v5787 = vpop.f32.mrf.mxu0
      %v5788 = vpop.f32.mrf.mxu0
      %v5789 = vpop.f32.mrf.mxu0
      %5790 = vmatprep.mubr.bf16.mxu0 0
      %5791 = vmatmul.mubr.bf16.gmra.mxu0 %v5300
      %v5792 = vpop.f32.mrf.mxu0
      %v5793 = vadd.f32 %v5584, %v5792
      %v5794 = vpop.f32.mrf.mxu0
      %v5795 = vpop.f32.mrf.mxu0
      %v5796 = vadd.f32 %v5587, %v5795
      %v5797 = vpop.f32.mrf.mxu0
      %5798 = vmatprep.mubr.bf16.mxu0 0
      %5799 = vmatmul.mubr.bf16.gmra.mxu0 %v5301
      %v5800 = vpop.f32.mrf.mxu0
      %v5801 = vpop.f32.mrf.mxu0
      %v5802 = vpop.f32.mrf.mxu0
      %v5803 = vpop.f32.mrf.mxu0
      %5804 = vmatprep.mubr.bf16.mxu0 0
      %5805 = vmatmul.mubr.bf16.gmra.mxu0 %v5302
      %v5806 = vpop.f32.mrf.mxu0
      %v5807 = vadd.f32 %v5598, %v5806
      %v5808 = vpop.f32.mrf.mxu0
      %v5809 = vpop.f32.mrf.mxu0
      %v5810 = vadd.f32 %v5601, %v5809
      %v5811 = vpop.f32.mrf.mxu0
      %5812 = vmatprep.mubr.bf16.mxu0 0
      %5813 = vmatmul.mubr.bf16.gmra.mxu0 %v5303
      %v5814 = vpop.f32.mrf.mxu0
      %v5815 = vpop.f32.mrf.mxu0
      %v5816 = vpop.f32.mrf.mxu0
      %v5817 = vpop.f32.mrf.mxu0
      %5818 = vmatprep.mubr.bf16.mxu0 0
      %5819 = vmatmul.mubr.bf16.gmra.mxu0 %v5304
      %v5820 = vpop.f32.mrf.mxu0
      %v5821 = vadd.f32 %v5612, %v5820
      %v5822 = vpop.f32.mrf.mxu0
      %v5823 = vpop.f32.mrf.mxu0
      %v5824 = vadd.f32 %v5615, %v5823
      %v5825 = vpop.f32.mrf.mxu0
      %5826 = vmatprep.mubr.bf16.mxu0 0
      %5827 = vmatmul.mubr.bf16.gmra.mxu0 %v5305
      %v5828 = vpop.f32.mrf.mxu0
      %v5829 = vpop.f32.mrf.mxu0
      %v5830 = vpop.f32.mrf.mxu0
      %v5831 = vpop.f32.mrf.mxu0
      %5832 = vmatprep.mubr.bf16.mxu0 0
      %5833 = vmatmul.mubr.bf16.gmra.mxu0 %v5306
      %v5834 = vpop.f32.mrf.mxu0
      %v5835 = vadd.f32 %v5626, %v5834
      %v5836 = vpop.f32.mrf.mxu0
      %v5837 = vpop.f32.mrf.mxu0
      %v5838 = vadd.f32 %v5629, %v5837
      %v5839 = vpop.f32.mrf.mxu0
      %5840 = vmatprep.mubr.bf16.mxu0 0
      %5841 = vmatmul.mubr.bf16.gmra.mxu0 %v5307
      %v5842 = vpop.f32.mrf.mxu0
      %v5843 = vpop.f32.mrf.mxu0
      %v5844 = vpop.f32.mrf.mxu0
      %v5845 = vpop.f32.mrf.mxu0
      %5846 = vmatprep.mubr.bf16.mxu0 0
      %5847 = vmatmul.mubr.bf16.gmra.mxu0 %v5308
      %v5848 = vpop.f32.mrf.mxu0
      %v5849 = vadd.f32 %v5640, %v5848
      %v5850 = vpop.f32.mrf.mxu0
      %v5851 = vpop.f32.mrf.mxu0
      %v5852 = vadd.f32 %v5643, %v5851
      %v5853 = vpop.f32.mrf.mxu0
      %5854 = vmatprep.mubr.bf16.mxu0 0
      %5855 = vmatmul.mubr.bf16.gmra.mxu0 %v5309
      %v5856 = vpop.f32.mrf.mxu0
      %v5857 = vpop.f32.mrf.mxu0
      %v5858 = vpop.f32.mrf.mxu0
      %v5859 = vpop.f32.mrf.mxu0
      %5860 = vdwg.mxu0
      %v5861 = vld [vmem:[#allocation3] sm:$0xe]
      %s5862 = scalar_lea.vmem %s3, 128
      %v5863 = vld [vmem:[%s5862] sm:$0xf]
      %v5864 = vld [vmem:[%s5862 + $0x4] sm:$0xf]
      %v5865 = vld [vmem:[%s5862 + $0x8] sm:$0xf]
      %v5866 = vld [vmem:[%s5862 + $0xc] sm:$0xf]
      %v5867 = vld [vmem:[%s5862 + $0x10] sm:$0xf]
      %v5868 = vld [vmem:[%s5862 + $0x14] sm:$0xf]
      %v5869 = vld [vmem:[%s5862 + $0x18] sm:$0xf]
      %v5870 = vld [vmem:[%s5862 + $0x1c] sm:$0xf]
      %v5871 = vld [vmem:[%s5862 + $0x20] sm:$0xf]
      %v5872 = vld [vmem:[%s5862 + $0x24] sm:$0xf]
      %v5873 = vld [vmem:[%s5862 + $0x28] sm:$0xf]
      %v5874 = vld [vmem:[%s5862 + $0x2c] sm:$0xf]
      %v5875 = vld [vmem:[%s5862 + $0x30] sm:$0xf]
      %v5876 = vld [vmem:[%s5862 + $0x34] sm:$0xf]
      %v5877 = vld [vmem:[%s5862 + $0x38] sm:$0xf]
      %v5878 = vld [vmem:[%s5862 + $0x3c] sm:$0xf]
      %v5880 = vunpack.c.l.b16 %v5861
      %v5881 = vpack.c.b16 %v5262, %v5880
      %v5882 = vrot.slane %v5881, 1
      %v5883 = vrot.slane %v5295, 1
      %v5884 = vsel %vm1412, %v5882, %v5883
      %v5885 = vrot.slane %v5296, 1
      %v5886 = vsel %vm1412, %v5883, %v5885
      %v5887 = vrot.slane %v5297, 1
      %v5888 = vsel %vm1412, %v5885, %v5887
      %v5889 = vrot.slane %v5298, 1
      %v5890 = vsel %vm1412, %v5887, %v5889
      %v5891 = vrot.slane %v5299, 1
      %v5892 = vsel %vm1412, %v5889, %v5891
      %v5893 = vrot.slane %v5300, 1
      %v5894 = vsel %vm1412, %v5891, %v5893
      %v5895 = vrot.slane %v5301, 1
      %v5896 = vsel %vm1412, %v5893, %v5895
      %v5897 = vrot.slane %v5302, 1
      %v5898 = vsel %vm1412, %v5895, %v5897
      %v5899 = vrot.slane %v5303, 1
      %v5900 = vsel %vm1412, %v5897, %v5899
      %v5901 = vrot.slane %v5304, 1
      %v5902 = vsel %vm1412, %v5899, %v5901
      %v5903 = vrot.slane %v5305, 1
      %v5904 = vsel %vm1412, %v5901, %v5903
      %v5905 = vrot.slane %v5306, 1
      %v5906 = vsel %vm1412, %v5903, %v5905
      %v5907 = vrot.slane %v5307, 1
      %v5908 = vsel %vm1412, %v5905, %v5907
      %v5909 = vrot.slane %v5308, 1
      %v5910 = vsel %vm1412, %v5907, %v5909
      %v5911 = vrot.slane %v5309, 1
      %v5912 = vsel %vm1412, %v5909, %v5911
      %v5913 = vrot.slane %v5310, 1
      %v5914 = vsel %vm1412, %v5911, %v5913
      %v5947 = vunpack.c.l.b16 %v5863
      %v5948 = vunpack.c.l.b16 %v5864
      %v5949 = vunpack.c.l.b16 %v5865
      %v5950 = vunpack.c.l.b16 %v5866
      %v5951 = vunpack.c.l.b16 %v5867
      %v5952 = vunpack.c.l.b16 %v5868
      %v5953 = vunpack.c.l.b16 %v5869
      %v5954 = vunpack.c.l.b16 %v5870
      %v5955 = vunpack.c.l.b16 %v5871
      %v5956 = vunpack.c.l.b16 %v5872
      %v5957 = vunpack.c.l.b16 %v5873
      %v5958 = vunpack.c.l.b16 %v5874
      %v5959 = vunpack.c.l.b16 %v5875
      %v5960 = vunpack.c.l.b16 %v5876
      %v5961 = vunpack.c.l.b16 %v5877
      %v5962 = vunpack.c.l.b16 %v5878
      %v5963 = vpack.c.b16 %v5948, %v5947
      %v5964 = vpack.c.b16 %v5950, %v5949
      %v5965 = vpack.c.b16 %v5952, %v5951
      %v5966 = vpack.c.b16 %v5954, %v5953
      %v5967 = vpack.c.b16 %v5956, %v5955
      %v5968 = vpack.c.b16 %v5958, %v5957
      %v5969 = vpack.c.b16 %v5960, %v5959
      %v5970 = vpack.c.b16 %v5962, %v5961
      %5979 = vmatprep.subr.bf16.mxu0 0
      %5980 = vmatpush1.bf16.msra.mxu0 %v5970
      %5981 = vmatprep.subr.bf16.mxu0 0
      %5982 = vmatpush1.bf16.msra.mxu0 %v5969
      %5983 = vmatprep.subr.bf16.mxu0 0
      %5984 = vmatpush1.bf16.msra.mxu0 %v5968
      %5985 = vmatprep.subr.bf16.mxu0 0
      %5986 = vmatpush1.bf16.msra.mxu0 %v5967
      %5987 = vmatprep.subr.bf16.mxu0 0
      %5988 = vmatpush1.bf16.msra.mxu0 %v5966
      %5989 = vmatprep.subr.bf16.mxu0 0
      %5990 = vmatpush1.bf16.msra.mxu0 %v5965
      %5991 = vmatprep.subr.bf16.mxu0 0
      %5992 = vmatpush1.bf16.msra.mxu0 %v5964
      %5993 = vmatprep.subr.bf16.mxu0 0
      %5994 = vmatpush1.bf16.msra.mxu0 %v5963
      %5995 = vmatprep.subr.bf16.mxu0 0
      %5996 = vmatpush2.bf16.msra.mxu0 0
      %5997 = vmatprep.subr.bf16.mxu0 0
      %5998 = vmatpush2.bf16.msra.mxu0 0
      %5999 = vmatprep.subr.bf16.mxu0 0
      %6000 = vmatpush2.bf16.msra.mxu0 0
      %6001 = vmatprep.subr.bf16.mxu0 0
      %6002 = vmatpush2.bf16.msra.mxu0 0
      %6003 = vmatprep.subr.bf16.mxu0 0
      %6004 = vmatpush2.bf16.msra.mxu0 0
      %6005 = vmatprep.subr.bf16.mxu0 0
      %6006 = vmatpush2.bf16.msra.mxu0 0
      %6007 = vmatprep.subr.bf16.mxu0 0
      %6008 = vmatpush2.bf16.msra.mxu0 0
      %6009 = vmatprep.subr.bf16.mxu0 0
      %6010 = vmatpush2.bf16.msra.mxu0 0
      %6011 = vmatprep.mubr.bf16.mxu0 0
      %6012 = vmatmul.mubr.bf16.gmra.mxu0 %v5884
      %v6013 = vpop.f32.mrf.mxu0
      %v6014 = vadd.f32 0.0, %v6013
      %v6015 = vpop.f32.mrf.mxu0
      %v6016 = vpop.f32.mrf.mxu0
      %v6017 = vadd.f32 0.0, %v6016
      %v6018 = vpop.f32.mrf.mxu0
      %6019 = vmatprep.mubr.bf16.mxu0 0
      %6020 = vmatmul.mubr.bf16.gmra.mxu0 %v5886
      %v6021 = vpop.f32.mrf.mxu0
      %v6022 = vpop.f32.mrf.mxu0
      %v6023 = vpop.f32.mrf.mxu0
      %v6024 = vpop.f32.mrf.mxu0
      %6025 = vmatprep.mubr.bf16.mxu0 0
      %6026 = vmatmul.mubr.bf16.gmra.mxu0 %v5888
      %v6027 = vpop.f32.mrf.mxu0
      %v6028 = vadd.f32 0.0, %v6027
      %v6029 = vpop.f32.mrf.mxu0
      %v6030 = vpop.f32.mrf.mxu0
      %v6031 = vadd.f32 0.0, %v6030
      %v6032 = vpop.f32.mrf.mxu0
      %6033 = vmatprep.mubr.bf16.mxu0 0
      %6034 = vmatmul.mubr.bf16.gmra.mxu0 %v5890
      %v6035 = vpop.f32.mrf.mxu0
      %v6036 = vpop.f32.mrf.mxu0
      %v6037 = vpop.f32.mrf.mxu0
      %v6038 = vpop.f32.mrf.mxu0
      %6039 = vmatprep.mubr.bf16.mxu0 0
      %6040 = vmatmul.mubr.bf16.gmra.mxu0 %v5892
      %v6041 = vpop.f32.mrf.mxu0
      %v6042 = vadd.f32 0.0, %v6041
      %v6043 = vpop.f32.mrf.mxu0
      %v6044 = vpop.f32.mrf.mxu0
      %v6045 = vadd.f32 0.0, %v6044
      %v6046 = vpop.f32.mrf.mxu0
      %6047 = vmatprep.mubr.bf16.mxu0 0
      %6048 = vmatmul.mubr.bf16.gmra.mxu0 %v5894
      %v6049 = vpop.f32.mrf.mxu0
      %v6050 = vpop.f32.mrf.mxu0
      %v6051 = vpop.f32.mrf.mxu0
      %v6052 = vpop.f32.mrf.mxu0
      %6053 = vmatprep.mubr.bf16.mxu0 0
      %6054 = vmatmul.mubr.bf16.gmra.mxu0 %v5896
      %v6055 = vpop.f32.mrf.mxu0
      %v6056 = vadd.f32 0.0, %v6055
      %v6057 = vpop.f32.mrf.mxu0
      %v6058 = vpop.f32.mrf.mxu0
      %v6059 = vadd.f32 0.0, %v6058
      %v6060 = vpop.f32.mrf.mxu0
      %6061 = vmatprep.mubr.bf16.mxu0 0
      %6062 = vmatmul.mubr.bf16.gmra.mxu0 %v5898
      %v6063 = vpop.f32.mrf.mxu0
      %v6064 = vpop.f32.mrf.mxu0
      %v6065 = vpop.f32.mrf.mxu0
      %v6066 = vpop.f32.mrf.mxu0
      %6067 = vmatprep.mubr.bf16.mxu0 0
      %6068 = vmatmul.mubr.bf16.gmra.mxu0 %v5900
      %v6069 = vpop.f32.mrf.mxu0
      %v6070 = vadd.f32 0.0, %v6069
      %v6071 = vpop.f32.mrf.mxu0
      %v6072 = vpop.f32.mrf.mxu0
      %v6073 = vadd.f32 0.0, %v6072
      %v6074 = vpop.f32.mrf.mxu0
      %6075 = vmatprep.mubr.bf16.mxu0 0
      %6076 = vmatmul.mubr.bf16.gmra.mxu0 %v5902
      %v6077 = vpop.f32.mrf.mxu0
      %v6078 = vpop.f32.mrf.mxu0
      %v6079 = vpop.f32.mrf.mxu0
      %v6080 = vpop.f32.mrf.mxu0
      %6081 = vmatprep.mubr.bf16.mxu0 0
      %6082 = vmatmul.mubr.bf16.gmra.mxu0 %v5904
      %v6083 = vpop.f32.mrf.mxu0
      %v6084 = vadd.f32 0.0, %v6083
      %v6085 = vpop.f32.mrf.mxu0
      %v6086 = vpop.f32.mrf.mxu0
      %v6087 = vadd.f32 0.0, %v6086
      %v6088 = vpop.f32.mrf.mxu0
      %6089 = vmatprep.mubr.bf16.mxu0 0
      %6090 = vmatmul.mubr.bf16.gmra.mxu0 %v5906
      %v6091 = vpop.f32.mrf.mxu0
      %v6092 = vpop.f32.mrf.mxu0
      %v6093 = vpop.f32.mrf.mxu0
      %v6094 = vpop.f32.mrf.mxu0
      %6095 = vmatprep.mubr.bf16.mxu0 0
      %6096 = vmatmul.mubr.bf16.gmra.mxu0 %v5908
      %v6097 = vpop.f32.mrf.mxu0
      %v6098 = vadd.f32 0.0, %v6097
      %v6099 = vpop.f32.mrf.mxu0
      %v6100 = vpop.f32.mrf.mxu0
      %v6101 = vadd.f32 0.0, %v6100
      %v6102 = vpop.f32.mrf.mxu0
      %6103 = vmatprep.mubr.bf16.mxu0 0
      %6104 = vmatmul.mubr.bf16.gmra.mxu0 %v5910
      %v6105 = vpop.f32.mrf.mxu0
      %v6106 = vpop.f32.mrf.mxu0
      %v6107 = vpop.f32.mrf.mxu0
      %v6108 = vpop.f32.mrf.mxu0
      %6109 = vmatprep.mubr.bf16.mxu0 0
      %6110 = vmatmul.mubr.bf16.gmra.mxu0 %v5912
      %v6111 = vpop.f32.mrf.mxu0
      %v6112 = vadd.f32 0.0, %v6111
      %v6113 = vpop.f32.mrf.mxu0
      %v6114 = vpop.f32.mrf.mxu0
      %v6115 = vadd.f32 0.0, %v6114
      %v6116 = vpop.f32.mrf.mxu0
      %6117 = vmatprep.mubr.bf16.mxu0 0
      %6118 = vmatmul.mubr.bf16.gmra.mxu0 %v5914
      %v6119 = vpop.f32.mrf.mxu0
      %v6120 = vpop.f32.mrf.mxu0
      %v6121 = vpop.f32.mrf.mxu0
      %v6122 = vpop.f32.mrf.mxu0
      %6123 = vdwg.mxu0
      %v6124 = vadd.f32 %v5751, %v6014
      %v6125 = vadd.f32 %v5754, %v6017
      %v6126 = vadd.f32 %v5765, %v6028
      %v6127 = vadd.f32 %v5768, %v6031
      %v6128 = vadd.f32 %v5779, %v6042
      %v6129 = vadd.f32 %v5782, %v6045
      %v6130 = vadd.f32 %v5793, %v6056
      %v6131 = vadd.f32 %v5796, %v6059
      %v6132 = vadd.f32 %v5807, %v6070
      %v6133 = vadd.f32 %v5810, %v6073
      %v6134 = vadd.f32 %v5821, %v6084
      %v6135 = vadd.f32 %v5824, %v6087
      %v6136 = vadd.f32 %v5835, %v6098
      %v6137 = vadd.f32 %v5838, %v6101
      %v6138 = vadd.f32 %v5849, %v6112
      %v6139 = vadd.f32 %v5852, %v6115
      %v6140 = vld [vmem:[#allocation3 + $0x10] sm:$0xf]
      %v6141 = vld [vmem:[#allocation3 + $0x14] sm:$0xf]
      %v6142 = vld [vmem:[#allocation3 + $0x18] sm:$0xf]
      %v6143 = vld [vmem:[#allocation3 + $0x1c] sm:$0xf]
      %v6144 = vld [vmem:[#allocation3 + $0x20] sm:$0xf]
      %v6145 = vld [vmem:[#allocation3 + $0x24] sm:$0xf]
      %v6146 = vld [vmem:[#allocation3 + $0x28] sm:$0xf]
      %v6147 = vld [vmem:[#allocation3 + $0x2c] sm:$0xf]
      %v6148 = vld [vmem:[#allocation3 + $0x30] sm:$0xf]
      %v6149 = vld [vmem:[#allocation3 + $0x34] sm:$0xf]
      %v6150 = vld [vmem:[#allocation3 + $0x38] sm:$0xf]
      %v6151 = vld [vmem:[#allocation3 + $0x3c] sm:$0xf]
      %v6152 = vld [vmem:[#allocation3 + $0x40] sm:$0xf]
      %v6153 = vld [vmem:[#allocation3 + $0x44] sm:$0xf]
      %v6154 = vld [vmem:[#allocation3 + $0x48] sm:$0xf]
      %v6155 = vld [vmem:[#allocation3 + $0x4c] sm:$0xf]
      %v6156 = vld [vmem:[#allocation3 + $0x50] sm:$0xf]
      %v6157 = vld [vmem:[#allocation3 + $0x54] sm:$0xf]
      %v6158 = vld [vmem:[#allocation3 + $0x58] sm:$0xf]
      %v6159 = vld [vmem:[#allocation3 + $0x5c] sm:$0xf]
      %v6160 = vld [vmem:[#allocation3 + $0x60] sm:$0xf]
      %v6161 = vld [vmem:[#allocation3 + $0x64] sm:$0xf]
      %v6162 = vld [vmem:[#allocation3 + $0x68] sm:$0xf]
      %v6163 = vld [vmem:[#allocation3 + $0x6c] sm:$0xf]
      %v6164 = vld [vmem:[#allocation3 + $0x70] sm:$0xf]
      %v6165 = vld [vmem:[#allocation3 + $0x74] sm:$0xf]
      %v6166 = vld [vmem:[#allocation3 + $0x78] sm:$0xf]
      %v6167 = vld [vmem:[#allocation3 + $0x7c] sm:$0xf]
      %v6168 = vld [vmem:[#allocation3 + $0x80] sm:$0xf]
      %v6169 = vld [vmem:[#allocation3 + $0x84] sm:$0xf]
      %v6170 = vld [vmem:[#allocation3 + $0x88] sm:$0xf]
      %v6171 = vld [vmem:[#allocation3 + $0x8c] sm:$0xf]
      %s6172 = scalar_lea.vmem %s3, 192
      %v6173 = vld [vmem:[%s6172] sm:$0xf]
      %v6174 = vld [vmem:[%s6172 + $0x4] sm:$0xf]
      %v6175 = vld [vmem:[%s6172 + $0x8] sm:$0xf]
      %v6176 = vld [vmem:[%s6172 + $0xc] sm:$0xf]
      %v6177 = vld [vmem:[%s6172 + $0x10] sm:$0xf]
      %v6178 = vld [vmem:[%s6172 + $0x14] sm:$0xf]
      %v6179 = vld [vmem:[%s6172 + $0x18] sm:$0xf]
      %v6180 = vld [vmem:[%s6172 + $0x1c] sm:$0xf]
      %v6181 = vld [vmem:[%s6172 + $0x20] sm:$0xf]
      %v6182 = vld [vmem:[%s6172 + $0x24] sm:$0xf]
      %v6183 = vld [vmem:[%s6172 + $0x28] sm:$0xf]
      %v6184 = vld [vmem:[%s6172 + $0x2c] sm:$0xf]
      %v6185 = vld [vmem:[%s6172 + $0x30] sm:$0xf]
      %v6186 = vld [vmem:[%s6172 + $0x34] sm:$0xf]
      %v6187 = vld [vmem:[%s6172 + $0x38] sm:$0xf]
      %v6188 = vld [vmem:[%s6172 + $0x3c] sm:$0xf]
      %v6221 = vunpack.c.l.b16 %v6140
      %v6222 = vunpack.c.l.b16 %v6141
      %v6223 = vunpack.c.l.b16 %v6142
      %v6224 = vunpack.c.l.b16 %v6143
      %v6225 = vunpack.c.l.b16 %v6144
      %v6226 = vunpack.c.l.b16 %v6145
      %v6227 = vunpack.c.l.b16 %v6146
      %v6228 = vunpack.c.l.b16 %v6147
      %v6229 = vunpack.c.l.b16 %v6148
      %v6230 = vunpack.c.l.b16 %v6149
      %v6231 = vunpack.c.l.b16 %v6150
      %v6232 = vunpack.c.l.b16 %v6151
      %v6233 = vunpack.c.l.b16 %v6152
      %v6234 = vunpack.c.l.b16 %v6153
      %v6235 = vunpack.c.l.b16 %v6154
      %v6236 = vunpack.c.l.b16 %v6155
      %v6237 = vunpack.c.l.b16 %v6156
      %v6238 = vunpack.c.l.b16 %v6157
      %v6239 = vunpack.c.l.b16 %v6158
      %v6240 = vunpack.c.l.b16 %v6159
      %v6241 = vunpack.c.l.b16 %v6160
      %v6242 = vunpack.c.l.b16 %v6161
      %v6243 = vunpack.c.l.b16 %v6162
      %v6244 = vunpack.c.l.b16 %v6163
      %v6245 = vunpack.c.l.b16 %v6164
      %v6246 = vunpack.c.l.b16 %v6165
      %v6247 = vunpack.c.l.b16 %v6166
      %v6248 = vunpack.c.l.b16 %v6167
      %v6249 = vunpack.c.l.b16 %v6168
      %v6250 = vunpack.c.l.b16 %v6169
      %v6251 = vunpack.c.l.b16 %v6170
      %v6252 = vunpack.c.l.b16 %v6171
      %v6253 = vpack.c.b16 %v6222, %v6221
      %v6254 = vpack.c.b16 %v6224, %v6223
      %v6255 = vpack.c.b16 %v6226, %v6225
      %v6256 = vpack.c.b16 %v6228, %v6227
      %v6257 = vpack.c.b16 %v6230, %v6229
      %v6258 = vpack.c.b16 %v6232, %v6231
      %v6259 = vpack.c.b16 %v6234, %v6233
      %v6260 = vpack.c.b16 %v6236, %v6235
      %v6261 = vpack.c.b16 %v6238, %v6237
      %v6262 = vpack.c.b16 %v6240, %v6239
      %v6263 = vpack.c.b16 %v6242, %v6241
      %v6264 = vpack.c.b16 %v6244, %v6243
      %v6265 = vpack.c.b16 %v6246, %v6245
      %v6266 = vpack.c.b16 %v6248, %v6247
      %v6267 = vpack.c.b16 %v6250, %v6249
      %v6268 = vpack.c.b16 %v6252, %v6251
      %v6301 = vunpack.c.l.b16 %v6173
      %v6302 = vunpack.c.l.b16 %v6174
      %v6303 = vunpack.c.l.b16 %v6175
      %v6304 = vunpack.c.l.b16 %v6176
      %v6305 = vunpack.c.l.b16 %v6177
      %v6306 = vunpack.c.l.b16 %v6178
      %v6307 = vunpack.c.l.b16 %v6179
      %v6308 = vunpack.c.l.b16 %v6180
      %v6309 = vunpack.c.l.b16 %v6181
      %v6310 = vunpack.c.l.b16 %v6182
      %v6311 = vunpack.c.l.b16 %v6183
      %v6312 = vunpack.c.l.b16 %v6184
      %v6313 = vunpack.c.l.b16 %v6185
      %v6314 = vunpack.c.l.b16 %v6186
      %v6315 = vunpack.c.l.b16 %v6187
      %v6316 = vunpack.c.l.b16 %v6188
      %v6317 = vpack.c.b16 %v6302, %v6301
      %v6318 = vpack.c.b16 %v6304, %v6303
      %v6319 = vpack.c.b16 %v6306, %v6305
      %v6320 = vpack.c.b16 %v6308, %v6307
      %v6321 = vpack.c.b16 %v6310, %v6309
      %v6322 = vpack.c.b16 %v6312, %v6311
      %v6323 = vpack.c.b16 %v6314, %v6313
      %v6324 = vpack.c.b16 %v6316, %v6315
      %6333 = vmatprep.subr.bf16.mxu0 0
      %6334 = vmatpush1.bf16.msra.mxu0 %v6324
      %6335 = vmatprep.subr.bf16.mxu0 0
      %6336 = vmatpush1.bf16.msra.mxu0 %v6323
      %6337 = vmatprep.subr.bf16.mxu0 0
      %6338 = vmatpush1.bf16.msra.mxu0 %v6322
      %6339 = vmatprep.subr.bf16.mxu0 0
      %6340 = vmatpush1.bf16.msra.mxu0 %v6321
      %6341 = vmatprep.subr.bf16.mxu0 0
      %6342 = vmatpush1.bf16.msra.mxu0 %v6320
      %6343 = vmatprep.subr.bf16.mxu0 0
      %6344 = vmatpush1.bf16.msra.mxu0 %v6319
      %6345 = vmatprep.subr.bf16.mxu0 0
      %6346 = vmatpush1.bf16.msra.mxu0 %v6318
      %6347 = vmatprep.subr.bf16.mxu0 0
      %6348 = vmatpush1.bf16.msra.mxu0 %v6317
      %6349 = vmatprep.subr.bf16.mxu0 0
      %6350 = vmatpush2.bf16.msra.mxu0 0
      %6351 = vmatprep.subr.bf16.mxu0 0
      %6352 = vmatpush2.bf16.msra.mxu0 0
      %6353 = vmatprep.subr.bf16.mxu0 0
      %6354 = vmatpush2.bf16.msra.mxu0 0
      %6355 = vmatprep.subr.bf16.mxu0 0
      %6356 = vmatpush2.bf16.msra.mxu0 0
      %6357 = vmatprep.subr.bf16.mxu0 0
      %6358 = vmatpush2.bf16.msra.mxu0 0
      %6359 = vmatprep.subr.bf16.mxu0 0
      %6360 = vmatpush2.bf16.msra.mxu0 0
      %6361 = vmatprep.subr.bf16.mxu0 0
      %6362 = vmatpush2.bf16.msra.mxu0 0
      %6363 = vmatprep.subr.bf16.mxu0 0
      %6364 = vmatpush2.bf16.msra.mxu0 0
      %6365 = vmatprep.mubr.bf16.mxu0 0
      %6366 = vmatmul.mubr.bf16.gmra.mxu0 %v6253
      %v6367 = vpop.f32.mrf.mxu0
      %v6368 = vadd.f32 0.0, %v6367
      %v6369 = vpop.f32.mrf.mxu0
      %v6370 = vpop.f32.mrf.mxu0
      %v6371 = vadd.f32 0.0, %v6370
      %v6372 = vpop.f32.mrf.mxu0
      %6373 = vmatprep.mubr.bf16.mxu0 0
      %6374 = vmatmul.mubr.bf16.gmra.mxu0 %v6254
      %v6375 = vpop.f32.mrf.mxu0
      %v6376 = vpop.f32.mrf.mxu0
      %v6377 = vpop.f32.mrf.mxu0
      %v6378 = vpop.f32.mrf.mxu0
      %6379 = vmatprep.mubr.bf16.mxu0 0
      %6380 = vmatmul.mubr.bf16.gmra.mxu0 %v6255
      %v6381 = vpop.f32.mrf.mxu0
      %v6382 = vadd.f32 0.0, %v6381
      %v6383 = vpop.f32.mrf.mxu0
      %v6384 = vpop.f32.mrf.mxu0
      %v6385 = vadd.f32 0.0, %v6384
      %v6386 = vpop.f32.mrf.mxu0
      %6387 = vmatprep.mubr.bf16.mxu0 0
      %6388 = vmatmul.mubr.bf16.gmra.mxu0 %v6256
      %v6389 = vpop.f32.mrf.mxu0
      %v6390 = vpop.f32.mrf.mxu0
      %v6391 = vpop.f32.mrf.mxu0
      %v6392 = vpop.f32.mrf.mxu0
      %6393 = vmatprep.mubr.bf16.mxu0 0
      %6394 = vmatmul.mubr.bf16.gmra.mxu0 %v6257
      %v6395 = vpop.f32.mrf.mxu0
      %v6396 = vadd.f32 0.0, %v6395
      %v6397 = vpop.f32.mrf.mxu0
      %v6398 = vpop.f32.mrf.mxu0
      %v6399 = vadd.f32 0.0, %v6398
      %v6400 = vpop.f32.mrf.mxu0
      %6401 = vmatprep.mubr.bf16.mxu0 0
      %6402 = vmatmul.mubr.bf16.gmra.mxu0 %v6258
      %v6403 = vpop.f32.mrf.mxu0
      %v6404 = vpop.f32.mrf.mxu0
      %v6405 = vpop.f32.mrf.mxu0
      %v6406 = vpop.f32.mrf.mxu0
      %6407 = vmatprep.mubr.bf16.mxu0 0
      %6408 = vmatmul.mubr.bf16.gmra.mxu0 %v6259
      %v6409 = vpop.f32.mrf.mxu0
      %v6410 = vadd.f32 0.0, %v6409
      %v6411 = vpop.f32.mrf.mxu0
      %v6412 = vpop.f32.mrf.mxu0
      %v6413 = vadd.f32 0.0, %v6412
      %v6414 = vpop.f32.mrf.mxu0
      %6415 = vmatprep.mubr.bf16.mxu0 0
      %6416 = vmatmul.mubr.bf16.gmra.mxu0 %v6260
      %v6417 = vpop.f32.mrf.mxu0
      %v6418 = vpop.f32.mrf.mxu0
      %v6419 = vpop.f32.mrf.mxu0
      %v6420 = vpop.f32.mrf.mxu0
      %6421 = vmatprep.mubr.bf16.mxu0 0
      %6422 = vmatmul.mubr.bf16.gmra.mxu0 %v6261
      %v6423 = vpop.f32.mrf.mxu0
      %v6424 = vadd.f32 0.0, %v6423
      %v6425 = vpop.f32.mrf.mxu0
      %v6426 = vpop.f32.mrf.mxu0
      %v6427 = vadd.f32 0.0, %v6426
      %v6428 = vpop.f32.mrf.mxu0
      %6429 = vmatprep.mubr.bf16.mxu0 0
      %6430 = vmatmul.mubr.bf16.gmra.mxu0 %v6262
      %v6431 = vpop.f32.mrf.mxu0
      %v6432 = vpop.f32.mrf.mxu0
      %v6433 = vpop.f32.mrf.mxu0
      %v6434 = vpop.f32.mrf.mxu0
      %6435 = vmatprep.mubr.bf16.mxu0 0
      %6436 = vmatmul.mubr.bf16.gmra.mxu0 %v6263
      %v6437 = vpop.f32.mrf.mxu0
      %v6438 = vadd.f32 0.0, %v6437
      %v6439 = vpop.f32.mrf.mxu0
      %v6440 = vpop.f32.mrf.mxu0
      %v6441 = vadd.f32 0.0, %v6440
      %v6442 = vpop.f32.mrf.mxu0
      %6443 = vmatprep.mubr.bf16.mxu0 0
      %6444 = vmatmul.mubr.bf16.gmra.mxu0 %v6264
      %v6445 = vpop.f32.mrf.mxu0
      %v6446 = vpop.f32.mrf.mxu0
      %v6447 = vpop.f32.mrf.mxu0
      %v6448 = vpop.f32.mrf.mxu0
      %6449 = vmatprep.mubr.bf16.mxu0 0
      %6450 = vmatmul.mubr.bf16.gmra.mxu0 %v6265
      %v6451 = vpop.f32.mrf.mxu0
      %v6452 = vadd.f32 0.0, %v6451
      %v6453 = vpop.f32.mrf.mxu0
      %v6454 = vpop.f32.mrf.mxu0
      %v6455 = vadd.f32 0.0, %v6454
      %v6456 = vpop.f32.mrf.mxu0
      %6457 = vmatprep.mubr.bf16.mxu0 0
      %6458 = vmatmul.mubr.bf16.gmra.mxu0 %v6266
      %v6459 = vpop.f32.mrf.mxu0
      %v6460 = vpop.f32.mrf.mxu0
      %v6461 = vpop.f32.mrf.mxu0
      %v6462 = vpop.f32.mrf.mxu0
      %6463 = vmatprep.mubr.bf16.mxu0 0
      %6464 = vmatmul.mubr.bf16.gmra.mxu0 %v6267
      %v6465 = vpop.f32.mrf.mxu0
      %v6466 = vadd.f32 0.0, %v6465
      %v6467 = vpop.f32.mrf.mxu0
      %v6468 = vpop.f32.mrf.mxu0
      %v6469 = vadd.f32 0.0, %v6468
      %v6470 = vpop.f32.mrf.mxu0
      %6471 = vmatprep.mubr.bf16.mxu0 0
      %6472 = vmatmul.mubr.bf16.gmra.mxu0 %v6268
      %v6473 = vpop.f32.mrf.mxu0
      %v6474 = vpop.f32.mrf.mxu0
      %v6475 = vpop.f32.mrf.mxu0
      %v6476 = vpop.f32.mrf.mxu0
      %6477 = vdwg.mxu0
      %v6478 = vadd.f32 %v6124, %v6368
      %v6479 = vadd.f32 %v6125, %v6371
      %v6480 = vadd.f32 %v6126, %v6382
      %v6481 = vadd.f32 %v6127, %v6385
      %v6482 = vadd.f32 %v6128, %v6396
      %v6483 = vadd.f32 %v6129, %v6399
      %v6484 = vadd.f32 %v6130, %v6410
      %v6485 = vadd.f32 %v6131, %v6413
      %v6486 = vadd.f32 %v6132, %v6424
      %v6487 = vadd.f32 %v6133, %v6427
      %v6488 = vadd.f32 %v6134, %v6438
      %v6489 = vadd.f32 %v6135, %v6441
      %v6490 = vadd.f32 %v6136, %v6452
      %v6491 = vadd.f32 %v6137, %v6455
      %v6492 = vadd.f32 %v6138, %v6466
      %v6493 = vadd.f32 %v6139, %v6469
      %v6494 = vld [vmem:[#allocation3 + $0x10] sm:$0xf]
      %v6495 = vld [vmem:[#allocation3 + $0x14] sm:$0xf]
      %v6496 = vld [vmem:[#allocation3 + $0x18] sm:$0xf]
      %v6497 = vld [vmem:[#allocation3 + $0x1c] sm:$0xf]
      %v6498 = vld [vmem:[#allocation3 + $0x20] sm:$0xf]
      %v6499 = vld [vmem:[#allocation3 + $0x24] sm:$0xf]
      %v6500 = vld [vmem:[#allocation3 + $0x28] sm:$0xf]
      %v6501 = vld [vmem:[#allocation3 + $0x2c] sm:$0xf]
      %v6502 = vld [vmem:[#allocation3 + $0x30] sm:$0xf]
      %v6503 = vld [vmem:[#allocation3 + $0x34] sm:$0xf]
      %v6504 = vld [vmem:[#allocation3 + $0x38] sm:$0xf]
      %v6505 = vld [vmem:[#allocation3 + $0x3c] sm:$0xf]
      %v6506 = vld [vmem:[#allocation3 + $0x40] sm:$0xf]
      %v6507 = vld [vmem:[#allocation3 + $0x44] sm:$0xf]
      %v6508 = vld [vmem:[#allocation3 + $0x48] sm:$0xf]
      %v6509 = vld [vmem:[#allocation3 + $0x4c] sm:$0xf]
      %v6510 = vld [vmem:[#allocation3 + $0x50] sm:$0xf]
      %v6511 = vld [vmem:[#allocation3 + $0x54] sm:$0xf]
      %v6512 = vld [vmem:[#allocation3 + $0x58] sm:$0xf]
      %v6513 = vld [vmem:[#allocation3 + $0x5c] sm:$0xf]
      %v6514 = vld [vmem:[#allocation3 + $0x60] sm:$0xf]
      %v6515 = vld [vmem:[#allocation3 + $0x64] sm:$0xf]
      %v6516 = vld [vmem:[#allocation3 + $0x68] sm:$0xf]
      %v6517 = vld [vmem:[#allocation3 + $0x6c] sm:$0xf]
      %v6518 = vld [vmem:[#allocation3 + $0x70] sm:$0xf]
      %v6519 = vld [vmem:[#allocation3 + $0x74] sm:$0xf]
      %v6520 = vld [vmem:[#allocation3 + $0x78] sm:$0xf]
      %v6521 = vld [vmem:[#allocation3 + $0x7c] sm:$0xf]
      %v6522 = vld [vmem:[#allocation3 + $0x80] sm:$0xf]
      %v6523 = vld [vmem:[#allocation3 + $0x84] sm:$0xf]
      %v6524 = vld [vmem:[#allocation3 + $0x88] sm:$0xf]
      %v6525 = vld [vmem:[#allocation3 + $0x8c] sm:$0xf]
      %v6526 = vld [vmem:[#allocation3 + $0x90] sm:$0x1]
      %s6527 = scalar_lea.vmem %s3, 256
      %v6528 = vld [vmem:[%s6527] sm:$0xf]
      %v6529 = vld [vmem:[%s6527 + $0x4] sm:$0xf]
      %v6530 = vld [vmem:[%s6527 + $0x8] sm:$0xf]
      %v6531 = vld [vmem:[%s6527 + $0xc] sm:$0xf]
      %v6532 = vld [vmem:[%s6527 + $0x10] sm:$0xf]
      %v6533 = vld [vmem:[%s6527 + $0x14] sm:$0xf]
      %v6534 = vld [vmem:[%s6527 + $0x18] sm:$0xf]
      %v6535 = vld [vmem:[%s6527 + $0x1c] sm:$0xf]
      %v6536 = vld [vmem:[%s6527 + $0x20] sm:$0xf]
      %v6537 = vld [vmem:[%s6527 + $0x24] sm:$0xf]
      %v6538 = vld [vmem:[%s6527 + $0x28] sm:$0xf]
      %v6539 = vld [vmem:[%s6527 + $0x2c] sm:$0xf]
      %v6540 = vld [vmem:[%s6527 + $0x30] sm:$0xf]
      %v6541 = vld [vmem:[%s6527 + $0x34] sm:$0xf]
      %v6542 = vld [vmem:[%s6527 + $0x38] sm:$0xf]
      %v6543 = vld [vmem:[%s6527 + $0x3c] sm:$0xf]
      %v6577 = vunpack.c.l.b16 %v6494
      %v6578 = vunpack.c.l.b16 %v6495
      %v6579 = vunpack.c.l.b16 %v6496
      %v6580 = vunpack.c.l.b16 %v6497
      %v6581 = vunpack.c.l.b16 %v6498
      %v6582 = vunpack.c.l.b16 %v6499
      %v6583 = vunpack.c.l.b16 %v6500
      %v6584 = vunpack.c.l.b16 %v6501
      %v6585 = vunpack.c.l.b16 %v6502
      %v6586 = vunpack.c.l.b16 %v6503
      %v6587 = vunpack.c.l.b16 %v6504
      %v6588 = vunpack.c.l.b16 %v6505
      %v6589 = vunpack.c.l.b16 %v6506
      %v6590 = vunpack.c.l.b16 %v6507
      %v6591 = vunpack.c.l.b16 %v6508
      %v6592 = vunpack.c.l.b16 %v6509
      %v6593 = vunpack.c.l.b16 %v6510
      %v6594 = vunpack.c.l.b16 %v6511
      %v6595 = vunpack.c.l.b16 %v6512
      %v6596 = vunpack.c.l.b16 %v6513
      %v6597 = vunpack.c.l.b16 %v6514
      %v6598 = vunpack.c.l.b16 %v6515
      %v6599 = vunpack.c.l.b16 %v6516
      %v6600 = vunpack.c.l.b16 %v6517
      %v6601 = vunpack.c.l.b16 %v6518
      %v6602 = vunpack.c.l.b16 %v6519
      %v6603 = vunpack.c.l.b16 %v6520
      %v6604 = vunpack.c.l.b16 %v6521
      %v6605 = vunpack.c.l.b16 %v6522
      %v6606 = vunpack.c.l.b16 %v6523
      %v6607 = vunpack.c.l.b16 %v6524
      %v6608 = vunpack.c.l.b16 %v6525
      %v6609 = vunpack.c.l.b16 %v6526
      %v6610 = vpack.c.b16 %v6578, %v6577
      %v6611 = vpack.c.b16 %v6580, %v6579
      %v6612 = vpack.c.b16 %v6582, %v6581
      %v6613 = vpack.c.b16 %v6584, %v6583
      %v6614 = vpack.c.b16 %v6586, %v6585
      %v6615 = vpack.c.b16 %v6588, %v6587
      %v6616 = vpack.c.b16 %v6590, %v6589
      %v6617 = vpack.c.b16 %v6592, %v6591
      %v6618 = vpack.c.b16 %v6594, %v6593
      %v6619 = vpack.c.b16 %v6596, %v6595
      %v6620 = vpack.c.b16 %v6598, %v6597
      %v6621 = vpack.c.b16 %v6600, %v6599
      %v6622 = vpack.c.b16 %v6602, %v6601
      %v6623 = vpack.c.b16 %v6604, %v6603
      %v6624 = vpack.c.b16 %v6606, %v6605
      %v6625 = vpack.c.b16 %v6608, %v6607
      %v6626 = vpack.c.b16 %v6609, %v6609
      %v6628 = vshrl.u32 %v6610, 16
      %v6630 = vshll.u32 %v6610, 16
      %v6632 = vrot.slane %v6630, 1
      %v6633 = vor.u32 %v6628, %v6632
      %v6635 = vshll.u32 %v6611, 16
      %v6637 = vrot.slane %v6635, 1
      %v6638 = vsel %vm704, %v6633, %v6637
      %v6639 = vshrl.u32 %v6611, 16
      %v6641 = vor.u32 %v6639, %v6637
      %v6643 = vshll.u32 %v6612, 16
      %v6645 = vrot.slane %v6643, 1
      %v6646 = vsel %vm704, %v6641, %v6645
      %v6647 = vshrl.u32 %v6612, 16
      %v6649 = vor.u32 %v6647, %v6645
      %v6651 = vshll.u32 %v6613, 16
      %v6653 = vrot.slane %v6651, 1
      %v6654 = vsel %vm704, %v6649, %v6653
      %v6655 = vshrl.u32 %v6613, 16
      %v6657 = vor.u32 %v6655, %v6653
      %v6659 = vshll.u32 %v6614, 16
      %v6661 = vrot.slane %v6659, 1
      %v6662 = vsel %vm704, %v6657, %v6661
      %v6663 = vshrl.u32 %v6614, 16
      %v6665 = vor.u32 %v6663, %v6661
      %v6667 = vshll.u32 %v6615, 16
      %v6669 = vrot.slane %v6667, 1
      %v6670 = vsel %vm704, %v6665, %v6669
      %v6671 = vshrl.u32 %v6615, 16
      %v6673 = vor.u32 %v6671, %v6669
      %v6675 = vshll.u32 %v6616, 16
      %v6677 = vrot.slane %v6675, 1
      %v6678 = vsel %vm704, %v6673, %v6677
      %v6679 = vshrl.u32 %v6616, 16
      %v6681 = vor.u32 %v6679, %v6677
      %v6683 = vshll.u32 %v6617, 16
      %v6685 = vrot.slane %v6683, 1
      %v6686 = vsel %vm704, %v6681, %v6685
      %v6687 = vshrl.u32 %v6617, 16
      %v6689 = vor.u32 %v6687, %v6685
      %v6691 = vshll.u32 %v6618, 16
      %v6693 = vrot.slane %v6691, 1
      %v6694 = vsel %vm704, %v6689, %v6693
      %v6695 = vshrl.u32 %v6618, 16
      %v6697 = vor.u32 %v6695, %v6693
      %v6699 = vshll.u32 %v6619, 16
      %v6701 = vrot.slane %v6699, 1
      %v6702 = vsel %vm704, %v6697, %v6701
      %v6703 = vshrl.u32 %v6619, 16
      %v6705 = vor.u32 %v6703, %v6701
      %v6707 = vshll.u32 %v6620, 16
      %v6709 = vrot.slane %v6707, 1
      %v6710 = vsel %vm704, %v6705, %v6709
      %v6711 = vshrl.u32 %v6620, 16
      %v6713 = vor.u32 %v6711, %v6709
      %v6715 = vshll.u32 %v6621, 16
      %v6717 = vrot.slane %v6715, 1
      %v6718 = vsel %vm704, %v6713, %v6717
      %v6719 = vshrl.u32 %v6621, 16
      %v6721 = vor.u32 %v6719, %v6717
      %v6723 = vshll.u32 %v6622, 16
      %v6725 = vrot.slane %v6723, 1
      %v6726 = vsel %vm704, %v6721, %v6725
      %v6727 = vshrl.u32 %v6622, 16
      %v6729 = vor.u32 %v6727, %v6725
      %v6731 = vshll.u32 %v6623, 16
      %v6733 = vrot.slane %v6731, 1
      %v6734 = vsel %vm704, %v6729, %v6733
      %v6735 = vshrl.u32 %v6623, 16
      %v6737 = vor.u32 %v6735, %v6733
      %v6739 = vshll.u32 %v6624, 16
      %v6741 = vrot.slane %v6739, 1
      %v6742 = vsel %vm704, %v6737, %v6741
      %v6743 = vshrl.u32 %v6624, 16
      %v6745 = vor.u32 %v6743, %v6741
      %v6747 = vshll.u32 %v6625, 16
      %v6749 = vrot.slane %v6747, 1
      %v6750 = vsel %vm704, %v6745, %v6749
      %v6751 = vshrl.u32 %v6625, 16
      %v6753 = vor.u32 %v6751, %v6749
      %v6755 = vshll.u32 %v6626, 16
      %v6757 = vrot.slane %v6755, 1
      %v6758 = vsel %vm704, %v6753, %v6757
      %v6791 = vunpack.c.l.b16 %v6528
      %v6792 = vunpack.c.l.b16 %v6529
      %v6793 = vunpack.c.l.b16 %v6530
      %v6794 = vunpack.c.l.b16 %v6531
      %v6795 = vunpack.c.l.b16 %v6532
      %v6796 = vunpack.c.l.b16 %v6533
      %v6797 = vunpack.c.l.b16 %v6534
      %v6798 = vunpack.c.l.b16 %v6535
      %v6799 = vunpack.c.l.b16 %v6536
      %v6800 = vunpack.c.l.b16 %v6537
      %v6801 = vunpack.c.l.b16 %v6538
      %v6802 = vunpack.c.l.b16 %v6539
      %v6803 = vunpack.c.l.b16 %v6540
      %v6804 = vunpack.c.l.b16 %v6541
      %v6805 = vunpack.c.l.b16 %v6542
      %v6806 = vunpack.c.l.b16 %v6543
      %v6807 = vpack.c.b16 %v6792, %v6791
      %v6808 = vpack.c.b16 %v6794, %v6793
      %v6809 = vpack.c.b16 %v6796, %v6795
      %v6810 = vpack.c.b16 %v6798, %v6797
      %v6811 = vpack.c.b16 %v6800, %v6799
      %v6812 = vpack.c.b16 %v6802, %v6801
      %v6813 = vpack.c.b16 %v6804, %v6803
      %v6814 = vpack.c.b16 %v6806, %v6805
      %6823 = vmatprep.subr.bf16.mxu0 0
      %6824 = vmatpush1.bf16.msra.mxu0 %v6814
      %6825 = vmatprep.subr.bf16.mxu0 0
      %6826 = vmatpush1.bf16.msra.mxu0 %v6813
      %6827 = vmatprep.subr.bf16.mxu0 0
      %6828 = vmatpush1.bf16.msra.mxu0 %v6812
      %6829 = vmatprep.subr.bf16.mxu0 0
      %6830 = vmatpush1.bf16.msra.mxu0 %v6811
      %6831 = vmatprep.subr.bf16.mxu0 0
      %6832 = vmatpush1.bf16.msra.mxu0 %v6810
      %6833 = vmatprep.subr.bf16.mxu0 0
      %6834 = vmatpush1.bf16.msra.mxu0 %v6809
      %6835 = vmatprep.subr.bf16.mxu0 0
      %6836 = vmatpush1.bf16.msra.mxu0 %v6808
      %6837 = vmatprep.subr.bf16.mxu0 0
      %6838 = vmatpush1.bf16.msra.mxu0 %v6807
      %6839 = vmatprep.subr.bf16.mxu0 0
      %6840 = vmatpush2.bf16.msra.mxu0 0
      %6841 = vmatprep.subr.bf16.mxu0 0
      %6842 = vmatpush2.bf16.msra.mxu0 0
      %6843 = vmatprep.subr.bf16.mxu0 0
      %6844 = vmatpush2.bf16.msra.mxu0 0
      %6845 = vmatprep.subr.bf16.mxu0 0
      %6846 = vmatpush2.bf16.msra.mxu0 0
      %6847 = vmatprep.subr.bf16.mxu0 0
      %6848 = vmatpush2.bf16.msra.mxu0 0
      %6849 = vmatprep.subr.bf16.mxu0 0
      %6850 = vmatpush2.bf16.msra.mxu0 0
      %6851 = vmatprep.subr.bf16.mxu0 0
      %6852 = vmatpush2.bf16.msra.mxu0 0
      %6853 = vmatprep.subr.bf16.mxu0 0
      %6854 = vmatpush2.bf16.msra.mxu0 0
      %6855 = vmatprep.mubr.bf16.mxu0 0
      %6856 = vmatmul.mubr.bf16.gmra.mxu0 %v6638
      %v6857 = vpop.f32.mrf.mxu0
      %v6858 = vadd.f32 0.0, %v6857
      %v6859 = vpop.f32.mrf.mxu0
      %v6860 = vpop.f32.mrf.mxu0
      %v6861 = vadd.f32 0.0, %v6860
      %v6862 = vpop.f32.mrf.mxu0
      %6863 = vmatprep.mubr.bf16.mxu0 0
      %6864 = vmatmul.mubr.bf16.gmra.mxu0 %v6646
      %v6865 = vpop.f32.mrf.mxu0
      %v6866 = vpop.f32.mrf.mxu0
      %v6867 = vpop.f32.mrf.mxu0
      %v6868 = vpop.f32.mrf.mxu0
      %6869 = vmatprep.mubr.bf16.mxu0 0
      %6870 = vmatmul.mubr.bf16.gmra.mxu0 %v6654
      %v6871 = vpop.f32.mrf.mxu0
      %v6872 = vadd.f32 0.0, %v6871
      %v6873 = vpop.f32.mrf.mxu0
      %v6874 = vpop.f32.mrf.mxu0
      %v6875 = vadd.f32 0.0, %v6874
      %v6876 = vpop.f32.mrf.mxu0
      %6877 = vmatprep.mubr.bf16.mxu0 0
      %6878 = vmatmul.mubr.bf16.gmra.mxu0 %v6662
      %v6879 = vpop.f32.mrf.mxu0
      %v6880 = vpop.f32.mrf.mxu0
      %v6881 = vpop.f32.mrf.mxu0
      %v6882 = vpop.f32.mrf.mxu0
      %6883 = vmatprep.mubr.bf16.mxu0 0
      %6884 = vmatmul.mubr.bf16.gmra.mxu0 %v6670
      %v6885 = vpop.f32.mrf.mxu0
      %v6886 = vadd.f32 0.0, %v6885
      %v6887 = vpop.f32.mrf.mxu0
      %v6888 = vpop.f32.mrf.mxu0
      %v6889 = vadd.f32 0.0, %v6888
      %v6890 = vpop.f32.mrf.mxu0
      %6891 = vmatprep.mubr.bf16.mxu0 0
      %6892 = vmatmul.mubr.bf16.gmra.mxu0 %v6678
      %v6893 = vpop.f32.mrf.mxu0
      %v6894 = vpop.f32.mrf.mxu0
      %v6895 = vpop.f32.mrf.mxu0
      %v6896 = vpop.f32.mrf.mxu0
      %6897 = vmatprep.mubr.bf16.mxu0 0
      %6898 = vmatmul.mubr.bf16.gmra.mxu0 %v6686
      %v6899 = vpop.f32.mrf.mxu0
      %v6900 = vadd.f32 0.0, %v6899
      %v6901 = vpop.f32.mrf.mxu0
      %v6902 = vpop.f32.mrf.mxu0
      %v6903 = vadd.f32 0.0, %v6902
      %v6904 = vpop.f32.mrf.mxu0
      %6905 = vmatprep.mubr.bf16.mxu0 0
      %6906 = vmatmul.mubr.bf16.gmra.mxu0 %v6694
      %v6907 = vpop.f32.mrf.mxu0
      %v6908 = vpop.f32.mrf.mxu0
      %v6909 = vpop.f32.mrf.mxu0
      %v6910 = vpop.f32.mrf.mxu0
      %6911 = vmatprep.mubr.bf16.mxu0 0
      %6912 = vmatmul.mubr.bf16.gmra.mxu0 %v6702
      %v6913 = vpop.f32.mrf.mxu0
      %v6914 = vadd.f32 0.0, %v6913
      %v6915 = vpop.f32.mrf.mxu0
      %v6916 = vpop.f32.mrf.mxu0
      %v6917 = vadd.f32 0.0, %v6916
      %v6918 = vpop.f32.mrf.mxu0
      %6919 = vmatprep.mubr.bf16.mxu0 0
      %6920 = vmatmul.mubr.bf16.gmra.mxu0 %v6710
      %v6921 = vpop.f32.mrf.mxu0
      %v6922 = vpop.f32.mrf.mxu0
      %v6923 = vpop.f32.mrf.mxu0
      %v6924 = vpop.f32.mrf.mxu0
      %6925 = vmatprep.mubr.bf16.mxu0 0
      %6926 = vmatmul.mubr.bf16.gmra.mxu0 %v6718
      %v6927 = vpop.f32.mrf.mxu0
      %v6928 = vadd.f32 0.0, %v6927
      %v6929 = vpop.f32.mrf.mxu0
      %v6930 = vpop.f32.mrf.mxu0
      %v6931 = vadd.f32 0.0, %v6930
      %v6932 = vpop.f32.mrf.mxu0
      %6933 = vmatprep.mubr.bf16.mxu0 0
      %6934 = vmatmul.mubr.bf16.gmra.mxu0 %v6726
      %v6935 = vpop.f32.mrf.mxu0
      %v6936 = vpop.f32.mrf.mxu0
      %v6937 = vpop.f32.mrf.mxu0
      %v6938 = vpop.f32.mrf.mxu0
      %6939 = vmatprep.mubr.bf16.mxu0 0
      %6940 = vmatmul.mubr.bf16.gmra.mxu0 %v6734
      %v6941 = vpop.f32.mrf.mxu0
      %v6942 = vadd.f32 0.0, %v6941
      %v6943 = vpop.f32.mrf.mxu0
      %v6944 = vpop.f32.mrf.mxu0
      %v6945 = vadd.f32 0.0, %v6944
      %v6946 = vpop.f32.mrf.mxu0
      %6947 = vmatprep.mubr.bf16.mxu0 0
      %6948 = vmatmul.mubr.bf16.gmra.mxu0 %v6742
      %v6949 = vpop.f32.mrf.mxu0
      %v6950 = vpop.f32.mrf.mxu0
      %v6951 = vpop.f32.mrf.mxu0
      %v6952 = vpop.f32.mrf.mxu0
      %6953 = vmatprep.mubr.bf16.mxu0 0
      %6954 = vmatmul.mubr.bf16.gmra.mxu0 %v6750
      %v6955 = vpop.f32.mrf.mxu0
      %v6956 = vadd.f32 0.0, %v6955
      %v6957 = vpop.f32.mrf.mxu0
      %v6958 = vpop.f32.mrf.mxu0
      %v6959 = vadd.f32 0.0, %v6958
      %v6960 = vpop.f32.mrf.mxu0
      %6961 = vmatprep.mubr.bf16.mxu0 0
      %6962 = vmatmul.mubr.bf16.gmra.mxu0 %v6758
      %v6963 = vpop.f32.mrf.mxu0
      %v6964 = vpop.f32.mrf.mxu0
      %v6965 = vpop.f32.mrf.mxu0
      %v6966 = vpop.f32.mrf.mxu0
      %6967 = vdwg.mxu0
      %v6968 = vadd.f32 %v6478, %v6858
      %v6969 = vadd.f32 %v6479, %v6861
      %v6970 = vadd.f32 %v6480, %v6872
      %v6971 = vadd.f32 %v6481, %v6875
      %v6972 = vadd.f32 %v6482, %v6886
      %v6973 = vadd.f32 %v6483, %v6889
      %v6974 = vadd.f32 %v6484, %v6900
      %v6975 = vadd.f32 %v6485, %v6903
      %v6976 = vadd.f32 %v6486, %v6914
      %v6977 = vadd.f32 %v6487, %v6917
      %v6978 = vadd.f32 %v6488, %v6928
      %v6979 = vadd.f32 %v6489, %v6931
      %v6980 = vadd.f32 %v6490, %v6942
      %v6981 = vadd.f32 %v6491, %v6945
      %v6982 = vadd.f32 %v6492, %v6956
      %v6983 = vadd.f32 %v6493, %v6959
      %v6984 = vld [vmem:[#allocation3 + $0x10] sm:$0xe]
      %s6985 = scalar_lea.vmem %s3, 320
      %v6986 = vld [vmem:[%s6985] sm:$0xf]
      %v6987 = vld [vmem:[%s6985 + $0x4] sm:$0xf]
      %v6988 = vld [vmem:[%s6985 + $0x8] sm:$0xf]
      %v6989 = vld [vmem:[%s6985 + $0xc] sm:$0xf]
      %v6990 = vld [vmem:[%s6985 + $0x10] sm:$0xf]
      %v6991 = vld [vmem:[%s6985 + $0x14] sm:$0xf]
      %v6992 = vld [vmem:[%s6985 + $0x18] sm:$0xf]
      %v6993 = vld [vmem:[%s6985 + $0x1c] sm:$0xf]
      %v6994 = vld [vmem:[%s6985 + $0x20] sm:$0xf]
      %v6995 = vld [vmem:[%s6985 + $0x24] sm:$0xf]
      %v6996 = vld [vmem:[%s6985 + $0x28] sm:$0xf]
      %v6997 = vld [vmem:[%s6985 + $0x2c] sm:$0xf]
      %v6998 = vld [vmem:[%s6985 + $0x30] sm:$0xf]
      %v6999 = vld [vmem:[%s6985 + $0x34] sm:$0xf]
      %v7000 = vld [vmem:[%s6985 + $0x38] sm:$0xf]
      %v7001 = vld [vmem:[%s6985 + $0x3c] sm:$0xf]
      %v7003 = vunpack.c.l.b16 %v6984
      %v7004 = vpack.c.b16 %v6578, %v7003
      %v7005 = vrot.slane %v7004, 1
      %v7006 = vrot.slane %v6611, 1
      %v7007 = vsel %vm1412, %v7005, %v7006
      %v7008 = vrot.slane %v6612, 1
      %v7009 = vsel %vm1412, %v7006, %v7008
      %v7010 = vrot.slane %v6613, 1
      %v7011 = vsel %vm1412, %v7008, %v7010
      %v7012 = vrot.slane %v6614, 1
      %v7013 = vsel %vm1412, %v7010, %v7012
      %v7014 = vrot.slane %v6615, 1
      %v7015 = vsel %vm1412, %v7012, %v7014
      %v7016 = vrot.slane %v6616, 1
      %v7017 = vsel %vm1412, %v7014, %v7016
      %v7018 = vrot.slane %v6617, 1
      %v7019 = vsel %vm1412, %v7016, %v7018
      %v7020 = vrot.slane %v6618, 1
      %v7021 = vsel %vm1412, %v7018, %v7020
      %v7022 = vrot.slane %v6619, 1
      %v7023 = vsel %vm1412, %v7020, %v7022
      %v7024 = vrot.slane %v6620, 1
      %v7025 = vsel %vm1412, %v7022, %v7024
      %v7026 = vrot.slane %v6621, 1
      %v7027 = vsel %vm1412, %v7024, %v7026
      %v7028 = vrot.slane %v6622, 1
      %v7029 = vsel %vm1412, %v7026, %v7028
      %v7030 = vrot.slane %v6623, 1
      %v7031 = vsel %vm1412, %v7028, %v7030
      %v7032 = vrot.slane %v6624, 1
      %v7033 = vsel %vm1412, %v7030, %v7032
      %v7034 = vrot.slane %v6625, 1
      %v7035 = vsel %vm1412, %v7032, %v7034
      %v7036 = vrot.slane %v6626, 1
      %v7037 = vsel %vm1412, %v7034, %v7036
      %v7070 = vunpack.c.l.b16 %v6986
      %v7071 = vunpack.c.l.b16 %v6987
      %v7072 = vunpack.c.l.b16 %v6988
      %v7073 = vunpack.c.l.b16 %v6989
      %v7074 = vunpack.c.l.b16 %v6990
      %v7075 = vunpack.c.l.b16 %v6991
      %v7076 = vunpack.c.l.b16 %v6992
      %v7077 = vunpack.c.l.b16 %v6993
      %v7078 = vunpack.c.l.b16 %v6994
      %v7079 = vunpack.c.l.b16 %v6995
      %v7080 = vunpack.c.l.b16 %v6996
      %v7081 = vunpack.c.l.b16 %v6997
      %v7082 = vunpack.c.l.b16 %v6998
      %v7083 = vunpack.c.l.b16 %v6999
      %v7084 = vunpack.c.l.b16 %v7000
      %v7085 = vunpack.c.l.b16 %v7001
      %v7086 = vpack.c.b16 %v7071, %v7070
      %v7087 = vpack.c.b16 %v7073, %v7072
      %v7088 = vpack.c.b16 %v7075, %v7074
      %v7089 = vpack.c.b16 %v7077, %v7076
      %v7090 = vpack.c.b16 %v7079, %v7078
      %v7091 = vpack.c.b16 %v7081, %v7080
      %v7092 = vpack.c.b16 %v7083, %v7082
      %v7093 = vpack.c.b16 %v7085, %v7084
      %7102 = vmatprep.subr.bf16.mxu0 0
      %7103 = vmatpush1.bf16.msra.mxu0 %v7093
      %7104 = vmatprep.subr.bf16.mxu0 0
      %7105 = vmatpush1.bf16.msra.mxu0 %v7092
      %7106 = vmatprep.subr.bf16.mxu0 0
      %7107 = vmatpush1.bf16.msra.mxu0 %v7091
      %7108 = vmatprep.subr.bf16.mxu0 0
      %7109 = vmatpush1.bf16.msra.mxu0 %v7090
      %7110 = vmatprep.subr.bf16.mxu0 0
      %7111 = vmatpush1.bf16.msra.mxu0 %v7089
      %7112 = vmatprep.subr.bf16.mxu0 0
      %7113 = vmatpush1.bf16.msra.mxu0 %v7088
      %7114 = vmatprep.subr.bf16.mxu0 0
      %7115 = vmatpush1.bf16.msra.mxu0 %v7087
      %7116 = vmatprep.subr.bf16.mxu0 0
      %7117 = vmatpush1.bf16.msra.mxu0 %v7086
      %7118 = vmatprep.subr.bf16.mxu0 0
      %7119 = vmatpush2.bf16.msra.mxu0 0
      %7120 = vmatprep.subr.bf16.mxu0 0
      %7121 = vmatpush2.bf16.msra.mxu0 0
      %7122 = vmatprep.subr.bf16.mxu0 0
      %7123 = vmatpush2.bf16.msra.mxu0 0
      %7124 = vmatprep.subr.bf16.mxu0 0
      %7125 = vmatpush2.bf16.msra.mxu0 0
      %7126 = vmatprep.subr.bf16.mxu0 0
      %7127 = vmatpush2.bf16.msra.mxu0 0
      %7128 = vmatprep.subr.bf16.mxu0 0
      %7129 = vmatpush2.bf16.msra.mxu0 0
      %7130 = vmatprep.subr.bf16.mxu0 0
      %7131 = vmatpush2.bf16.msra.mxu0 0
      %7132 = vmatprep.subr.bf16.mxu0 0
      %7133 = vmatpush2.bf16.msra.mxu0 0
      %7134 = vmatprep.mubr.bf16.mxu0 0
      %7135 = vmatmul.mubr.bf16.gmra.mxu0 %v7007
      %v7136 = vpop.f32.mrf.mxu0
      %v7137 = vadd.f32 0.0, %v7136
      %v7138 = vpop.f32.mrf.mxu0
      %v7139 = vpop.f32.mrf.mxu0
      %v7140 = vadd.f32 0.0, %v7139
      %v7141 = vpop.f32.mrf.mxu0
      %7142 = vmatprep.mubr.bf16.mxu0 0
      %7143 = vmatmul.mubr.bf16.gmra.mxu0 %v7009
      %v7144 = vpop.f32.mrf.mxu0
      %v7145 = vpop.f32.mrf.mxu0
      %v7146 = vpop.f32.mrf.mxu0
      %v7147 = vpop.f32.mrf.mxu0
      %7148 = vmatprep.mubr.bf16.mxu0 0
      %7149 = vmatmul.mubr.bf16.gmra.mxu0 %v7011
      %v7150 = vpop.f32.mrf.mxu0
      %v7151 = vadd.f32 0.0, %v7150
      %v7152 = vpop.f32.mrf.mxu0
      %v7153 = vpop.f32.mrf.mxu0
      %v7154 = vadd.f32 0.0, %v7153
      %v7155 = vpop.f32.mrf.mxu0
      %7156 = vmatprep.mubr.bf16.mxu0 0
      %7157 = vmatmul.mubr.bf16.gmra.mxu0 %v7013
      %v7158 = vpop.f32.mrf.mxu0
      %v7159 = vpop.f32.mrf.mxu0
      %v7160 = vpop.f32.mrf.mxu0
      %v7161 = vpop.f32.mrf.mxu0
      %7162 = vmatprep.mubr.bf16.mxu0 0
      %7163 = vmatmul.mubr.bf16.gmra.mxu0 %v7015
      %v7164 = vpop.f32.mrf.mxu0
      %v7165 = vadd.f32 0.0, %v7164
      %v7166 = vpop.f32.mrf.mxu0
      %v7167 = vpop.f32.mrf.mxu0
      %v7168 = vadd.f32 0.0, %v7167
      %v7169 = vpop.f32.mrf.mxu0
      %7170 = vmatprep.mubr.bf16.mxu0 0
      %7171 = vmatmul.mubr.bf16.gmra.mxu0 %v7017
      %v7172 = vpop.f32.mrf.mxu0
      %v7173 = vpop.f32.mrf.mxu0
      %v7174 = vpop.f32.mrf.mxu0
      %v7175 = vpop.f32.mrf.mxu0
      %7176 = vmatprep.mubr.bf16.mxu0 0
      %7177 = vmatmul.mubr.bf16.gmra.mxu0 %v7019
      %v7178 = vpop.f32.mrf.mxu0
      %v7179 = vadd.f32 0.0, %v7178
      %v7180 = vpop.f32.mrf.mxu0
      %v7181 = vpop.f32.mrf.mxu0
      %v7182 = vadd.f32 0.0, %v7181
      %v7183 = vpop.f32.mrf.mxu0
      %7184 = vmatprep.mubr.bf16.mxu0 0
      %7185 = vmatmul.mubr.bf16.gmra.mxu0 %v7021
      %v7186 = vpop.f32.mrf.mxu0
      %v7187 = vpop.f32.mrf.mxu0
      %v7188 = vpop.f32.mrf.mxu0
      %v7189 = vpop.f32.mrf.mxu0
      %7190 = vmatprep.mubr.bf16.mxu0 0
      %7191 = vmatmul.mubr.bf16.gmra.mxu0 %v7023
      %v7192 = vpop.f32.mrf.mxu0
      %v7193 = vadd.f32 0.0, %v7192
      %v7194 = vpop.f32.mrf.mxu0
      %v7195 = vpop.f32.mrf.mxu0
      %v7196 = vadd.f32 0.0, %v7195
      %v7197 = vpop.f32.mrf.mxu0
      %7198 = vmatprep.mubr.bf16.mxu0 0
      %7199 = vmatmul.mubr.bf16.gmra.mxu0 %v7025
      %v7200 = vpop.f32.mrf.mxu0
      %v7201 = vpop.f32.mrf.mxu0
      %v7202 = vpop.f32.mrf.mxu0
      %v7203 = vpop.f32.mrf.mxu0
      %7204 = vmatprep.mubr.bf16.mxu0 0
      %7205 = vmatmul.mubr.bf16.gmra.mxu0 %v7027
      %v7206 = vpop.f32.mrf.mxu0
      %v7207 = vadd.f32 0.0, %v7206
      %v7208 = vpop.f32.mrf.mxu0
      %v7209 = vpop.f32.mrf.mxu0
      %v7210 = vadd.f32 0.0, %v7209
      %v7211 = vpop.f32.mrf.mxu0
      %7212 = vmatprep.mubr.bf16.mxu0 0
      %7213 = vmatmul.mubr.bf16.gmra.mxu0 %v7029
      %v7214 = vpop.f32.mrf.mxu0
      %v7215 = vpop.f32.mrf.mxu0
      %v7216 = vpop.f32.mrf.mxu0
      %v7217 = vpop.f32.mrf.mxu0
      %7218 = vmatprep.mubr.bf16.mxu0 0
      %7219 = vmatmul.mubr.bf16.gmra.mxu0 %v7031
      %v7220 = vpop.f32.mrf.mxu0
      %v7221 = vadd.f32 0.0, %v7220
      %v7222 = vpop.f32.mrf.mxu0
      %v7223 = vpop.f32.mrf.mxu0
      %v7224 = vadd.f32 0.0, %v7223
      %v7225 = vpop.f32.mrf.mxu0
      %7226 = vmatprep.mubr.bf16.mxu0 0
      %7227 = vmatmul.mubr.bf16.gmra.mxu0 %v7033
      %v7228 = vpop.f32.mrf.mxu0
      %v7229 = vpop.f32.mrf.mxu0
      %v7230 = vpop.f32.mrf.mxu0
      %v7231 = vpop.f32.mrf.mxu0
      %7232 = vmatprep.mubr.bf16.mxu0 0
      %7233 = vmatmul.mubr.bf16.gmra.mxu0 %v7035
      %v7234 = vpop.f32.mrf.mxu0
      %v7235 = vadd.f32 0.0, %v7234
      %v7236 = vpop.f32.mrf.mxu0
      %v7237 = vpop.f32.mrf.mxu0
      %v7238 = vadd.f32 0.0, %v7237
      %v7239 = vpop.f32.mrf.mxu0
      %7240 = vmatprep.mubr.bf16.mxu0 0
      %7241 = vmatmul.mubr.bf16.gmra.mxu0 %v7037
      %v7242 = vpop.f32.mrf.mxu0
      %v7243 = vpop.f32.mrf.mxu0
      %v7244 = vpop.f32.mrf.mxu0
      %v7245 = vpop.f32.mrf.mxu0
      %7246 = vdwg.mxu0
      %v7247 = vadd.f32 %v6968, %v7137
      %v7248 = vadd.f32 %v6969, %v7140
      %v7249 = vadd.f32 %v6970, %v7151
      %v7250 = vadd.f32 %v6971, %v7154
      %v7251 = vadd.f32 %v6972, %v7165
      %v7252 = vadd.f32 %v6973, %v7168
      %v7253 = vadd.f32 %v6974, %v7179
      %v7254 = vadd.f32 %v6975, %v7182
      %v7255 = vadd.f32 %v6976, %v7193
      %v7256 = vadd.f32 %v6977, %v7196
      %v7257 = vadd.f32 %v6978, %v7207
      %v7258 = vadd.f32 %v6979, %v7210
      %v7259 = vadd.f32 %v6980, %v7221
      %v7260 = vadd.f32 %v6981, %v7224
      %v7261 = vadd.f32 %v6982, %v7235
      %v7262 = vadd.f32 %v6983, %v7238
      %v7263 = vld [vmem:[#allocation3 + $0x20] sm:$0xf]
      %v7264 = vld [vmem:[#allocation3 + $0x24] sm:$0xf]
      %v7265 = vld [vmem:[#allocation3 + $0x28] sm:$0xf]
      %v7266 = vld [vmem:[#allocation3 + $0x2c] sm:$0xf]
      %v7267 = vld [vmem:[#allocation3 + $0x30] sm:$0xf]
      %v7268 = vld [vmem:[#allocation3 + $0x34] sm:$0xf]
      %v7269 = vld [vmem:[#allocation3 + $0x38] sm:$0xf]
      %v7270 = vld [vmem:[#allocation3 + $0x3c] sm:$0xf]
      %v7271 = vld [vmem:[#allocation3 + $0x40] sm:$0xf]
      %v7272 = vld [vmem:[#allocation3 + $0x44] sm:$0xf]
      %v7273 = vld [vmem:[#allocation3 + $0x48] sm:$0xf]
      %v7274 = vld [vmem:[#allocation3 + $0x4c] sm:$0xf]
      %v7275 = vld [vmem:[#allocation3 + $0x50] sm:$0xf]
      %v7276 = vld [vmem:[#allocation3 + $0x54] sm:$0xf]
      %v7277 = vld [vmem:[#allocation3 + $0x58] sm:$0xf]
      %v7278 = vld [vmem:[#allocation3 + $0x5c] sm:$0xf]
      %v7279 = vld [vmem:[#allocation3 + $0x60] sm:$0xf]
      %v7280 = vld [vmem:[#allocation3 + $0x64] sm:$0xf]
      %v7281 = vld [vmem:[#allocation3 + $0x68] sm:$0xf]
      %v7282 = vld [vmem:[#allocation3 + $0x6c] sm:$0xf]
      %v7283 = vld [vmem:[#allocation3 + $0x70] sm:$0xf]
      %v7284 = vld [vmem:[#allocation3 + $0x74] sm:$0xf]
      %v7285 = vld [vmem:[#allocation3 + $0x78] sm:$0xf]
      %v7286 = vld [vmem:[#allocation3 + $0x7c] sm:$0xf]
      %v7287 = vld [vmem:[#allocation3 + $0x80] sm:$0xf]
      %v7288 = vld [vmem:[#allocation3 + $0x84] sm:$0xf]
      %v7289 = vld [vmem:[#allocation3 + $0x88] sm:$0xf]
      %v7290 = vld [vmem:[#allocation3 + $0x8c] sm:$0xf]
      %v7291 = vld [vmem:[#allocation3 + $0x90] sm:$0xf]
      %v7292 = vld [vmem:[#allocation3 + $0x94] sm:$0xf]
      %v7293 = vld [vmem:[#allocation3 + $0x98] sm:$0xf]
      %v7294 = vld [vmem:[#allocation3 + $0x9c] sm:$0xf]
      %s7295 = scalar_lea.vmem %s3, 384
      %v7296 = vld [vmem:[%s7295] sm:$0xf]
      %v7297 = vld [vmem:[%s7295 + $0x4] sm:$0xf]
      %v7298 = vld [vmem:[%s7295 + $0x8] sm:$0xf]
      %v7299 = vld [vmem:[%s7295 + $0xc] sm:$0xf]
      %v7300 = vld [vmem:[%s7295 + $0x10] sm:$0xf]
      %v7301 = vld [vmem:[%s7295 + $0x14] sm:$0xf]
      %v7302 = vld [vmem:[%s7295 + $0x18] sm:$0xf]
      %v7303 = vld [vmem:[%s7295 + $0x1c] sm:$0xf]
      %v7304 = vld [vmem:[%s7295 + $0x20] sm:$0xf]
      %v7305 = vld [vmem:[%s7295 + $0x24] sm:$0xf]
      %v7306 = vld [vmem:[%s7295 + $0x28] sm:$0xf]
      %v7307 = vld [vmem:[%s7295 + $0x2c] sm:$0xf]
      %v7308 = vld [vmem:[%s7295 + $0x30] sm:$0xf]
      %v7309 = vld [vmem:[%s7295 + $0x34] sm:$0xf]
      %v7310 = vld [vmem:[%s7295 + $0x38] sm:$0xf]
      %v7311 = vld [vmem:[%s7295 + $0x3c] sm:$0xf]
      %v7344 = vunpack.c.l.b16 %v7263
      %v7345 = vunpack.c.l.b16 %v7264
      %v7346 = vunpack.c.l.b16 %v7265
      %v7347 = vunpack.c.l.b16 %v7266
      %v7348 = vunpack.c.l.b16 %v7267
      %v7349 = vunpack.c.l.b16 %v7268
      %v7350 = vunpack.c.l.b16 %v7269
      %v7351 = vunpack.c.l.b16 %v7270
      %v7352 = vunpack.c.l.b16 %v7271
      %v7353 = vunpack.c.l.b16 %v7272
      %v7354 = vunpack.c.l.b16 %v7273
      %v7355 = vunpack.c.l.b16 %v7274
      %v7356 = vunpack.c.l.b16 %v7275
      %v7357 = vunpack.c.l.b16 %v7276
      %v7358 = vunpack.c.l.b16 %v7277
      %v7359 = vunpack.c.l.b16 %v7278
      %v7360 = vunpack.c.l.b16 %v7279
      %v7361 = vunpack.c.l.b16 %v7280
      %v7362 = vunpack.c.l.b16 %v7281
      %v7363 = vunpack.c.l.b16 %v7282
      %v7364 = vunpack.c.l.b16 %v7283
      %v7365 = vunpack.c.l.b16 %v7284
      %v7366 = vunpack.c.l.b16 %v7285
      %v7367 = vunpack.c.l.b16 %v7286
      %v7368 = vunpack.c.l.b16 %v7287
      %v7369 = vunpack.c.l.b16 %v7288
      %v7370 = vunpack.c.l.b16 %v7289
      %v7371 = vunpack.c.l.b16 %v7290
      %v7372 = vunpack.c.l.b16 %v7291
      %v7373 = vunpack.c.l.b16 %v7292
      %v7374 = vunpack.c.l.b16 %v7293
      %v7375 = vunpack.c.l.b16 %v7294
      %v7376 = vpack.c.b16 %v7345, %v7344
      %v7377 = vpack.c.b16 %v7347, %v7346
      %v7378 = vpack.c.b16 %v7349, %v7348
      %v7379 = vpack.c.b16 %v7351, %v7350
      %v7380 = vpack.c.b16 %v7353, %v7352
      %v7381 = vpack.c.b16 %v7355, %v7354
      %v7382 = vpack.c.b16 %v7357, %v7356
      %v7383 = vpack.c.b16 %v7359, %v7358
      %v7384 = vpack.c.b16 %v7361, %v7360
      %v7385 = vpack.c.b16 %v7363, %v7362
      %v7386 = vpack.c.b16 %v7365, %v7364
      %v7387 = vpack.c.b16 %v7367, %v7366
      %v7388 = vpack.c.b16 %v7369, %v7368
      %v7389 = vpack.c.b16 %v7371, %v7370
      %v7390 = vpack.c.b16 %v7373, %v7372
      %v7391 = vpack.c.b16 %v7375, %v7374
      %v7424 = vunpack.c.l.b16 %v7296
      %v7425 = vunpack.c.l.b16 %v7297
      %v7426 = vunpack.c.l.b16 %v7298
      %v7427 = vunpack.c.l.b16 %v7299
      %v7428 = vunpack.c.l.b16 %v7300
      %v7429 = vunpack.c.l.b16 %v7301
      %v7430 = vunpack.c.l.b16 %v7302
      %v7431 = vunpack.c.l.b16 %v7303
      %v7432 = vunpack.c.l.b16 %v7304
      %v7433 = vunpack.c.l.b16 %v7305
      %v7434 = vunpack.c.l.b16 %v7306
      %v7435 = vunpack.c.l.b16 %v7307
      %v7436 = vunpack.c.l.b16 %v7308
      %v7437 = vunpack.c.l.b16 %v7309
      %v7438 = vunpack.c.l.b16 %v7310
      %v7439 = vunpack.c.l.b16 %v7311
      %v7440 = vpack.c.b16 %v7425, %v7424
      %v7441 = vpack.c.b16 %v7427, %v7426
      %v7442 = vpack.c.b16 %v7429, %v7428
      %v7443 = vpack.c.b16 %v7431, %v7430
      %v7444 = vpack.c.b16 %v7433, %v7432
      %v7445 = vpack.c.b16 %v7435, %v7434
      %v7446 = vpack.c.b16 %v7437, %v7436
      %v7447 = vpack.c.b16 %v7439, %v7438
      %7456 = vmatprep.subr.bf16.mxu0 0
      %7457 = vmatpush1.bf16.msra.mxu0 %v7447
      %7458 = vmatprep.subr.bf16.mxu0 0
      %7459 = vmatpush1.bf16.msra.mxu0 %v7446
      %7460 = vmatprep.subr.bf16.mxu0 0
      %7461 = vmatpush1.bf16.msra.mxu0 %v7445
      %7462 = vmatprep.subr.bf16.mxu0 0
      %7463 = vmatpush1.bf16.msra.mxu0 %v7444
      %7464 = vmatprep.subr.bf16.mxu0 0
      %7465 = vmatpush1.bf16.msra.mxu0 %v7443
      %7466 = vmatprep.subr.bf16.mxu0 0
      %7467 = vmatpush1.bf16.msra.mxu0 %v7442
      %7468 = vmatprep.subr.bf16.mxu0 0
      %7469 = vmatpush1.bf16.msra.mxu0 %v7441
      %7470 = vmatprep.subr.bf16.mxu0 0
      %7471 = vmatpush1.bf16.msra.mxu0 %v7440
      %7472 = vmatprep.subr.bf16.mxu0 0
      %7473 = vmatpush2.bf16.msra.mxu0 0
      %7474 = vmatprep.subr.bf16.mxu0 0
      %7475 = vmatpush2.bf16.msra.mxu0 0
      %7476 = vmatprep.subr.bf16.mxu0 0
      %7477 = vmatpush2.bf16.msra.mxu0 0
      %7478 = vmatprep.subr.bf16.mxu0 0
      %7479 = vmatpush2.bf16.msra.mxu0 0
      %7480 = vmatprep.subr.bf16.mxu0 0
      %7481 = vmatpush2.bf16.msra.mxu0 0
      %7482 = vmatprep.subr.bf16.mxu0 0
      %7483 = vmatpush2.bf16.msra.mxu0 0
      %7484 = vmatprep.subr.bf16.mxu0 0
      %7485 = vmatpush2.bf16.msra.mxu0 0
      %7486 = vmatprep.subr.bf16.mxu0 0
      %7487 = vmatpush2.bf16.msra.mxu0 0
      %7488 = vmatprep.mubr.bf16.mxu0 0
      %7489 = vmatmul.mubr.bf16.gmra.mxu0 %v7376
      %v7490 = vpop.f32.mrf.mxu0
      %v7491 = vadd.f32 0.0, %v7490
      %v7492 = vpop.f32.mrf.mxu0
      %v7493 = vpop.f32.mrf.mxu0
      %v7494 = vadd.f32 0.0, %v7493
      %v7495 = vpop.f32.mrf.mxu0
      %7496 = vmatprep.mubr.bf16.mxu0 0
      %7497 = vmatmul.mubr.bf16.gmra.mxu0 %v7377
      %v7498 = vpop.f32.mrf.mxu0
      %v7499 = vpop.f32.mrf.mxu0
      %v7500 = vpop.f32.mrf.mxu0
      %v7501 = vpop.f32.mrf.mxu0
      %7502 = vmatprep.mubr.bf16.mxu0 0
      %7503 = vmatmul.mubr.bf16.gmra.mxu0 %v7378
      %v7504 = vpop.f32.mrf.mxu0
      %v7505 = vadd.f32 0.0, %v7504
      %v7506 = vpop.f32.mrf.mxu0
      %v7507 = vpop.f32.mrf.mxu0
      %v7508 = vadd.f32 0.0, %v7507
      %v7509 = vpop.f32.mrf.mxu0
      %7510 = vmatprep.mubr.bf16.mxu0 0
      %7511 = vmatmul.mubr.bf16.gmra.mxu0 %v7379
      %v7512 = vpop.f32.mrf.mxu0
      %v7513 = vpop.f32.mrf.mxu0
      %v7514 = vpop.f32.mrf.mxu0
      %v7515 = vpop.f32.mrf.mxu0
      %7516 = vmatprep.mubr.bf16.mxu0 0
      %7517 = vmatmul.mubr.bf16.gmra.mxu0 %v7380
      %v7518 = vpop.f32.mrf.mxu0
      %v7519 = vadd.f32 0.0, %v7518
      %v7520 = vpop.f32.mrf.mxu0
      %v7521 = vpop.f32.mrf.mxu0
      %v7522 = vadd.f32 0.0, %v7521
      %v7523 = vpop.f32.mrf.mxu0
      %7524 = vmatprep.mubr.bf16.mxu0 0
      %7525 = vmatmul.mubr.bf16.gmra.mxu0 %v7381
      %v7526 = vpop.f32.mrf.mxu0
      %v7527 = vpop.f32.mrf.mxu0
      %v7528 = vpop.f32.mrf.mxu0
      %v7529 = vpop.f32.mrf.mxu0
      %7530 = vmatprep.mubr.bf16.mxu0 0
      %7531 = vmatmul.mubr.bf16.gmra.mxu0 %v7382
      %v7532 = vpop.f32.mrf.mxu0
      %v7533 = vadd.f32 0.0, %v7532
      %v7534 = vpop.f32.mrf.mxu0
      %v7535 = vpop.f32.mrf.mxu0
      %v7536 = vadd.f32 0.0, %v7535
      %v7537 = vpop.f32.mrf.mxu0
      %7538 = vmatprep.mubr.bf16.mxu0 0
      %7539 = vmatmul.mubr.bf16.gmra.mxu0 %v7383
      %v7540 = vpop.f32.mrf.mxu0
      %v7541 = vpop.f32.mrf.mxu0
      %v7542 = vpop.f32.mrf.mxu0
      %v7543 = vpop.f32.mrf.mxu0
      %7544 = vmatprep.mubr.bf16.mxu0 0
      %7545 = vmatmul.mubr.bf16.gmra.mxu0 %v7384
      %v7546 = vpop.f32.mrf.mxu0
      %v7547 = vadd.f32 0.0, %v7546
      %v7548 = vpop.f32.mrf.mxu0
      %v7549 = vpop.f32.mrf.mxu0
      %v7550 = vadd.f32 0.0, %v7549
      %v7551 = vpop.f32.mrf.mxu0
      %7552 = vmatprep.mubr.bf16.mxu0 0
      %7553 = vmatmul.mubr.bf16.gmra.mxu0 %v7385
      %v7554 = vpop.f32.mrf.mxu0
      %v7555 = vpop.f32.mrf.mxu0
      %v7556 = vpop.f32.mrf.mxu0
      %v7557 = vpop.f32.mrf.mxu0
      %7558 = vmatprep.mubr.bf16.mxu0 0
      %7559 = vmatmul.mubr.bf16.gmra.mxu0 %v7386
      %v7560 = vpop.f32.mrf.mxu0
      %v7561 = vadd.f32 0.0, %v7560
      %v7562 = vpop.f32.mrf.mxu0
      %v7563 = vpop.f32.mrf.mxu0
      %v7564 = vadd.f32 0.0, %v7563
      %v7565 = vpop.f32.mrf.mxu0
      %7566 = vmatprep.mubr.bf16.mxu0 0
      %7567 = vmatmul.mubr.bf16.gmra.mxu0 %v7387
      %v7568 = vpop.f32.mrf.mxu0
      %v7569 = vpop.f32.mrf.mxu0
      %v7570 = vpop.f32.mrf.mxu0
      %v7571 = vpop.f32.mrf.mxu0
      %7572 = vmatprep.mubr.bf16.mxu0 0
      %7573 = vmatmul.mubr.bf16.gmra.mxu0 %v7388
      %v7574 = vpop.f32.mrf.mxu0
      %v7575 = vadd.f32 0.0, %v7574
      %v7576 = vpop.f32.mrf.mxu0
      %v7577 = vpop.f32.mrf.mxu0
      %v7578 = vadd.f32 0.0, %v7577
      %v7579 = vpop.f32.mrf.mxu0
      %7580 = vmatprep.mubr.bf16.mxu0 0
      %7581 = vmatmul.mubr.bf16.gmra.mxu0 %v7389
      %v7582 = vpop.f32.mrf.mxu0
      %v7583 = vpop.f32.mrf.mxu0
      %v7584 = vpop.f32.mrf.mxu0
      %v7585 = vpop.f32.mrf.mxu0
      %7586 = vmatprep.mubr.bf16.mxu0 0
      %7587 = vmatmul.mubr.bf16.gmra.mxu0 %v7390
      %v7588 = vpop.f32.mrf.mxu0
      %v7589 = vadd.f32 0.0, %v7588
      %v7590 = vpop.f32.mrf.mxu0
      %v7591 = vpop.f32.mrf.mxu0
      %v7592 = vadd.f32 0.0, %v7591
      %v7593 = vpop.f32.mrf.mxu0
      %7594 = vmatprep.mubr.bf16.mxu0 0
      %7595 = vmatmul.mubr.bf16.gmra.mxu0 %v7391
      %v7596 = vpop.f32.mrf.mxu0
      %v7597 = vpop.f32.mrf.mxu0
      %v7598 = vpop.f32.mrf.mxu0
      %v7599 = vpop.f32.mrf.mxu0
      %7600 = vdwg.mxu0
      %v7601 = vadd.f32 %v7247, %v7491
      %v7602 = vadd.f32 %v7248, %v7494
      %v7603 = vadd.f32 %v7249, %v7505
      %v7604 = vadd.f32 %v7250, %v7508
      %v7605 = vadd.f32 %v7251, %v7519
      %v7606 = vadd.f32 %v7252, %v7522
      %v7607 = vadd.f32 %v7253, %v7533
      %v7608 = vadd.f32 %v7254, %v7536
      %v7609 = vadd.f32 %v7255, %v7547
      %v7610 = vadd.f32 %v7256, %v7550
      %v7611 = vadd.f32 %v7257, %v7561
      %v7612 = vadd.f32 %v7258, %v7564
      %v7613 = vadd.f32 %v7259, %v7575
      %v7614 = vadd.f32 %v7260, %v7578
      %v7615 = vadd.f32 %v7261, %v7589
      %v7616 = vadd.f32 %v7262, %v7592
      %v7617 = vld [vmem:[#allocation3 + $0x20] sm:$0xf]
      %v7618 = vld [vmem:[#allocation3 + $0x24] sm:$0xf]
      %v7619 = vld [vmem:[#allocation3 + $0x28] sm:$0xf]
      %v7620 = vld [vmem:[#allocation3 + $0x2c] sm:$0xf]
      %v7621 = vld [vmem:[#allocation3 + $0x30] sm:$0xf]
      %v7622 = vld [vmem:[#allocation3 + $0x34] sm:$0xf]
      %v7623 = vld [vmem:[#allocation3 + $0x38] sm:$0xf]
      %v7624 = vld [vmem:[#allocation3 + $0x3c] sm:$0xf]
      %v7625 = vld [vmem:[#allocation3 + $0x40] sm:$0xf]
      %v7626 = vld [vmem:[#allocation3 + $0x44] sm:$0xf]
      %v7627 = vld [vmem:[#allocation3 + $0x48] sm:$0xf]
      %v7628 = vld [vmem:[#allocation3 + $0x4c] sm:$0xf]
      %v7629 = vld [vmem:[#allocation3 + $0x50] sm:$0xf]
      %v7630 = vld [vmem:[#allocation3 + $0x54] sm:$0xf]
      %v7631 = vld [vmem:[#allocation3 + $0x58] sm:$0xf]
      %v7632 = vld [vmem:[#allocation3 + $0x5c] sm:$0xf]
      %v7633 = vld [vmem:[#allocation3 + $0x60] sm:$0xf]
      %v7634 = vld [vmem:[#allocation3 + $0x64] sm:$0xf]
      %v7635 = vld [vmem:[#allocation3 + $0x68] sm:$0xf]
      %v7636 = vld [vmem:[#allocation3 + $0x6c] sm:$0xf]
      %v7637 = vld [vmem:[#allocation3 + $0x70] sm:$0xf]
      %v7638 = vld [vmem:[#allocation3 + $0x74] sm:$0xf]
      %v7639 = vld [vmem:[#allocation3 + $0x78] sm:$0xf]
      %v7640 = vld [vmem:[#allocation3 + $0x7c] sm:$0xf]
      %v7641 = vld [vmem:[#allocation3 + $0x80] sm:$0xf]
      %v7642 = vld [vmem:[#allocation3 + $0x84] sm:$0xf]
      %v7643 = vld [vmem:[#allocation3 + $0x88] sm:$0xf]
      %v7644 = vld [vmem:[#allocation3 + $0x8c] sm:$0xf]
      %v7645 = vld [vmem:[#allocation3 + $0x90] sm:$0xf]
      %v7646 = vld [vmem:[#allocation3 + $0x94] sm:$0xf]
      %v7647 = vld [vmem:[#allocation3 + $0x98] sm:$0xf]
      %v7648 = vld [vmem:[#allocation3 + $0x9c] sm:$0xf]
      %v7649 = vld [vmem:[#allocation3 + $0xa0] sm:$0x1]
      %s7650 = scalar_lea.vmem %s3, 448
      %v7651 = vld [vmem:[%s7650] sm:$0xf]
      %v7652 = vld [vmem:[%s7650 + $0x4] sm:$0xf]
      %v7653 = vld [vmem:[%s7650 + $0x8] sm:$0xf]
      %v7654 = vld [vmem:[%s7650 + $0xc] sm:$0xf]
      %v7655 = vld [vmem:[%s7650 + $0x10] sm:$0xf]
      %v7656 = vld [vmem:[%s7650 + $0x14] sm:$0xf]
      %v7657 = vld [vmem:[%s7650 + $0x18] sm:$0xf]
      %v7658 = vld [vmem:[%s7650 + $0x1c] sm:$0xf]
      %v7659 = vld [vmem:[%s7650 + $0x20] sm:$0xf]
      %v7660 = vld [vmem:[%s7650 + $0x24] sm:$0xf]
      %v7661 = vld [vmem:[%s7650 + $0x28] sm:$0xf]
      %v7662 = vld [vmem:[%s7650 + $0x2c] sm:$0xf]
      %v7663 = vld [vmem:[%s7650 + $0x30] sm:$0xf]
      %v7664 = vld [vmem:[%s7650 + $0x34] sm:$0xf]
      %v7665 = vld [vmem:[%s7650 + $0x38] sm:$0xf]
      %v7666 = vld [vmem:[%s7650 + $0x3c] sm:$0xf]
      %v7700 = vunpack.c.l.b16 %v7617
      %v7701 = vunpack.c.l.b16 %v7618
      %v7702 = vunpack.c.l.b16 %v7619
      %v7703 = vunpack.c.l.b16 %v7620
      %v7704 = vunpack.c.l.b16 %v7621
      %v7705 = vunpack.c.l.b16 %v7622
      %v7706 = vunpack.c.l.b16 %v7623
      %v7707 = vunpack.c.l.b16 %v7624
      %v7708 = vunpack.c.l.b16 %v7625
      %v7709 = vunpack.c.l.b16 %v7626
      %v7710 = vunpack.c.l.b16 %v7627
      %v7711 = vunpack.c.l.b16 %v7628
      %v7712 = vunpack.c.l.b16 %v7629
      %v7713 = vunpack.c.l.b16 %v7630
      %v7714 = vunpack.c.l.b16 %v7631
      %v7715 = vunpack.c.l.b16 %v7632
      %v7716 = vunpack.c.l.b16 %v7633
      %v7717 = vunpack.c.l.b16 %v7634
      %v7718 = vunpack.c.l.b16 %v7635
      %v7719 = vunpack.c.l.b16 %v7636
      %v7720 = vunpack.c.l.b16 %v7637
      %v7721 = vunpack.c.l.b16 %v7638
      %v7722 = vunpack.c.l.b16 %v7639
      %v7723 = vunpack.c.l.b16 %v7640
      %v7724 = vunpack.c.l.b16 %v7641
      %v7725 = vunpack.c.l.b16 %v7642
      %v7726 = vunpack.c.l.b16 %v7643
      %v7727 = vunpack.c.l.b16 %v7644
      %v7728 = vunpack.c.l.b16 %v7645
      %v7729 = vunpack.c.l.b16 %v7646
      %v7730 = vunpack.c.l.b16 %v7647
      %v7731 = vunpack.c.l.b16 %v7648
      %v7732 = vunpack.c.l.b16 %v7649
      %v7733 = vpack.c.b16 %v7701, %v7700
      %v7734 = vpack.c.b16 %v7703, %v7702
      %v7735 = vpack.c.b16 %v7705, %v7704
      %v7736 = vpack.c.b16 %v7707, %v7706
      %v7737 = vpack.c.b16 %v7709, %v7708
      %v7738 = vpack.c.b16 %v7711, %v7710
      %v7739 = vpack.c.b16 %v7713, %v7712
      %v7740 = vpack.c.b16 %v7715, %v7714
      %v7741 = vpack.c.b16 %v7717, %v7716
      %v7742 = vpack.c.b16 %v7719, %v7718
      %v7743 = vpack.c.b16 %v7721, %v7720
      %v7744 = vpack.c.b16 %v7723, %v7722
      %v7745 = vpack.c.b16 %v7725, %v7724
      %v7746 = vpack.c.b16 %v7727, %v7726
      %v7747 = vpack.c.b16 %v7729, %v7728
      %v7748 = vpack.c.b16 %v7731, %v7730
      %v7749 = vpack.c.b16 %v7732, %v7732
      %v7751 = vshrl.u32 %v7733, 16
      %v7753 = vshll.u32 %v7733, 16
      %v7755 = vrot.slane %v7753, 1
      %v7756 = vor.u32 %v7751, %v7755
      %v7758 = vshll.u32 %v7734, 16
      %v7760 = vrot.slane %v7758, 1
      %v7761 = vsel %vm704, %v7756, %v7760
      %v7762 = vshrl.u32 %v7734, 16
      %v7764 = vor.u32 %v7762, %v7760
      %v7766 = vshll.u32 %v7735, 16
      %v7768 = vrot.slane %v7766, 1
      %v7769 = vsel %vm704, %v7764, %v7768
      %v7770 = vshrl.u32 %v7735, 16
      %v7772 = vor.u32 %v7770, %v7768
      %v7774 = vshll.u32 %v7736, 16
      %v7776 = vrot.slane %v7774, 1
      %v7777 = vsel %vm704, %v7772, %v7776
      %v7778 = vshrl.u32 %v7736, 16
      %v7780 = vor.u32 %v7778, %v7776
      %v7782 = vshll.u32 %v7737, 16
      %v7784 = vrot.slane %v7782, 1
      %v7785 = vsel %vm704, %v7780, %v7784
      %v7786 = vshrl.u32 %v7737, 16
      %v7788 = vor.u32 %v7786, %v7784
      %v7790 = vshll.u32 %v7738, 16
      %v7792 = vrot.slane %v7790, 1
      %v7793 = vsel %vm704, %v7788, %v7792
      %v7794 = vshrl.u32 %v7738, 16
      %v7796 = vor.u32 %v7794, %v7792
      %v7798 = vshll.u32 %v7739, 16
      %v7800 = vrot.slane %v7798, 1
      %v7801 = vsel %vm704, %v7796, %v7800
      %v7802 = vshrl.u32 %v7739, 16
      %v7804 = vor.u32 %v7802, %v7800
      %v7806 = vshll.u32 %v7740, 16
      %v7808 = vrot.slane %v7806, 1
      %v7809 = vsel %vm704, %v7804, %v7808
      %v7810 = vshrl.u32 %v7740, 16
      %v7812 = vor.u32 %v7810, %v7808
      %v7814 = vshll.u32 %v7741, 16
      %v7816 = vrot.slane %v7814, 1
      %v7817 = vsel %vm704, %v7812, %v7816
      %v7818 = vshrl.u32 %v7741, 16
      %v7820 = vor.u32 %v7818, %v7816
      %v7822 = vshll.u32 %v7742, 16
      %v7824 = vrot.slane %v7822, 1
      %v7825 = vsel %vm704, %v7820, %v7824
      %v7826 = vshrl.u32 %v7742, 16
      %v7828 = vor.u32 %v7826, %v7824
      %v7830 = vshll.u32 %v7743, 16
      %v7832 = vrot.slane %v7830, 1
      %v7833 = vsel %vm704, %v7828, %v7832
      %v7834 = vshrl.u32 %v7743, 16
      %v7836 = vor.u32 %v7834, %v7832
      %v7838 = vshll.u32 %v7744, 16
      %v7840 = vrot.slane %v7838, 1
      %v7841 = vsel %vm704, %v7836, %v7840
      %v7842 = vshrl.u32 %v7744, 16
      %v7844 = vor.u32 %v7842, %v7840
      %v7846 = vshll.u32 %v7745, 16
      %v7848 = vrot.slane %v7846, 1
      %v7849 = vsel %vm704, %v7844, %v7848
      %v7850 = vshrl.u32 %v7745, 16
      %v7852 = vor.u32 %v7850, %v7848
      %v7854 = vshll.u32 %v7746, 16
      %v7856 = vrot.slane %v7854, 1
      %v7857 = vsel %vm704, %v7852, %v7856
      %v7858 = vshrl.u32 %v7746, 16
      %v7860 = vor.u32 %v7858, %v7856
      %v7862 = vshll.u32 %v7747, 16
      %v7864 = vrot.slane %v7862, 1
      %v7865 = vsel %vm704, %v7860, %v7864
      %v7866 = vshrl.u32 %v7747, 16
      %v7868 = vor.u32 %v7866, %v7864
      %v7870 = vshll.u32 %v7748, 16
      %v7872 = vrot.slane %v7870, 1
      %v7873 = vsel %vm704, %v7868, %v7872
      %v7874 = vshrl.u32 %v7748, 16
      %v7876 = vor.u32 %v7874, %v7872
      %v7878 = vshll.u32 %v7749, 16
      %v7880 = vrot.slane %v7878, 1
      %v7881 = vsel %vm704, %v7876, %v7880
      %v7914 = vunpack.c.l.b16 %v7651
      %v7915 = vunpack.c.l.b16 %v7652
      %v7916 = vunpack.c.l.b16 %v7653
      %v7917 = vunpack.c.l.b16 %v7654
      %v7918 = vunpack.c.l.b16 %v7655
      %v7919 = vunpack.c.l.b16 %v7656
      %v7920 = vunpack.c.l.b16 %v7657
      %v7921 = vunpack.c.l.b16 %v7658
      %v7922 = vunpack.c.l.b16 %v7659
      %v7923 = vunpack.c.l.b16 %v7660
      %v7924 = vunpack.c.l.b16 %v7661
      %v7925 = vunpack.c.l.b16 %v7662
      %v7926 = vunpack.c.l.b16 %v7663
      %v7927 = vunpack.c.l.b16 %v7664
      %v7928 = vunpack.c.l.b16 %v7665
      %v7929 = vunpack.c.l.b16 %v7666
      %v7930 = vpack.c.b16 %v7915, %v7914
      %v7931 = vpack.c.b16 %v7917, %v7916
      %v7932 = vpack.c.b16 %v7919, %v7918
      %v7933 = vpack.c.b16 %v7921, %v7920
      %v7934 = vpack.c.b16 %v7923, %v7922
      %v7935 = vpack.c.b16 %v7925, %v7924
      %v7936 = vpack.c.b16 %v7927, %v7926
      %v7937 = vpack.c.b16 %v7929, %v7928
      %7946 = vmatprep.subr.bf16.mxu0 0
      %7947 = vmatpush1.bf16.msra.mxu0 %v7937
      %7948 = vmatprep.subr.bf16.mxu0 0
      %7949 = vmatpush1.bf16.msra.mxu0 %v7936
      %7950 = vmatprep.subr.bf16.mxu0 0
      %7951 = vmatpush1.bf16.msra.mxu0 %v7935
      %7952 = vmatprep.subr.bf16.mxu0 0
      %7953 = vmatpush1.bf16.msra.mxu0 %v7934
      %7954 = vmatprep.subr.bf16.mxu0 0
      %7955 = vmatpush1.bf16.msra.mxu0 %v7933
      %7956 = vmatprep.subr.bf16.mxu0 0
      %7957 = vmatpush1.bf16.msra.mxu0 %v7932
      %7958 = vmatprep.subr.bf16.mxu0 0
      %7959 = vmatpush1.bf16.msra.mxu0 %v7931
      %7960 = vmatprep.subr.bf16.mxu0 0
      %7961 = vmatpush1.bf16.msra.mxu0 %v7930
      %7962 = vmatprep.subr.bf16.mxu0 0
      %7963 = vmatpush2.bf16.msra.mxu0 0
      %7964 = vmatprep.subr.bf16.mxu0 0
      %7965 = vmatpush2.bf16.msra.mxu0 0
      %7966 = vmatprep.subr.bf16.mxu0 0
      %7967 = vmatpush2.bf16.msra.mxu0 0
      %7968 = vmatprep.subr.bf16.mxu0 0
      %7969 = vmatpush2.bf16.msra.mxu0 0
      %7970 = vmatprep.subr.bf16.mxu0 0
      %7971 = vmatpush2.bf16.msra.mxu0 0
      %7972 = vmatprep.subr.bf16.mxu0 0
      %7973 = vmatpush2.bf16.msra.mxu0 0
      %7974 = vmatprep.subr.bf16.mxu0 0
      %7975 = vmatpush2.bf16.msra.mxu0 0
      %7976 = vmatprep.subr.bf16.mxu0 0
      %7977 = vmatpush2.bf16.msra.mxu0 0
      %7978 = vmatprep.mubr.bf16.mxu0 0
      %7979 = vmatmul.mubr.bf16.gmra.mxu0 %v7761
      %v7980 = vpop.f32.mrf.mxu0
      %v7981 = vadd.f32 0.0, %v7980
      %v7982 = vpop.f32.mrf.mxu0
      %v7983 = vpop.f32.mrf.mxu0
      %v7984 = vadd.f32 0.0, %v7983
      %v7985 = vpop.f32.mrf.mxu0
      %7986 = vmatprep.mubr.bf16.mxu0 0
      %7987 = vmatmul.mubr.bf16.gmra.mxu0 %v7769
      %v7988 = vpop.f32.mrf.mxu0
      %v7989 = vpop.f32.mrf.mxu0
      %v7990 = vpop.f32.mrf.mxu0
      %v7991 = vpop.f32.mrf.mxu0
      %7992 = vmatprep.mubr.bf16.mxu0 0
      %7993 = vmatmul.mubr.bf16.gmra.mxu0 %v7777
      %v7994 = vpop.f32.mrf.mxu0
      %v7995 = vadd.f32 0.0, %v7994
      %v7996 = vpop.f32.mrf.mxu0
      %v7997 = vpop.f32.mrf.mxu0
      %v7998 = vadd.f32 0.0, %v7997
      %v7999 = vpop.f32.mrf.mxu0
      %8000 = vmatprep.mubr.bf16.mxu0 0
      %8001 = vmatmul.mubr.bf16.gmra.mxu0 %v7785
      %v8002 = vpop.f32.mrf.mxu0
      %v8003 = vpop.f32.mrf.mxu0
      %v8004 = vpop.f32.mrf.mxu0
      %v8005 = vpop.f32.mrf.mxu0
      %8006 = vmatprep.mubr.bf16.mxu0 0
      %8007 = vmatmul.mubr.bf16.gmra.mxu0 %v7793
      %v8008 = vpop.f32.mrf.mxu0
      %v8009 = vadd.f32 0.0, %v8008
      %v8010 = vpop.f32.mrf.mxu0
      %v8011 = vpop.f32.mrf.mxu0
      %v8012 = vadd.f32 0.0, %v8011
      %v8013 = vpop.f32.mrf.mxu0
      %8014 = vmatprep.mubr.bf16.mxu0 0
      %8015 = vmatmul.mubr.bf16.gmra.mxu0 %v7801
      %v8016 = vpop.f32.mrf.mxu0
      %v8017 = vpop.f32.mrf.mxu0
      %v8018 = vpop.f32.mrf.mxu0
      %v8019 = vpop.f32.mrf.mxu0
      %8020 = vmatprep.mubr.bf16.mxu0 0
      %8021 = vmatmul.mubr.bf16.gmra.mxu0 %v7809
      %v8022 = vpop.f32.mrf.mxu0
      %v8023 = vadd.f32 0.0, %v8022
      %v8024 = vpop.f32.mrf.mxu0
      %v8025 = vpop.f32.mrf.mxu0
      %v8026 = vadd.f32 0.0, %v8025
      %v8027 = vpop.f32.mrf.mxu0
      %8028 = vmatprep.mubr.bf16.mxu0 0
      %8029 = vmatmul.mubr.bf16.gmra.mxu0 %v7817
      %v8030 = vpop.f32.mrf.mxu0
      %v8031 = vpop.f32.mrf.mxu0
      %v8032 = vpop.f32.mrf.mxu0
      %v8033 = vpop.f32.mrf.mxu0
      %8034 = vmatprep.mubr.bf16.mxu0 0
      %8035 = vmatmul.mubr.bf16.gmra.mxu0 %v7825
      %v8036 = vpop.f32.mrf.mxu0
      %v8037 = vadd.f32 0.0, %v8036
      %v8038 = vpop.f32.mrf.mxu0
      %v8039 = vpop.f32.mrf.mxu0
      %v8040 = vadd.f32 0.0, %v8039
      %v8041 = vpop.f32.mrf.mxu0
      %8042 = vmatprep.mubr.bf16.mxu0 0
      %8043 = vmatmul.mubr.bf16.gmra.mxu0 %v7833
      %v8044 = vpop.f32.mrf.mxu0
      %v8045 = vpop.f32.mrf.mxu0
      %v8046 = vpop.f32.mrf.mxu0
      %v8047 = vpop.f32.mrf.mxu0
      %8048 = vmatprep.mubr.bf16.mxu0 0
      %8049 = vmatmul.mubr.bf16.gmra.mxu0 %v7841
      %v8050 = vpop.f32.mrf.mxu0
      %v8051 = vadd.f32 0.0, %v8050
      %v8052 = vpop.f32.mrf.mxu0
      %v8053 = vpop.f32.mrf.mxu0
      %v8054 = vadd.f32 0.0, %v8053
      %v8055 = vpop.f32.mrf.mxu0
      %8056 = vmatprep.mubr.bf16.mxu0 0
      %8057 = vmatmul.mubr.bf16.gmra.mxu0 %v7849
      %v8058 = vpop.f32.mrf.mxu0
      %v8059 = vpop.f32.mrf.mxu0
      %v8060 = vpop.f32.mrf.mxu0
      %v8061 = vpop.f32.mrf.mxu0
      %8062 = vmatprep.mubr.bf16.mxu0 0
      %8063 = vmatmul.mubr.bf16.gmra.mxu0 %v7857
      %v8064 = vpop.f32.mrf.mxu0
      %v8065 = vadd.f32 0.0, %v8064
      %v8066 = vpop.f32.mrf.mxu0
      %v8067 = vpop.f32.mrf.mxu0
      %v8068 = vadd.f32 0.0, %v8067
      %v8069 = vpop.f32.mrf.mxu0
      %8070 = vmatprep.mubr.bf16.mxu0 0
      %8071 = vmatmul.mubr.bf16.gmra.mxu0 %v7865
      %v8072 = vpop.f32.mrf.mxu0
      %v8073 = vpop.f32.mrf.mxu0
      %v8074 = vpop.f32.mrf.mxu0
      %v8075 = vpop.f32.mrf.mxu0
      %8076 = vmatprep.mubr.bf16.mxu0 0
      %8077 = vmatmul.mubr.bf16.gmra.mxu0 %v7873
      %v8078 = vpop.f32.mrf.mxu0
      %v8079 = vadd.f32 0.0, %v8078
      %v8080 = vpop.f32.mrf.mxu0
      %v8081 = vpop.f32.mrf.mxu0
      %v8082 = vadd.f32 0.0, %v8081
      %v8083 = vpop.f32.mrf.mxu0
      %8084 = vmatprep.mubr.bf16.mxu0 0
      %8085 = vmatmul.mubr.bf16.gmra.mxu0 %v7881
      %v8086 = vpop.f32.mrf.mxu0
      %v8087 = vpop.f32.mrf.mxu0
      %v8088 = vpop.f32.mrf.mxu0
      %v8089 = vpop.f32.mrf.mxu0
      %8090 = vdwg.mxu0
      %v8091 = vadd.f32 %v7601, %v7981
      %v8092 = vadd.f32 %v7602, %v7984
      %v8093 = vadd.f32 %v7603, %v7995
      %v8094 = vadd.f32 %v7604, %v7998
      %v8095 = vadd.f32 %v7605, %v8009
      %v8096 = vadd.f32 %v7606, %v8012
      %v8097 = vadd.f32 %v7607, %v8023
      %v8098 = vadd.f32 %v7608, %v8026
      %v8099 = vadd.f32 %v7609, %v8037
      %v8100 = vadd.f32 %v7610, %v8040
      %v8101 = vadd.f32 %v7611, %v8051
      %v8102 = vadd.f32 %v7612, %v8054
      %v8103 = vadd.f32 %v7613, %v8065
      %v8104 = vadd.f32 %v7614, %v8068
      %v8105 = vadd.f32 %v7615, %v8079
      %v8106 = vadd.f32 %v7616, %v8082
      %v8107 = vld [vmem:[#allocation3 + $0x20] sm:$0xe]
      %s8108 = scalar_lea.vmem %s3, 512
      %v8109 = vld [vmem:[%s8108] sm:$0xf]
      %v8110 = vld [vmem:[%s8108 + $0x4] sm:$0xf]
      %v8111 = vld [vmem:[%s8108 + $0x8] sm:$0xf]
      %v8112 = vld [vmem:[%s8108 + $0xc] sm:$0xf]
      %v8113 = vld [vmem:[%s8108 + $0x10] sm:$0xf]
      %v8114 = vld [vmem:[%s8108 + $0x14] sm:$0xf]
      %v8115 = vld [vmem:[%s8108 + $0x18] sm:$0xf]
      %v8116 = vld [vmem:[%s8108 + $0x1c] sm:$0xf]
      %v8117 = vld [vmem:[%s8108 + $0x20] sm:$0xf]
      %v8118 = vld [vmem:[%s8108 + $0x24] sm:$0xf]
      %v8119 = vld [vmem:[%s8108 + $0x28] sm:$0xf]
      %v8120 = vld [vmem:[%s8108 + $0x2c] sm:$0xf]
      %v8121 = vld [vmem:[%s8108 + $0x30] sm:$0xf]
      %v8122 = vld [vmem:[%s8108 + $0x34] sm:$0xf]
      %v8123 = vld [vmem:[%s8108 + $0x38] sm:$0xf]
      %v8124 = vld [vmem:[%s8108 + $0x3c] sm:$0xf]
      %v8126 = vunpack.c.l.b16 %v8107
      %v8127 = vpack.c.b16 %v7701, %v8126
      %v8128 = vrot.slane %v8127, 1
      %v8129 = vrot.slane %v7734, 1
      %v8130 = vsel %vm1412, %v8128, %v8129
      %v8131 = vrot.slane %v7735, 1
      %v8132 = vsel %vm1412, %v8129, %v8131
      %v8133 = vrot.slane %v7736, 1
      %v8134 = vsel %vm1412, %v8131, %v8133
      %v8135 = vrot.slane %v7737, 1
      %v8136 = vsel %vm1412, %v8133, %v8135
      %v8137 = vrot.slane %v7738, 1
      %v8138 = vsel %vm1412, %v8135, %v8137
      %v8139 = vrot.slane %v7739, 1
      %v8140 = vsel %vm1412, %v8137, %v8139
      %v8141 = vrot.slane %v7740, 1
      %v8142 = vsel %vm1412, %v8139, %v8141
      %v8143 = vrot.slane %v7741, 1
      %v8144 = vsel %vm1412, %v8141, %v8143
      %v8145 = vrot.slane %v7742, 1
      %v8146 = vsel %vm1412, %v8143, %v8145
      %v8147 = vrot.slane %v7743, 1
      %v8148 = vsel %vm1412, %v8145, %v8147
      %v8149 = vrot.slane %v7744, 1
      %v8150 = vsel %vm1412, %v8147, %v8149
      %v8151 = vrot.slane %v7745, 1
      %v8152 = vsel %vm1412, %v8149, %v8151
      %v8153 = vrot.slane %v7746, 1
      %v8154 = vsel %vm1412, %v8151, %v8153
      %v8155 = vrot.slane %v7747, 1
      %v8156 = vsel %vm1412, %v8153, %v8155
      %v8157 = vrot.slane %v7748, 1
      %v8158 = vsel %vm1412, %v8155, %v8157
      %v8159 = vrot.slane %v7749, 1
      %v8160 = vsel %vm1412, %v8157, %v8159
      %v8193 = vunpack.c.l.b16 %v8109
      %v8194 = vunpack.c.l.b16 %v8110
      %v8195 = vunpack.c.l.b16 %v8111
      %v8196 = vunpack.c.l.b16 %v8112
      %v8197 = vunpack.c.l.b16 %v8113
      %v8198 = vunpack.c.l.b16 %v8114
      %v8199 = vunpack.c.l.b16 %v8115
      %v8200 = vunpack.c.l.b16 %v8116
      %v8201 = vunpack.c.l.b16 %v8117
      %v8202 = vunpack.c.l.b16 %v8118
      %v8203 = vunpack.c.l.b16 %v8119
      %v8204 = vunpack.c.l.b16 %v8120
      %v8205 = vunpack.c.l.b16 %v8121
      %v8206 = vunpack.c.l.b16 %v8122
      %v8207 = vunpack.c.l.b16 %v8123
      %v8208 = vunpack.c.l.b16 %v8124
      %v8209 = vpack.c.b16 %v8194, %v8193
      %v8210 = vpack.c.b16 %v8196, %v8195
      %v8211 = vpack.c.b16 %v8198, %v8197
      %v8212 = vpack.c.b16 %v8200, %v8199
      %v8213 = vpack.c.b16 %v8202, %v8201
      %v8214 = vpack.c.b16 %v8204, %v8203
      %v8215 = vpack.c.b16 %v8206, %v8205
      %v8216 = vpack.c.b16 %v8208, %v8207
      %8225 = vmatprep.subr.bf16.mxu0 0
      %8226 = vmatpush1.bf16.msra.mxu0 %v8216
      %8227 = vmatprep.subr.bf16.mxu0 0
      %8228 = vmatpush1.bf16.msra.mxu0 %v8215
      %8229 = vmatprep.subr.bf16.mxu0 0
      %8230 = vmatpush1.bf16.msra.mxu0 %v8214
      %8231 = vmatprep.subr.bf16.mxu0 0
      %8232 = vmatpush1.bf16.msra.mxu0 %v8213
      %8233 = vmatprep.subr.bf16.mxu0 0
      %8234 = vmatpush1.bf16.msra.mxu0 %v8212
      %8235 = vmatprep.subr.bf16.mxu0 0
      %8236 = vmatpush1.bf16.msra.mxu0 %v8211
      %8237 = vmatprep.subr.bf16.mxu0 0
      %8238 = vmatpush1.bf16.msra.mxu0 %v8210
      %8239 = vmatprep.subr.bf16.mxu0 0
      %8240 = vmatpush1.bf16.msra.mxu0 %v8209
      %8241 = vmatprep.subr.bf16.mxu0 0
      %8242 = vmatpush2.bf16.msra.mxu0 0
      %8243 = vmatprep.subr.bf16.mxu0 0
      %8244 = vmatpush2.bf16.msra.mxu0 0
      %8245 = vmatprep.subr.bf16.mxu0 0
      %8246 = vmatpush2.bf16.msra.mxu0 0
      %8247 = vmatprep.subr.bf16.mxu0 0
      %8248 = vmatpush2.bf16.msra.mxu0 0
      %8249 = vmatprep.subr.bf16.mxu0 0
      %8250 = vmatpush2.bf16.msra.mxu0 0
      %8251 = vmatprep.subr.bf16.mxu0 0
      %8252 = vmatpush2.bf16.msra.mxu0 0
      %8253 = vmatprep.subr.bf16.mxu0 0
      %8254 = vmatpush2.bf16.msra.mxu0 0
      %8255 = vmatprep.subr.bf16.mxu0 0
      %8256 = vmatpush2.bf16.msra.mxu0 0
      %8257 = vmatprep.mubr.bf16.mxu0 0
      %8258 = vmatmul.mubr.bf16.gmra.mxu0 %v8130
      %v8259 = vpop.f32.mrf.mxu0
      %v8260 = vadd.f32 0.0, %v8259
      %v8261 = vpop.f32.mrf.mxu0
      %v8262 = vpop.f32.mrf.mxu0
      %v8263 = vadd.f32 0.0, %v8262
      %v8264 = vpop.f32.mrf.mxu0
      %8265 = vmatprep.mubr.bf16.mxu0 0
      %8266 = vmatmul.mubr.bf16.gmra.mxu0 %v8132
      %v8267 = vpop.f32.mrf.mxu0
      %v8268 = vpop.f32.mrf.mxu0
      %v8269 = vpop.f32.mrf.mxu0
      %v8270 = vpop.f32.mrf.mxu0
      %8271 = vmatprep.mubr.bf16.mxu0 0
      %8272 = vmatmul.mubr.bf16.gmra.mxu0 %v8134
      %v8273 = vpop.f32.mrf.mxu0
      %v8274 = vadd.f32 0.0, %v8273
      %v8275 = vpop.f32.mrf.mxu0
      %v8276 = vpop.f32.mrf.mxu0
      %v8277 = vadd.f32 0.0, %v8276
      %v8278 = vpop.f32.mrf.mxu0
      %8279 = vmatprep.mubr.bf16.mxu0 0
      %8280 = vmatmul.mubr.bf16.gmra.mxu0 %v8136
      %v8281 = vpop.f32.mrf.mxu0
      %v8282 = vpop.f32.mrf.mxu0
      %v8283 = vpop.f32.mrf.mxu0
      %v8284 = vpop.f32.mrf.mxu0
      %8285 = vmatprep.mubr.bf16.mxu0 0
      %8286 = vmatmul.mubr.bf16.gmra.mxu0 %v8138
      %v8287 = vpop.f32.mrf.mxu0
      %v8288 = vadd.f32 0.0, %v8287
      %v8289 = vpop.f32.mrf.mxu0
      %v8290 = vpop.f32.mrf.mxu0
      %v8291 = vadd.f32 0.0, %v8290
      %v8292 = vpop.f32.mrf.mxu0
      %8293 = vmatprep.mubr.bf16.mxu0 0
      %8294 = vmatmul.mubr.bf16.gmra.mxu0 %v8140
      %v8295 = vpop.f32.mrf.mxu0
      %v8296 = vpop.f32.mrf.mxu0
      %v8297 = vpop.f32.mrf.mxu0
      %v8298 = vpop.f32.mrf.mxu0
      %8299 = vmatprep.mubr.bf16.mxu0 0
      %8300 = vmatmul.mubr.bf16.gmra.mxu0 %v8142
      %v8301 = vpop.f32.mrf.mxu0
      %v8302 = vadd.f32 0.0, %v8301
      %v8303 = vpop.f32.mrf.mxu0
      %v8304 = vpop.f32.mrf.mxu0
      %v8305 = vadd.f32 0.0, %v8304
      %v8306 = vpop.f32.mrf.mxu0
      %8307 = vmatprep.mubr.bf16.mxu0 0
      %8308 = vmatmul.mubr.bf16.gmra.mxu0 %v8144
      %v8309 = vpop.f32.mrf.mxu0
      %v8310 = vpop.f32.mrf.mxu0
      %v8311 = vpop.f32.mrf.mxu0
      %v8312 = vpop.f32.mrf.mxu0
      %8313 = vmatprep.mubr.bf16.mxu0 0
      %8314 = vmatmul.mubr.bf16.gmra.mxu0 %v8146
      %v8315 = vpop.f32.mrf.mxu0
      %v8316 = vadd.f32 0.0, %v8315
      %v8317 = vpop.f32.mrf.mxu0
      %v8318 = vpop.f32.mrf.mxu0
      %v8319 = vadd.f32 0.0, %v8318
      %v8320 = vpop.f32.mrf.mxu0
      %8321 = vmatprep.mubr.bf16.mxu0 0
      %8322 = vmatmul.mubr.bf16.gmra.mxu0 %v8148
      %v8323 = vpop.f32.mrf.mxu0
      %v8324 = vpop.f32.mrf.mxu0
      %v8325 = vpop.f32.mrf.mxu0
      %v8326 = vpop.f32.mrf.mxu0
      %8327 = vmatprep.mubr.bf16.mxu0 0
      %8328 = vmatmul.mubr.bf16.gmra.mxu0 %v8150
      %v8329 = vpop.f32.mrf.mxu0
      %v8330 = vadd.f32 0.0, %v8329
      %v8331 = vpop.f32.mrf.mxu0
      %v8332 = vpop.f32.mrf.mxu0
      %v8333 = vadd.f32 0.0, %v8332
      %v8334 = vpop.f32.mrf.mxu0
      %8335 = vmatprep.mubr.bf16.mxu0 0
      %8336 = vmatmul.mubr.bf16.gmra.mxu0 %v8152
      %v8337 = vpop.f32.mrf.mxu0
      %v8338 = vpop.f32.mrf.mxu0
      %v8339 = vpop.f32.mrf.mxu0
      %v8340 = vpop.f32.mrf.mxu0
      %8341 = vmatprep.mubr.bf16.mxu0 0
      %8342 = vmatmul.mubr.bf16.gmra.mxu0 %v8154
      %v8343 = vpop.f32.mrf.mxu0
      %v8344 = vadd.f32 0.0, %v8343
      %v8345 = vpop.f32.mrf.mxu0
      %v8346 = vpop.f32.mrf.mxu0
      %v8347 = vadd.f32 0.0, %v8346
      %v8348 = vpop.f32.mrf.mxu0
      %8349 = vmatprep.mubr.bf16.mxu0 0
      %8350 = vmatmul.mubr.bf16.gmra.mxu0 %v8156
      %v8351 = vpop.f32.mrf.mxu0
      %v8352 = vpop.f32.mrf.mxu0
      %v8353 = vpop.f32.mrf.mxu0
      %v8354 = vpop.f32.mrf.mxu0
      %8355 = vmatprep.mubr.bf16.mxu0 0
      %8356 = vmatmul.mubr.bf16.gmra.mxu0 %v8158
      %v8357 = vpop.f32.mrf.mxu0
      %v8358 = vadd.f32 0.0, %v8357
      %v8359 = vpop.f32.mrf.mxu0
      %v8360 = vpop.f32.mrf.mxu0
      %v8361 = vadd.f32 0.0, %v8360
      %v8362 = vpop.f32.mrf.mxu0
      %8363 = vmatprep.mubr.bf16.mxu0 0
      %8364 = vmatmul.mubr.bf16.gmra.mxu0 %v8160
      %v8365 = vpop.f32.mrf.mxu0
      %v8366 = vpop.f32.mrf.mxu0
      %v8367 = vpop.f32.mrf.mxu0
      %v8368 = vpop.f32.mrf.mxu0
      %8369 = vdwg.mxu0
      %v8370 = vadd.f32 %v8091, %v8260
      %v8371 = vadd.f32 %v8092, %v8263
      %v8372 = vadd.f32 %v8093, %v8274
      %v8373 = vadd.f32 %v8094, %v8277
      %v8374 = vadd.f32 %v8095, %v8288
      %v8375 = vadd.f32 %v8096, %v8291
      %v8376 = vadd.f32 %v8097, %v8302
      %v8377 = vadd.f32 %v8098, %v8305
      %v8378 = vadd.f32 %v8099, %v8316
      %v8379 = vadd.f32 %v8100, %v8319
      %v8380 = vadd.f32 %v8101, %v8330
      %v8381 = vadd.f32 %v8102, %v8333
      %v8382 = vadd.f32 %v8103, %v8344
      %v8383 = vadd.f32 %v8104, %v8347
      %v8384 = vadd.f32 %v8105, %v8358
      %v8385 = vadd.f32 %v8106, %v8361
      %v8386 = vld [vmem:[%s6] sm:$0x1]
      %v8388 = vlaneseq
      %v8389 = vshrl.u32 %v8388, 7
      %v8390 = vsub.s32 0, %v8389
      %v8391 = vrot.slane %v8386, %v8390
      %v8393 = vmul.f32 %v8370, %v8391
      %v8394 = vmul.f32 %v8371, %v8391
      %v8395 = vmul.f32 %v8372, %v8391
      %v8396 = vmul.f32 %v8373, %v8391
      %v8397 = vmul.f32 %v8374, %v8391
      %v8398 = vmul.f32 %v8375, %v8391
      %v8399 = vmul.f32 %v8376, %v8391
      %v8400 = vmul.f32 %v8377, %v8391
      %v8401 = vmul.f32 %v8378, %v8391
      %v8402 = vmul.f32 %v8379, %v8391
      %v8403 = vmul.f32 %v8380, %v8391
      %v8404 = vmul.f32 %v8381, %v8391
      %v8405 = vmul.f32 %v8382, %v8391
      %v8406 = vmul.f32 %v8383, %v8391
      %v8407 = vmul.f32 %v8384, %v8391
      %v8408 = vmul.f32 %v8385, %v8391
      %v8409 = vld [vmem:[%s7] sm:$0x1]
      %v8411 = vlaneseq
      %v8412 = vshrl.u32 %v8411, 7
      %v8413 = vsub.s32 0, %v8412
      %v8414 = vrot.slane %v8409, %v8413
      %v8416 = vadd.f32 %v8393, %v8414
      %v8417 = vadd.f32 %v8394, %v8414
      %v8418 = vadd.f32 %v8395, %v8414
      %v8419 = vadd.f32 %v8396, %v8414
      %v8420 = vadd.f32 %v8397, %v8414
      %v8421 = vadd.f32 %v8398, %v8414
      %v8422 = vadd.f32 %v8399, %v8414
      %v8423 = vadd.f32 %v8400, %v8414
      %v8424 = vadd.f32 %v8401, %v8414
      %v8425 = vadd.f32 %v8402, %v8414
      %v8426 = vadd.f32 %v8403, %v8414
      %v8427 = vadd.f32 %v8404, %v8414
      %v8428 = vadd.f32 %v8405, %v8414
      %v8429 = vadd.f32 %v8406, %v8414
      %v8430 = vadd.f32 %v8407, %v8414
      %v8431 = vadd.f32 %v8408, %v8414
      %v8432 = vmax.f32 %v8416, 0.0
      %v8433 = vmax.f32 %v8417, 0.0
      %v8434 = vmax.f32 %v8418, 0.0
      %v8435 = vmax.f32 %v8419, 0.0
      %v8436 = vmax.f32 %v8420, 0.0
      %v8437 = vmax.f32 %v8421, 0.0
      %v8438 = vmax.f32 %v8422, 0.0
      %v8439 = vmax.f32 %v8423, 0.0
      %v8440 = vmax.f32 %v8424, 0.0
      %v8441 = vmax.f32 %v8425, 0.0
      %v8442 = vmax.f32 %v8426, 0.0
      %v8443 = vmax.f32 %v8427, 0.0
      %v8444 = vmax.f32 %v8428, 0.0
      %v8445 = vmax.f32 %v8429, 0.0
      %v8446 = vmax.f32 %v8430, 0.0
      %v8447 = vmax.f32 %v8431, 0.0
      %8448 = vst [vmem:[%s426] sm:$0xff] %v8432
      %8449 = vst [vmem:[%s426 + $0x8] sm:$0xff] %v8433
      %8450 = vst [vmem:[%s426 + $0x10] sm:$0xff] %v8434
      %8451 = vst [vmem:[%s426 + $0x18] sm:$0xff] %v8435
      %8452 = vst [vmem:[%s426 + $0x20] sm:$0xff] %v8436
      %8453 = vst [vmem:[%s426 + $0x28] sm:$0xff] %v8437
      %8454 = vst [vmem:[%s426 + $0x30] sm:$0xff] %v8438
      %8455 = vst [vmem:[%s426 + $0x38] sm:$0xff] %v8439
      %8456 = vst [vmem:[%s426 + $0x40] sm:$0xff] %v8440
      %8457 = vst [vmem:[%s426 + $0x48] sm:$0xff] %v8441
      %8458 = vst [vmem:[%s426 + $0x50] sm:$0xff] %v8442
      %8459 = vst [vmem:[%s426 + $0x58] sm:$0xff] %v8443
      %8460 = vst [vmem:[%s426 + $0x60] sm:$0xff] %v8444
      %8461 = vst [vmem:[%s426 + $0x68] sm:$0xff] %v8445
      %8462 = vst [vmem:[%s426 + $0x70] sm:$0xff] %v8446
      %8463 = vst [vmem:[%s426 + $0x78] sm:$0xff] %v8447
      %s8464 = smul.u32 8, %s24
      %p8465 = scmp.lt.s32.totalorder %s23, 1
      %s8466 = scalar_select %p8465, %s23, 1
      %p8467 = scmp.lt.s32.totalorder %s8464, 15
      %s8468 = scalar_select %p8467, %s8464, 15
      %s8469 = smul.addr %s8468, 2
      %s8470 = smul.addr %s8466, 32
      %s8471 = sadd.s32 %s8469, %s8470
      %s8472 = smul.addr %s8471, 8
      %s8473 = scalar_lea.vmem %s8, %s8472
      // Predicated region
      $region53: #{up_forward.1} parent=51 // pred_check
        %p8474 = pneg %p237
      $region54: #{up_forward.1} parent=51 // pred_check_branch
        %8476 = sbr.rel (%p8474) target = $region56
      $region55: #{up_forward.1} parent=51 // pred_region
        %s8477 = smul.u32 8, %s24
      $region56: #{up_forward.1} parent=51 // pred_fallthru
        _
    $region52: #{up_forward.1} parent=5 // pred_fallthru
      _
    %p8478 = scmp.le.s32.totalorder 2, %s14
    // Predicated region
    $region57: #{up_forward.1} parent=5 // pred_check
      %p8479 = pneg %p8478
    $region58: #{up_forward.1} parent=5 // pred_check_branch
      %8481 = sbr.rel (%p8479) target = $region60
    $region59: #{up_forward.1} parent=5 // pred_region
      %s8482 = ssub.s32 %s14, 2
      // Predicated region
      $region61: #{up_forward.1} parent=59 // pred_check
        %p8483 = pneg %p243
      $region62: #{up_forward.1} parent=59 // pred_check_branch
        %8485 = sbr.rel (%p8483) target = $region64
      $region63: #{up_forward.1} parent=59 // pred_region
        %s8486 = smul.u32 8, %s26
        %p8487 = scmp.lt.s32.totalorder %s25, 1
        %s8488 = scalar_select %p8487, %s25, 1
        %p8489 = scmp.lt.s32.totalorder %s8486, 15
        %s8490 = scalar_select %p8489, %s8486, 15
        %s8491 = smul.addr %s8490, 2
        %s8492 = smul.addr %s8488, 32
        %s8493 = sadd.s32 %s8491, %s8492
        %s8494 = smul.addr %s8493, 8
        %s8495 = scalar_lea.vmem %s8, %s8494
      $region64: #{up_forward.1} parent=59 // pred_fallthru
        _
    $region60: #{up_forward.1} parent=5 // pred_fallthru
      _
  $region6: #{up_forward.1} parent=0 // loop_footer
    %s18 = sadd.s32 1, %s14
  $region7: #{up_forward.1} parent=0 // loop_footer_branch
    %13 = sbr.rel target = $region3
  $region8: #{up_forward.1} parent=0 // loop_exit
    _

</llo_original>
